<compile_context>
chip_gen: v5e
topology: v5e:2x2
jax: 0.10.0
libtpu: 0.0.40
codegen_flags: <defaults>
</compile_context>

<pallas_src>
import numpy as np
import jax
import jax.numpy as jnp
from jax import lax
from jax.experimental import pallas as pl
from jax.experimental.pallas import tpu as pltpu

INPUT_SIZE = 1
HIDDEN1 = 128
HIDDEN2 = 64
NUM_LAYERS = 3
OUTPUT_SIZE = 3
FC_PAD = 128          # lane-dense padded width for fc1/fc2 outputs


def lstm_kernel(x_ref,                         # (T, BB, 1)  f32 raw input
                wih0_ref, b0_ref, whh0_ref,    # (1,1,4H) f32, (1,1,4H) f32, (H,4H) bf16
                wih1_ref, b1_ref, whh1_ref,    # (H,4H) bf16, (1,1,4H) f32, (H,4H) bf16
                wih2_ref, b2_ref, whh2_ref,    # (H,4H) bf16, (1,1,4H) f32, (H,4H) bf16
                fc1w_ref, fc1b_ref,            # (H,128) bf16, (1,128) f32
                fc2w_ref, fc2b_ref,            # (128,128) bf16, (1,128) f32
                out_ref,                       # (BB, 128) f32
                hseq_ref,                      # (T, BB, H)  f32 scratch (per-layer h(t))
                proj_ref):                     # (T, BB, 4H) f32 scratch (input proj + bias)
    T, BB, _ = x_ref.shape
    H = whh0_ref.shape[0]
    G = 4 * H

    def cell(gates, c):
        # PyTorch gate order: i, f, g, o (elementwise math kept in f32).
        i = jax.nn.sigmoid(gates[:, 0:H])
        f = jax.nn.sigmoid(gates[:, H:2 * H])
        g = jnp.tanh(gates[:, 2 * H:3 * H])
        o = jax.nn.sigmoid(gates[:, 3 * H:4 * H])
        c_new = f * c + i * g
        h_new = o * jnp.tanh(c_new)
        return h_new, c_new

    # Serial recurrence is latency-bound; full unroll only while T is small.
    unroll = True if T <= 16 else 4

    def run_layer(whh_ref, store_seq):
        """Serial time loop: gates = proj[t] + h_prev @ Whh (single K=128 dot)."""
        def step(t, carry):
            h_bf, c = carry
            g = proj_ref[t] + jnp.dot(h_bf, whh_ref[...],
                                      preferred_element_type=jnp.float32)
            h, c = cell(g, c)
            if store_seq:
                hseq_ref[t] = h                 # f32 scratch; batched bf16 cast later
            return (h.astype(jnp.bfloat16), c)  # carry h as bf16, c as f32
        carry0 = (jnp.zeros((BB, H), jnp.bfloat16), jnp.zeros((BB, H), jnp.float32))
        h_bf, _ = lax.fori_loop(0, T, step, carry0, unroll=unroll)
        return h_bf

    # ---- layer 0: input_size == 1 -> batched projection is a broadcast multiply ----
    proj_ref[...] = x_ref[...] * wih0_ref[...] + b0_ref[...]
    run_layer(whh0_ref, store_seq=True)

    # ---- layer 1: batched input projection over all T (one MXU matmul) ----
    h_flat = hseq_ref[...].reshape(T * BB, H).astype(jnp.bfloat16)
    p1 = jnp.dot(h_flat, wih1_ref[...], preferred_element_type=jnp.float32)
    proj_ref[...] = p1.reshape(T, BB, G) + b1_ref[...]
    run_layer(whh1_ref, store_seq=True)

    # ---- layer 2 ----
    h_flat = hseq_ref[...].reshape(T * BB, H).astype(jnp.bfloat16)
    p2 = jnp.dot(h_flat, wih2_ref[...], preferred_element_type=jnp.float32)
    proj_ref[...] = p2.reshape(T, BB, G) + b2_ref[...]
    h_last = run_layer(whh2_ref, store_seq=False)   # only last h needed

    # fc1 -> fc2 (dropout_prob = 0), padded to 128 lanes for unmasked stores.
    y = jnp.dot(h_last, fc1w_ref[...], preferred_element_type=jnp.float32) + fc1b_ref[...]
    y = jnp.dot(y.astype(jnp.bfloat16), fc2w_ref[...],
                preferred_element_type=jnp.float32) + fc2b_ref[...]
    out_ref[...] = y


def custom_lstm_forward(x, p):
    """x: (B, T, 1) float32.  Returns (B, 3) float32."""
    B, T, _ = x.shape
    bf = jnp.bfloat16
    H, G = HIDDEN1, 4 * HIDDEN1

    # Batch tiling: up to 256 padded rows per grid step (fills v6e/v7x MXU and
    # shards across v7x's two TensorCores via the "parallel" grid axis).
    if B <= 256:
        BB = ((B + 7) // 8) * 8
        Bp = BB
    else:
        BB = 256
        Bp = ((B + BB - 1) // BB) * BB
    grid = (Bp // BB,)

    x_tm = jnp.transpose(x, (1, 0, 2)).astype(jnp.float32)          # (T, B, 1)
    if Bp != B:
        x_tm = jnp.pad(x_tm, ((0, 0), (0, Bp - B), (0, 0)))         # (T, Bp, 1)

    # Layer-0 row weight + combined biases (added once per layer, outside the loop).
    wih0 = p["w_ih_0"].T.reshape(1, 1, G).astype(jnp.float32)
    b0 = (p["b_ih_0"] + p["b_hh_0"]).reshape(1, 1, G).astype(jnp.float32)
    b1 = (p["b_ih_1"] + p["b_hh_1"]).reshape(1, 1, G).astype(jnp.float32)
    b2 = (p["b_ih_2"] + p["b_hh_2"]).reshape(1, 1, G).astype(jnp.float32)

    # Lane-dense padded fc weights (zero padding keeps the math exact).
    fc1w_pad = jnp.zeros((H, FC_PAD), jnp.float32).at[:, :HIDDEN2].set(p["fc1_w"].T).astype(bf)
    fc1b_pad = jnp.zeros((1, FC_PAD), jnp.float32).at[0, :HIDDEN2].set(p["fc1_b"])
    fc2w_pad = jnp.zeros((FC_PAD, FC_PAD), jnp.float32).at[:HIDDEN2, :OUTPUT_SIZE].set(p["fc2_w"].T).astype(bf)
    fc2b_pad = jnp.zeros((1, FC_PAD), jnp.float32).at[0, :OUTPUT_SIZE].set(p["fc2_b"])

    args = [
        x_tm,
        wih0, b0, p["w_hh_0"].T.astype(bf),
        p["w_ih_1"].T.astype(bf), b1, p["w_hh_1"].T.astype(bf),
        p["w_ih_2"].T.astype(bf), b2, p["w_hh_2"].T.astype(bf),
        fc1w_pad, fc1b_pad, fc2w_pad, fc2b_pad,
    ]

    fix3 = lambda b: (0, 0, 0)    # replicated (1,1,G) rows
    fix2 = lambda b: (0, 0)       # replicated weight matrices
    in_specs = [
        pl.BlockSpec((T, BB, 1), lambda b: (0, b, 0)),      # x: tiled over batch
        pl.BlockSpec((1, 1, G), fix3),                      # wih0
        pl.BlockSpec((1, 1, G), fix3),                      # b0
        pl.BlockSpec((H, G), fix2),                         # whh0
        pl.BlockSpec((H, G), fix2),                         # wih1
        pl.BlockSpec((1, 1, G), fix3),                      # b1
        pl.BlockSpec((H, G), fix2),                         # whh1
        pl.BlockSpec((H, G), fix2),                         # wih2
        pl.BlockSpec((1, 1, G), fix3),                      # b2
        pl.BlockSpec((H, G), fix2),                         # whh2
        pl.BlockSpec((H, FC_PAD), fix2),                    # fc1w
        pl.BlockSpec((1, FC_PAD), fix2),                    # fc1b
        pl.BlockSpec((FC_PAD, FC_PAD), fix2),               # fc2w
        pl.BlockSpec((1, FC_PAD), fix2),                    # fc2b
    ]

    out_pad = pl.pallas_call(
        lstm_kernel,
        out_shape=jax.ShapeDtypeStruct((Bp, FC_PAD), jnp.float32),
        grid=grid,
        in_specs=in_specs,
        out_specs=pl.BlockSpec((BB, FC_PAD), lambda b: (b, 0)),
        scratch_shapes=[
            pltpu.VMEM((T, BB, H), jnp.float32),            # per-layer h(t) sequence
            pltpu.VMEM((T, BB, G), jnp.float32),            # per-layer input projection
        ],
        compiler_params=pltpu.CompilerParams(
            dimension_semantics=("parallel",)),
    )(*args)
    # TODO(synk): for very long T, add an "arbitrary" grid axis over time with
    # (chunk, BB, 1) x blocks and carry h/c in scratch so VMEM is T-independent.
    return out_pad[:B, :OUTPUT_SIZE]


def init_params(key):
    """Deterministic PyTorch-style uniform(-1/sqrt(fan), 1/sqrt(fan)) init."""
    ks = jax.random.split(key, 16)
    ki = iter(ks)

    def u(k, shape, bound):
        return jax.random.uniform(k, shape, jnp.float32, -bound, bound)

    p = {}
    bnd = 1.0 / np.sqrt(HIDDEN1)
    in_sizes = [INPUT_SIZE, HIDDEN1, HIDDEN1]
    for l in range(NUM_LAYERS):
        p[f"w_ih_{l}"] = u(next(ki), (4 * HIDDEN1, in_sizes[l]), bnd)
        p[f"w_hh_{l}"] = u(next(ki), (4 * HIDDEN1, HIDDEN1), bnd)
        p[f"b_ih_{l}"] = u(next(ki), (4 * HIDDEN1,), bnd)
        p[f"b_hh_{l}"] = u(next(ki), (4 * HIDDEN1,), bnd)
    p["fc1_w"] = u(next(ki), (HIDDEN2, HIDDEN1), 1.0 / np.sqrt(HIDDEN1))
    p["fc1_b"] = u(next(ki), (HIDDEN2,), 1.0 / np.sqrt(HIDDEN1))
    p["fc2_w"] = u(next(ki), (OUTPUT_SIZE, HIDDEN2), 1.0 / np.sqrt(HIDDEN2))
    p["fc2_b"] = u(next(ki), (OUTPUT_SIZE,), 1.0 / np.sqrt(HIDDEN2))
    return p


def ref_forward(x, p):
    """Pure-JAX reference matching nn.LSTM(batch_first) + fc1 + fc2 semantics."""
    B, T, _ = x.shape
    H = HIDDEN1
    hs = [jnp.zeros((B, H), jnp.float32) for _ in range(NUM_LAYERS)]
    cs = [jnp.zeros((B, H), jnp.float32) for _ in range(NUM_LAYERS)]
    for t in range(T):
        inp = x[:, t, :]
        for l in range(NUM_LAYERS):
            gates = (inp @ p[f"w_ih_{l}"].T + hs[l] @ p[f"w_hh_{l}"].T
                     + p[f"b_ih_{l}"] + p[f"b_hh_{l}"])
            i = jax.nn.sigmoid(gates[:, :H])
            f = jax.nn.sigmoid(gates[:, H:2 * H])
            g = jnp.tanh(gates[:, 2 * H:3 * H])
            o = jax.nn.sigmoid(gates[:, 3 * H:])
            cs[l] = f * cs[l] + i * g
            hs[l] = o * jnp.tanh(cs[l])
            inp = hs[l]
    y = hs[-1] @ p["fc1_w"].T + p["fc1_b"]
    y = y @ p["fc2_w"].T + p["fc2_b"]
    return y


if __name__ == "__main__":
    key = jax.random.PRNGKey(0)
    k_param, k_x = jax.random.split(key)

    params = init_params(k_param)
    B, T = 2, 8
    x = jax.random.normal(k_x, (B, T, INPUT_SIZE), dtype=jnp.float32)

    out = custom_lstm_forward(x, params)
    out = jax.block_until_ready(out)

    ref = ref_forward(x, params)
    assert out.shape == (B, OUTPUT_SIZE)
    assert bool(jnp.all(jnp.isfinite(out)))
    np.testing.assert_allclose(np.asarray(out), np.asarray(ref), atol=2e-2, rtol=2e-2)

    print("KERNEL_OK")
</pallas_src>

<mosaic_0001>
module attributes {stable_mosaic.version = 11 : i64} {
  func.func @lstm_kernel(%arg0: i32, %arg1: memref<8x8x1xf32, #tpu.memory_space<vmem>>, %arg2: memref<1x1x512xf32, #tpu.memory_space<vmem>>, %arg3: memref<1x1x512xf32, #tpu.memory_space<vmem>>, %arg4: memref<128x512xbf16, #tpu.memory_space<vmem>>, %arg5: memref<128x512xbf16, #tpu.memory_space<vmem>>, %arg6: memref<1x1x512xf32, #tpu.memory_space<vmem>>, %arg7: memref<128x512xbf16, #tpu.memory_space<vmem>>, %arg8: memref<128x512xbf16, #tpu.memory_space<vmem>>, %arg9: memref<1x1x512xf32, #tpu.memory_space<vmem>>, %arg10: memref<128x512xbf16, #tpu.memory_space<vmem>>, %arg11: memref<128x128xbf16, #tpu.memory_space<vmem>>, %arg12: memref<1x128xf32, #tpu.memory_space<vmem>>, %arg13: memref<128x128xbf16, #tpu.memory_space<vmem>>, %arg14: memref<1x128xf32, #tpu.memory_space<vmem>>, %arg15: memref<8x128xf32, #tpu.memory_space<vmem>>, %arg16: memref<8x8x128xf32, #tpu.memory_space<vmem>>, %arg17: memref<8x8x512xf32, #tpu.memory_space<vmem>>) attributes {dimension_semantics = [#tpu.dimension_semantics<parallel>], iteration_bounds = array<i64: 1>, scalar_prefetch = 0 : i64, scratch_operands = 2 : i64, tpu.core_type = #tpu.core_type<tc>, window_params = [{transform_indices = @transform_0, window_bounds = array<i64: 8, 8, 1>}, {pipeline_mode = #tpu.pipeline_mode<synchronous>, transform_indices = @transform_1, window_bounds = array<i64: 1, 1, 512>}, {pipeline_mode = #tpu.pipeline_mode<synchronous>, transform_indices = @transform_2, window_bounds = array<i64: 1, 1, 512>}, {pipeline_mode = #tpu.pipeline_mode<synchronous>, transform_indices = @transform_3, window_bounds = array<i64: 128, 512>}, {pipeline_mode = #tpu.pipeline_mode<synchronous>, transform_indices = @transform_4, window_bounds = array<i64: 128, 512>}, {pipeline_mode = #tpu.pipeline_mode<synchronous>, transform_indices = @transform_5, window_bounds = array<i64: 1, 1, 512>}, {pipeline_mode = #tpu.pipeline_mode<synchronous>, transform_indices = @transform_6, window_bounds = array<i64: 128, 512>}, {pipeline_mode = #tpu.pipeline_mode<synchronous>, transform_indices = @transform_7, window_bounds = array<i64: 128, 512>}, {pipeline_mode = #tpu.pipeline_mode<synchronous>, transform_indices = @transform_8, window_bounds = array<i64: 1, 1, 512>}, {pipeline_mode = #tpu.pipeline_mode<synchronous>, transform_indices = @transform_9, window_bounds = array<i64: 128, 512>}, {pipeline_mode = #tpu.pipeline_mode<synchronous>, transform_indices = @transform_10, window_bounds = array<i64: 128, 128>}, {pipeline_mode = #tpu.pipeline_mode<synchronous>, transform_indices = @transform_11, window_bounds = array<i64: 1, 128>}, {pipeline_mode = #tpu.pipeline_mode<synchronous>, transform_indices = @transform_12, window_bounds = array<i64: 128, 128>}, {pipeline_mode = #tpu.pipeline_mode<synchronous>, transform_indices = @transform_13, window_bounds = array<i64: 1, 128>}, {transform_indices = @transform_14, window_bounds = array<i64: 8, 128>}]} {
    %c0 = arith.constant 0 : index
    %c0_0 = arith.constant 0 : index
    %c0_1 = arith.constant 0 : index
    %0 = vector.load %arg1[%c0, %c0_0, %c0_1] : memref<8x8x1xf32, #tpu.memory_space<vmem>>, vector<8x8x1xf32>
    %c0_2 = arith.constant 0 : index
    %c0_3 = arith.constant 0 : index
    %c0_4 = arith.constant 0 : index
    %1 = vector.load %arg2[%c0_2, %c0_3, %c0_4] : memref<1x1x512xf32, #tpu.memory_space<vmem>>, vector<1x1x512xf32>
    %2 = vector.broadcast %0 : vector<8x8x1xf32> to vector<8x8x512xf32>
    %3 = vector.broadcast %1 : vector<1x1x512xf32> to vector<8x8x512xf32>
    %4 = arith.mulf %2, %3 : vector<8x8x512xf32>
    %c0_5 = arith.constant 0 : index
    %c0_6 = arith.constant 0 : index
    %c0_7 = arith.constant 0 : index
    %5 = vector.load %arg3[%c0_5, %c0_6, %c0_7] : memref<1x1x512xf32, #tpu.memory_space<vmem>>, vector<1x1x512xf32>
    %6 = vector.broadcast %5 : vector<1x1x512xf32> to vector<8x8x512xf32>
    %7 = arith.addf %4, %6 : vector<8x8x512xf32>
    %c0_8 = arith.constant 0 : index
    %c0_9 = arith.constant 0 : index
    %c0_10 = arith.constant 0 : index
    %8 = vector.load %arg17[%c0_8, %c0_9, %c0_10] : memref<8x8x512xf32, #tpu.memory_space<vmem>>, vector<8x8x512xf32>
    tpu.vector_store %arg17[%c0_8, %c0_9, %c0_10], %7 {strides = array<i32>} : memref<8x8x512xf32, #tpu.memory_space<vmem>>, vector<8x8x512xf32>,
    %cst = arith.constant 0.000000e+00 : bf16
    %9 = vector.broadcast %cst : bf16 to vector<8x128xbf16>
    %cst_11 = arith.constant 0.000000e+00 : f32
    %10 = vector.broadcast %cst_11 : f32 to vector<8x128xf32>
    %c0_i32 = arith.constant 0 : i32
    %11 = arith.index_cast %c0_i32 : i32 to index
    %c0_12 = arith.constant 0 : index
    %c0_13 = arith.constant 0 : index
    %12 = vector.load %arg17[%11, %c0_12, %c0_13] : memref<8x8x512xf32, #tpu.memory_space<vmem>>, vector<1x8x512xf32>
    %13 = vector.shape_cast %12 : vector<1x8x512xf32> to vector<8x512xf32>
    %c0_14 = arith.constant 0 : index
    %c0_15 = arith.constant 0 : index
    %14 = vector.load %arg4[%c0_14, %c0_15] : memref<128x512xbf16, #tpu.memory_space<vmem>>, vector<128x512xbf16>
    %cst_16 = arith.constant dense<0.000000e+00> : vector<8x512xf32>
    %15 = tpu.matmul %9, %14, %cst_16 {dimension_numbers = #tpu.dot_dimension_numbers<[1], [0], [0], [1], [0, 0, 1, 1], [], []>} : vector<8x128xbf16>, vector<128x512xbf16>, vector<8x512xf32> -> vector<8x512xf32>
    %16 = arith.addf %13, %15 : vector<8x512xf32>
    %17 = vector.extract_strided_slice %16 {offsets = [0, 0], sizes = [8, 128], strides = [1, 1]} : vector<8x512xf32> to vector<8x128xf32>
    %18 = arith.negf %17 : vector<8x128xf32>
    %19 = math.exp %18 : vector<8x128xf32>
    %cst_17 = arith.constant 1.000000e+00 : f32
    %20 = vector.broadcast %cst_17 : f32 to vector<8x128xf32>
    %21 = arith.addf %20, %19 : vector<8x128xf32>
    %22 = arith.divf %20, %21 : vector<8x128xf32>
    %23 = vector.extract_strided_slice %16 {offsets = [0, 128], sizes = [8, 128], strides = [1, 1]} : vector<8x512xf32> to vector<8x128xf32>
    %24 = arith.negf %23 : vector<8x128xf32>
    %25 = math.exp %24 : vector<8x128xf32>
    %cst_18 = arith.constant 1.000000e+00 : f32
    %26 = vector.broadcast %cst_18 : f32 to vector<8x128xf32>
    %27 = arith.addf %26, %25 : vector<8x128xf32>
    %28 = arith.divf %26, %27 : vector<8x128xf32>
    %29 = vector.extract_strided_slice %16 {offsets = [0, 256], sizes = [8, 128], strides = [1, 1]} : vector<8x512xf32> to vector<8x128xf32>
    %30 = math.tanh %29 : vector<8x128xf32>
    %31 = vector.extract_strided_slice %16 {offsets = [0, 384], sizes = [8, 128], strides = [1, 1]} : vector<8x512xf32> to vector<8x128xf32>
    %32 = arith.negf %31 : vector<8x128xf32>
    %33 = math.exp %32 : vector<8x128xf32>
    %cst_19 = arith.constant 1.000000e+00 : f32
    %34 = vector.broadcast %cst_19 : f32 to vector<8x128xf32>
    %35 = arith.addf %34, %33 : vector<8x128xf32>
    %36 = arith.divf %34, %35 : vector<8x128xf32>
    %37 = arith.mulf %28, %10 : vector<8x128xf32>
    %38 = arith.mulf %22, %30 : vector<8x128xf32>
    %39 = arith.addf %37, %38 : vector<8x128xf32>
    %40 = math.tanh %39 : vector<8x128xf32>
    %41 = arith.mulf %36, %40 : vector<8x128xf32>
    %42 = arith.index_cast %c0_i32 : i32 to index
    %c0_20 = arith.constant 0 : index
    %c0_21 = arith.constant 0 : index
    %43 = vector.load %arg16[%42, %c0_20, %c0_21] : memref<8x8x128xf32, #tpu.memory_space<vmem>>, vector<1x8x128xf32>
    %44 = vector.shape_cast %43 : vector<1x8x128xf32> to vector<8x128xf32>
    %45 = vector.shape_cast %41 : vector<8x128xf32> to vector<1x8x128xf32>
    tpu.vector_store %arg16[%42, %c0_20, %c0_21], %45 {strides = array<i32>} : memref<8x8x128xf32, #tpu.memory_space<vmem>>, vector<1x8x128xf32>,
    %46 = arith.truncf %41 : vector<8x128xf32> to vector<8x128xbf16>
    %c1_i32 = arith.constant 1 : i32
    %47 = arith.index_cast %c1_i32 : i32 to index
    %c0_22 = arith.constant 0 : index
    %c0_23 = arith.constant 0 : index
    %48 = vector.load %arg17[%47, %c0_22, %c0_23] : memref<8x8x512xf32, #tpu.memory_space<vmem>>, vector<1x8x512xf32>
    %49 = vector.shape_cast %48 : vector<1x8x512xf32> to vector<8x512xf32>
    %c0_24 = arith.constant 0 : index
    %c0_25 = arith.constant 0 : index
    %50 = vector.load %arg4[%c0_24, %c0_25] : memref<128x512xbf16, #tpu.memory_space<vmem>>, vector<128x512xbf16>
    %cst_26 = arith.constant dense<0.000000e+00> : vector<8x512xf32>
    %51 = tpu.matmul %46, %50, %cst_26 {dimension_numbers = #tpu.dot_dimension_numbers<[1], [0], [0], [1], [0, 0, 1, 1], [], []>} : vector<8x128xbf16>, vector<128x512xbf16>, vector<8x512xf32> -> vector<8x512xf32>
    %52 = arith.addf %49, %51 : vector<8x512xf32>
    %53 = vector.extract_strided_slice %52 {offsets = [0, 0], sizes = [8, 128], strides = [1, 1]} : vector<8x512xf32> to vector<8x128xf32>
    %54 = arith.negf %53 : vector<8x128xf32>
    %55 = math.exp %54 : vector<8x128xf32>
    %cst_27 = arith.constant 1.000000e+00 : f32
    %56 = vector.broadcast %cst_27 : f32 to vector<8x128xf32>
    %57 = arith.addf %56, %55 : vector<8x128xf32>
    %58 = arith.divf %56, %57 : vector<8x128xf32>
    %59 = vector.extract_strided_slice %52 {offsets = [0, 128], sizes = [8, 128], strides = [1, 1]} : vector<8x512xf32> to vector<8x128xf32>
    %60 = arith.negf %59 : vector<8x128xf32>
    %61 = math.exp %60 : vector<8x128xf32>
    %cst_28 = arith.constant 1.000000e+00 : f32
    %62 = vector.broadcast %cst_28 : f32 to vector<8x128xf32>
    %63 = arith.addf %62, %61 : vector<8x128xf32>
    %64 = arith.divf %62, %63 : vector<8x128xf32>
    %65 = vector.extract_strided_slice %52 {offsets = [0, 256], sizes = [8, 128], strides = [1, 1]} : vector<8x512xf32> to vector<8x128xf32>
    %66 = math.tanh %65 : vector<8x128xf32>
    %67 = vector.extract_strided_slice %52 {offsets = [0, 384], sizes = [8, 128], strides = [1, 1]} : vector<8x512xf32> to vector<8x128xf32>
    %68 = arith.negf %67 : vector<8x128xf32>
    %69 = math.exp %68 : vector<8x128xf32>
    %cst_29 = arith.constant 1.000000e+00 : f32
    %70 = vector.broadcast %cst_29 : f32 to vector<8x128xf32>
    %71 = arith.addf %70, %69 : vector<8x128xf32>
    %72 = arith.divf %70, %71 : vector<8x128xf32>
    %73 = arith.mulf %64, %39 : vector<8x128xf32>
    %74 = arith.mulf %58, %66 : vector<8x128xf32>
    %75 = arith.addf %73, %74 : vector<8x128xf32>
    %76 = math.tanh %75 : vector<8x128xf32>
    %77 = arith.mulf %72, %76 : vector<8x128xf32>
    %78 = arith.index_cast %c1_i32 : i32 to index
    %c0_30 = arith.constant 0 : index
    %c0_31 = arith.constant 0 : index
    %79 = vector.load %arg16[%78, %c0_30, %c0_31] : memref<8x8x128xf32, #tpu.memory_space<vmem>>, vector<1x8x128xf32>
    %80 = vector.shape_cast %79 : vector<1x8x128xf32> to vector<8x128xf32>
    %81 = vector.shape_cast %77 : vector<8x128xf32> to vector<1x8x128xf32>
    tpu.vector_store %arg16[%78, %c0_30, %c0_31], %81 {strides = array<i32>} : memref<8x8x128xf32, #tpu.memory_space<vmem>>, vector<1x8x128xf32>,
    %82 = arith.truncf %77 : vector<8x128xf32> to vector<8x128xbf16>
    %c2_i32 = arith.constant 2 : i32
    %83 = arith.index_cast %c2_i32 : i32 to index
    %c0_32 = arith.constant 0 : index
    %c0_33 = arith.constant 0 : index
    %84 = vector.load %arg17[%83, %c0_32, %c0_33] : memref<8x8x512xf32, #tpu.memory_space<vmem>>, vector<1x8x512xf32>
    %85 = vector.shape_cast %84 : vector<1x8x512xf32> to vector<8x512xf32>
    %c0_34 = arith.constant 0 : index
    %c0_35 = arith.constant 0 : index
    %86 = vector.load %arg4[%c0_34, %c0_35] : memref<128x512xbf16, #tpu.memory_space<vmem>>, vector<128x512xbf16>
    %cst_36 = arith.constant dense<0.000000e+00> : vector<8x512xf32>
    %87 = tpu.matmul %82, %86, %cst_36 {dimension_numbers = #tpu.dot_dimension_numbers<[1], [0], [0], [1], [0, 0, 1, 1], [], []>} : vector<8x128xbf16>, vector<128x512xbf16>, vector<8x512xf32> -> vector<8x512xf32>
    %88 = arith.addf %85, %87 : vector<8x512xf32>
    %89 = vector.extract_strided_slice %88 {offsets = [0, 0], sizes = [8, 128], strides = [1, 1]} : vector<8x512xf32> to vector<8x128xf32>
    %90 = arith.negf %89 : vector<8x128xf32>
    %91 = math.exp %90 : vector<8x128xf32>
    %cst_37 = arith.constant 1.000000e+00 : f32
    %92 = vector.broadcast %cst_37 : f32 to vector<8x128xf32>
    %93 = arith.addf %92, %91 : vector<8x128xf32>
    %94 = arith.divf %92, %93 : vector<8x128xf32>
    %95 = vector.extract_strided_slice %88 {offsets = [0, 128], sizes = [8, 128], strides = [1, 1]} : vector<8x512xf32> to vector<8x128xf32>
    %96 = arith.negf %95 : vector<8x128xf32>
    %97 = math.exp %96 : vector<8x128xf32>
    %cst_38 = arith.constant 1.000000e+00 : f32
    %98 = vector.broadcast %cst_38 : f32 to vector<8x128xf32>
    %99 = arith.addf %98, %97 : vector<8x128xf32>
    %100 = arith.divf %98, %99 : vector<8x128xf32>
    %101 = vector.extract_strided_slice %88 {offsets = [0, 256], sizes = [8, 128], strides = [1, 1]} : vector<8x512xf32> to vector<8x128xf32>
    %102 = math.tanh %101 : vector<8x128xf32>
    %103 = vector.extract_strided_slice %88 {offsets = [0, 384], sizes = [8, 128], strides = [1, 1]} : vector<8x512xf32> to vector<8x128xf32>
    %104 = arith.negf %103 : vector<8x128xf32>
    %105 = math.exp %104 : vector<8x128xf32>
    %cst_39 = arith.constant 1.000000e+00 : f32
    %106 = vector.broadcast %cst_39 : f32 to vector<8x128xf32>
    %107 = arith.addf %106, %105 : vector<8x128xf32>
    %108 = arith.divf %106, %107 : vector<8x128xf32>
    %109 = arith.mulf %100, %75 : vector<8x128xf32>
    %110 = arith.mulf %94, %102 : vector<8x128xf32>
    %111 = arith.addf %109, %110 : vector<8x128xf32>
    %112 = math.tanh %111 : vector<8x128xf32>
    %113 = arith.mulf %108, %112 : vector<8x128xf32>
    %114 = arith.index_cast %c2_i32 : i32 to index
    %c0_40 = arith.constant 0 : index
    %c0_41 = arith.constant 0 : index
    %115 = vector.load %arg16[%114, %c0_40, %c0_41] : memref<8x8x128xf32, #tpu.memory_space<vmem>>, vector<1x8x128xf32>
    %116 = vector.shape_cast %115 : vector<1x8x128xf32> to vector<8x128xf32>
    %117 = vector.shape_cast %113 : vector<8x128xf32> to vector<1x8x128xf32>
    tpu.vector_store %arg16[%114, %c0_40, %c0_41], %117 {strides = array<i32>} : memref<8x8x128xf32, #tpu.memory_space<vmem>>, vector<1x8x128xf32>,
    %118 = arith.truncf %113 : vector<8x128xf32> to vector<8x128xbf16>
    %c3_i32 = arith.constant 3 : i32
    %119 = arith.index_cast %c3_i32 : i32 to index
    %c0_42 = arith.constant 0 : index
    %c0_43 = arith.constant 0 : index
    %120 = vector.load %arg17[%119, %c0_42, %c0_43] : memref<8x8x512xf32, #tpu.memory_space<vmem>>, vector<1x8x512xf32>
    %121 = vector.shape_cast %120 : vector<1x8x512xf32> to vector<8x512xf32>
    %c0_44 = arith.constant 0 : index
    %c0_45 = arith.constant 0 : index
    %122 = vector.load %arg4[%c0_44, %c0_45] : memref<128x512xbf16, #tpu.memory_space<vmem>>, vector<128x512xbf16>
    %cst_46 = arith.constant dense<0.000000e+00> : vector<8x512xf32>
    %123 = tpu.matmul %118, %122, %cst_46 {dimension_numbers = #tpu.dot_dimension_numbers<[1], [0], [0], [1], [0, 0, 1, 1], [], []>} : vector<8x128xbf16>, vector<128x512xbf16>, vector<8x512xf32> -> vector<8x512xf32>
    %124 = arith.addf %121, %123 : vector<8x512xf32>
    %125 = vector.extract_strided_slice %124 {offsets = [0, 0], sizes = [8, 128], strides = [1, 1]} : vector<8x512xf32> to vector<8x128xf32>
    %126 = arith.negf %125 : vector<8x128xf32>
    %127 = math.exp %126 : vector<8x128xf32>
    %cst_47 = arith.constant 1.000000e+00 : f32
    %128 = vector.broadcast %cst_47 : f32 to vector<8x128xf32>
    %129 = arith.addf %128, %127 : vector<8x128xf32>
    %130 = arith.divf %128, %129 : vector<8x128xf32>
    %131 = vector.extract_strided_slice %124 {offsets = [0, 128], sizes = [8, 128], strides = [1, 1]} : vector<8x512xf32> to vector<8x128xf32>
    %132 = arith.negf %131 : vector<8x128xf32>
    %133 = math.exp %132 : vector<8x128xf32>
    %cst_48 = arith.constant 1.000000e+00 : f32
    %134 = vector.broadcast %cst_48 : f32 to vector<8x128xf32>
    %135 = arith.addf %134, %133 : vector<8x128xf32>
    %136 = arith.divf %134, %135 : vector<8x128xf32>
    %137 = vector.extract_strided_slice %124 {offsets = [0, 256], sizes = [8, 128], strides = [1, 1]} : vector<8x512xf32> to vector<8x128xf32>
    %138 = math.tanh %137 : vector<8x128xf32>
    %139 = vector.extract_strided_slice %124 {offsets = [0, 384], sizes = [8, 128], strides = [1, 1]} : vector<8x512xf32> to vector<8x128xf32>
    %140 = arith.negf %139 : vector<8x128xf32>
    %141 = math.exp %140 : vector<8x128xf32>
    %cst_49 = arith.constant 1.000000e+00 : f32
    %142 = vector.broadcast %cst_49 : f32 to vector<8x128xf32>
    %143 = arith.addf %142, %141 : vector<8x128xf32>
    %144 = arith.divf %142, %143 : vector<8x128xf32>
    %145 = arith.mulf %136, %111 : vector<8x128xf32>
    %146 = arith.mulf %130, %138 : vector<8x128xf32>
    %147 = arith.addf %145, %146 : vector<8x128xf32>
    %148 = math.tanh %147 : vector<8x128xf32>
    %149 = arith.mulf %144, %148 : vector<8x128xf32>
    %150 = arith.index_cast %c3_i32 : i32 to index
    %c0_50 = arith.constant 0 : index
    %c0_51 = arith.constant 0 : index
    %151 = vector.load %arg16[%150, %c0_50, %c0_51] : memref<8x8x128xf32, #tpu.memory_space<vmem>>, vector<1x8x128xf32>
    %152 = vector.shape_cast %151 : vector<1x8x128xf32> to vector<8x128xf32>
    %153 = vector.shape_cast %149 : vector<8x128xf32> to vector<1x8x128xf32>
    tpu.vector_store %arg16[%150, %c0_50, %c0_51], %153 {strides = array<i32>} : memref<8x8x128xf32, #tpu.memory_space<vmem>>, vector<1x8x128xf32>,
    %154 = arith.truncf %149 : vector<8x128xf32> to vector<8x128xbf16>
    %c4_i32 = arith.constant 4 : i32
    %155 = arith.index_cast %c4_i32 : i32 to index
    %c0_52 = arith.constant 0 : index
    %c0_53 = arith.constant 0 : index
    %156 = vector.load %arg17[%155, %c0_52, %c0_53] : memref<8x8x512xf32, #tpu.memory_space<vmem>>, vector<1x8x512xf32>
    %157 = vector.shape_cast %156 : vector<1x8x512xf32> to vector<8x512xf32>
    %c0_54 = arith.constant 0 : index
    %c0_55 = arith.constant 0 : index
    %158 = vector.load %arg4[%c0_54, %c0_55] : memref<128x512xbf16, #tpu.memory_space<vmem>>, vector<128x512xbf16>
    %cst_56 = arith.constant dense<0.000000e+00> : vector<8x512xf32>
    %159 = tpu.matmul %154, %158, %cst_56 {dimension_numbers = #tpu.dot_dimension_numbers<[1], [0], [0], [1], [0, 0, 1, 1], [], []>} : vector<8x128xbf16>, vector<128x512xbf16>, vector<8x512xf32> -> vector<8x512xf32>
    %160 = arith.addf %157, %159 : vector<8x512xf32>
    %161 = vector.extract_strided_slice %160 {offsets = [0, 0], sizes = [8, 128], strides = [1, 1]} : vector<8x512xf32> to vector<8x128xf32>
    %162 = arith.negf %161 : vector<8x128xf32>
    %163 = math.exp %162 : vector<8x128xf32>
    %cst_57 = arith.constant 1.000000e+00 : f32
    %164 = vector.broadcast %cst_57 : f32 to vector<8x128xf32>
    %165 = arith.addf %164, %163 : vector<8x128xf32>
    %166 = arith.divf %164, %165 : vector<8x128xf32>
    %167 = vector.extract_strided_slice %160 {offsets = [0, 128], sizes = [8, 128], strides = [1, 1]} : vector<8x512xf32> to vector<8x128xf32>
    %168 = arith.negf %167 : vector<8x128xf32>
    %169 = math.exp %168 : vector<8x128xf32>
    %cst_58 = arith.constant 1.000000e+00 : f32
    %170 = vector.broadcast %cst_58 : f32 to vector<8x128xf32>
    %171 = arith.addf %170, %169 : vector<8x128xf32>
    %172 = arith.divf %170, %171 : vector<8x128xf32>
    %173 = vector.extract_strided_slice %160 {offsets = [0, 256], sizes = [8, 128], strides = [1, 1]} : vector<8x512xf32> to vector<8x128xf32>
    %174 = math.tanh %173 : vector<8x128xf32>
    %175 = vector.extract_strided_slice %160 {offsets = [0, 384], sizes = [8, 128], strides = [1, 1]} : vector<8x512xf32> to vector<8x128xf32>
    %176 = arith.negf %175 : vector<8x128xf32>
    %177 = math.exp %176 : vector<8x128xf32>
    %cst_59 = arith.constant 1.000000e+00 : f32
    %178 = vector.broadcast %cst_59 : f32 to vector<8x128xf32>
    %179 = arith.addf %178, %177 : vector<8x128xf32>
    %180 = arith.divf %178, %179 : vector<8x128xf32>
    %181 = arith.mulf %172, %147 : vector<8x128xf32>
    %182 = arith.mulf %166, %174 : vector<8x128xf32>
    %183 = arith.addf %181, %182 : vector<8x128xf32>
    %184 = math.tanh %183 : vector<8x128xf32>
    %185 = arith.mulf %180, %184 : vector<8x128xf32>
    %186 = arith.index_cast %c4_i32 : i32 to index
    %c0_60 = arith.constant 0 : index
    %c0_61 = arith.constant 0 : index
    %187 = vector.load %arg16[%186, %c0_60, %c0_61] : memref<8x8x128xf32, #tpu.memory_space<vmem>>, vector<1x8x128xf32>
    %188 = vector.shape_cast %187 : vector<1x8x128xf32> to vector<8x128xf32>
    %189 = vector.shape_cast %185 : vector<8x128xf32> to vector<1x8x128xf32>
    tpu.vector_store %arg16[%186, %c0_60, %c0_61], %189 {strides = array<i32>} : memref<8x8x128xf32, #tpu.memory_space<vmem>>, vector<1x8x128xf32>,
    %190 = arith.truncf %185 : vector<8x128xf32> to vector<8x128xbf16>
    %c5_i32 = arith.constant 5 : i32
    %191 = arith.index_cast %c5_i32 : i32 to index
    %c0_62 = arith.constant 0 : index
    %c0_63 = arith.constant 0 : index
    %192 = vector.load %arg17[%191, %c0_62, %c0_63] : memref<8x8x512xf32, #tpu.memory_space<vmem>>, vector<1x8x512xf32>
    %193 = vector.shape_cast %192 : vector<1x8x512xf32> to vector<8x512xf32>
    %c0_64 = arith.constant 0 : index
    %c0_65 = arith.constant 0 : index
    %194 = vector.load %arg4[%c0_64, %c0_65] : memref<128x512xbf16, #tpu.memory_space<vmem>>, vector<128x512xbf16>
    %cst_66 = arith.constant dense<0.000000e+00> : vector<8x512xf32>
    %195 = tpu.matmul %190, %194, %cst_66 {dimension_numbers = #tpu.dot_dimension_numbers<[1], [0], [0], [1], [0, 0, 1, 1], [], []>} : vector<8x128xbf16>, vector<128x512xbf16>, vector<8x512xf32> -> vector<8x512xf32>
    %196 = arith.addf %193, %195 : vector<8x512xf32>
    %197 = vector.extract_strided_slice %196 {offsets = [0, 0], sizes = [8, 128], strides = [1, 1]} : vector<8x512xf32> to vector<8x128xf32>
    %198 = arith.negf %197 : vector<8x128xf32>
    %199 = math.exp %198 : vector<8x128xf32>
    %cst_67 = arith.constant 1.000000e+00 : f32
    %200 = vector.broadcast %cst_67 : f32 to vector<8x128xf32>
    %201 = arith.addf %200, %199 : vector<8x128xf32>
    %202 = arith.divf %200, %201 : vector<8x128xf32>
    %203 = vector.extract_strided_slice %196 {offsets = [0, 128], sizes = [8, 128], strides = [1, 1]} : vector<8x512xf32> to vector<8x128xf32>
    %204 = arith.negf %203 : vector<8x128xf32>
    %205 = math.exp %204 : vector<8x128xf32>
    %cst_68 = arith.constant 1.000000e+00 : f32
    %206 = vector.broadcast %cst_68 : f32 to vector<8x128xf32>
    %207 = arith.addf %206, %205 : vector<8x128xf32>
    %208 = arith.divf %206, %207 : vector<8x128xf32>
    %209 = vector.extract_strided_slice %196 {offsets = [0, 256], sizes = [8, 128], strides = [1, 1]} : vector<8x512xf32> to vector<8x128xf32>
    %210 = math.tanh %209 : vector<8x128xf32>
    %211 = vector.extract_strided_slice %196 {offsets = [0, 384], sizes = [8, 128], strides = [1, 1]} : vector<8x512xf32> to vector<8x128xf32>
    %212 = arith.negf %211 : vector<8x128xf32>
    %213 = math.exp %212 : vector<8x128xf32>
    %cst_69 = arith.constant 1.000000e+00 : f32
    %214 = vector.broadcast %cst_69 : f32 to vector<8x128xf32>
    %215 = arith.addf %214, %213 : vector<8x128xf32>
    %216 = arith.divf %214, %215 : vector<8x128xf32>
    %217 = arith.mulf %208, %183 : vector<8x128xf32>
    %218 = arith.mulf %202, %210 : vector<8x128xf32>
    %219 = arith.addf %217, %218 : vector<8x128xf32>
    %220 = math.tanh %219 : vector<8x128xf32>
    %221 = arith.mulf %216, %220 : vector<8x128xf32>
    %222 = arith.index_cast %c5_i32 : i32 to index
    %c0_70 = arith.constant 0 : index
    %c0_71 = arith.constant 0 : index
    %223 = vector.load %arg16[%222, %c0_70, %c0_71] : memref<8x8x128xf32, #tpu.memory_space<vmem>>, vector<1x8x128xf32>
    %224 = vector.shape_cast %223 : vector<1x8x128xf32> to vector<8x128xf32>
    %225 = vector.shape_cast %221 : vector<8x128xf32> to vector<1x8x128xf32>
    tpu.vector_store %arg16[%222, %c0_70, %c0_71], %225 {strides = array<i32>} : memref<8x8x128xf32, #tpu.memory_space<vmem>>, vector<1x8x128xf32>,
    %226 = arith.truncf %221 : vector<8x128xf32> to vector<8x128xbf16>
    %c6_i32 = arith.constant 6 : i32
    %227 = arith.index_cast %c6_i32 : i32 to index
    %c0_72 = arith.constant 0 : index
    %c0_73 = arith.constant 0 : index
    %228 = vector.load %arg17[%227, %c0_72, %c0_73] : memref<8x8x512xf32, #tpu.memory_space<vmem>>, vector<1x8x512xf32>
    %229 = vector.shape_cast %228 : vector<1x8x512xf32> to vector<8x512xf32>
    %c0_74 = arith.constant 0 : index
    %c0_75 = arith.constant 0 : index
    %230 = vector.load %arg4[%c0_74, %c0_75] : memref<128x512xbf16, #tpu.memory_space<vmem>>, vector<128x512xbf16>
    %cst_76 = arith.constant dense<0.000000e+00> : vector<8x512xf32>
    %231 = tpu.matmul %226, %230, %cst_76 {dimension_numbers = #tpu.dot_dimension_numbers<[1], [0], [0], [1], [0, 0, 1, 1], [], []>} : vector<8x128xbf16>, vector<128x512xbf16>, vector<8x512xf32> -> vector<8x512xf32>
    %232 = arith.addf %229, %231 : vector<8x512xf32>
    %233 = vector.extract_strided_slice %232 {offsets = [0, 0], sizes = [8, 128], strides = [1, 1]} : vector<8x512xf32> to vector<8x128xf32>
    %234 = arith.negf %233 : vector<8x128xf32>
    %235 = math.exp %234 : vector<8x128xf32>
    %cst_77 = arith.constant 1.000000e+00 : f32
    %236 = vector.broadcast %cst_77 : f32 to vector<8x128xf32>
    %237 = arith.addf %236, %235 : vector<8x128xf32>
    %238 = arith.divf %236, %237 : vector<8x128xf32>
    %239 = vector.extract_strided_slice %232 {offsets = [0, 128], sizes = [8, 128], strides = [1, 1]} : vector<8x512xf32> to vector<8x128xf32>
    %240 = arith.negf %239 : vector<8x128xf32>
    %241 = math.exp %240 : vector<8x128xf32>
    %cst_78 = arith.constant 1.000000e+00 : f32
    %242 = vector.broadcast %cst_78 : f32 to vector<8x128xf32>
    %243 = arith.addf %242, %241 : vector<8x128xf32>
    %244 = arith.divf %242, %243 : vector<8x128xf32>
    %245 = vector.extract_strided_slice %232 {offsets = [0, 256], sizes = [8, 128], strides = [1, 1]} : vector<8x512xf32> to vector<8x128xf32>
    %246 = math.tanh %245 : vector<8x128xf32>
    %247 = vector.extract_strided_slice %232 {offsets = [0, 384], sizes = [8, 128], strides = [1, 1]} : vector<8x512xf32> to vector<8x128xf32>
    %248 = arith.negf %247 : vector<8x128xf32>
    %249 = math.exp %248 : vector<8x128xf32>
    %cst_79 = arith.constant 1.000000e+00 : f32
    %250 = vector.broadcast %cst_79 : f32 to vector<8x128xf32>
    %251 = arith.addf %250, %249 : vector<8x128xf32>
    %252 = arith.divf %250, %251 : vector<8x128xf32>
    %253 = arith.mulf %244, %219 : vector<8x128xf32>
    %254 = arith.mulf %238, %246 : vector<8x128xf32>
    %255 = arith.addf %253, %254 : vector<8x128xf32>
    %256 = math.tanh %255 : vector<8x128xf32>
    %257 = arith.mulf %252, %256 : vector<8x128xf32>
    %258 = arith.index_cast %c6_i32 : i32 to index
    %c0_80 = arith.constant 0 : index
    %c0_81 = arith.constant 0 : index
    %259 = vector.load %arg16[%258, %c0_80, %c0_81] : memref<8x8x128xf32, #tpu.memory_space<vmem>>, vector<1x8x128xf32>
    %260 = vector.shape_cast %259 : vector<1x8x128xf32> to vector<8x128xf32>
    %261 = vector.shape_cast %257 : vector<8x128xf32> to vector<1x8x128xf32>
    tpu.vector_store %arg16[%258, %c0_80, %c0_81], %261 {strides = array<i32>} : memref<8x8x128xf32, #tpu.memory_space<vmem>>, vector<1x8x128xf32>,
    %262 = arith.truncf %257 : vector<8x128xf32> to vector<8x128xbf16>
    %c7_i32 = arith.constant 7 : i32
    %263 = arith.index_cast %c7_i32 : i32 to index
    %c0_82 = arith.constant 0 : index
    %c0_83 = arith.constant 0 : index
    %264 = vector.load %arg17[%263, %c0_82, %c0_83] : memref<8x8x512xf32, #tpu.memory_space<vmem>>, vector<1x8x512xf32>
    %265 = vector.shape_cast %264 : vector<1x8x512xf32> to vector<8x512xf32>
    %c0_84 = arith.constant 0 : index
    %c0_85 = arith.constant 0 : index
    %266 = vector.load %arg4[%c0_84, %c0_85] : memref<128x512xbf16, #tpu.memory_space<vmem>>, vector<128x512xbf16>
    %cst_86 = arith.constant dense<0.000000e+00> : vector<8x512xf32>
    %267 = tpu.matmul %262, %266, %cst_86 {dimension_numbers = #tpu.dot_dimension_numbers<[1], [0], [0], [1], [0, 0, 1, 1], [], []>} : vector<8x128xbf16>, vector<128x512xbf16>, vector<8x512xf32> -> vector<8x512xf32>
    %268 = arith.addf %265, %267 : vector<8x512xf32>
    %269 = vector.extract_strided_slice %268 {offsets = [0, 0], sizes = [8, 128], strides = [1, 1]} : vector<8x512xf32> to vector<8x128xf32>
    %270 = arith.negf %269 : vector<8x128xf32>
    %271 = math.exp %270 : vector<8x128xf32>
    %cst_87 = arith.constant 1.000000e+00 : f32
    %272 = vector.broadcast %cst_87 : f32 to vector<8x128xf32>
    %273 = arith.addf %272, %271 : vector<8x128xf32>
    %274 = arith.divf %272, %273 : vector<8x128xf32>
    %275 = vector.extract_strided_slice %268 {offsets = [0, 128], sizes = [8, 128], strides = [1, 1]} : vector<8x512xf32> to vector<8x128xf32>
    %276 = arith.negf %275 : vector<8x128xf32>
    %277 = math.exp %276 : vector<8x128xf32>
    %cst_88 = arith.constant 1.000000e+00 : f32
    %278 = vector.broadcast %cst_88 : f32 to vector<8x128xf32>
    %279 = arith.addf %278, %277 : vector<8x128xf32>
    %280 = arith.divf %278, %279 : vector<8x128xf32>
    %281 = vector.extract_strided_slice %268 {offsets = [0, 256], sizes = [8, 128], strides = [1, 1]} : vector<8x512xf32> to vector<8x128xf32>
    %282 = math.tanh %281 : vector<8x128xf32>
    %283 = vector.extract_strided_slice %268 {offsets = [0, 384], sizes = [8, 128], strides = [1, 1]} : vector<8x512xf32> to vector<8x128xf32>
    %284 = arith.negf %283 : vector<8x128xf32>
    %285 = math.exp %284 : vector<8x128xf32>
    %cst_89 = arith.constant 1.000000e+00 : f32
    %286 = vector.broadcast %cst_89 : f32 to vector<8x128xf32>
    %287 = arith.addf %286, %285 : vector<8x128xf32>
    %288 = arith.divf %286, %287 : vector<8x128xf32>
    %289 = arith.mulf %280, %255 : vector<8x128xf32>
    %290 = arith.mulf %274, %282 : vector<8x128xf32>
    %291 = arith.addf %289, %290 : vector<8x128xf32>
    %292 = math.tanh %291 : vector<8x128xf32>
    %293 = arith.mulf %288, %292 : vector<8x128xf32>
    %294 = arith.index_cast %c7_i32 : i32 to index
    %c0_90 = arith.constant 0 : index
    %c0_91 = arith.constant 0 : index
    %295 = vector.load %arg16[%294, %c0_90, %c0_91] : memref<8x8x128xf32, #tpu.memory_space<vmem>>, vector<1x8x128xf32>
    %296 = vector.shape_cast %295 : vector<1x8x128xf32> to vector<8x128xf32>
    %297 = vector.shape_cast %293 : vector<8x128xf32> to vector<1x8x128xf32>
    tpu.vector_store %arg16[%294, %c0_90, %c0_91], %297 {strides = array<i32>} : memref<8x8x128xf32, #tpu.memory_space<vmem>>, vector<1x8x128xf32>,
    %298 = arith.truncf %293 : vector<8x128xf32> to vector<8x128xbf16>
    %c8_i32 = arith.constant 8 : i32
    %c0_92 = arith.constant 0 : index
    %c0_93 = arith.constant 0 : index
    %c0_94 = arith.constant 0 : index
    %299 = vector.load %arg16[%c0_92, %c0_93, %c0_94] : memref<8x8x128xf32, #tpu.memory_space<vmem>>, vector<8x8x128xf32>
    %300 = vector.shape_cast %299 : vector<8x8x128xf32> to vector<64x128xf32>
    %301 = arith.truncf %300 : vector<64x128xf32> to vector<64x128xbf16>
    %c0_95 = arith.constant 0 : index
    %c0_96 = arith.constant 0 : index
    %302 = vector.load %arg5[%c0_95, %c0_96] : memref<128x512xbf16, #tpu.memory_space<vmem>>, vector<128x512xbf16>
    %cst_97 = arith.constant dense<0.000000e+00> : vector<64x512xf32>
    %303 = tpu.matmul %301, %302, %cst_97 {dimension_numbers = #tpu.dot_dimension_numbers<[1], [0], [0], [1], [0, 0, 1, 1], [], []>} : vector<64x128xbf16>, vector<128x512xbf16>, vector<64x512xf32> -> vector<64x512xf32>
    %304 = vector.shape_cast %303 : vector<64x512xf32> to vector<8x8x512xf32>
    %c0_98 = arith.constant 0 : index
    %c0_99 = arith.constant 0 : index
    %c0_100 = arith.constant 0 : index
    %305 = vector.load %arg6[%c0_98, %c0_99, %c0_100] : memref<1x1x512xf32, #tpu.memory_space<vmem>>, vector<1x1x512xf32>
    %306 = vector.broadcast %305 : vector<1x1x512xf32> to vector<8x8x512xf32>
    %307 = arith.addf %304, %306 : vector<8x8x512xf32>
    %c0_101 = arith.constant 0 : index
    %c0_102 = arith.constant 0 : index
    %c0_103 = arith.constant 0 : index
    %308 = vector.load %arg17[%c0_101, %c0_102, %c0_103] : memref<8x8x512xf32, #tpu.memory_space<vmem>>, vector<8x8x512xf32>
    tpu.vector_store %arg17[%c0_101, %c0_102, %c0_103], %307 {strides = array<i32>} : memref<8x8x512xf32, #tpu.memory_space<vmem>>, vector<8x8x512xf32>,
    %cst_104 = arith.constant 0.000000e+00 : bf16
    %309 = vector.broadcast %cst_104 : bf16 to vector<8x128xbf16>
    %cst_105 = arith.constant 0.000000e+00 : f32
    %310 = vector.broadcast %cst_105 : f32 to vector<8x128xf32>
    %c0_i32_106 = arith.constant 0 : i32
    %311 = arith.index_cast %c0_i32_106 : i32 to index
    %c0_107 = arith.constant 0 : index
    %c0_108 = arith.constant 0 : index
    %312 = vector.load %arg17[%311, %c0_107, %c0_108] : memref<8x8x512xf32, #tpu.memory_space<vmem>>, vector<1x8x512xf32>
    %313 = vector.shape_cast %312 : vector<1x8x512xf32> to vector<8x512xf32>
    %c0_109 = arith.constant 0 : index
    %c0_110 = arith.constant 0 : index
    %314 = vector.load %arg7[%c0_109, %c0_110] : memref<128x512xbf16, #tpu.memory_space<vmem>>, vector<128x512xbf16>
    %cst_111 = arith.constant dense<0.000000e+00> : vector<8x512xf32>
    %315 = tpu.matmul %309, %314, %cst_111 {dimension_numbers = #tpu.dot_dimension_numbers<[1], [0], [0], [1], [0, 0, 1, 1], [], []>} : vector<8x128xbf16>, vector<128x512xbf16>, vector<8x512xf32> -> vector<8x512xf32>
    %316 = arith.addf %313, %315 : vector<8x512xf32>
    %317 = vector.extract_strided_slice %316 {offsets = [0, 0], sizes = [8, 128], strides = [1, 1]} : vector<8x512xf32> to vector<8x128xf32>
    %318 = arith.negf %317 : vector<8x128xf32>
    %319 = math.exp %318 : vector<8x128xf32>
    %cst_112 = arith.constant 1.000000e+00 : f32
    %320 = vector.broadcast %cst_112 : f32 to vector<8x128xf32>
    %321 = arith.addf %320, %319 : vector<8x128xf32>
    %322 = arith.divf %320, %321 : vector<8x128xf32>
    %323 = vector.extract_strided_slice %316 {offsets = [0, 128], sizes = [8, 128], strides = [1, 1]} : vector<8x512xf32> to vector<8x128xf32>
    %324 = arith.negf %323 : vector<8x128xf32>
    %325 = math.exp %324 : vector<8x128xf32>
    %cst_113 = arith.constant 1.000000e+00 : f32
    %326 = vector.broadcast %cst_113 : f32 to vector<8x128xf32>
    %327 = arith.addf %326, %325 : vector<8x128xf32>
    %328 = arith.divf %326, %327 : vector<8x128xf32>
    %329 = vector.extract_strided_slice %316 {offsets = [0, 256], sizes = [8, 128], strides = [1, 1]} : vector<8x512xf32> to vector<8x128xf32>
    %330 = math.tanh %329 : vector<8x128xf32>
    %331 = vector.extract_strided_slice %316 {offsets = [0, 384], sizes = [8, 128], strides = [1, 1]} : vector<8x512xf32> to vector<8x128xf32>
    %332 = arith.negf %331 : vector<8x128xf32>
    %333 = math.exp %332 : vector<8x128xf32>
    %cst_114 = arith.constant 1.000000e+00 : f32
    %334 = vector.broadcast %cst_114 : f32 to vector<8x128xf32>
    %335 = arith.addf %334, %333 : vector<8x128xf32>
    %336 = arith.divf %334, %335 : vector<8x128xf32>
    %337 = arith.mulf %328, %310 : vector<8x128xf32>
    %338 = arith.mulf %322, %330 : vector<8x128xf32>
    %339 = arith.addf %337, %338 : vector<8x128xf32>
    %340 = math.tanh %339 : vector<8x128xf32>
    %341 = arith.mulf %336, %340 : vector<8x128xf32>
    %342 = arith.index_cast %c0_i32_106 : i32 to index
    %c0_115 = arith.constant 0 : index
    %c0_116 = arith.constant 0 : index
    %343 = vector.load %arg16[%342, %c0_115, %c0_116] : memref<8x8x128xf32, #tpu.memory_space<vmem>>, vector<1x8x128xf32>
    %344 = vector.shape_cast %343 : vector<1x8x128xf32> to vector<8x128xf32>
    %345 = vector.shape_cast %341 : vector<8x128xf32> to vector<1x8x128xf32>
    tpu.vector_store %arg16[%342, %c0_115, %c0_116], %345 {strides = array<i32>} : memref<8x8x128xf32, #tpu.memory_space<vmem>>, vector<1x8x128xf32>,
    %346 = arith.truncf %341 : vector<8x128xf32> to vector<8x128xbf16>
    %c1_i32_117 = arith.constant 1 : i32
    %347 = arith.index_cast %c1_i32_117 : i32 to index
    %c0_118 = arith.constant 0 : index
    %c0_119 = arith.constant 0 : index
    %348 = vector.load %arg17[%347, %c0_118, %c0_119] : memref<8x8x512xf32, #tpu.memory_space<vmem>>, vector<1x8x512xf32>
    %349 = vector.shape_cast %348 : vector<1x8x512xf32> to vector<8x512xf32>
    %c0_120 = arith.constant 0 : index
    %c0_121 = arith.constant 0 : index
    %350 = vector.load %arg7[%c0_120, %c0_121] : memref<128x512xbf16, #tpu.memory_space<vmem>>, vector<128x512xbf16>
    %cst_122 = arith.constant dense<0.000000e+00> : vector<8x512xf32>
    %351 = tpu.matmul %346, %350, %cst_122 {dimension_numbers = #tpu.dot_dimension_numbers<[1], [0], [0], [1], [0, 0, 1, 1], [], []>} : vector<8x128xbf16>, vector<128x512xbf16>, vector<8x512xf32> -> vector<8x512xf32>
    %352 = arith.addf %349, %351 : vector<8x512xf32>
    %353 = vector.extract_strided_slice %352 {offsets = [0, 0], sizes = [8, 128], strides = [1, 1]} : vector<8x512xf32> to vector<8x128xf32>
    %354 = arith.negf %353 : vector<8x128xf32>
    %355 = math.exp %354 : vector<8x128xf32>
    %cst_123 = arith.constant 1.000000e+00 : f32
    %356 = vector.broadcast %cst_123 : f32 to vector<8x128xf32>
    %357 = arith.addf %356, %355 : vector<8x128xf32>
    %358 = arith.divf %356, %357 : vector<8x128xf32>
    %359 = vector.extract_strided_slice %352 {offsets = [0, 128], sizes = [8, 128], strides = [1, 1]} : vector<8x512xf32> to vector<8x128xf32>
    %360 = arith.negf %359 : vector<8x128xf32>
    %361 = math.exp %360 : vector<8x128xf32>
    %cst_124 = arith.constant 1.000000e+00 : f32
    %362 = vector.broadcast %cst_124 : f32 to vector<8x128xf32>
    %363 = arith.addf %362, %361 : vector<8x128xf32>
    %364 = arith.divf %362, %363 : vector<8x128xf32>
    %365 = vector.extract_strided_slice %352 {offsets = [0, 256], sizes = [8, 128], strides = [1, 1]} : vector<8x512xf32> to vector<8x128xf32>
    %366 = math.tanh %365 : vector<8x128xf32>
    %367 = vector.extract_strided_slice %352 {offsets = [0, 384], sizes = [8, 128], strides = [1, 1]} : vector<8x512xf32> to vector<8x128xf32>
    %368 = arith.negf %367 : vector<8x128xf32>
    %369 = math.exp %368 : vector<8x128xf32>
    %cst_125 = arith.constant 1.000000e+00 : f32
    %370 = vector.broadcast %cst_125 : f32 to vector<8x128xf32>
    %371 = arith.addf %370, %369 : vector<8x128xf32>
    %372 = arith.divf %370, %371 : vector<8x128xf32>
    %373 = arith.mulf %364, %339 : vector<8x128xf32>
    %374 = arith.mulf %358, %366 : vector<8x128xf32>
    %375 = arith.addf %373, %374 : vector<8x128xf32>
    %376 = math.tanh %375 : vector<8x128xf32>
    %377 = arith.mulf %372, %376 : vector<8x128xf32>
    %378 = arith.index_cast %c1_i32_117 : i32 to index
    %c0_126 = arith.constant 0 : index
    %c0_127 = arith.constant 0 : index
    %379 = vector.load %arg16[%378, %c0_126, %c0_127] : memref<8x8x128xf32, #tpu.memory_space<vmem>>, vector<1x8x128xf32>
    %380 = vector.shape_cast %379 : vector<1x8x128xf32> to vector<8x128xf32>
    %381 = vector.shape_cast %377 : vector<8x128xf32> to vector<1x8x128xf32>
    tpu.vector_store %arg16[%378, %c0_126, %c0_127], %381 {strides = array<i32>} : memref<8x8x128xf32, #tpu.memory_space<vmem>>, vector<1x8x128xf32>,
    %382 = arith.truncf %377 : vector<8x128xf32> to vector<8x128xbf16>
    %c2_i32_128 = arith.constant 2 : i32
    %383 = arith.index_cast %c2_i32_128 : i32 to index
    %c0_129 = arith.constant 0 : index
    %c0_130 = arith.constant 0 : index
    %384 = vector.load %arg17[%383, %c0_129, %c0_130] : memref<8x8x512xf32, #tpu.memory_space<vmem>>, vector<1x8x512xf32>
    %385 = vector.shape_cast %384 : vector<1x8x512xf32> to vector<8x512xf32>
    %c0_131 = arith.constant 0 : index
    %c0_132 = arith.constant 0 : index
    %386 = vector.load %arg7[%c0_131, %c0_132] : memref<128x512xbf16, #tpu.memory_space<vmem>>, vector<128x512xbf16>
    %cst_133 = arith.constant dense<0.000000e+00> : vector<8x512xf32>
    %387 = tpu.matmul %382, %386, %cst_133 {dimension_numbers = #tpu.dot_dimension_numbers<[1], [0], [0], [1], [0, 0, 1, 1], [], []>} : vector<8x128xbf16>, vector<128x512xbf16>, vector<8x512xf32> -> vector<8x512xf32>
    %388 = arith.addf %385, %387 : vector<8x512xf32>
    %389 = vector.extract_strided_slice %388 {offsets = [0, 0], sizes = [8, 128], strides = [1, 1]} : vector<8x512xf32> to vector<8x128xf32>
    %390 = arith.negf %389 : vector<8x128xf32>
    %391 = math.exp %390 : vector<8x128xf32>
    %cst_134 = arith.constant 1.000000e+00 : f32
    %392 = vector.broadcast %cst_134 : f32 to vector<8x128xf32>
    %393 = arith.addf %392, %391 : vector<8x128xf32>
    %394 = arith.divf %392, %393 : vector<8x128xf32>
    %395 = vector.extract_strided_slice %388 {offsets = [0, 128], sizes = [8, 128], strides = [1, 1]} : vector<8x512xf32> to vector<8x128xf32>
    %396 = arith.negf %395 : vector<8x128xf32>
    %397 = math.exp %396 : vector<8x128xf32>
    %cst_135 = arith.constant 1.000000e+00 : f32
    %398 = vector.broadcast %cst_135 : f32 to vector<8x128xf32>
    %399 = arith.addf %398, %397 : vector<8x128xf32>
    %400 = arith.divf %398, %399 : vector<8x128xf32>
    %401 = vector.extract_strided_slice %388 {offsets = [0, 256], sizes = [8, 128], strides = [1, 1]} : vector<8x512xf32> to vector<8x128xf32>
    %402 = math.tanh %401 : vector<8x128xf32>
    %403 = vector.extract_strided_slice %388 {offsets = [0, 384], sizes = [8, 128], strides = [1, 1]} : vector<8x512xf32> to vector<8x128xf32>
    %404 = arith.negf %403 : vector<8x128xf32>
    %405 = math.exp %404 : vector<8x128xf32>
    %cst_136 = arith.constant 1.000000e+00 : f32
    %406 = vector.broadcast %cst_136 : f32 to vector<8x128xf32>
    %407 = arith.addf %406, %405 : vector<8x128xf32>
    %408 = arith.divf %406, %407 : vector<8x128xf32>
    %409 = arith.mulf %400, %375 : vector<8x128xf32>
    %410 = arith.mulf %394, %402 : vector<8x128xf32>
    %411 = arith.addf %409, %410 : vector<8x128xf32>
    %412 = math.tanh %411 : vector<8x128xf32>
    %413 = arith.mulf %408, %412 : vector<8x128xf32>
    %414 = arith.index_cast %c2_i32_128 : i32 to index
    %c0_137 = arith.constant 0 : index
    %c0_138 = arith.constant 0 : index
    %415 = vector.load %arg16[%414, %c0_137, %c0_138] : memref<8x8x128xf32, #tpu.memory_space<vmem>>, vector<1x8x128xf32>
    %416 = vector.shape_cast %415 : vector<1x8x128xf32> to vector<8x128xf32>
    %417 = vector.shape_cast %413 : vector<8x128xf32> to vector<1x8x128xf32>
    tpu.vector_store %arg16[%414, %c0_137, %c0_138], %417 {strides = array<i32>} : memref<8x8x128xf32, #tpu.memory_space<vmem>>, vector<1x8x128xf32>,
    %418 = arith.truncf %413 : vector<8x128xf32> to vector<8x128xbf16>
    %c3_i32_139 = arith.constant 3 : i32
    %419 = arith.index_cast %c3_i32_139 : i32 to index
    %c0_140 = arith.constant 0 : index
    %c0_141 = arith.constant 0 : index
    %420 = vector.load %arg17[%419, %c0_140, %c0_141] : memref<8x8x512xf32, #tpu.memory_space<vmem>>, vector<1x8x512xf32>
    %421 = vector.shape_cast %420 : vector<1x8x512xf32> to vector<8x512xf32>
    %c0_142 = arith.constant 0 : index
    %c0_143 = arith.constant 0 : index
    %422 = vector.load %arg7[%c0_142, %c0_143] : memref<128x512xbf16, #tpu.memory_space<vmem>>, vector<128x512xbf16>
    %cst_144 = arith.constant dense<0.000000e+00> : vector<8x512xf32>
    %423 = tpu.matmul %418, %422, %cst_144 {dimension_numbers = #tpu.dot_dimension_numbers<[1], [0], [0], [1], [0, 0, 1, 1], [], []>} : vector<8x128xbf16>, vector<128x512xbf16>, vector<8x512xf32> -> vector<8x512xf32>
    %424 = arith.addf %421, %423 : vector<8x512xf32>
    %425 = vector.extract_strided_slice %424 {offsets = [0, 0], sizes = [8, 128], strides = [1, 1]} : vector<8x512xf32> to vector<8x128xf32>
    %426 = arith.negf %425 : vector<8x128xf32>
    %427 = math.exp %426 : vector<8x128xf32>
    %cst_145 = arith.constant 1.000000e+00 : f32
    %428 = vector.broadcast %cst_145 : f32 to vector<8x128xf32>
    %429 = arith.addf %428, %427 : vector<8x128xf32>
    %430 = arith.divf %428, %429 : vector<8x128xf32>
    %431 = vector.extract_strided_slice %424 {offsets = [0, 128], sizes = [8, 128], strides = [1, 1]} : vector<8x512xf32> to vector<8x128xf32>
    %432 = arith.negf %431 : vector<8x128xf32>
    %433 = math.exp %432 : vector<8x128xf32>
    %cst_146 = arith.constant 1.000000e+00 : f32
    %434 = vector.broadcast %cst_146 : f32 to vector<8x128xf32>
    %435 = arith.addf %434, %433 : vector<8x128xf32>
    %436 = arith.divf %434, %435 : vector<8x128xf32>
    %437 = vector.extract_strided_slice %424 {offsets = [0, 256], sizes = [8, 128], strides = [1, 1]} : vector<8x512xf32> to vector<8x128xf32>
    %438 = math.tanh %437 : vector<8x128xf32>
    %439 = vector.extract_strided_slice %424 {offsets = [0, 384], sizes = [8, 128], strides = [1, 1]} : vector<8x512xf32> to vector<8x128xf32>
    %440 = arith.negf %439 : vector<8x128xf32>
    %441 = math.exp %440 : vector<8x128xf32>
    %cst_147 = arith.constant 1.000000e+00 : f32
    %442 = vector.broadcast %cst_147 : f32 to vector<8x128xf32>
    %443 = arith.addf %442, %441 : vector<8x128xf32>
    %444 = arith.divf %442, %443 : vector<8x128xf32>
    %445 = arith.mulf %436, %411 : vector<8x128xf32>
    %446 = arith.mulf %430, %438 : vector<8x128xf32>
    %447 = arith.addf %445, %446 : vector<8x128xf32>
    %448 = math.tanh %447 : vector<8x128xf32>
    %449 = arith.mulf %444, %448 : vector<8x128xf32>
    %450 = arith.index_cast %c3_i32_139 : i32 to index
    %c0_148 = arith.constant 0 : index
    %c0_149 = arith.constant 0 : index
    %451 = vector.load %arg16[%450, %c0_148, %c0_149] : memref<8x8x128xf32, #tpu.memory_space<vmem>>, vector<1x8x128xf32>
    %452 = vector.shape_cast %451 : vector<1x8x128xf32> to vector<8x128xf32>
    %453 = vector.shape_cast %449 : vector<8x128xf32> to vector<1x8x128xf32>
    tpu.vector_store %arg16[%450, %c0_148, %c0_149], %453 {strides = array<i32>} : memref<8x8x128xf32, #tpu.memory_space<vmem>>, vector<1x8x128xf32>,
    %454 = arith.truncf %449 : vector<8x128xf32> to vector<8x128xbf16>
    %c4_i32_150 = arith.constant 4 : i32
    %455 = arith.index_cast %c4_i32_150 : i32 to index
    %c0_151 = arith.constant 0 : index
    %c0_152 = arith.constant 0 : index
    %456 = vector.load %arg17[%455, %c0_151, %c0_152] : memref<8x8x512xf32, #tpu.memory_space<vmem>>, vector<1x8x512xf32>
    %457 = vector.shape_cast %456 : vector<1x8x512xf32> to vector<8x512xf32>
    %c0_153 = arith.constant 0 : index
    %c0_154 = arith.constant 0 : index
    %458 = vector.load %arg7[%c0_153, %c0_154] : memref<128x512xbf16, #tpu.memory_space<vmem>>, vector<128x512xbf16>
    %cst_155 = arith.constant dense<0.000000e+00> : vector<8x512xf32>
    %459 = tpu.matmul %454, %458, %cst_155 {dimension_numbers = #tpu.dot_dimension_numbers<[1], [0], [0], [1], [0, 0, 1, 1], [], []>} : vector<8x128xbf16>, vector<128x512xbf16>, vector<8x512xf32> -> vector<8x512xf32>
    %460 = arith.addf %457, %459 : vector<8x512xf32>
    %461 = vector.extract_strided_slice %460 {offsets = [0, 0], sizes = [8, 128], strides = [1, 1]} : vector<8x512xf32> to vector<8x128xf32>
    %462 = arith.negf %461 : vector<8x128xf32>
    %463 = math.exp %462 : vector<8x128xf32>
    %cst_156 = arith.constant 1.000000e+00 : f32
    %464 = vector.broadcast %cst_156 : f32 to vector<8x128xf32>
    %465 = arith.addf %464, %463 : vector<8x128xf32>
    %466 = arith.divf %464, %465 : vector<8x128xf32>
    %467 = vector.extract_strided_slice %460 {offsets = [0, 128], sizes = [8, 128], strides = [1, 1]} : vector<8x512xf32> to vector<8x128xf32>
    %468 = arith.negf %467 : vector<8x128xf32>
    %469 = math.exp %468 : vector<8x128xf32>
    %cst_157 = arith.constant 1.000000e+00 : f32
    %470 = vector.broadcast %cst_157 : f32 to vector<8x128xf32>
    %471 = arith.addf %470, %469 : vector<8x128xf32>
    %472 = arith.divf %470, %471 : vector<8x128xf32>
    %473 = vector.extract_strided_slice %460 {offsets = [0, 256], sizes = [8, 128], strides = [1, 1]} : vector<8x512xf32> to vector<8x128xf32>
    %474 = math.tanh %473 : vector<8x128xf32>
    %475 = vector.extract_strided_slice %460 {offsets = [0, 384], sizes = [8, 128], strides = [1, 1]} : vector<8x512xf32> to vector<8x128xf32>
    %476 = arith.negf %475 : vector<8x128xf32>
    %477 = math.exp %476 : vector<8x128xf32>
    %cst_158 = arith.constant 1.000000e+00 : f32
    %478 = vector.broadcast %cst_158 : f32 to vector<8x128xf32>
    %479 = arith.addf %478, %477 : vector<8x128xf32>
    %480 = arith.divf %478, %479 : vector<8x128xf32>
    %481 = arith.mulf %472, %447 : vector<8x128xf32>
    %482 = arith.mulf %466, %474 : vector<8x128xf32>
    %483 = arith.addf %481, %482 : vector<8x128xf32>
    %484 = math.tanh %483 : vector<8x128xf32>
    %485 = arith.mulf %480, %484 : vector<8x128xf32>
    %486 = arith.index_cast %c4_i32_150 : i32 to index
    %c0_159 = arith.constant 0 : index
    %c0_160 = arith.constant 0 : index
    %487 = vector.load %arg16[%486, %c0_159, %c0_160] : memref<8x8x128xf32, #tpu.memory_space<vmem>>, vector<1x8x128xf32>
    %488 = vector.shape_cast %487 : vector<1x8x128xf32> to vector<8x128xf32>
    %489 = vector.shape_cast %485 : vector<8x128xf32> to vector<1x8x128xf32>
    tpu.vector_store %arg16[%486, %c0_159, %c0_160], %489 {strides = array<i32>} : memref<8x8x128xf32, #tpu.memory_space<vmem>>, vector<1x8x128xf32>,
    %490 = arith.truncf %485 : vector<8x128xf32> to vector<8x128xbf16>
    %c5_i32_161 = arith.constant 5 : i32
    %491 = arith.index_cast %c5_i32_161 : i32 to index
    %c0_162 = arith.constant 0 : index
    %c0_163 = arith.constant 0 : index
    %492 = vector.load %arg17[%491, %c0_162, %c0_163] : memref<8x8x512xf32, #tpu.memory_space<vmem>>, vector<1x8x512xf32>
    %493 = vector.shape_cast %492 : vector<1x8x512xf32> to vector<8x512xf32>
    %c0_164 = arith.constant 0 : index
    %c0_165 = arith.constant 0 : index
    %494 = vector.load %arg7[%c0_164, %c0_165] : memref<128x512xbf16, #tpu.memory_space<vmem>>, vector<128x512xbf16>
    %cst_166 = arith.constant dense<0.000000e+00> : vector<8x512xf32>
    %495 = tpu.matmul %490, %494, %cst_166 {dimension_numbers = #tpu.dot_dimension_numbers<[1], [0], [0], [1], [0, 0, 1, 1], [], []>} : vector<8x128xbf16>, vector<128x512xbf16>, vector<8x512xf32> -> vector<8x512xf32>
    %496 = arith.addf %493, %495 : vector<8x512xf32>
    %497 = vector.extract_strided_slice %496 {offsets = [0, 0], sizes = [8, 128], strides = [1, 1]} : vector<8x512xf32> to vector<8x128xf32>
    %498 = arith.negf %497 : vector<8x128xf32>
    %499 = math.exp %498 : vector<8x128xf32>
    %cst_167 = arith.constant 1.000000e+00 : f32
    %500 = vector.broadcast %cst_167 : f32 to vector<8x128xf32>
    %501 = arith.addf %500, %499 : vector<8x128xf32>
    %502 = arith.divf %500, %501 : vector<8x128xf32>
    %503 = vector.extract_strided_slice %496 {offsets = [0, 128], sizes = [8, 128], strides = [1, 1]} : vector<8x512xf32> to vector<8x128xf32>
    %504 = arith.negf %503 : vector<8x128xf32>
    %505 = math.exp %504 : vector<8x128xf32>
    %cst_168 = arith.constant 1.000000e+00 : f32
    %506 = vector.broadcast %cst_168 : f32 to vector<8x128xf32>
    %507 = arith.addf %506, %505 : vector<8x128xf32>
    %508 = arith.divf %506, %507 : vector<8x128xf32>
    %509 = vector.extract_strided_slice %496 {offsets = [0, 256], sizes = [8, 128], strides = [1, 1]} : vector<8x512xf32> to vector<8x128xf32>
    %510 = math.tanh %509 : vector<8x128xf32>
    %511 = vector.extract_strided_slice %496 {offsets = [0, 384], sizes = [8, 128], strides = [1, 1]} : vector<8x512xf32> to vector<8x128xf32>
    %512 = arith.negf %511 : vector<8x128xf32>
    %513 = math.exp %512 : vector<8x128xf32>
    %cst_169 = arith.constant 1.000000e+00 : f32
    %514 = vector.broadcast %cst_169 : f32 to vector<8x128xf32>
    %515 = arith.addf %514, %513 : vector<8x128xf32>
    %516 = arith.divf %514, %515 : vector<8x128xf32>
    %517 = arith.mulf %508, %483 : vector<8x128xf32>
    %518 = arith.mulf %502, %510 : vector<8x128xf32>
    %519 = arith.addf %517, %518 : vector<8x128xf32>
    %520 = math.tanh %519 : vector<8x128xf32>
    %521 = arith.mulf %516, %520 : vector<8x128xf32>
    %522 = arith.index_cast %c5_i32_161 : i32 to index
    %c0_170 = arith.constant 0 : index
    %c0_171 = arith.constant 0 : index
    %523 = vector.load %arg16[%522, %c0_170, %c0_171] : memref<8x8x128xf32, #tpu.memory_space<vmem>>, vector<1x8x128xf32>
    %524 = vector.shape_cast %523 : vector<1x8x128xf32> to vector<8x128xf32>
    %525 = vector.shape_cast %521 : vector<8x128xf32> to vector<1x8x128xf32>
    tpu.vector_store %arg16[%522, %c0_170, %c0_171], %525 {strides = array<i32>} : memref<8x8x128xf32, #tpu.memory_space<vmem>>, vector<1x8x128xf32>,
    %526 = arith.truncf %521 : vector<8x128xf32> to vector<8x128xbf16>
    %c6_i32_172 = arith.constant 6 : i32
    %527 = arith.index_cast %c6_i32_172 : i32 to index
    %c0_173 = arith.constant 0 : index
    %c0_174 = arith.constant 0 : index
    %528 = vector.load %arg17[%527, %c0_173, %c0_174] : memref<8x8x512xf32, #tpu.memory_space<vmem>>, vector<1x8x512xf32>
    %529 = vector.shape_cast %528 : vector<1x8x512xf32> to vector<8x512xf32>
    %c0_175 = arith.constant 0 : index
    %c0_176 = arith.constant 0 : index
    %530 = vector.load %arg7[%c0_175, %c0_176] : memref<128x512xbf16, #tpu.memory_space<vmem>>, vector<128x512xbf16>
    %cst_177 = arith.constant dense<0.000000e+00> : vector<8x512xf32>
    %531 = tpu.matmul %526, %530, %cst_177 {dimension_numbers = #tpu.dot_dimension_numbers<[1], [0], [0], [1], [0, 0, 1, 1], [], []>} : vector<8x128xbf16>, vector<128x512xbf16>, vector<8x512xf32> -> vector<8x512xf32>
    %532 = arith.addf %529, %531 : vector<8x512xf32>
    %533 = vector.extract_strided_slice %532 {offsets = [0, 0], sizes = [8, 128], strides = [1, 1]} : vector<8x512xf32> to vector<8x128xf32>
    %534 = arith.negf %533 : vector<8x128xf32>
    %535 = math.exp %534 : vector<8x128xf32>
    %cst_178 = arith.constant 1.000000e+00 : f32
    %536 = vector.broadcast %cst_178 : f32 to vector<8x128xf32>
    %537 = arith.addf %536, %535 : vector<8x128xf32>
    %538 = arith.divf %536, %537 : vector<8x128xf32>
    %539 = vector.extract_strided_slice %532 {offsets = [0, 128], sizes = [8, 128], strides = [1, 1]} : vector<8x512xf32> to vector<8x128xf32>
    %540 = arith.negf %539 : vector<8x128xf32>
    %541 = math.exp %540 : vector<8x128xf32>
    %cst_179 = arith.constant 1.000000e+00 : f32
    %542 = vector.broadcast %cst_179 : f32 to vector<8x128xf32>
    %543 = arith.addf %542, %541 : vector<8x128xf32>
    %544 = arith.divf %542, %543 : vector<8x128xf32>
    %545 = vector.extract_strided_slice %532 {offsets = [0, 256], sizes = [8, 128], strides = [1, 1]} : vector<8x512xf32> to vector<8x128xf32>
    %546 = math.tanh %545 : vector<8x128xf32>
    %547 = vector.extract_strided_slice %532 {offsets = [0, 384], sizes = [8, 128], strides = [1, 1]} : vector<8x512xf32> to vector<8x128xf32>
    %548 = arith.negf %547 : vector<8x128xf32>
    %549 = math.exp %548 : vector<8x128xf32>
    %cst_180 = arith.constant 1.000000e+00 : f32
    %550 = vector.broadcast %cst_180 : f32 to vector<8x128xf32>
    %551 = arith.addf %550, %549 : vector<8x128xf32>
    %552 = arith.divf %550, %551 : vector<8x128xf32>
    %553 = arith.mulf %544, %519 : vector<8x128xf32>
    %554 = arith.mulf %538, %546 : vector<8x128xf32>
    %555 = arith.addf %553, %554 : vector<8x128xf32>
    %556 = math.tanh %555 : vector<8x128xf32>
    %557 = arith.mulf %552, %556 : vector<8x128xf32>
    %558 = arith.index_cast %c6_i32_172 : i32 to index
    %c0_181 = arith.constant 0 : index
    %c0_182 = arith.constant 0 : index
    %559 = vector.load %arg16[%558, %c0_181, %c0_182] : memref<8x8x128xf32, #tpu.memory_space<vmem>>, vector<1x8x128xf32>
    %560 = vector.shape_cast %559 : vector<1x8x128xf32> to vector<8x128xf32>
    %561 = vector.shape_cast %557 : vector<8x128xf32> to vector<1x8x128xf32>
    tpu.vector_store %arg16[%558, %c0_181, %c0_182], %561 {strides = array<i32>} : memref<8x8x128xf32, #tpu.memory_space<vmem>>, vector<1x8x128xf32>,
    %562 = arith.truncf %557 : vector<8x128xf32> to vector<8x128xbf16>
    %c7_i32_183 = arith.constant 7 : i32
    %563 = arith.index_cast %c7_i32_183 : i32 to index
    %c0_184 = arith.constant 0 : index
    %c0_185 = arith.constant 0 : index
    %564 = vector.load %arg17[%563, %c0_184, %c0_185] : memref<8x8x512xf32, #tpu.memory_space<vmem>>, vector<1x8x512xf32>
    %565 = vector.shape_cast %564 : vector<1x8x512xf32> to vector<8x512xf32>
    %c0_186 = arith.constant 0 : index
    %c0_187 = arith.constant 0 : index
    %566 = vector.load %arg7[%c0_186, %c0_187] : memref<128x512xbf16, #tpu.memory_space<vmem>>, vector<128x512xbf16>
    %cst_188 = arith.constant dense<0.000000e+00> : vector<8x512xf32>
    %567 = tpu.matmul %562, %566, %cst_188 {dimension_numbers = #tpu.dot_dimension_numbers<[1], [0], [0], [1], [0, 0, 1, 1], [], []>} : vector<8x128xbf16>, vector<128x512xbf16>, vector<8x512xf32> -> vector<8x512xf32>
    %568 = arith.addf %565, %567 : vector<8x512xf32>
    %569 = vector.extract_strided_slice %568 {offsets = [0, 0], sizes = [8, 128], strides = [1, 1]} : vector<8x512xf32> to vector<8x128xf32>
    %570 = arith.negf %569 : vector<8x128xf32>
    %571 = math.exp %570 : vector<8x128xf32>
    %cst_189 = arith.constant 1.000000e+00 : f32
    %572 = vector.broadcast %cst_189 : f32 to vector<8x128xf32>
    %573 = arith.addf %572, %571 : vector<8x128xf32>
    %574 = arith.divf %572, %573 : vector<8x128xf32>
    %575 = vector.extract_strided_slice %568 {offsets = [0, 128], sizes = [8, 128], strides = [1, 1]} : vector<8x512xf32> to vector<8x128xf32>
    %576 = arith.negf %575 : vector<8x128xf32>
    %577 = math.exp %576 : vector<8x128xf32>
    %cst_190 = arith.constant 1.000000e+00 : f32
    %578 = vector.broadcast %cst_190 : f32 to vector<8x128xf32>
    %579 = arith.addf %578, %577 : vector<8x128xf32>
    %580 = arith.divf %578, %579 : vector<8x128xf32>
    %581 = vector.extract_strided_slice %568 {offsets = [0, 256], sizes = [8, 128], strides = [1, 1]} : vector<8x512xf32> to vector<8x128xf32>
    %582 = math.tanh %581 : vector<8x128xf32>
    %583 = vector.extract_strided_slice %568 {offsets = [0, 384], sizes = [8, 128], strides = [1, 1]} : vector<8x512xf32> to vector<8x128xf32>
    %584 = arith.negf %583 : vector<8x128xf32>
    %585 = math.exp %584 : vector<8x128xf32>
    %cst_191 = arith.constant 1.000000e+00 : f32
    %586 = vector.broadcast %cst_191 : f32 to vector<8x128xf32>
    %587 = arith.addf %586, %585 : vector<8x128xf32>
    %588 = arith.divf %586, %587 : vector<8x128xf32>
    %589 = arith.mulf %580, %555 : vector<8x128xf32>
    %590 = arith.mulf %574, %582 : vector<8x128xf32>
    %591 = arith.addf %589, %590 : vector<8x128xf32>
    %592 = math.tanh %591 : vector<8x128xf32>
    %593 = arith.mulf %588, %592 : vector<8x128xf32>
    %594 = arith.index_cast %c7_i32_183 : i32 to index
    %c0_192 = arith.constant 0 : index
    %c0_193 = arith.constant 0 : index
    %595 = vector.load %arg16[%594, %c0_192, %c0_193] : memref<8x8x128xf32, #tpu.memory_space<vmem>>, vector<1x8x128xf32>
    %596 = vector.shape_cast %595 : vector<1x8x128xf32> to vector<8x128xf32>
    %597 = vector.shape_cast %593 : vector<8x128xf32> to vector<1x8x128xf32>
    tpu.vector_store %arg16[%594, %c0_192, %c0_193], %597 {strides = array<i32>} : memref<8x8x128xf32, #tpu.memory_space<vmem>>, vector<1x8x128xf32>,
    %598 = arith.truncf %593 : vector<8x128xf32> to vector<8x128xbf16>
    %c8_i32_194 = arith.constant 8 : i32
    %c0_195 = arith.constant 0 : index
    %c0_196 = arith.constant 0 : index
    %c0_197 = arith.constant 0 : index
    %599 = vector.load %arg16[%c0_195, %c0_196, %c0_197] : memref<8x8x128xf32, #tpu.memory_space<vmem>>, vector<8x8x128xf32>
    %600 = vector.shape_cast %599 : vector<8x8x128xf32> to vector<64x128xf32>
    %601 = arith.truncf %600 : vector<64x128xf32> to vector<64x128xbf16>
    %c0_198 = arith.constant 0 : index
    %c0_199 = arith.constant 0 : index
    %602 = vector.load %arg8[%c0_198, %c0_199] : memref<128x512xbf16, #tpu.memory_space<vmem>>, vector<128x512xbf16>
    %cst_200 = arith.constant dense<0.000000e+00> : vector<64x512xf32>
    %603 = tpu.matmul %601, %602, %cst_200 {dimension_numbers = #tpu.dot_dimension_numbers<[1], [0], [0], [1], [0, 0, 1, 1], [], []>} : vector<64x128xbf16>, vector<128x512xbf16>, vector<64x512xf32> -> vector<64x512xf32>
    %604 = vector.shape_cast %603 : vector<64x512xf32> to vector<8x8x512xf32>
    %c0_201 = arith.constant 0 : index
    %c0_202 = arith.constant 0 : index
    %c0_203 = arith.constant 0 : index
    %605 = vector.load %arg9[%c0_201, %c0_202, %c0_203] : memref<1x1x512xf32, #tpu.memory_space<vmem>>, vector<1x1x512xf32>
    %606 = vector.broadcast %605 : vector<1x1x512xf32> to vector<8x8x512xf32>
    %607 = arith.addf %604, %606 : vector<8x8x512xf32>
    %c0_204 = arith.constant 0 : index
    %c0_205 = arith.constant 0 : index
    %c0_206 = arith.constant 0 : index
    %608 = vector.load %arg17[%c0_204, %c0_205, %c0_206] : memref<8x8x512xf32, #tpu.memory_space<vmem>>, vector<8x8x512xf32>
    tpu.vector_store %arg17[%c0_204, %c0_205, %c0_206], %607 {strides = array<i32>} : memref<8x8x512xf32, #tpu.memory_space<vmem>>, vector<8x8x512xf32>,
    %cst_207 = arith.constant 0.000000e+00 : bf16
    %609 = vector.broadcast %cst_207 : bf16 to vector<8x128xbf16>
    %cst_208 = arith.constant 0.000000e+00 : f32
    %610 = vector.broadcast %cst_208 : f32 to vector<8x128xf32>
    %c0_i32_209 = arith.constant 0 : i32
    %611 = arith.index_cast %c0_i32_209 : i32 to index
    %c0_210 = arith.constant 0 : index
    %c0_211 = arith.constant 0 : index
    %612 = vector.load %arg17[%611, %c0_210, %c0_211] : memref<8x8x512xf32, #tpu.memory_space<vmem>>, vector<1x8x512xf32>
    %613 = vector.shape_cast %612 : vector<1x8x512xf32> to vector<8x512xf32>
    %c0_212 = arith.constant 0 : index
    %c0_213 = arith.constant 0 : index
    %614 = vector.load %arg10[%c0_212, %c0_213] : memref<128x512xbf16, #tpu.memory_space<vmem>>, vector<128x512xbf16>
    %cst_214 = arith.constant dense<0.000000e+00> : vector<8x512xf32>
    %615 = tpu.matmul %609, %614, %cst_214 {dimension_numbers = #tpu.dot_dimension_numbers<[1], [0], [0], [1], [0, 0, 1, 1], [], []>} : vector<8x128xbf16>, vector<128x512xbf16>, vector<8x512xf32> -> vector<8x512xf32>
    %616 = arith.addf %613, %615 : vector<8x512xf32>
    %617 = vector.extract_strided_slice %616 {offsets = [0, 0], sizes = [8, 128], strides = [1, 1]} : vector<8x512xf32> to vector<8x128xf32>
    %618 = arith.negf %617 : vector<8x128xf32>
    %619 = math.exp %618 : vector<8x128xf32>
    %cst_215 = arith.constant 1.000000e+00 : f32
    %620 = vector.broadcast %cst_215 : f32 to vector<8x128xf32>
    %621 = arith.addf %620, %619 : vector<8x128xf32>
    %622 = arith.divf %620, %621 : vector<8x128xf32>
    %623 = vector.extract_strided_slice %616 {offsets = [0, 128], sizes = [8, 128], strides = [1, 1]} : vector<8x512xf32> to vector<8x128xf32>
    %624 = arith.negf %623 : vector<8x128xf32>
    %625 = math.exp %624 : vector<8x128xf32>
    %cst_216 = arith.constant 1.000000e+00 : f32
    %626 = vector.broadcast %cst_216 : f32 to vector<8x128xf32>
    %627 = arith.addf %626, %625 : vector<8x128xf32>
    %628 = arith.divf %626, %627 : vector<8x128xf32>
    %629 = vector.extract_strided_slice %616 {offsets = [0, 256], sizes = [8, 128], strides = [1, 1]} : vector<8x512xf32> to vector<8x128xf32>
    %630 = math.tanh %629 : vector<8x128xf32>
    %631 = vector.extract_strided_slice %616 {offsets = [0, 384], sizes = [8, 128], strides = [1, 1]} : vector<8x512xf32> to vector<8x128xf32>
    %632 = arith.negf %631 : vector<8x128xf32>
    %633 = math.exp %632 : vector<8x128xf32>
    %cst_217 = arith.constant 1.000000e+00 : f32
    %634 = vector.broadcast %cst_217 : f32 to vector<8x128xf32>
    %635 = arith.addf %634, %633 : vector<8x128xf32>
    %636 = arith.divf %634, %635 : vector<8x128xf32>
    %637 = arith.mulf %628, %610 : vector<8x128xf32>
    %638 = arith.mulf %622, %630 : vector<8x128xf32>
    %639 = arith.addf %637, %638 : vector<8x128xf32>
    %640 = math.tanh %639 : vector<8x128xf32>
    %641 = arith.mulf %636, %640 : vector<8x128xf32>
    %642 = arith.truncf %641 : vector<8x128xf32> to vector<8x128xbf16>
    %c1_i32_218 = arith.constant 1 : i32
    %643 = arith.index_cast %c1_i32_218 : i32 to index
    %c0_219 = arith.constant 0 : index
    %c0_220 = arith.constant 0 : index
    %644 = vector.load %arg17[%643, %c0_219, %c0_220] : memref<8x8x512xf32, #tpu.memory_space<vmem>>, vector<1x8x512xf32>
    %645 = vector.shape_cast %644 : vector<1x8x512xf32> to vector<8x512xf32>
    %c0_221 = arith.constant 0 : index
    %c0_222 = arith.constant 0 : index
    %646 = vector.load %arg10[%c0_221, %c0_222] : memref<128x512xbf16, #tpu.memory_space<vmem>>, vector<128x512xbf16>
    %cst_223 = arith.constant dense<0.000000e+00> : vector<8x512xf32>
    %647 = tpu.matmul %642, %646, %cst_223 {dimension_numbers = #tpu.dot_dimension_numbers<[1], [0], [0], [1], [0, 0, 1, 1], [], []>} : vector<8x128xbf16>, vector<128x512xbf16>, vector<8x512xf32> -> vector<8x512xf32>
    %648 = arith.addf %645, %647 : vector<8x512xf32>
    %649 = vector.extract_strided_slice %648 {offsets = [0, 0], sizes = [8, 128], strides = [1, 1]} : vector<8x512xf32> to vector<8x128xf32>
    %650 = arith.negf %649 : vector<8x128xf32>
    %651 = math.exp %650 : vector<8x128xf32>
    %cst_224 = arith.constant 1.000000e+00 : f32
    %652 = vector.broadcast %cst_224 : f32 to vector<8x128xf32>
    %653 = arith.addf %652, %651 : vector<8x128xf32>
    %654 = arith.divf %652, %653 : vector<8x128xf32>
    %655 = vector.extract_strided_slice %648 {offsets = [0, 128], sizes = [8, 128], strides = [1, 1]} : vector<8x512xf32> to vector<8x128xf32>
    %656 = arith.negf %655 : vector<8x128xf32>
    %657 = math.exp %656 : vector<8x128xf32>
    %cst_225 = arith.constant 1.000000e+00 : f32
    %658 = vector.broadcast %cst_225 : f32 to vector<8x128xf32>
    %659 = arith.addf %658, %657 : vector<8x128xf32>
    %660 = arith.divf %658, %659 : vector<8x128xf32>
    %661 = vector.extract_strided_slice %648 {offsets = [0, 256], sizes = [8, 128], strides = [1, 1]} : vector<8x512xf32> to vector<8x128xf32>
    %662 = math.tanh %661 : vector<8x128xf32>
    %663 = vector.extract_strided_slice %648 {offsets = [0, 384], sizes = [8, 128], strides = [1, 1]} : vector<8x512xf32> to vector<8x128xf32>
    %664 = arith.negf %663 : vector<8x128xf32>
    %665 = math.exp %664 : vector<8x128xf32>
    %cst_226 = arith.constant 1.000000e+00 : f32
    %666 = vector.broadcast %cst_226 : f32 to vector<8x128xf32>
    %667 = arith.addf %666, %665 : vector<8x128xf32>
    %668 = arith.divf %666, %667 : vector<8x128xf32>
    %669 = arith.mulf %660, %639 : vector<8x128xf32>
    %670 = arith.mulf %654, %662 : vector<8x128xf32>
    %671 = arith.addf %669, %670 : vector<8x128xf32>
    %672 = math.tanh %671 : vector<8x128xf32>
    %673 = arith.mulf %668, %672 : vector<8x128xf32>
    %674 = arith.truncf %673 : vector<8x128xf32> to vector<8x128xbf16>
    %c2_i32_227 = arith.constant 2 : i32
    %675 = arith.index_cast %c2_i32_227 : i32 to index
    %c0_228 = arith.constant 0 : index
    %c0_229 = arith.constant 0 : index
    %676 = vector.load %arg17[%675, %c0_228, %c0_229] : memref<8x8x512xf32, #tpu.memory_space<vmem>>, vector<1x8x512xf32>
    %677 = vector.shape_cast %676 : vector<1x8x512xf32> to vector<8x512xf32>
    %c0_230 = arith.constant 0 : index
    %c0_231 = arith.constant 0 : index
    %678 = vector.load %arg10[%c0_230, %c0_231] : memref<128x512xbf16, #tpu.memory_space<vmem>>, vector<128x512xbf16>
    %cst_232 = arith.constant dense<0.000000e+00> : vector<8x512xf32>
    %679 = tpu.matmul %674, %678, %cst_232 {dimension_numbers = #tpu.dot_dimension_numbers<[1], [0], [0], [1], [0, 0, 1, 1], [], []>} : vector<8x128xbf16>, vector<128x512xbf16>, vector<8x512xf32> -> vector<8x512xf32>
    %680 = arith.addf %677, %679 : vector<8x512xf32>
    %681 = vector.extract_strided_slice %680 {offsets = [0, 0], sizes = [8, 128], strides = [1, 1]} : vector<8x512xf32> to vector<8x128xf32>
    %682 = arith.negf %681 : vector<8x128xf32>
    %683 = math.exp %682 : vector<8x128xf32>
    %cst_233 = arith.constant 1.000000e+00 : f32
    %684 = vector.broadcast %cst_233 : f32 to vector<8x128xf32>
    %685 = arith.addf %684, %683 : vector<8x128xf32>
    %686 = arith.divf %684, %685 : vector<8x128xf32>
    %687 = vector.extract_strided_slice %680 {offsets = [0, 128], sizes = [8, 128], strides = [1, 1]} : vector<8x512xf32> to vector<8x128xf32>
    %688 = arith.negf %687 : vector<8x128xf32>
    %689 = math.exp %688 : vector<8x128xf32>
    %cst_234 = arith.constant 1.000000e+00 : f32
    %690 = vector.broadcast %cst_234 : f32 to vector<8x128xf32>
    %691 = arith.addf %690, %689 : vector<8x128xf32>
    %692 = arith.divf %690, %691 : vector<8x128xf32>
    %693 = vector.extract_strided_slice %680 {offsets = [0, 256], sizes = [8, 128], strides = [1, 1]} : vector<8x512xf32> to vector<8x128xf32>
    %694 = math.tanh %693 : vector<8x128xf32>
    %695 = vector.extract_strided_slice %680 {offsets = [0, 384], sizes = [8, 128], strides = [1, 1]} : vector<8x512xf32> to vector<8x128xf32>
    %696 = arith.negf %695 : vector<8x128xf32>
    %697 = math.exp %696 : vector<8x128xf32>
    %cst_235 = arith.constant 1.000000e+00 : f32
    %698 = vector.broadcast %cst_235 : f32 to vector<8x128xf32>
    %699 = arith.addf %698, %697 : vector<8x128xf32>
    %700 = arith.divf %698, %699 : vector<8x128xf32>
    %701 = arith.mulf %692, %671 : vector<8x128xf32>
    %702 = arith.mulf %686, %694 : vector<8x128xf32>
    %703 = arith.addf %701, %702 : vector<8x128xf32>
    %704 = math.tanh %703 : vector<8x128xf32>
    %705 = arith.mulf %700, %704 : vector<8x128xf32>
    %706 = arith.truncf %705 : vector<8x128xf32> to vector<8x128xbf16>
    %c3_i32_236 = arith.constant 3 : i32
    %707 = arith.index_cast %c3_i32_236 : i32 to index
    %c0_237 = arith.constant 0 : index
    %c0_238 = arith.constant 0 : index
    %708 = vector.load %arg17[%707, %c0_237, %c0_238] : memref<8x8x512xf32, #tpu.memory_space<vmem>>, vector<1x8x512xf32>
    %709 = vector.shape_cast %708 : vector<1x8x512xf32> to vector<8x512xf32>
    %c0_239 = arith.constant 0 : index
    %c0_240 = arith.constant 0 : index
    %710 = vector.load %arg10[%c0_239, %c0_240] : memref<128x512xbf16, #tpu.memory_space<vmem>>, vector<128x512xbf16>
    %cst_241 = arith.constant dense<0.000000e+00> : vector<8x512xf32>
    %711 = tpu.matmul %706, %710, %cst_241 {dimension_numbers = #tpu.dot_dimension_numbers<[1], [0], [0], [1], [0, 0, 1, 1], [], []>} : vector<8x128xbf16>, vector<128x512xbf16>, vector<8x512xf32> -> vector<8x512xf32>
    %712 = arith.addf %709, %711 : vector<8x512xf32>
    %713 = vector.extract_strided_slice %712 {offsets = [0, 0], sizes = [8, 128], strides = [1, 1]} : vector<8x512xf32> to vector<8x128xf32>
    %714 = arith.negf %713 : vector<8x128xf32>
    %715 = math.exp %714 : vector<8x128xf32>
    %cst_242 = arith.constant 1.000000e+00 : f32
    %716 = vector.broadcast %cst_242 : f32 to vector<8x128xf32>
    %717 = arith.addf %716, %715 : vector<8x128xf32>
    %718 = arith.divf %716, %717 : vector<8x128xf32>
    %719 = vector.extract_strided_slice %712 {offsets = [0, 128], sizes = [8, 128], strides = [1, 1]} : vector<8x512xf32> to vector<8x128xf32>
    %720 = arith.negf %719 : vector<8x128xf32>
    %721 = math.exp %720 : vector<8x128xf32>
    %cst_243 = arith.constant 1.000000e+00 : f32
    %722 = vector.broadcast %cst_243 : f32 to vector<8x128xf32>
    %723 = arith.addf %722, %721 : vector<8x128xf32>
    %724 = arith.divf %722, %723 : vector<8x128xf32>
    %725 = vector.extract_strided_slice %712 {offsets = [0, 256], sizes = [8, 128], strides = [1, 1]} : vector<8x512xf32> to vector<8x128xf32>
    %726 = math.tanh %725 : vector<8x128xf32>
    %727 = vector.extract_strided_slice %712 {offsets = [0, 384], sizes = [8, 128], strides = [1, 1]} : vector<8x512xf32> to vector<8x128xf32>
    %728 = arith.negf %727 : vector<8x128xf32>
    %729 = math.exp %728 : vector<8x128xf32>
    %cst_244 = arith.constant 1.000000e+00 : f32
    %730 = vector.broadcast %cst_244 : f32 to vector<8x128xf32>
    %731 = arith.addf %730, %729 : vector<8x128xf32>
    %732 = arith.divf %730, %731 : vector<8x128xf32>
    %733 = arith.mulf %724, %703 : vector<8x128xf32>
    %734 = arith.mulf %718, %726 : vector<8x128xf32>
    %735 = arith.addf %733, %734 : vector<8x128xf32>
    %736 = math.tanh %735 : vector<8x128xf32>
    %737 = arith.mulf %732, %736 : vector<8x128xf32>
    %738 = arith.truncf %737 : vector<8x128xf32> to vector<8x128xbf16>
    %c4_i32_245 = arith.constant 4 : i32
    %739 = arith.index_cast %c4_i32_245 : i32 to index
    %c0_246 = arith.constant 0 : index
    %c0_247 = arith.constant 0 : index
    %740 = vector.load %arg17[%739, %c0_246, %c0_247] : memref<8x8x512xf32, #tpu.memory_space<vmem>>, vector<1x8x512xf32>
    %741 = vector.shape_cast %740 : vector<1x8x512xf32> to vector<8x512xf32>
    %c0_248 = arith.constant 0 : index
    %c0_249 = arith.constant 0 : index
    %742 = vector.load %arg10[%c0_248, %c0_249] : memref<128x512xbf16, #tpu.memory_space<vmem>>, vector<128x512xbf16>
    %cst_250 = arith.constant dense<0.000000e+00> : vector<8x512xf32>
    %743 = tpu.matmul %738, %742, %cst_250 {dimension_numbers = #tpu.dot_dimension_numbers<[1], [0], [0], [1], [0, 0, 1, 1], [], []>} : vector<8x128xbf16>, vector<128x512xbf16>, vector<8x512xf32> -> vector<8x512xf32>
    %744 = arith.addf %741, %743 : vector<8x512xf32>
    %745 = vector.extract_strided_slice %744 {offsets = [0, 0], sizes = [8, 128], strides = [1, 1]} : vector<8x512xf32> to vector<8x128xf32>
    %746 = arith.negf %745 : vector<8x128xf32>
    %747 = math.exp %746 : vector<8x128xf32>
    %cst_251 = arith.constant 1.000000e+00 : f32
    %748 = vector.broadcast %cst_251 : f32 to vector<8x128xf32>
    %749 = arith.addf %748, %747 : vector<8x128xf32>
    %750 = arith.divf %748, %749 : vector<8x128xf32>
    %751 = vector.extract_strided_slice %744 {offsets = [0, 128], sizes = [8, 128], strides = [1, 1]} : vector<8x512xf32> to vector<8x128xf32>
    %752 = arith.negf %751 : vector<8x128xf32>
    %753 = math.exp %752 : vector<8x128xf32>
    %cst_252 = arith.constant 1.000000e+00 : f32
    %754 = vector.broadcast %cst_252 : f32 to vector<8x128xf32>
    %755 = arith.addf %754, %753 : vector<8x128xf32>
    %756 = arith.divf %754, %755 : vector<8x128xf32>
    %757 = vector.extract_strided_slice %744 {offsets = [0, 256], sizes = [8, 128], strides = [1, 1]} : vector<8x512xf32> to vector<8x128xf32>
    %758 = math.tanh %757 : vector<8x128xf32>
    %759 = vector.extract_strided_slice %744 {offsets = [0, 384], sizes = [8, 128], strides = [1, 1]} : vector<8x512xf32> to vector<8x128xf32>
    %760 = arith.negf %759 : vector<8x128xf32>
    %761 = math.exp %760 : vector<8x128xf32>
    %cst_253 = arith.constant 1.000000e+00 : f32
    %762 = vector.broadcast %cst_253 : f32 to vector<8x128xf32>
    %763 = arith.addf %762, %761 : vector<8x128xf32>
    %764 = arith.divf %762, %763 : vector<8x128xf32>
    %765 = arith.mulf %756, %735 : vector<8x128xf32>
    %766 = arith.mulf %750, %758 : vector<8x128xf32>
    %767 = arith.addf %765, %766 : vector<8x128xf32>
    %768 = math.tanh %767 : vector<8x128xf32>
    %769 = arith.mulf %764, %768 : vector<8x128xf32>
    %770 = arith.truncf %769 : vector<8x128xf32> to vector<8x128xbf16>
    %c5_i32_254 = arith.constant 5 : i32
    %771 = arith.index_cast %c5_i32_254 : i32 to index
    %c0_255 = arith.constant 0 : index
    %c0_256 = arith.constant 0 : index
    %772 = vector.load %arg17[%771, %c0_255, %c0_256] : memref<8x8x512xf32, #tpu.memory_space<vmem>>, vector<1x8x512xf32>
    %773 = vector.shape_cast %772 : vector<1x8x512xf32> to vector<8x512xf32>
    %c0_257 = arith.constant 0 : index
    %c0_258 = arith.constant 0 : index
    %774 = vector.load %arg10[%c0_257, %c0_258] : memref<128x512xbf16, #tpu.memory_space<vmem>>, vector<128x512xbf16>
    %cst_259 = arith.constant dense<0.000000e+00> : vector<8x512xf32>
    %775 = tpu.matmul %770, %774, %cst_259 {dimension_numbers = #tpu.dot_dimension_numbers<[1], [0], [0], [1], [0, 0, 1, 1], [], []>} : vector<8x128xbf16>, vector<128x512xbf16>, vector<8x512xf32> -> vector<8x512xf32>
    %776 = arith.addf %773, %775 : vector<8x512xf32>
    %777 = vector.extract_strided_slice %776 {offsets = [0, 0], sizes = [8, 128], strides = [1, 1]} : vector<8x512xf32> to vector<8x128xf32>
    %778 = arith.negf %777 : vector<8x128xf32>
    %779 = math.exp %778 : vector<8x128xf32>
    %cst_260 = arith.constant 1.000000e+00 : f32
    %780 = vector.broadcast %cst_260 : f32 to vector<8x128xf32>
    %781 = arith.addf %780, %779 : vector<8x128xf32>
    %782 = arith.divf %780, %781 : vector<8x128xf32>
    %783 = vector.extract_strided_slice %776 {offsets = [0, 128], sizes = [8, 128], strides = [1, 1]} : vector<8x512xf32> to vector<8x128xf32>
    %784 = arith.negf %783 : vector<8x128xf32>
    %785 = math.exp %784 : vector<8x128xf32>
    %cst_261 = arith.constant 1.000000e+00 : f32
    %786 = vector.broadcast %cst_261 : f32 to vector<8x128xf32>
    %787 = arith.addf %786, %785 : vector<8x128xf32>
    %788 = arith.divf %786, %787 : vector<8x128xf32>
    %789 = vector.extract_strided_slice %776 {offsets = [0, 256], sizes = [8, 128], strides = [1, 1]} : vector<8x512xf32> to vector<8x128xf32>
    %790 = math.tanh %789 : vector<8x128xf32>
    %791 = vector.extract_strided_slice %776 {offsets = [0, 384], sizes = [8, 128], strides = [1, 1]} : vector<8x512xf32> to vector<8x128xf32>
    %792 = arith.negf %791 : vector<8x128xf32>
    %793 = math.exp %792 : vector<8x128xf32>
    %cst_262 = arith.constant 1.000000e+00 : f32
    %794 = vector.broadcast %cst_262 : f32 to vector<8x128xf32>
    %795 = arith.addf %794, %793 : vector<8x128xf32>
    %796 = arith.divf %794, %795 : vector<8x128xf32>
    %797 = arith.mulf %788, %767 : vector<8x128xf32>
    %798 = arith.mulf %782, %790 : vector<8x128xf32>
    %799 = arith.addf %797, %798 : vector<8x128xf32>
    %800 = math.tanh %799 : vector<8x128xf32>
    %801 = arith.mulf %796, %800 : vector<8x128xf32>
    %802 = arith.truncf %801 : vector<8x128xf32> to vector<8x128xbf16>
    %c6_i32_263 = arith.constant 6 : i32
    %803 = arith.index_cast %c6_i32_263 : i32 to index
    %c0_264 = arith.constant 0 : index
    %c0_265 = arith.constant 0 : index
    %804 = vector.load %arg17[%803, %c0_264, %c0_265] : memref<8x8x512xf32, #tpu.memory_space<vmem>>, vector<1x8x512xf32>
    %805 = vector.shape_cast %804 : vector<1x8x512xf32> to vector<8x512xf32>
    %c0_266 = arith.constant 0 : index
    %c0_267 = arith.constant 0 : index
    %806 = vector.load %arg10[%c0_266, %c0_267] : memref<128x512xbf16, #tpu.memory_space<vmem>>, vector<128x512xbf16>
    %cst_268 = arith.constant dense<0.000000e+00> : vector<8x512xf32>
    %807 = tpu.matmul %802, %806, %cst_268 {dimension_numbers = #tpu.dot_dimension_numbers<[1], [0], [0], [1], [0, 0, 1, 1], [], []>} : vector<8x128xbf16>, vector<128x512xbf16>, vector<8x512xf32> -> vector<8x512xf32>
    %808 = arith.addf %805, %807 : vector<8x512xf32>
    %809 = vector.extract_strided_slice %808 {offsets = [0, 0], sizes = [8, 128], strides = [1, 1]} : vector<8x512xf32> to vector<8x128xf32>
    %810 = arith.negf %809 : vector<8x128xf32>
    %811 = math.exp %810 : vector<8x128xf32>
    %cst_269 = arith.constant 1.000000e+00 : f32
    %812 = vector.broadcast %cst_269 : f32 to vector<8x128xf32>
    %813 = arith.addf %812, %811 : vector<8x128xf32>
    %814 = arith.divf %812, %813 : vector<8x128xf32>
    %815 = vector.extract_strided_slice %808 {offsets = [0, 128], sizes = [8, 128], strides = [1, 1]} : vector<8x512xf32> to vector<8x128xf32>
    %816 = arith.negf %815 : vector<8x128xf32>
    %817 = math.exp %816 : vector<8x128xf32>
    %cst_270 = arith.constant 1.000000e+00 : f32
    %818 = vector.broadcast %cst_270 : f32 to vector<8x128xf32>
    %819 = arith.addf %818, %817 : vector<8x128xf32>
    %820 = arith.divf %818, %819 : vector<8x128xf32>
    %821 = vector.extract_strided_slice %808 {offsets = [0, 256], sizes = [8, 128], strides = [1, 1]} : vector<8x512xf32> to vector<8x128xf32>
    %822 = math.tanh %821 : vector<8x128xf32>
    %823 = vector.extract_strided_slice %808 {offsets = [0, 384], sizes = [8, 128], strides = [1, 1]} : vector<8x512xf32> to vector<8x128xf32>
    %824 = arith.negf %823 : vector<8x128xf32>
    %825 = math.exp %824 : vector<8x128xf32>
    %cst_271 = arith.constant 1.000000e+00 : f32
    %826 = vector.broadcast %cst_271 : f32 to vector<8x128xf32>
    %827 = arith.addf %826, %825 : vector<8x128xf32>
    %828 = arith.divf %826, %827 : vector<8x128xf32>
    %829 = arith.mulf %820, %799 : vector<8x128xf32>
    %830 = arith.mulf %814, %822 : vector<8x128xf32>
    %831 = arith.addf %829, %830 : vector<8x128xf32>
    %832 = math.tanh %831 : vector<8x128xf32>
    %833 = arith.mulf %828, %832 : vector<8x128xf32>
    %834 = arith.truncf %833 : vector<8x128xf32> to vector<8x128xbf16>
    %c7_i32_272 = arith.constant 7 : i32
    %835 = arith.index_cast %c7_i32_272 : i32 to index
    %c0_273 = arith.constant 0 : index
    %c0_274 = arith.constant 0 : index
    %836 = vector.load %arg17[%835, %c0_273, %c0_274] : memref<8x8x512xf32, #tpu.memory_space<vmem>>, vector<1x8x512xf32>
    %837 = vector.shape_cast %836 : vector<1x8x512xf32> to vector<8x512xf32>
    %c0_275 = arith.constant 0 : index
    %c0_276 = arith.constant 0 : index
    %838 = vector.load %arg10[%c0_275, %c0_276] : memref<128x512xbf16, #tpu.memory_space<vmem>>, vector<128x512xbf16>
    %cst_277 = arith.constant dense<0.000000e+00> : vector<8x512xf32>
    %839 = tpu.matmul %834, %838, %cst_277 {dimension_numbers = #tpu.dot_dimension_numbers<[1], [0], [0], [1], [0, 0, 1, 1], [], []>} : vector<8x128xbf16>, vector<128x512xbf16>, vector<8x512xf32> -> vector<8x512xf32>
    %840 = arith.addf %837, %839 : vector<8x512xf32>
    %841 = vector.extract_strided_slice %840 {offsets = [0, 0], sizes = [8, 128], strides = [1, 1]} : vector<8x512xf32> to vector<8x128xf32>
    %842 = arith.negf %841 : vector<8x128xf32>
    %843 = math.exp %842 : vector<8x128xf32>
    %cst_278 = arith.constant 1.000000e+00 : f32
    %844 = vector.broadcast %cst_278 : f32 to vector<8x128xf32>
    %845 = arith.addf %844, %843 : vector<8x128xf32>
    %846 = arith.divf %844, %845 : vector<8x128xf32>
    %847 = vector.extract_strided_slice %840 {offsets = [0, 128], sizes = [8, 128], strides = [1, 1]} : vector<8x512xf32> to vector<8x128xf32>
    %848 = arith.negf %847 : vector<8x128xf32>
    %849 = math.exp %848 : vector<8x128xf32>
    %cst_279 = arith.constant 1.000000e+00 : f32
    %850 = vector.broadcast %cst_279 : f32 to vector<8x128xf32>
    %851 = arith.addf %850, %849 : vector<8x128xf32>
    %852 = arith.divf %850, %851 : vector<8x128xf32>
    %853 = vector.extract_strided_slice %840 {offsets = [0, 256], sizes = [8, 128], strides = [1, 1]} : vector<8x512xf32> to vector<8x128xf32>
    %854 = math.tanh %853 : vector<8x128xf32>
    %855 = vector.extract_strided_slice %840 {offsets = [0, 384], sizes = [8, 128], strides = [1, 1]} : vector<8x512xf32> to vector<8x128xf32>
    %856 = arith.negf %855 : vector<8x128xf32>
    %857 = math.exp %856 : vector<8x128xf32>
    %cst_280 = arith.constant 1.000000e+00 : f32
    %858 = vector.broadcast %cst_280 : f32 to vector<8x128xf32>
    %859 = arith.addf %858, %857 : vector<8x128xf32>
    %860 = arith.divf %858, %859 : vector<8x128xf32>
    %861 = arith.mulf %852, %831 : vector<8x128xf32>
    %862 = arith.mulf %846, %854 : vector<8x128xf32>
    %863 = arith.addf %861, %862 : vector<8x128xf32>
    %864 = math.tanh %863 : vector<8x128xf32>
    %865 = arith.mulf %860, %864 : vector<8x128xf32>
    %866 = arith.truncf %865 : vector<8x128xf32> to vector<8x128xbf16>
    %c8_i32_281 = arith.constant 8 : i32
    %c0_282 = arith.constant 0 : index
    %c0_283 = arith.constant 0 : index
    %867 = vector.load %arg11[%c0_282, %c0_283] : memref<128x128xbf16, #tpu.memory_space<vmem>>, vector<128x128xbf16>
    %cst_284 = arith.constant dense<0.000000e+00> : vector<8x128xf32>
    %868 = tpu.matmul %866, %867, %cst_284 {dimension_numbers = #tpu.dot_dimension_numbers<[1], [0], [0], [1], [0, 0, 1, 1], [], []>} : vector<8x128xbf16>, vector<128x128xbf16>, vector<8x128xf32> -> vector<8x128xf32>
    %c0_285 = arith.constant 0 : index
    %c0_286 = arith.constant 0 : index
    %869 = vector.load %arg12[%c0_285, %c0_286] : memref<1x128xf32, #tpu.memory_space<vmem>>, vector<1x128xf32>
    %870 = vector.broadcast %869 : vector<1x128xf32> to vector<8x128xf32>
    %871 = arith.addf %868, %870 : vector<8x128xf32>
    %872 = arith.truncf %871 : vector<8x128xf32> to vector<8x128xbf16>
    %c0_287 = arith.constant 0 : index
    %c0_288 = arith.constant 0 : index
    %873 = vector.load %arg13[%c0_287, %c0_288] : memref<128x128xbf16, #tpu.memory_space<vmem>>, vector<128x128xbf16>
    %cst_289 = arith.constant dense<0.000000e+00> : vector<8x128xf32>
    %874 = tpu.matmul %872, %873, %cst_289 {dimension_numbers = #tpu.dot_dimension_numbers<[1], [0], [0], [1], [0, 0, 1, 1], [], []>} : vector<8x128xbf16>, vector<128x128xbf16>, vector<8x128xf32> -> vector<8x128xf32>
    %c0_290 = arith.constant 0 : index
    %c0_291 = arith.constant 0 : index
    %875 = vector.load %arg14[%c0_290, %c0_291] : memref<1x128xf32, #tpu.memory_space<vmem>>, vector<1x128xf32>
    %876 = vector.broadcast %875 : vector<1x128xf32> to vector<8x128xf32>
    %877 = arith.addf %874, %876 : vector<8x128xf32>
    %c0_292 = arith.constant 0 : index
    %c0_293 = arith.constant 0 : index
    %878 = vector.load %arg15[%c0_292, %c0_293] : memref<8x128xf32, #tpu.memory_space<vmem>>, vector<8x128xf32>
    tpu.vector_store %arg15[%c0_292, %c0_293], %877 {strides = array<i32>} : memref<8x128xf32, #tpu.memory_space<vmem>>, vector<8x128xf32>,
    return
  }
  func.func @transform_0(%arg0: i32) -> (i32, i32, i32) {
    %c0_i32 = arith.constant 0 : i32
    %c0_i32_0 = arith.constant 0 : i32
    %c0_i32_1 = arith.constant 0 : i32
    return %c0_i32, %arg0, %c0_i32_0 : i32, i32, i32
  }
  func.func @transform_1(%arg0: i32) -> (i32, i32, i32) {
    %c0_i32 = arith.constant 0 : i32
    %c0_i32_0 = arith.constant 0 : i32
    %c0_i32_1 = arith.constant 0 : i32
    %c0_i32_2 = arith.constant 0 : i32
    return %c0_i32, %c0_i32_0, %c0_i32_1 : i32, i32, i32
  }
  func.func @transform_2(%arg0: i32) -> (i32, i32, i32) {
    %c0_i32 = arith.constant 0 : i32
    %c0_i32_0 = arith.constant 0 : i32
    %c0_i32_1 = arith.constant 0 : i32
    %c0_i32_2 = arith.constant 0 : i32
    return %c0_i32, %c0_i32_0, %c0_i32_1 : i32, i32, i32
  }
  func.func @transform_3(%arg0: i32) -> (i32, i32) {
    %c0_i32 = arith.constant 0 : i32
    %c0_i32_0 = arith.constant 0 : i32
    %c0_i32_1 = arith.constant 0 : i32
    return %c0_i32, %c0_i32_0 : i32, i32
  }
  func.func @transform_4(%arg0: i32) -> (i32, i32) {
    %c0_i32 = arith.constant 0 : i32
    %c0_i32_0 = arith.constant 0 : i32
    %c0_i32_1 = arith.constant 0 : i32
    return %c0_i32, %c0_i32_0 : i32, i32
  }
  func.func @transform_5(%arg0: i32) -> (i32, i32, i32) {
    %c0_i32 = arith.constant 0 : i32
    %c0_i32_0 = arith.constant 0 : i32
    %c0_i32_1 = arith.constant 0 : i32
    %c0_i32_2 = arith.constant 0 : i32
    return %c0_i32, %c0_i32_0, %c0_i32_1 : i32, i32, i32
  }
  func.func @transform_6(%arg0: i32) -> (i32, i32) {
    %c0_i32 = arith.constant 0 : i32
    %c0_i32_0 = arith.constant 0 : i32
    %c0_i32_1 = arith.constant 0 : i32
    return %c0_i32, %c0_i32_0 : i32, i32
  }
  func.func @transform_7(%arg0: i32) -> (i32, i32) {
    %c0_i32 = arith.constant 0 : i32
    %c0_i32_0 = arith.constant 0 : i32
    %c0_i32_1 = arith.constant 0 : i32
    return %c0_i32, %c0_i32_0 : i32, i32
  }
  func.func @transform_8(%arg0: i32) -> (i32, i32, i32) {
    %c0_i32 = arith.constant 0 : i32
    %c0_i32_0 = arith.constant 0 : i32
    %c0_i32_1 = arith.constant 0 : i32
    %c0_i32_2 = arith.constant 0 : i32
    return %c0_i32, %c0_i32_0, %c0_i32_1 : i32, i32, i32
  }
  func.func @transform_9(%arg0: i32) -> (i32, i32) {
    %c0_i32 = arith.constant 0 : i32
    %c0_i32_0 = arith.constant 0 : i32
    %c0_i32_1 = arith.constant 0 : i32
    return %c0_i32, %c0_i32_0 : i32, i32
  }
  func.func @transform_10(%arg0: i32) -> (i32, i32) {
    %c0_i32 = arith.constant 0 : i32
    %c0_i32_0 = arith.constant 0 : i32
    %c0_i32_1 = arith.constant 0 : i32
    return %c0_i32, %c0_i32_0 : i32, i32
  }
  func.func @transform_11(%arg0: i32) -> (i32, i32) {
    %c0_i32 = arith.constant 0 : i32
    %c0_i32_0 = arith.constant 0 : i32
    %c0_i32_1 = arith.constant 0 : i32
    return %c0_i32, %c0_i32_0 : i32, i32
  }
  func.func @transform_12(%arg0: i32) -> (i32, i32) {
    %c0_i32 = arith.constant 0 : i32
    %c0_i32_0 = arith.constant 0 : i32
    %c0_i32_1 = arith.constant 0 : i32
    return %c0_i32, %c0_i32_0 : i32, i32
  }
  func.func @transform_13(%arg0: i32) -> (i32, i32) {
    %c0_i32 = arith.constant 0 : i32
    %c0_i32_0 = arith.constant 0 : i32
    %c0_i32_1 = arith.constant 0 : i32
    return %c0_i32, %c0_i32_0 : i32, i32
  }
  func.func @transform_14(%arg0: i32) -> (i32, i32) {
    %c0_i32 = arith.constant 0 : i32
    %c0_i32_0 = arith.constant 0 : i32
    return %arg0, %c0_i32 : i32, i32
  }
}

</mosaic_0001>

<llo_original>
// kernel: tpu_custom_call.1
$region0: #{tpu_custom_call.1}
  #allocation0 [shape = 'u32[]', space=smem, size = 0x4, offset = 0x4, fixed_abs, tag = 'smem constant byte address 0x4 - core index']
  #allocation1 [shape = 'u32[72,128]{1,0:T(1,128)}', space=vmem, size = 0x9000, scoped, tag = 'internal scratch']
  #allocation2 [shape = 'f32[8,8,128]{2,1,0:T(8,128)}', space=vmem, size = 0x8000, scoped, tag = 'scratch operand']
  #allocation3 [shape = 'f32[8,8,512]{2,1,0:T(8,128)}', space=vmem, size = 0x20000, scoped, tag = 'scratch operand']
  %s0 = inlined_call_operand.vmem [shape: f32[8,8,1], index: 0, kind: input, shape index: {}]
  %s1 = inlined_call_operand.vmem [shape: f32[1,1,512], index: 1, kind: input, shape index: {}]
  %s2 = inlined_call_operand.vmem [shape: f32[1,1,512], index: 2, kind: input, shape index: {}]
  %s3 = inlined_call_operand.hbm [shape: bf16[128,512], index: 3, kind: input, shape index: {}]
  %s4 = inlined_call_operand.hbm [shape: bf16[128,512], index: 4, kind: input, shape index: {}]
  %s5 = inlined_call_operand.vmem [shape: f32[1,1,512], index: 5, kind: input, shape index: {}]
  %s6 = inlined_call_operand.hbm [shape: bf16[128,512], index: 6, kind: input, shape index: {}]
  %s7 = inlined_call_operand.hbm [shape: bf16[128,512], index: 7, kind: input, shape index: {}]
  %s8 = inlined_call_operand.vmem [shape: f32[1,1,512], index: 8, kind: input, shape index: {}]
  %s9 = inlined_call_operand.hbm [shape: bf16[128,512], index: 9, kind: input, shape index: {}]
  %s10 = inlined_call_operand.vmem [shape: bf16[128,128], index: 10, kind: input, shape index: {}]
  %s11 = inlined_call_operand.vmem [shape: f32[1,128], index: 11, kind: input, shape index: {}]
  %s12 = inlined_call_operand.hbm [shape: bf16[128,128], index: 12, kind: input, shape index: {}]
  %s13 = inlined_call_operand.vmem [shape: f32[1,128], index: 13, kind: input, shape index: {}]
  %s14 = inlined_call_operand.hbm [shape: f32[8,128], index: 14, kind: output, shape index: {}]
  %s15 = sld [smem:[#allocation0]]
  $region90: #{tpu_custom_call.1} parent=0
    _
  %s17 = ssub.s32 1, %s15
  %s18 = scalar_select 0, %s17, %s15
  $region1: #{tpu_custom_call.1} parent=0
    #allocation4 [shape = 'u8[131072]{0}', space=vmem, size = 0x20000, scoped, tag = 'input window, operand 3, single buffered']
    #allocation5 [shape = 's32[1]{0}', space=sflag, size = 0x4, scoped, tag = 'scoped memory for tpu_custom_call.1']
    #allocation6 [shape = 's32[1]{0}', space=sflag, size = 0x4, scoped, tag = 'scoped memory for tpu_custom_call.1']
    #allocation7 [shape = 'u8[131072]{0}', space=vmem, size = 0x20000, scoped, tag = 'input window, operand 4, single buffered']
    #allocation8 [shape = 's32[1]{0}', space=sflag, size = 0x4, scoped, tag = 'scoped memory for tpu_custom_call.1']
    #allocation9 [shape = 'u8[131072]{0}', space=vmem, size = 0x20000, scoped, tag = 'input window, operand 6, single buffered']
    #allocation10 [shape = 'u8[131072]{0}', space=vmem, size = 0x20000, scoped, tag = 'input window, operand 7, single buffered']
    #allocation11 [shape = 's32[1]{0}', space=sflag, size = 0x4, scoped, tag = 'scoped memory for tpu_custom_call.1']
    #allocation12 [shape = 'u8[131072]{0}', space=vmem, size = 0x20000, scoped, tag = 'input window, operand 9, single buffered']
    #allocation13 [shape = 'u8[32768]{0}', space=vmem, size = 0x8000, scoped, tag = 'input window, operand 12, single buffered']
    #allocation14 [shape = 's32[1]{0}', space=sflag, size = 0x4, scoped, tag = 'scoped memory for tpu_custom_call.1']
    #allocation15 [shape = 'u8[4096]{0}', space=vmem, size = 0x1000, scoped, tag = 'output window, operand 0, single buffered']
    %19 = vsyncpa [#allocation5], 0
    %20 = vsyncpa [#allocation8], 0
    %21 = vsyncpa [#allocation11], 0
    %22 = vsyncpa [#allocation14], 0
    %23 = vsyncpa [#allocation6], 0
    // Predicated region
    $region2: #{tpu_custom_call.1} parent=1 // pred_check
      _
    $region3: #{tpu_custom_call.1} parent=1 // pred_check_branch
      %25 = sbr.rel (0) target = $region5
    $region4: #{tpu_custom_call.1} parent=1 // pred_region
      _
    $region5: #{tpu_custom_call.1} parent=1 // pred_fallthru
      _
    // Predicated region
    $region6: #{tpu_custom_call.1} parent=1 // pred_check
      _
    $region7: #{tpu_custom_call.1} parent=1 // pred_check_branch
      %27 = sbr.rel (0) target = $region9
    $region8: #{tpu_custom_call.1} parent=1 // pred_region
      _
    $region9: #{tpu_custom_call.1} parent=1 // pred_fallthru
      _
    // Predicated region
    $region10: #{tpu_custom_call.1} parent=1 // pred_check
      _
    $region11: #{tpu_custom_call.1} parent=1 // pred_check_branch
      %29 = sbr.rel (0) target = $region13
    $region12: #{tpu_custom_call.1} parent=1 // pred_region
      _
    $region13: #{tpu_custom_call.1} parent=1 // pred_fallthru
      _
    // Predicated region
    $region14: #{tpu_custom_call.1} parent=1 // pred_check
      _
    $region15: #{tpu_custom_call.1} parent=1 // pred_check_branch
      %31 = sbr.rel (0) target = $region17
    $region16: #{tpu_custom_call.1} parent=1 // pred_region
      %33 = vsyncadd [#allocation5], 0
      %s34 = sshll.u32 %s3, 4
      %s35 = int_to_ptr.hbm [resolvable:$true] %s34
      %s36 = sshll.u32 [#allocation4], 4
      %s37 = int_to_ptr.vmem [resolvable:$true] %s36
      %42 = dma.hbm_to_vmem [thread:$0]  %s35, 4096, %s37, [#allocation5], 256, 256, 16
    $region17: #{tpu_custom_call.1} parent=1 // pred_fallthru
      _
    // Predicated region
    $region18: #{tpu_custom_call.1} parent=1 // pred_check
      _
    $region19: #{tpu_custom_call.1} parent=1 // pred_check_branch
      %44 = sbr.rel (0) target = $region21
    $region20: #{tpu_custom_call.1} parent=1 // pred_region
      %46 = vsyncadd [#allocation8], 0
      %s47 = sshll.u32 %s4, 4
      %s48 = int_to_ptr.hbm [resolvable:$true] %s47
      %s49 = sshll.u32 [#allocation7], 4
      %s50 = int_to_ptr.vmem [resolvable:$true] %s49
      %55 = dma.hbm_to_vmem [thread:$0]  %s48, 4096, %s50, [#allocation8], 256, 256, 16
    $region21: #{tpu_custom_call.1} parent=1 // pred_fallthru
      _
    // Predicated region
    $region22: #{tpu_custom_call.1} parent=1 // pred_check
      _
    $region23: #{tpu_custom_call.1} parent=1 // pred_check_branch
      %57 = sbr.rel (0) target = $region25
    $region24: #{tpu_custom_call.1} parent=1 // pred_region
      _
    $region25: #{tpu_custom_call.1} parent=1 // pred_fallthru
      _
    // Predicated region
    $region26: #{tpu_custom_call.1} parent=1 // pred_check
      _
    $region27: #{tpu_custom_call.1} parent=1 // pred_check_branch
      %59 = sbr.rel (0) target = $region29
    $region28: #{tpu_custom_call.1} parent=1 // pred_region
      %61 = vsyncadd [#allocation8], 0
      %s62 = sshll.u32 %s6, 4
      %s63 = int_to_ptr.hbm [resolvable:$true] %s62
      %s64 = sshll.u32 [#allocation9], 4
      %s65 = int_to_ptr.vmem [resolvable:$true] %s64
      %70 = dma.hbm_to_vmem [thread:$0]  %s63, 4096, %s65, [#allocation8], 256, 256, 16
    $region29: #{tpu_custom_call.1} parent=1 // pred_fallthru
      _
    // Predicated region
    $region30: #{tpu_custom_call.1} parent=1 // pred_check
      _
    $region31: #{tpu_custom_call.1} parent=1 // pred_check_branch
      %72 = sbr.rel (0) target = $region33
    $region32: #{tpu_custom_call.1} parent=1 // pred_region
      %74 = vsyncadd [#allocation11], 0
      %s75 = sshll.u32 %s7, 4
      %s76 = int_to_ptr.hbm [resolvable:$true] %s75
      %s77 = sshll.u32 [#allocation10], 4
      %s78 = int_to_ptr.vmem [resolvable:$true] %s77
      %83 = dma.hbm_to_vmem [thread:$0]  %s76, 4096, %s78, [#allocation11], 256, 256, 16
    $region33: #{tpu_custom_call.1} parent=1 // pred_fallthru
      _
    // Predicated region
    $region34: #{tpu_custom_call.1} parent=1 // pred_check
      _
    $region35: #{tpu_custom_call.1} parent=1 // pred_check_branch
      %85 = sbr.rel (0) target = $region37
    $region36: #{tpu_custom_call.1} parent=1 // pred_region
      _
    $region37: #{tpu_custom_call.1} parent=1 // pred_fallthru
      _
    // Predicated region
    $region38: #{tpu_custom_call.1} parent=1 // pred_check
      _
    $region39: #{tpu_custom_call.1} parent=1 // pred_check_branch
      %87 = sbr.rel (0) target = $region41
    $region40: #{tpu_custom_call.1} parent=1 // pred_region
      %89 = vsyncadd [#allocation11], 0
      %s90 = sshll.u32 %s9, 4
      %s91 = int_to_ptr.hbm [resolvable:$true] %s90
      %s92 = sshll.u32 [#allocation12], 4
      %s93 = int_to_ptr.vmem [resolvable:$true] %s92
      %98 = dma.hbm_to_vmem [thread:$0]  %s91, 4096, %s93, [#allocation11], 256, 256, 16
    $region41: #{tpu_custom_call.1} parent=1 // pred_fallthru
      _
    // Predicated region
    $region42: #{tpu_custom_call.1} parent=1 // pred_check
      _
    $region43: #{tpu_custom_call.1} parent=1 // pred_check_branch
      %100 = sbr.rel (0) target = $region45
    $region44: #{tpu_custom_call.1} parent=1 // pred_region
      _
    $region45: #{tpu_custom_call.1} parent=1 // pred_fallthru
      _
    // Predicated region
    $region46: #{tpu_custom_call.1} parent=1 // pred_check
      _
    $region47: #{tpu_custom_call.1} parent=1 // pred_check_branch
      %102 = sbr.rel (0) target = $region49
    $region48: #{tpu_custom_call.1} parent=1 // pred_region
      _
    $region49: #{tpu_custom_call.1} parent=1 // pred_fallthru
      _
    // Predicated region
    $region50: #{tpu_custom_call.1} parent=1 // pred_check
      _
    $region51: #{tpu_custom_call.1} parent=1 // pred_check_branch
      %104 = sbr.rel (0) target = $region53
    $region52: #{tpu_custom_call.1} parent=1 // pred_region
      %106 = vsyncadd [#allocation14], 0
      %s107 = sshll.u32 %s12, 4
      %s108 = int_to_ptr.hbm [resolvable:$true] %s107
      %s109 = sshll.u32 [#allocation13], 4
      %s110 = int_to_ptr.vmem [resolvable:$true] %s109
      %115 = dma.hbm_to_vmem [thread:$0]  %s108, 1024, %s110, [#allocation14], 64, 64, 4
    $region53: #{tpu_custom_call.1} parent=1 // pred_fallthru
      _
    // Predicated region
    $region54: #{tpu_custom_call.1} parent=1 // pred_check
      _
    $region55: #{tpu_custom_call.1} parent=1 // pred_check_branch
      %117 = sbr.rel (0) target = $region57
    $region56: #{tpu_custom_call.1} parent=1 // pred_region
      _
    $region57: #{tpu_custom_call.1} parent=1 // pred_fallthru
      _
    // Predicated region
    $region58: #{tpu_custom_call.1} parent=1 // pred_check
      _
    $region59: #{tpu_custom_call.1} parent=1 // pred_check_branch
      %119 = sbr.rel (0) target = $region61
    $region60: #{tpu_custom_call.1} parent=1 // pred_region
      %121 = dma.done [#allocation5], 4096
    $region61: #{tpu_custom_call.1} parent=1 // pred_fallthru
      _
    // Predicated region
    $region62: #{tpu_custom_call.1} parent=1 // pred_check
      _
    $region63: #{tpu_custom_call.1} parent=1 // pred_check_branch
      %123 = sbr.rel (0) target = $region65
    $region64: #{tpu_custom_call.1} parent=1 // pred_region
      %125 = dma.done [#allocation8], 4096
    $region65: #{tpu_custom_call.1} parent=1 // pred_fallthru
      _
    // Predicated region
    $region66: #{tpu_custom_call.1} parent=1 // pred_check
      _
    $region67: #{tpu_custom_call.1} parent=1 // pred_check_branch
      %127 = sbr.rel (0) target = $region69
    $region68: #{tpu_custom_call.1} parent=1 // pred_region
      %129 = dma.done [#allocation8], 4096
    $region69: #{tpu_custom_call.1} parent=1 // pred_fallthru
      _
    // Predicated region
    $region70: #{tpu_custom_call.1} parent=1 // pred_check
      _
    $region71: #{tpu_custom_call.1} parent=1 // pred_check_branch
      %131 = sbr.rel (0) target = $region73
    $region72: #{tpu_custom_call.1} parent=1 // pred_region
      %133 = dma.done [#allocation11], 4096
    $region73: #{tpu_custom_call.1} parent=1 // pred_fallthru
      _
    // Predicated region
    $region74: #{tpu_custom_call.1} parent=1 // pred_check
      _
    $region75: #{tpu_custom_call.1} parent=1 // pred_check_branch
      %135 = sbr.rel (0) target = $region77
    $region76: #{tpu_custom_call.1} parent=1 // pred_region
      %137 = dma.done [#allocation11], 4096
    $region77: #{tpu_custom_call.1} parent=1 // pred_fallthru
      _
    // Predicated region
    $region78: #{tpu_custom_call.1} parent=1 // pred_check
      _
    $region79: #{tpu_custom_call.1} parent=1 // pred_check_branch
      %139 = sbr.rel (0) target = $region81
    $region80: #{tpu_custom_call.1} parent=1 // pred_region
      %141 = dma.done [#allocation14], 1024
    $region81: #{tpu_custom_call.1} parent=1 // pred_fallthru
      _
    %v143 = vld [vmem:[%s0] sm:$0xff]
    %v144 = vld [vmem:[%s0 + $0x8] sm:$0xff]
    %v145 = vld [vmem:[%s0 + $0x10] sm:$0xff]
    %v146 = vld [vmem:[%s0 + $0x18] sm:$0xff]
    %v147 = vld [vmem:[%s0 + $0x20] sm:$0xff]
    %v148 = vld [vmem:[%s0 + $0x28] sm:$0xff]
    %v149 = vld [vmem:[%s0 + $0x30] sm:$0xff]
    %v150 = vld [vmem:[%s0 + $0x38] sm:$0xff]
    %v151 = vld [vmem:[%s1] sm:$0xf]
    %153 = vset.pattern.permute.xlu0 0
    %154 = vperm.xlu0 %153, %v143
    %v155 = vpop.permute.xlu0 %154
    %158 = vset.pattern.permute.xlu0 0
    %159 = vperm.xlu0 %158, %v144
    %v160 = vpop.permute.xlu0 %159
    %163 = vset.pattern.permute.xlu0 0
    %164 = vperm.xlu0 %163, %v145
    %v165 = vpop.permute.xlu0 %164
    %168 = vset.pattern.permute.xlu0 0
    %169 = vperm.xlu0 %168, %v146
    %v170 = vpop.permute.xlu0 %169
    %173 = vset.pattern.permute.xlu0 0
    %174 = vperm.xlu0 %173, %v147
    %v175 = vpop.permute.xlu0 %174
    %178 = vset.pattern.permute.xlu0 0
    %179 = vperm.xlu0 %178, %v148
    %v180 = vpop.permute.xlu0 %179
    %183 = vset.pattern.permute.xlu0 0
    %184 = vperm.xlu0 %183, %v149
    %v185 = vpop.permute.xlu0 %184
    %188 = vset.pattern.permute.xlu0 0
    %189 = vperm.xlu0 %188, %v150
    %v190 = vpop.permute.xlu0 %189
    %v193 = vperm.slane %v151, 0
    %v194 = vperm.slane %v151, 1
    %v195 = vperm.slane %v151, 2
    %v196 = vperm.slane %v151, 3
    %v201 = vmul.f32 %v155, %v193
    %v202 = vmul.f32 %v155, %v194
    %v203 = vmul.f32 %v155, %v195
    %v204 = vmul.f32 %v155, %v196
    %v205 = vmul.f32 %v160, %v193
    %v206 = vmul.f32 %v160, %v194
    %v207 = vmul.f32 %v160, %v195
    %v208 = vmul.f32 %v160, %v196
    %v209 = vmul.f32 %v165, %v193
    %v210 = vmul.f32 %v165, %v194
    %v211 = vmul.f32 %v165, %v195
    %v212 = vmul.f32 %v165, %v196
    %v213 = vmul.f32 %v170, %v193
    %v214 = vmul.f32 %v170, %v194
    %v215 = vmul.f32 %v170, %v195
    %v216 = vmul.f32 %v170, %v196
    %v217 = vmul.f32 %v175, %v193
    %v218 = vmul.f32 %v175, %v194
    %v219 = vmul.f32 %v175, %v195
    %v220 = vmul.f32 %v175, %v196
    %v221 = vmul.f32 %v180, %v193
    %v222 = vmul.f32 %v180, %v194
    %v223 = vmul.f32 %v180, %v195
    %v224 = vmul.f32 %v180, %v196
    %v225 = vmul.f32 %v185, %v193
    %v226 = vmul.f32 %v185, %v194
    %v227 = vmul.f32 %v185, %v195
    %v228 = vmul.f32 %v185, %v196
    %v229 = vmul.f32 %v190, %v193
    %v230 = vmul.f32 %v190, %v194
    %v231 = vmul.f32 %v190, %v195
    %v232 = vmul.f32 %v190, %v196
    %v233 = vld [vmem:[%s2] sm:$0xf]
    %v235 = vperm.slane %v233, 0
    %v236 = vperm.slane %v233, 1
    %v237 = vperm.slane %v233, 2
    %v238 = vperm.slane %v233, 3
    %v243 = vadd.f32 %v201, %v235
    %v244 = vadd.f32 %v202, %v236
    %v245 = vadd.f32 %v203, %v237
    %v246 = vadd.f32 %v204, %v238
    %v247 = vadd.f32 %v205, %v235
    %v248 = vadd.f32 %v206, %v236
    %v249 = vadd.f32 %v207, %v237
    %v250 = vadd.f32 %v208, %v238
    %v251 = vadd.f32 %v209, %v235
    %v252 = vadd.f32 %v210, %v236
    %v253 = vadd.f32 %v211, %v237
    %v254 = vadd.f32 %v212, %v238
    %v255 = vadd.f32 %v213, %v235
    %v256 = vadd.f32 %v214, %v236
    %v257 = vadd.f32 %v215, %v237
    %v258 = vadd.f32 %v216, %v238
    %v259 = vadd.f32 %v217, %v235
    %v260 = vadd.f32 %v218, %v236
    %v261 = vadd.f32 %v219, %v237
    %v262 = vadd.f32 %v220, %v238
    %v263 = vadd.f32 %v221, %v235
    %v264 = vadd.f32 %v222, %v236
    %v265 = vadd.f32 %v223, %v237
    %v266 = vadd.f32 %v224, %v238
    %v267 = vadd.f32 %v225, %v235
    %v268 = vadd.f32 %v226, %v236
    %v269 = vadd.f32 %v227, %v237
    %v270 = vadd.f32 %v228, %v238
    %v271 = vadd.f32 %v229, %v235
    %v272 = vadd.f32 %v230, %v236
    %v273 = vadd.f32 %v231, %v237
    %v274 = vadd.f32 %v232, %v238
    %275 = vst [vmem:[#allocation3] sm:$0xff] %v243
    %276 = vst [vmem:[#allocation3 + $0x8] sm:$0xff] %v244
    %277 = vst [vmem:[#allocation3 + $0x10] sm:$0xff] %v245
    %278 = vst [vmem:[#allocation3 + $0x18] sm:$0xff] %v246
    %279 = vst [vmem:[#allocation3 + $0x20] sm:$0xff] %v247
    %280 = vst [vmem:[#allocation3 + $0x28] sm:$0xff] %v248
    %281 = vst [vmem:[#allocation3 + $0x30] sm:$0xff] %v249
    %282 = vst [vmem:[#allocation3 + $0x38] sm:$0xff] %v250
    %283 = vst [vmem:[#allocation3 + $0x40] sm:$0xff] %v251
    %284 = vst [vmem:[#allocation3 + $0x48] sm:$0xff] %v252
    %285 = vst [vmem:[#allocation3 + $0x50] sm:$0xff] %v253
    %286 = vst [vmem:[#allocation3 + $0x58] sm:$0xff] %v254
    %287 = vst [vmem:[#allocation3 + $0x60] sm:$0xff] %v255
    %288 = vst [vmem:[#allocation3 + $0x68] sm:$0xff] %v256
    %289 = vst [vmem:[#allocation3 + $0x70] sm:$0xff] %v257
    %290 = vst [vmem:[#allocation3 + $0x78] sm:$0xff] %v258
    %291 = vst [vmem:[#allocation3 + $0x80] sm:$0xff] %v259
    %292 = vst [vmem:[#allocation3 + $0x88] sm:$0xff] %v260
    %293 = vst [vmem:[#allocation3 + $0x90] sm:$0xff] %v261
    %294 = vst [vmem:[#allocation3 + $0x98] sm:$0xff] %v262
    %295 = vst [vmem:[#allocation3 + $0xa0] sm:$0xff] %v263
    %296 = vst [vmem:[#allocation3 + $0xa8] sm:$0xff] %v264
    %297 = vst [vmem:[#allocation3 + $0xb0] sm:$0xff] %v265
    %298 = vst [vmem:[#allocation3 + $0xb8] sm:$0xff] %v266
    %299 = vst [vmem:[#allocation3 + $0xc0] sm:$0xff] %v267
    %300 = vst [vmem:[#allocation3 + $0xc8] sm:$0xff] %v268
    %301 = vst [vmem:[#allocation3 + $0xd0] sm:$0xff] %v269
    %302 = vst [vmem:[#allocation3 + $0xd8] sm:$0xff] %v270
    %303 = vst [vmem:[#allocation3 + $0xe0] sm:$0xff] %v271
    %304 = vst [vmem:[#allocation3 + $0xe8] sm:$0xff] %v272
    %305 = vst [vmem:[#allocation3 + $0xf0] sm:$0xff] %v273
    %306 = vst [vmem:[#allocation3 + $0xf8] sm:$0xff] %v274
    %v307 = vld [vmem:[#allocation3] sm:$0xff]
    %v308 = vld [vmem:[#allocation3 + $0x8] sm:$0xff]
    %v309 = vld [vmem:[#allocation3 + $0x10] sm:$0xff]
    %v310 = vld [vmem:[#allocation3 + $0x18] sm:$0xff]
    %v311 = vld [vmem:[#allocation4] sm:$0xff]
    %v312 = vld [vmem:[#allocation4 + $0x8] sm:$0xff]
    %v313 = vld [vmem:[#allocation4 + $0x10] sm:$0xff]
    %v314 = vld [vmem:[#allocation4 + $0x18] sm:$0xff]
    %v315 = vld [vmem:[#allocation4 + $0x20] sm:$0xff]
    %v316 = vld [vmem:[#allocation4 + $0x28] sm:$0xff]
    %v317 = vld [vmem:[#allocation4 + $0x30] sm:$0xff]
    %v318 = vld [vmem:[#allocation4 + $0x38] sm:$0xff]
    %v319 = vld [vmem:[#allocation4 + $0x40] sm:$0xff]
    %v320 = vld [vmem:[#allocation4 + $0x48] sm:$0xff]
    %v321 = vld [vmem:[#allocation4 + $0x50] sm:$0xff]
    %v322 = vld [vmem:[#allocation4 + $0x58] sm:$0xff]
    %v323 = vld [vmem:[#allocation4 + $0x60] sm:$0xff]
    %v324 = vld [vmem:[#allocation4 + $0x68] sm:$0xff]
    %v325 = vld [vmem:[#allocation4 + $0x70] sm:$0xff]
    %v326 = vld [vmem:[#allocation4 + $0x78] sm:$0xff]
    %v327 = vld [vmem:[#allocation4 + $0x80] sm:$0xff]
    %v328 = vld [vmem:[#allocation4 + $0x88] sm:$0xff]
    %v329 = vld [vmem:[#allocation4 + $0x90] sm:$0xff]
    %v330 = vld [vmem:[#allocation4 + $0x98] sm:$0xff]
    %v331 = vld [vmem:[#allocation4 + $0xa0] sm:$0xff]
    %v332 = vld [vmem:[#allocation4 + $0xa8] sm:$0xff]
    %v333 = vld [vmem:[#allocation4 + $0xb0] sm:$0xff]
    %v334 = vld [vmem:[#allocation4 + $0xb8] sm:$0xff]
    %v335 = vld [vmem:[#allocation4 + $0xc0] sm:$0xff]
    %v336 = vld [vmem:[#allocation4 + $0xc8] sm:$0xff]
    %v337 = vld [vmem:[#allocation4 + $0xd0] sm:$0xff]
    %v338 = vld [vmem:[#allocation4 + $0xd8] sm:$0xff]
    %v339 = vld [vmem:[#allocation4 + $0xe0] sm:$0xff]
    %v340 = vld [vmem:[#allocation4 + $0xe8] sm:$0xff]
    %v341 = vld [vmem:[#allocation4 + $0xf0] sm:$0xff]
    %v342 = vld [vmem:[#allocation4 + $0xf8] sm:$0xff]
    %v375 = vunpack.c.l.b16 %v311
    %v376 = vunpack.c.h.b16 %v311
    %v377 = vunpack.c.l.b16 %v312
    %v378 = vunpack.c.h.b16 %v312
    %v379 = vunpack.c.l.b16 %v313
    %v380 = vunpack.c.h.b16 %v313
    %v381 = vunpack.c.l.b16 %v314
    %v382 = vunpack.c.h.b16 %v314
    %v383 = vunpack.c.l.b16 %v315
    %v384 = vunpack.c.h.b16 %v315
    %v385 = vunpack.c.l.b16 %v316
    %v386 = vunpack.c.h.b16 %v316
    %v387 = vunpack.c.l.b16 %v317
    %v388 = vunpack.c.h.b16 %v317
    %v389 = vunpack.c.l.b16 %v318
    %v390 = vunpack.c.h.b16 %v318
    %v391 = vunpack.c.l.b16 %v319
    %v392 = vunpack.c.h.b16 %v319
    %v393 = vunpack.c.l.b16 %v320
    %v394 = vunpack.c.h.b16 %v320
    %v395 = vunpack.c.l.b16 %v321
    %v396 = vunpack.c.h.b16 %v321
    %v397 = vunpack.c.l.b16 %v322
    %v398 = vunpack.c.h.b16 %v322
    %v399 = vunpack.c.l.b16 %v323
    %v400 = vunpack.c.h.b16 %v323
    %v401 = vunpack.c.l.b16 %v324
    %v402 = vunpack.c.h.b16 %v324
    %v403 = vunpack.c.l.b16 %v325
    %v404 = vunpack.c.h.b16 %v325
    %v405 = vunpack.c.l.b16 %v326
    %v406 = vunpack.c.h.b16 %v326
    %v407 = vunpack.c.l.b16 %v327
    %v408 = vunpack.c.h.b16 %v327
    %v409 = vunpack.c.l.b16 %v328
    %v410 = vunpack.c.h.b16 %v328
    %v411 = vunpack.c.l.b16 %v329
    %v412 = vunpack.c.h.b16 %v329
    %v413 = vunpack.c.l.b16 %v330
    %v414 = vunpack.c.h.b16 %v330
    %v415 = vunpack.c.l.b16 %v331
    %v416 = vunpack.c.h.b16 %v331
    %v417 = vunpack.c.l.b16 %v332
    %v418 = vunpack.c.h.b16 %v332
    %v419 = vunpack.c.l.b16 %v333
    %v420 = vunpack.c.h.b16 %v333
    %v421 = vunpack.c.l.b16 %v334
    %v422 = vunpack.c.h.b16 %v334
    %v423 = vunpack.c.l.b16 %v335
    %v424 = vunpack.c.h.b16 %v335
    %v425 = vunpack.c.l.b16 %v336
    %v426 = vunpack.c.h.b16 %v336
    %v427 = vunpack.c.l.b16 %v337
    %v428 = vunpack.c.h.b16 %v337
    %v429 = vunpack.c.l.b16 %v338
    %v430 = vunpack.c.h.b16 %v338
    %v431 = vunpack.c.l.b16 %v339
    %v432 = vunpack.c.h.b16 %v339
    %v433 = vunpack.c.l.b16 %v340
    %v434 = vunpack.c.h.b16 %v340
    %v435 = vunpack.c.l.b16 %v341
    %v436 = vunpack.c.h.b16 %v341
    %v437 = vunpack.c.l.b16 %v342
    %v438 = vunpack.c.h.b16 %v342
    %v439 = vpack.c.b16 %v379, %v375
    %v440 = vpack.c.b16 %v380, %v376
    %v441 = vpack.c.b16 %v381, %v377
    %v442 = vpack.c.b16 %v382, %v378
    %v443 = vpack.c.b16 %v387, %v383
    %v444 = vpack.c.b16 %v388, %v384
    %v445 = vpack.c.b16 %v389, %v385
    %v446 = vpack.c.b16 %v390, %v386
    %v447 = vpack.c.b16 %v395, %v391
    %v448 = vpack.c.b16 %v396, %v392
    %v449 = vpack.c.b16 %v397, %v393
    %v450 = vpack.c.b16 %v398, %v394
    %v451 = vpack.c.b16 %v403, %v399
    %v452 = vpack.c.b16 %v404, %v400
    %v453 = vpack.c.b16 %v405, %v401
    %v454 = vpack.c.b16 %v406, %v402
    %v455 = vpack.c.b16 %v411, %v407
    %v456 = vpack.c.b16 %v412, %v408
    %v457 = vpack.c.b16 %v413, %v409
    %v458 = vpack.c.b16 %v414, %v410
    %v459 = vpack.c.b16 %v419, %v415
    %v460 = vpack.c.b16 %v420, %v416
    %v461 = vpack.c.b16 %v421, %v417
    %v462 = vpack.c.b16 %v422, %v418
    %v463 = vpack.c.b16 %v427, %v423
    %v464 = vpack.c.b16 %v428, %v424
    %v465 = vpack.c.b16 %v429, %v425
    %v466 = vpack.c.b16 %v430, %v426
    %v467 = vpack.c.b16 %v435, %v431
    %v468 = vpack.c.b16 %v436, %v432
    %v469 = vpack.c.b16 %v437, %v433
    %v470 = vpack.c.b16 %v438, %v434
    %503 = vmatpush.bf16.msra.mxu0 %v467
    %504 = vmatpush.bf16.msra.mxu0 %v463
    %505 = vmatpush.bf16.msra.mxu0 %v459
    %506 = vmatpush.bf16.msra.mxu0 %v455
    %507 = vmatpush.bf16.msra.mxu0 %v451
    %508 = vmatpush.bf16.msra.mxu0 %v447
    %509 = vmatpush.bf16.msra.mxu0 %v443
    %510 = vmatpush.bf16.msra.mxu0 %v439
    %511 = vmatmul.bf16.gmra.mxu0 0
    %v512 = vpop.f32.mrf.mxu0
    %v513 = vadd.f32 0.0, %v512
    %v514 = vpop.f32.mrf.mxu0
    %515 = vdwg.mxu0
    %516 = vmatpush.bf16.msra.mxu0 %v468
    %517 = vmatpush.bf16.msra.mxu0 %v464
    %518 = vmatpush.bf16.msra.mxu0 %v460
    %519 = vmatpush.bf16.msra.mxu0 %v456
    %520 = vmatpush.bf16.msra.mxu0 %v452
    %521 = vmatpush.bf16.msra.mxu0 %v448
    %522 = vmatpush.bf16.msra.mxu0 %v444
    %523 = vmatpush.bf16.msra.mxu0 %v440
    %524 = vmatmul.bf16.gmra.mxu0 0
    %v525 = vpop.f32.mrf.mxu0
    %v526 = vadd.f32 0.0, %v525
    %v527 = vpop.f32.mrf.mxu0
    %528 = vdwg.mxu0
    %529 = vmatpush.bf16.msra.mxu0 %v469
    %530 = vmatpush.bf16.msra.mxu0 %v465
    %531 = vmatpush.bf16.msra.mxu0 %v461
    %532 = vmatpush.bf16.msra.mxu0 %v457
    %533 = vmatpush.bf16.msra.mxu0 %v453
    %534 = vmatpush.bf16.msra.mxu0 %v449
    %535 = vmatpush.bf16.msra.mxu0 %v445
    %536 = vmatpush.bf16.msra.mxu0 %v441
    %537 = vmatmul.bf16.gmra.mxu0 0
    %v538 = vpop.f32.mrf.mxu0
    %v539 = vadd.f32 0.0, %v538
    %v540 = vpop.f32.mrf.mxu0
    %541 = vdwg.mxu0
    %542 = vmatpush.bf16.msra.mxu0 %v470
    %543 = vmatpush.bf16.msra.mxu0 %v466
    %544 = vmatpush.bf16.msra.mxu0 %v462
    %545 = vmatpush.bf16.msra.mxu0 %v458
    %546 = vmatpush.bf16.msra.mxu0 %v454
    %547 = vmatpush.bf16.msra.mxu0 %v450
    %548 = vmatpush.bf16.msra.mxu0 %v446
    %549 = vmatpush.bf16.msra.mxu0 %v442
    %550 = vmatmul.bf16.gmra.mxu0 0
    %v551 = vpop.f32.mrf.mxu0
    %v552 = vadd.f32 0.0, %v551
    %v553 = vpop.f32.mrf.mxu0
    %554 = vdwg.mxu0
    %v555 = vadd.f32 %v307, %v513
    %v556 = vadd.f32 %v308, %v526
    %v557 = vadd.f32 %v309, %v539
    %v558 = vadd.f32 %v310, %v552
    %v559 = vxor.u32 %v555, 2147483648
    %v560 = vmul.f32 %v559, 1.442695
    %v561 = vpow.pop %v560
    %v562 = vadd.f32 %v561, 1.0
    %v563 = vrcp.pop %v562
    %v564 = vmul.f32 %v562, %v563
    %v565 = vsub.f32 1.0, %v564
    %v566 = vmul.f32 %v563, %v565
    %v567 = vadd.f32 %v563, %v566
    %vm568 = vweird.f32 %v562
    %vm569 = vweird.f32 %v563
    %vm570 = vmor %vm568, %vm569
    %v571 = vsel %vm570, %v563, %v567
    %v572 = vand.u32 2147483647, %v562
    %vm573 = vcmp.eq.f32.partialorder %v572, 8.507059e+37
    %v574 = vand.u32 %v562, 2147483648
    %v575 = vor.u32 1.1754944e-38, %v574
    %v576 = vsel %vm573, %v575, %v571
    %v577 = vmul.f32 1.0, %v576
    %v578 = vxor.u32 %v556, 2147483648
    %v579 = vmul.f32 %v578, 1.442695
    %v580 = vpow.pop %v579
    %v581 = vadd.f32 %v580, 1.0
    %v582 = vrcp.pop %v581
    %v583 = vmul.f32 %v581, %v582
    %v584 = vsub.f32 1.0, %v583
    %v585 = vmul.f32 %v582, %v584
    %v586 = vadd.f32 %v582, %v585
    %vm587 = vweird.f32 %v581
    %vm588 = vweird.f32 %v582
    %vm589 = vmor %vm587, %vm588
    %v590 = vsel %vm589, %v582, %v586
    %v591 = vand.u32 2147483647, %v581
    %vm592 = vcmp.eq.f32.partialorder %v591, 8.507059e+37
    %v593 = vand.u32 %v581, 2147483648
    %v594 = vor.u32 1.1754944e-38, %v593
    %v595 = vsel %vm592, %v594, %v590
    %v596 = vmul.f32 1.0, %v595
    %v597 = vtanh.pop %v557
    %v598 = vxor.u32 %v558, 2147483648
    %v599 = vmul.f32 %v598, 1.442695
    %v600 = vpow.pop %v599
    %v601 = vadd.f32 %v600, 1.0
    %v602 = vrcp.pop %v601
    %v603 = vmul.f32 %v601, %v602
    %v604 = vsub.f32 1.0, %v603
    %v605 = vmul.f32 %v602, %v604
    %v606 = vadd.f32 %v602, %v605
    %vm607 = vweird.f32 %v601
    %vm608 = vweird.f32 %v602
    %vm609 = vmor %vm607, %vm608
    %v610 = vsel %vm609, %v602, %v606
    %v611 = vand.u32 2147483647, %v601
    %vm612 = vcmp.eq.f32.partialorder %v611, 8.507059e+37
    %v613 = vand.u32 %v601, 2147483648
    %v614 = vor.u32 1.1754944e-38, %v613
    %v615 = vsel %vm612, %v614, %v610
    %v616 = vmul.f32 1.0, %v615
    %v617 = vmul.f32 %v596, 0.0
    %v618 = vmul.f32 %v577, %v597
    %v619 = vadd.f32 %v617, %v618
    %v620 = vtanh.pop %v619
    %v621 = vmul.f32 %v616, %v620
    %622 = vst [vmem:[#allocation2] sm:$0xff] %v621
    %v623 = vpack.c.bf16 %v621, %v621
    %s624 = scalar_lea.vmem [#allocation3], 32
    %v625 = vld [vmem:[%s624] sm:$0xff]
    %v626 = vld [vmem:[%s624 + $0x8] sm:$0xff]
    %v627 = vld [vmem:[%s624 + $0x10] sm:$0xff]
    %v628 = vld [vmem:[%s624 + $0x18] sm:$0xff]
    %v629 = vld [vmem:[#allocation4] sm:$0xff]
    %v630 = vld [vmem:[#allocation4 + $0x8] sm:$0xff]
    %v631 = vld [vmem:[#allocation4 + $0x10] sm:$0xff]
    %v632 = vld [vmem:[#allocation4 + $0x18] sm:$0xff]
    %v633 = vld [vmem:[#allocation4 + $0x20] sm:$0xff]
    %v634 = vld [vmem:[#allocation4 + $0x28] sm:$0xff]
    %v635 = vld [vmem:[#allocation4 + $0x30] sm:$0xff]
    %v636 = vld [vmem:[#allocation4 + $0x38] sm:$0xff]
    %v637 = vld [vmem:[#allocation4 + $0x40] sm:$0xff]
    %v638 = vld [vmem:[#allocation4 + $0x48] sm:$0xff]
    %v639 = vld [vmem:[#allocation4 + $0x50] sm:$0xff]
    %v640 = vld [vmem:[#allocation4 + $0x58] sm:$0xff]
    %v641 = vld [vmem:[#allocation4 + $0x60] sm:$0xff]
    %v642 = vld [vmem:[#allocation4 + $0x68] sm:$0xff]
    %v643 = vld [vmem:[#allocation4 + $0x70] sm:$0xff]
    %v644 = vld [vmem:[#allocation4 + $0x78] sm:$0xff]
    %v645 = vld [vmem:[#allocation4 + $0x80] sm:$0xff]
    %v646 = vld [vmem:[#allocation4 + $0x88] sm:$0xff]
    %v647 = vld [vmem:[#allocation4 + $0x90] sm:$0xff]
    %v648 = vld [vmem:[#allocation4 + $0x98] sm:$0xff]
    %v649 = vld [vmem:[#allocation4 + $0xa0] sm:$0xff]
    %v650 = vld [vmem:[#allocation4 + $0xa8] sm:$0xff]
    %v651 = vld [vmem:[#allocation4 + $0xb0] sm:$0xff]
    %v652 = vld [vmem:[#allocation4 + $0xb8] sm:$0xff]
    %v653 = vld [vmem:[#allocation4 + $0xc0] sm:$0xff]
    %v654 = vld [vmem:[#allocation4 + $0xc8] sm:$0xff]
    %v655 = vld [vmem:[#allocation4 + $0xd0] sm:$0xff]
    %v656 = vld [vmem:[#allocation4 + $0xd8] sm:$0xff]
    %v657 = vld [vmem:[#allocation4 + $0xe0] sm:$0xff]
    %v658 = vld [vmem:[#allocation4 + $0xe8] sm:$0xff]
    %v659 = vld [vmem:[#allocation4 + $0xf0] sm:$0xff]
    %v660 = vld [vmem:[#allocation4 + $0xf8] sm:$0xff]
    %v693 = vunpack.c.l.b16 %v629
    %v694 = vunpack.c.h.b16 %v629
    %v695 = vunpack.c.l.b16 %v630
    %v696 = vunpack.c.h.b16 %v630
    %v697 = vunpack.c.l.b16 %v631
    %v698 = vunpack.c.h.b16 %v631
    %v699 = vunpack.c.l.b16 %v632
    %v700 = vunpack.c.h.b16 %v632
    %v701 = vunpack.c.l.b16 %v633
    %v702 = vunpack.c.h.b16 %v633
    %v703 = vunpack.c.l.b16 %v634
    %v704 = vunpack.c.h.b16 %v634
    %v705 = vunpack.c.l.b16 %v635
    %v706 = vunpack.c.h.b16 %v635
    %v707 = vunpack.c.l.b16 %v636
    %v708 = vunpack.c.h.b16 %v636
    %v709 = vunpack.c.l.b16 %v637
    %v710 = vunpack.c.h.b16 %v637
    %v711 = vunpack.c.l.b16 %v638
    %v712 = vunpack.c.h.b16 %v638
    %v713 = vunpack.c.l.b16 %v639
    %v714 = vunpack.c.h.b16 %v639
    %v715 = vunpack.c.l.b16 %v640
    %v716 = vunpack.c.h.b16 %v640
    %v717 = vunpack.c.l.b16 %v641
    %v718 = vunpack.c.h.b16 %v641
    %v719 = vunpack.c.l.b16 %v642
    %v720 = vunpack.c.h.b16 %v642
    %v721 = vunpack.c.l.b16 %v643
    %v722 = vunpack.c.h.b16 %v643
    %v723 = vunpack.c.l.b16 %v644
    %v724 = vunpack.c.h.b16 %v644
    %v725 = vunpack.c.l.b16 %v645
    %v726 = vunpack.c.h.b16 %v645
    %v727 = vunpack.c.l.b16 %v646
    %v728 = vunpack.c.h.b16 %v646
    %v729 = vunpack.c.l.b16 %v647
    %v730 = vunpack.c.h.b16 %v647
    %v731 = vunpack.c.l.b16 %v648
    %v732 = vunpack.c.h.b16 %v648
    %v733 = vunpack.c.l.b16 %v649
    %v734 = vunpack.c.h.b16 %v649
    %v735 = vunpack.c.l.b16 %v650
    %v736 = vunpack.c.h.b16 %v650
    %v737 = vunpack.c.l.b16 %v651
    %v738 = vunpack.c.h.b16 %v651
    %v739 = vunpack.c.l.b16 %v652
    %v740 = vunpack.c.h.b16 %v652
    %v741 = vunpack.c.l.b16 %v653
    %v742 = vunpack.c.h.b16 %v653
    %v743 = vunpack.c.l.b16 %v654
    %v744 = vunpack.c.h.b16 %v654
    %v745 = vunpack.c.l.b16 %v655
    %v746 = vunpack.c.h.b16 %v655
    %v747 = vunpack.c.l.b16 %v656
    %v748 = vunpack.c.h.b16 %v656
    %v749 = vunpack.c.l.b16 %v657
    %v750 = vunpack.c.h.b16 %v657
    %v751 = vunpack.c.l.b16 %v658
    %v752 = vunpack.c.h.b16 %v658
    %v753 = vunpack.c.l.b16 %v659
    %v754 = vunpack.c.h.b16 %v659
    %v755 = vunpack.c.l.b16 %v660
    %v756 = vunpack.c.h.b16 %v660
    %v757 = vpack.c.b16 %v697, %v693
    %v758 = vpack.c.b16 %v698, %v694
    %v759 = vpack.c.b16 %v699, %v695
    %v760 = vpack.c.b16 %v700, %v696
    %v761 = vpack.c.b16 %v705, %v701
    %v762 = vpack.c.b16 %v706, %v702
    %v763 = vpack.c.b16 %v707, %v703
    %v764 = vpack.c.b16 %v708, %v704
    %v765 = vpack.c.b16 %v713, %v709
    %v766 = vpack.c.b16 %v714, %v710
    %v767 = vpack.c.b16 %v715, %v711
    %v768 = vpack.c.b16 %v716, %v712
    %v769 = vpack.c.b16 %v721, %v717
    %v770 = vpack.c.b16 %v722, %v718
    %v771 = vpack.c.b16 %v723, %v719
    %v772 = vpack.c.b16 %v724, %v720
    %v773 = vpack.c.b16 %v729, %v725
    %v774 = vpack.c.b16 %v730, %v726
    %v775 = vpack.c.b16 %v731, %v727
    %v776 = vpack.c.b16 %v732, %v728
    %v777 = vpack.c.b16 %v737, %v733
    %v778 = vpack.c.b16 %v738, %v734
    %v779 = vpack.c.b16 %v739, %v735
    %v780 = vpack.c.b16 %v740, %v736
    %v781 = vpack.c.b16 %v745, %v741
    %v782 = vpack.c.b16 %v746, %v742
    %v783 = vpack.c.b16 %v747, %v743
    %v784 = vpack.c.b16 %v748, %v744
    %v785 = vpack.c.b16 %v753, %v749
    %v786 = vpack.c.b16 %v754, %v750
    %v787 = vpack.c.b16 %v755, %v751
    %v788 = vpack.c.b16 %v756, %v752
    %821 = vmatpush.bf16.msra.mxu0 %v785
    %822 = vmatpush.bf16.msra.mxu0 %v781
    %823 = vmatpush.bf16.msra.mxu0 %v777
    %824 = vmatpush.bf16.msra.mxu0 %v773
    %825 = vmatpush.bf16.msra.mxu0 %v769
    %826 = vmatpush.bf16.msra.mxu0 %v765
    %827 = vmatpush.bf16.msra.mxu0 %v761
    %828 = vmatpush.bf16.msra.mxu0 %v757
    %829 = vmatmul.bf16.gmra.mxu0 %v623
    %v830 = vpop.f32.mrf.mxu0
    %v831 = vadd.f32 0.0, %v830
    %v832 = vpop.f32.mrf.mxu0
    %833 = vdwg.mxu0
    %834 = vmatpush.bf16.msra.mxu0 %v786
    %835 = vmatpush.bf16.msra.mxu0 %v782
    %836 = vmatpush.bf16.msra.mxu0 %v778
    %837 = vmatpush.bf16.msra.mxu0 %v774
    %838 = vmatpush.bf16.msra.mxu0 %v770
    %839 = vmatpush.bf16.msra.mxu0 %v766
    %840 = vmatpush.bf16.msra.mxu0 %v762
    %841 = vmatpush.bf16.msra.mxu0 %v758
    %842 = vmatmul.bf16.gmra.mxu0 %v623
    %v843 = vpop.f32.mrf.mxu0
    %v844 = vadd.f32 0.0, %v843
    %v845 = vpop.f32.mrf.mxu0
    %846 = vdwg.mxu0
    %847 = vmatpush.bf16.msra.mxu0 %v787
    %848 = vmatpush.bf16.msra.mxu0 %v783
    %849 = vmatpush.bf16.msra.mxu0 %v779
    %850 = vmatpush.bf16.msra.mxu0 %v775
    %851 = vmatpush.bf16.msra.mxu0 %v771
    %852 = vmatpush.bf16.msra.mxu0 %v767
    %853 = vmatpush.bf16.msra.mxu0 %v763
    %854 = vmatpush.bf16.msra.mxu0 %v759
    %855 = vmatmul.bf16.gmra.mxu0 %v623
    %v856 = vpop.f32.mrf.mxu0
    %v857 = vadd.f32 0.0, %v856
    %v858 = vpop.f32.mrf.mxu0
    %859 = vdwg.mxu0
    %860 = vmatpush.bf16.msra.mxu0 %v788
    %861 = vmatpush.bf16.msra.mxu0 %v784
    %862 = vmatpush.bf16.msra.mxu0 %v780
    %863 = vmatpush.bf16.msra.mxu0 %v776
    %864 = vmatpush.bf16.msra.mxu0 %v772
    %865 = vmatpush.bf16.msra.mxu0 %v768
    %866 = vmatpush.bf16.msra.mxu0 %v764
    %867 = vmatpush.bf16.msra.mxu0 %v760
    %868 = vmatmul.bf16.gmra.mxu0 %v623
    %v869 = vpop.f32.mrf.mxu0
    %v870 = vadd.f32 0.0, %v869
    %v871 = vpop.f32.mrf.mxu0
    %872 = vdwg.mxu0
    %v873 = vadd.f32 %v625, %v831
    %v874 = vadd.f32 %v626, %v844
    %v875 = vadd.f32 %v627, %v857
    %v876 = vadd.f32 %v628, %v870
    %v877 = vxor.u32 %v873, 2147483648
    %v878 = vmul.f32 %v877, 1.442695
    %v879 = vpow.pop %v878
    %v880 = vadd.f32 %v879, 1.0
    %v881 = vrcp.pop %v880
    %v882 = vmul.f32 %v880, %v881
    %v883 = vsub.f32 1.0, %v882
    %v884 = vmul.f32 %v881, %v883
    %v885 = vadd.f32 %v881, %v884
    %vm886 = vweird.f32 %v880
    %vm887 = vweird.f32 %v881
    %vm888 = vmor %vm886, %vm887
    %v889 = vsel %vm888, %v881, %v885
    %v890 = vand.u32 2147483647, %v880
    %vm891 = vcmp.eq.f32.partialorder %v890, 8.507059e+37
    %v892 = vand.u32 %v880, 2147483648
    %v893 = vor.u32 1.1754944e-38, %v892
    %v894 = vsel %vm891, %v893, %v889
    %v895 = vmul.f32 1.0, %v894
    %v896 = vxor.u32 %v874, 2147483648
    %v897 = vmul.f32 %v896, 1.442695
    %v898 = vpow.pop %v897
    %v899 = vadd.f32 %v898, 1.0
    %v900 = vrcp.pop %v899
    %v901 = vmul.f32 %v899, %v900
    %v902 = vsub.f32 1.0, %v901
    %v903 = vmul.f32 %v900, %v902
    %v904 = vadd.f32 %v900, %v903
    %vm905 = vweird.f32 %v899
    %vm906 = vweird.f32 %v900
    %vm907 = vmor %vm905, %vm906
    %v908 = vsel %vm907, %v900, %v904
    %v909 = vand.u32 2147483647, %v899
    %vm910 = vcmp.eq.f32.partialorder %v909, 8.507059e+37
    %v911 = vand.u32 %v899, 2147483648
    %v912 = vor.u32 1.1754944e-38, %v911
    %v913 = vsel %vm910, %v912, %v908
    %v914 = vmul.f32 1.0, %v913
    %v915 = vtanh.pop %v875
    %v916 = vxor.u32 %v876, 2147483648
    %v917 = vmul.f32 %v916, 1.442695
    %v918 = vpow.pop %v917
    %v919 = vadd.f32 %v918, 1.0
    %v920 = vrcp.pop %v919
    %v921 = vmul.f32 %v919, %v920
    %v922 = vsub.f32 1.0, %v921
    %v923 = vmul.f32 %v920, %v922
    %v924 = vadd.f32 %v920, %v923
    %vm925 = vweird.f32 %v919
    %vm926 = vweird.f32 %v920
    %vm927 = vmor %vm925, %vm926
    %v928 = vsel %vm927, %v920, %v924
    %v929 = vand.u32 2147483647, %v919
    %vm930 = vcmp.eq.f32.partialorder %v929, 8.507059e+37
    %v931 = vand.u32 %v919, 2147483648
    %v932 = vor.u32 1.1754944e-38, %v931
    %v933 = vsel %vm930, %v932, %v928
    %v934 = vmul.f32 1.0, %v933
    %v935 = vmul.f32 %v914, %v619
    %v936 = vmul.f32 %v895, %v915
    %v937 = vadd.f32 %v935, %v936
    %v938 = vtanh.pop %v937
    %v939 = vmul.f32 %v934, %v938
    %s940 = scalar_lea.vmem [#allocation2], 8
    %941 = vst [vmem:[%s940] sm:$0xff] %v939
    %v942 = vpack.c.bf16 %v939, %v939
    %s943 = scalar_lea.vmem [#allocation3], 64
    %v944 = vld [vmem:[%s943] sm:$0xff]
    %v945 = vld [vmem:[%s943 + $0x8] sm:$0xff]
    %v946 = vld [vmem:[%s943 + $0x10] sm:$0xff]
    %v947 = vld [vmem:[%s943 + $0x18] sm:$0xff]
    %v948 = vld [vmem:[#allocation4] sm:$0xff]
    %v949 = vld [vmem:[#allocation4 + $0x8] sm:$0xff]
    %v950 = vld [vmem:[#allocation4 + $0x10] sm:$0xff]
    %v951 = vld [vmem:[#allocation4 + $0x18] sm:$0xff]
    %v952 = vld [vmem:[#allocation4 + $0x20] sm:$0xff]
    %v953 = vld [vmem:[#allocation4 + $0x28] sm:$0xff]
    %v954 = vld [vmem:[#allocation4 + $0x30] sm:$0xff]
    %v955 = vld [vmem:[#allocation4 + $0x38] sm:$0xff]
    %v956 = vld [vmem:[#allocation4 + $0x40] sm:$0xff]
    %v957 = vld [vmem:[#allocation4 + $0x48] sm:$0xff]
    %v958 = vld [vmem:[#allocation4 + $0x50] sm:$0xff]
    %v959 = vld [vmem:[#allocation4 + $0x58] sm:$0xff]
    %v960 = vld [vmem:[#allocation4 + $0x60] sm:$0xff]
    %v961 = vld [vmem:[#allocation4 + $0x68] sm:$0xff]
    %v962 = vld [vmem:[#allocation4 + $0x70] sm:$0xff]
    %v963 = vld [vmem:[#allocation4 + $0x78] sm:$0xff]
    %v964 = vld [vmem:[#allocation4 + $0x80] sm:$0xff]
    %v965 = vld [vmem:[#allocation4 + $0x88] sm:$0xff]
    %v966 = vld [vmem:[#allocation4 + $0x90] sm:$0xff]
    %v967 = vld [vmem:[#allocation4 + $0x98] sm:$0xff]
    %v968 = vld [vmem:[#allocation4 + $0xa0] sm:$0xff]
    %v969 = vld [vmem:[#allocation4 + $0xa8] sm:$0xff]
    %v970 = vld [vmem:[#allocation4 + $0xb0] sm:$0xff]
    %v971 = vld [vmem:[#allocation4 + $0xb8] sm:$0xff]
    %v972 = vld [vmem:[#allocation4 + $0xc0] sm:$0xff]
    %v973 = vld [vmem:[#allocation4 + $0xc8] sm:$0xff]
    %v974 = vld [vmem:[#allocation4 + $0xd0] sm:$0xff]
    %v975 = vld [vmem:[#allocation4 + $0xd8] sm:$0xff]
    %v976 = vld [vmem:[#allocation4 + $0xe0] sm:$0xff]
    %v977 = vld [vmem:[#allocation4 + $0xe8] sm:$0xff]
    %v978 = vld [vmem:[#allocation4 + $0xf0] sm:$0xff]
    %v979 = vld [vmem:[#allocation4 + $0xf8] sm:$0xff]
    %v1012 = vunpack.c.l.b16 %v948
    %v1013 = vunpack.c.h.b16 %v948
    %v1014 = vunpack.c.l.b16 %v949
    %v1015 = vunpack.c.h.b16 %v949
    %v1016 = vunpack.c.l.b16 %v950
    %v1017 = vunpack.c.h.b16 %v950
    %v1018 = vunpack.c.l.b16 %v951
    %v1019 = vunpack.c.h.b16 %v951
    %v1020 = vunpack.c.l.b16 %v952
    %v1021 = vunpack.c.h.b16 %v952
    %v1022 = vunpack.c.l.b16 %v953
    %v1023 = vunpack.c.h.b16 %v953
    %v1024 = vunpack.c.l.b16 %v954
    %v1025 = vunpack.c.h.b16 %v954
    %v1026 = vunpack.c.l.b16 %v955
    %v1027 = vunpack.c.h.b16 %v955
    %v1028 = vunpack.c.l.b16 %v956
    %v1029 = vunpack.c.h.b16 %v956
    %v1030 = vunpack.c.l.b16 %v957
    %v1031 = vunpack.c.h.b16 %v957
    %v1032 = vunpack.c.l.b16 %v958
    %v1033 = vunpack.c.h.b16 %v958
    %v1034 = vunpack.c.l.b16 %v959
    %v1035 = vunpack.c.h.b16 %v959
    %v1036 = vunpack.c.l.b16 %v960
    %v1037 = vunpack.c.h.b16 %v960
    %v1038 = vunpack.c.l.b16 %v961
    %v1039 = vunpack.c.h.b16 %v961
    %v1040 = vunpack.c.l.b16 %v962
    %v1041 = vunpack.c.h.b16 %v962
    %v1042 = vunpack.c.l.b16 %v963
    %v1043 = vunpack.c.h.b16 %v963
    %v1044 = vunpack.c.l.b16 %v964
    %v1045 = vunpack.c.h.b16 %v964
    %v1046 = vunpack.c.l.b16 %v965
    %v1047 = vunpack.c.h.b16 %v965
    %v1048 = vunpack.c.l.b16 %v966
    %v1049 = vunpack.c.h.b16 %v966
    %v1050 = vunpack.c.l.b16 %v967
    %v1051 = vunpack.c.h.b16 %v967
    %v1052 = vunpack.c.l.b16 %v968
    %v1053 = vunpack.c.h.b16 %v968
    %v1054 = vunpack.c.l.b16 %v969
    %v1055 = vunpack.c.h.b16 %v969
    %v1056 = vunpack.c.l.b16 %v970
    %v1057 = vunpack.c.h.b16 %v970
    %v1058 = vunpack.c.l.b16 %v971
    %v1059 = vunpack.c.h.b16 %v971
    %v1060 = vunpack.c.l.b16 %v972
    %v1061 = vunpack.c.h.b16 %v972
    %v1062 = vunpack.c.l.b16 %v973
    %v1063 = vunpack.c.h.b16 %v973
    %v1064 = vunpack.c.l.b16 %v974
    %v1065 = vunpack.c.h.b16 %v974
    %v1066 = vunpack.c.l.b16 %v975
    %v1067 = vunpack.c.h.b16 %v975
    %v1068 = vunpack.c.l.b16 %v976
    %v1069 = vunpack.c.h.b16 %v976
    %v1070 = vunpack.c.l.b16 %v977
    %v1071 = vunpack.c.h.b16 %v977
    %v1072 = vunpack.c.l.b16 %v978
    %v1073 = vunpack.c.h.b16 %v978
    %v1074 = vunpack.c.l.b16 %v979
    %v1075 = vunpack.c.h.b16 %v979
    %v1076 = vpack.c.b16 %v1016, %v1012
    %v1077 = vpack.c.b16 %v1017, %v1013
    %v1078 = vpack.c.b16 %v1018, %v1014
    %v1079 = vpack.c.b16 %v1019, %v1015
    %v1080 = vpack.c.b16 %v1024, %v1020
    %v1081 = vpack.c.b16 %v1025, %v1021
    %v1082 = vpack.c.b16 %v1026, %v1022
    %v1083 = vpack.c.b16 %v1027, %v1023
    %v1084 = vpack.c.b16 %v1032, %v1028
    %v1085 = vpack.c.b16 %v1033, %v1029
    %v1086 = vpack.c.b16 %v1034, %v1030
    %v1087 = vpack.c.b16 %v1035, %v1031
    %v1088 = vpack.c.b16 %v1040, %v1036
    %v1089 = vpack.c.b16 %v1041, %v1037
    %v1090 = vpack.c.b16 %v1042, %v1038
    %v1091 = vpack.c.b16 %v1043, %v1039
    %v1092 = vpack.c.b16 %v1048, %v1044
    %v1093 = vpack.c.b16 %v1049, %v1045
    %v1094 = vpack.c.b16 %v1050, %v1046
    %v1095 = vpack.c.b16 %v1051, %v1047
    %v1096 = vpack.c.b16 %v1056, %v1052
    %v1097 = vpack.c.b16 %v1057, %v1053
    %v1098 = vpack.c.b16 %v1058, %v1054
    %v1099 = vpack.c.b16 %v1059, %v1055
    %v1100 = vpack.c.b16 %v1064, %v1060
    %v1101 = vpack.c.b16 %v1065, %v1061
    %v1102 = vpack.c.b16 %v1066, %v1062
    %v1103 = vpack.c.b16 %v1067, %v1063
    %v1104 = vpack.c.b16 %v1072, %v1068
    %v1105 = vpack.c.b16 %v1073, %v1069
    %v1106 = vpack.c.b16 %v1074, %v1070
    %v1107 = vpack.c.b16 %v1075, %v1071
    %1140 = vmatpush.bf16.msra.mxu0 %v1104
    %1141 = vmatpush.bf16.msra.mxu0 %v1100
    %1142 = vmatpush.bf16.msra.mxu0 %v1096
    %1143 = vmatpush.bf16.msra.mxu0 %v1092
    %1144 = vmatpush.bf16.msra.mxu0 %v1088
    %1145 = vmatpush.bf16.msra.mxu0 %v1084
    %1146 = vmatpush.bf16.msra.mxu0 %v1080
    %1147 = vmatpush.bf16.msra.mxu0 %v1076
    %1148 = vmatmul.bf16.gmra.mxu0 %v942
    %v1149 = vpop.f32.mrf.mxu0
    %v1150 = vadd.f32 0.0, %v1149
    %v1151 = vpop.f32.mrf.mxu0
    %1152 = vdwg.mxu0
    %1153 = vmatpush.bf16.msra.mxu0 %v1105
    %1154 = vmatpush.bf16.msra.mxu0 %v1101
    %1155 = vmatpush.bf16.msra.mxu0 %v1097
    %1156 = vmatpush.bf16.msra.mxu0 %v1093
    %1157 = vmatpush.bf16.msra.mxu0 %v1089
    %1158 = vmatpush.bf16.msra.mxu0 %v1085
    %1159 = vmatpush.bf16.msra.mxu0 %v1081
    %1160 = vmatpush.bf16.msra.mxu0 %v1077
    %1161 = vmatmul.bf16.gmra.mxu0 %v942
    %v1162 = vpop.f32.mrf.mxu0
    %v1163 = vadd.f32 0.0, %v1162
    %v1164 = vpop.f32.mrf.mxu0
    %1165 = vdwg.mxu0
    %1166 = vmatpush.bf16.msra.mxu0 %v1106
    %1167 = vmatpush.bf16.msra.mxu0 %v1102
    %1168 = vmatpush.bf16.msra.mxu0 %v1098
    %1169 = vmatpush.bf16.msra.mxu0 %v1094
    %1170 = vmatpush.bf16.msra.mxu0 %v1090
    %1171 = vmatpush.bf16.msra.mxu0 %v1086
    %1172 = vmatpush.bf16.msra.mxu0 %v1082
    %1173 = vmatpush.bf16.msra.mxu0 %v1078
    %1174 = vmatmul.bf16.gmra.mxu0 %v942
    %v1175 = vpop.f32.mrf.mxu0
    %v1176 = vadd.f32 0.0, %v1175
    %v1177 = vpop.f32.mrf.mxu0
    %1178 = vdwg.mxu0
    %1179 = vmatpush.bf16.msra.mxu0 %v1107
    %1180 = vmatpush.bf16.msra.mxu0 %v1103
    %1181 = vmatpush.bf16.msra.mxu0 %v1099
    %1182 = vmatpush.bf16.msra.mxu0 %v1095
    %1183 = vmatpush.bf16.msra.mxu0 %v1091
    %1184 = vmatpush.bf16.msra.mxu0 %v1087
    %1185 = vmatpush.bf16.msra.mxu0 %v1083
    %1186 = vmatpush.bf16.msra.mxu0 %v1079
    %1187 = vmatmul.bf16.gmra.mxu0 %v942
    %v1188 = vpop.f32.mrf.mxu0
    %v1189 = vadd.f32 0.0, %v1188
    %v1190 = vpop.f32.mrf.mxu0
    %1191 = vdwg.mxu0
    %v1192 = vadd.f32 %v944, %v1150
    %v1193 = vadd.f32 %v945, %v1163
    %v1194 = vadd.f32 %v946, %v1176
    %v1195 = vadd.f32 %v947, %v1189
    %v1196 = vxor.u32 %v1192, 2147483648
    %v1197 = vmul.f32 %v1196, 1.442695
    %v1198 = vpow.pop %v1197
    %v1199 = vadd.f32 %v1198, 1.0
    %v1200 = vrcp.pop %v1199
    %v1201 = vmul.f32 %v1199, %v1200
    %v1202 = vsub.f32 1.0, %v1201
    %v1203 = vmul.f32 %v1200, %v1202
    %v1204 = vadd.f32 %v1200, %v1203
    %vm1205 = vweird.f32 %v1199
    %vm1206 = vweird.f32 %v1200
    %vm1207 = vmor %vm1205, %vm1206
    %v1208 = vsel %vm1207, %v1200, %v1204
    %v1209 = vand.u32 2147483647, %v1199
    %vm1210 = vcmp.eq.f32.partialorder %v1209, 8.507059e+37
    %v1211 = vand.u32 %v1199, 2147483648
    %v1212 = vor.u32 1.1754944e-38, %v1211
    %v1213 = vsel %vm1210, %v1212, %v1208
    %v1214 = vmul.f32 1.0, %v1213
    %v1215 = vxor.u32 %v1193, 2147483648
    %v1216 = vmul.f32 %v1215, 1.442695
    %v1217 = vpow.pop %v1216
    %v1218 = vadd.f32 %v1217, 1.0
    %v1219 = vrcp.pop %v1218
    %v1220 = vmul.f32 %v1218, %v1219
    %v1221 = vsub.f32 1.0, %v1220
    %v1222 = vmul.f32 %v1219, %v1221
    %v1223 = vadd.f32 %v1219, %v1222
    %vm1224 = vweird.f32 %v1218
    %vm1225 = vweird.f32 %v1219
    %vm1226 = vmor %vm1224, %vm1225
    %v1227 = vsel %vm1226, %v1219, %v1223
    %v1228 = vand.u32 2147483647, %v1218
    %vm1229 = vcmp.eq.f32.partialorder %v1228, 8.507059e+37
    %v1230 = vand.u32 %v1218, 2147483648
    %v1231 = vor.u32 1.1754944e-38, %v1230
    %v1232 = vsel %vm1229, %v1231, %v1227
    %v1233 = vmul.f32 1.0, %v1232
    %v1234 = vtanh.pop %v1194
    %v1235 = vxor.u32 %v1195, 2147483648
    %v1236 = vmul.f32 %v1235, 1.442695
    %v1237 = vpow.pop %v1236
    %v1238 = vadd.f32 %v1237, 1.0
    %v1239 = vrcp.pop %v1238
    %v1240 = vmul.f32 %v1238, %v1239
    %v1241 = vsub.f32 1.0, %v1240
    %v1242 = vmul.f32 %v1239, %v1241
    %v1243 = vadd.f32 %v1239, %v1242
    %vm1244 = vweird.f32 %v1238
    %vm1245 = vweird.f32 %v1239
    %vm1246 = vmor %vm1244, %vm1245
    %v1247 = vsel %vm1246, %v1239, %v1243
    %v1248 = vand.u32 2147483647, %v1238
    %vm1249 = vcmp.eq.f32.partialorder %v1248, 8.507059e+37
    %v1250 = vand.u32 %v1238, 2147483648
    %v1251 = vor.u32 1.1754944e-38, %v1250
    %v1252 = vsel %vm1249, %v1251, %v1247
    %v1253 = vmul.f32 1.0, %v1252
    %v1254 = vmul.f32 %v1233, %v937
    %v1255 = vmul.f32 %v1214, %v1234
    %v1256 = vadd.f32 %v1254, %v1255
    %v1257 = vtanh.pop %v1256
    %v1258 = vmul.f32 %v1253, %v1257
    %s1259 = scalar_lea.vmem [#allocation2], 16
    %1260 = vst [vmem:[%s1259] sm:$0xff] %v1258
    %v1261 = vpack.c.bf16 %v1258, %v1258
    %s1262 = scalar_lea.vmem [#allocation3], 96
    %v1263 = vld [vmem:[%s1262] sm:$0xff]
    %v1264 = vld [vmem:[%s1262 + $0x8] sm:$0xff]
    %v1265 = vld [vmem:[%s1262 + $0x10] sm:$0xff]
    %v1266 = vld [vmem:[%s1262 + $0x18] sm:$0xff]
    %v1267 = vld [vmem:[#allocation4] sm:$0xff]
    %v1268 = vld [vmem:[#allocation4 + $0x8] sm:$0xff]
    %v1269 = vld [vmem:[#allocation4 + $0x10] sm:$0xff]
    %v1270 = vld [vmem:[#allocation4 + $0x18] sm:$0xff]
    %v1271 = vld [vmem:[#allocation4 + $0x20] sm:$0xff]
    %v1272 = vld [vmem:[#allocation4 + $0x28] sm:$0xff]
    %v1273 = vld [vmem:[#allocation4 + $0x30] sm:$0xff]
    %v1274 = vld [vmem:[#allocation4 + $0x38] sm:$0xff]
    %v1275 = vld [vmem:[#allocation4 + $0x40] sm:$0xff]
    %v1276 = vld [vmem:[#allocation4 + $0x48] sm:$0xff]
    %v1277 = vld [vmem:[#allocation4 + $0x50] sm:$0xff]
    %v1278 = vld [vmem:[#allocation4 + $0x58] sm:$0xff]
    %v1279 = vld [vmem:[#allocation4 + $0x60] sm:$0xff]
    %v1280 = vld [vmem:[#allocation4 + $0x68] sm:$0xff]
    %v1281 = vld [vmem:[#allocation4 + $0x70] sm:$0xff]
    %v1282 = vld [vmem:[#allocation4 + $0x78] sm:$0xff]
    %v1283 = vld [vmem:[#allocation4 + $0x80] sm:$0xff]
    %v1284 = vld [vmem:[#allocation4 + $0x88] sm:$0xff]
    %v1285 = vld [vmem:[#allocation4 + $0x90] sm:$0xff]
    %v1286 = vld [vmem:[#allocation4 + $0x98] sm:$0xff]
    %v1287 = vld [vmem:[#allocation4 + $0xa0] sm:$0xff]
    %v1288 = vld [vmem:[#allocation4 + $0xa8] sm:$0xff]
    %v1289 = vld [vmem:[#allocation4 + $0xb0] sm:$0xff]
    %v1290 = vld [vmem:[#allocation4 + $0xb8] sm:$0xff]
    %v1291 = vld [vmem:[#allocation4 + $0xc0] sm:$0xff]
    %v1292 = vld [vmem:[#allocation4 + $0xc8] sm:$0xff]
    %v1293 = vld [vmem:[#allocation4 + $0xd0] sm:$0xff]
    %v1294 = vld [vmem:[#allocation4 + $0xd8] sm:$0xff]
    %v1295 = vld [vmem:[#allocation4 + $0xe0] sm:$0xff]
    %v1296 = vld [vmem:[#allocation4 + $0xe8] sm:$0xff]
    %v1297 = vld [vmem:[#allocation4 + $0xf0] sm:$0xff]
    %v1298 = vld [vmem:[#allocation4 + $0xf8] sm:$0xff]
    %v1331 = vunpack.c.l.b16 %v1267
    %v1332 = vunpack.c.h.b16 %v1267
    %v1333 = vunpack.c.l.b16 %v1268
    %v1334 = vunpack.c.h.b16 %v1268
    %v1335 = vunpack.c.l.b16 %v1269
    %v1336 = vunpack.c.h.b16 %v1269
    %v1337 = vunpack.c.l.b16 %v1270
    %v1338 = vunpack.c.h.b16 %v1270
    %v1339 = vunpack.c.l.b16 %v1271
    %v1340 = vunpack.c.h.b16 %v1271
    %v1341 = vunpack.c.l.b16 %v1272
    %v1342 = vunpack.c.h.b16 %v1272
    %v1343 = vunpack.c.l.b16 %v1273
    %v1344 = vunpack.c.h.b16 %v1273
    %v1345 = vunpack.c.l.b16 %v1274
    %v1346 = vunpack.c.h.b16 %v1274
    %v1347 = vunpack.c.l.b16 %v1275
    %v1348 = vunpack.c.h.b16 %v1275
    %v1349 = vunpack.c.l.b16 %v1276
    %v1350 = vunpack.c.h.b16 %v1276
    %v1351 = vunpack.c.l.b16 %v1277
    %v1352 = vunpack.c.h.b16 %v1277
    %v1353 = vunpack.c.l.b16 %v1278
    %v1354 = vunpack.c.h.b16 %v1278
    %v1355 = vunpack.c.l.b16 %v1279
    %v1356 = vunpack.c.h.b16 %v1279
    %v1357 = vunpack.c.l.b16 %v1280
    %v1358 = vunpack.c.h.b16 %v1280
    %v1359 = vunpack.c.l.b16 %v1281
    %v1360 = vunpack.c.h.b16 %v1281
    %v1361 = vunpack.c.l.b16 %v1282
    %v1362 = vunpack.c.h.b16 %v1282
    %v1363 = vunpack.c.l.b16 %v1283
    %v1364 = vunpack.c.h.b16 %v1283
    %v1365 = vunpack.c.l.b16 %v1284
    %v1366 = vunpack.c.h.b16 %v1284
    %v1367 = vunpack.c.l.b16 %v1285
    %v1368 = vunpack.c.h.b16 %v1285
    %v1369 = vunpack.c.l.b16 %v1286
    %v1370 = vunpack.c.h.b16 %v1286
    %v1371 = vunpack.c.l.b16 %v1287
    %v1372 = vunpack.c.h.b16 %v1287
    %v1373 = vunpack.c.l.b16 %v1288
    %v1374 = vunpack.c.h.b16 %v1288
    %v1375 = vunpack.c.l.b16 %v1289
    %v1376 = vunpack.c.h.b16 %v1289
    %v1377 = vunpack.c.l.b16 %v1290
    %v1378 = vunpack.c.h.b16 %v1290
    %v1379 = vunpack.c.l.b16 %v1291
    %v1380 = vunpack.c.h.b16 %v1291
    %v1381 = vunpack.c.l.b16 %v1292
    %v1382 = vunpack.c.h.b16 %v1292
    %v1383 = vunpack.c.l.b16 %v1293
    %v1384 = vunpack.c.h.b16 %v1293
    %v1385 = vunpack.c.l.b16 %v1294
    %v1386 = vunpack.c.h.b16 %v1294
    %v1387 = vunpack.c.l.b16 %v1295
    %v1388 = vunpack.c.h.b16 %v1295
    %v1389 = vunpack.c.l.b16 %v1296
    %v1390 = vunpack.c.h.b16 %v1296
    %v1391 = vunpack.c.l.b16 %v1297
    %v1392 = vunpack.c.h.b16 %v1297
    %v1393 = vunpack.c.l.b16 %v1298
    %v1394 = vunpack.c.h.b16 %v1298
    %v1395 = vpack.c.b16 %v1335, %v1331
    %v1396 = vpack.c.b16 %v1336, %v1332
    %v1397 = vpack.c.b16 %v1337, %v1333
    %v1398 = vpack.c.b16 %v1338, %v1334
    %v1399 = vpack.c.b16 %v1343, %v1339
    %v1400 = vpack.c.b16 %v1344, %v1340
    %v1401 = vpack.c.b16 %v1345, %v1341
    %v1402 = vpack.c.b16 %v1346, %v1342
    %v1403 = vpack.c.b16 %v1351, %v1347
    %v1404 = vpack.c.b16 %v1352, %v1348
    %v1405 = vpack.c.b16 %v1353, %v1349
    %v1406 = vpack.c.b16 %v1354, %v1350
    %v1407 = vpack.c.b16 %v1359, %v1355
    %v1408 = vpack.c.b16 %v1360, %v1356
    %v1409 = vpack.c.b16 %v1361, %v1357
    %v1410 = vpack.c.b16 %v1362, %v1358
    %v1411 = vpack.c.b16 %v1367, %v1363
    %v1412 = vpack.c.b16 %v1368, %v1364
    %v1413 = vpack.c.b16 %v1369, %v1365
    %v1414 = vpack.c.b16 %v1370, %v1366
    %v1415 = vpack.c.b16 %v1375, %v1371
    %v1416 = vpack.c.b16 %v1376, %v1372
    %v1417 = vpack.c.b16 %v1377, %v1373
    %v1418 = vpack.c.b16 %v1378, %v1374
    %v1419 = vpack.c.b16 %v1383, %v1379
    %v1420 = vpack.c.b16 %v1384, %v1380
    %v1421 = vpack.c.b16 %v1385, %v1381
    %v1422 = vpack.c.b16 %v1386, %v1382
    %v1423 = vpack.c.b16 %v1391, %v1387
    %v1424 = vpack.c.b16 %v1392, %v1388
    %v1425 = vpack.c.b16 %v1393, %v1389
    %v1426 = vpack.c.b16 %v1394, %v1390
    %1459 = vmatpush.bf16.msra.mxu0 %v1423
    %1460 = vmatpush.bf16.msra.mxu0 %v1419
    %1461 = vmatpush.bf16.msra.mxu0 %v1415
    %1462 = vmatpush.bf16.msra.mxu0 %v1411
    %1463 = vmatpush.bf16.msra.mxu0 %v1407
    %1464 = vmatpush.bf16.msra.mxu0 %v1403
    %1465 = vmatpush.bf16.msra.mxu0 %v1399
    %1466 = vmatpush.bf16.msra.mxu0 %v1395
    %1467 = vmatmul.bf16.gmra.mxu0 %v1261
    %v1468 = vpop.f32.mrf.mxu0
    %v1469 = vadd.f32 0.0, %v1468
    %v1470 = vpop.f32.mrf.mxu0
    %1471 = vdwg.mxu0
    %1472 = vmatpush.bf16.msra.mxu0 %v1424
    %1473 = vmatpush.bf16.msra.mxu0 %v1420
    %1474 = vmatpush.bf16.msra.mxu0 %v1416
    %1475 = vmatpush.bf16.msra.mxu0 %v1412
    %1476 = vmatpush.bf16.msra.mxu0 %v1408
    %1477 = vmatpush.bf16.msra.mxu0 %v1404
    %1478 = vmatpush.bf16.msra.mxu0 %v1400
    %1479 = vmatpush.bf16.msra.mxu0 %v1396
    %1480 = vmatmul.bf16.gmra.mxu0 %v1261
    %v1481 = vpop.f32.mrf.mxu0
    %v1482 = vadd.f32 0.0, %v1481
    %v1483 = vpop.f32.mrf.mxu0
    %1484 = vdwg.mxu0
    %1485 = vmatpush.bf16.msra.mxu0 %v1425
    %1486 = vmatpush.bf16.msra.mxu0 %v1421
    %1487 = vmatpush.bf16.msra.mxu0 %v1417
    %1488 = vmatpush.bf16.msra.mxu0 %v1413
    %1489 = vmatpush.bf16.msra.mxu0 %v1409
    %1490 = vmatpush.bf16.msra.mxu0 %v1405
    %1491 = vmatpush.bf16.msra.mxu0 %v1401
    %1492 = vmatpush.bf16.msra.mxu0 %v1397
    %1493 = vmatmul.bf16.gmra.mxu0 %v1261
    %v1494 = vpop.f32.mrf.mxu0
    %v1495 = vadd.f32 0.0, %v1494
    %v1496 = vpop.f32.mrf.mxu0
    %1497 = vdwg.mxu0
    %1498 = vmatpush.bf16.msra.mxu0 %v1426
    %1499 = vmatpush.bf16.msra.mxu0 %v1422
    %1500 = vmatpush.bf16.msra.mxu0 %v1418
    %1501 = vmatpush.bf16.msra.mxu0 %v1414
    %1502 = vmatpush.bf16.msra.mxu0 %v1410
    %1503 = vmatpush.bf16.msra.mxu0 %v1406
    %1504 = vmatpush.bf16.msra.mxu0 %v1402
    %1505 = vmatpush.bf16.msra.mxu0 %v1398
    %1506 = vmatmul.bf16.gmra.mxu0 %v1261
    %v1507 = vpop.f32.mrf.mxu0
    %v1508 = vadd.f32 0.0, %v1507
    %v1509 = vpop.f32.mrf.mxu0
    %1510 = vdwg.mxu0
    %v1511 = vadd.f32 %v1263, %v1469
    %v1512 = vadd.f32 %v1264, %v1482
    %v1513 = vadd.f32 %v1265, %v1495
    %v1514 = vadd.f32 %v1266, %v1508
    %v1515 = vxor.u32 %v1511, 2147483648
    %v1516 = vmul.f32 %v1515, 1.442695
    %v1517 = vpow.pop %v1516
    %v1518 = vadd.f32 %v1517, 1.0
    %v1519 = vrcp.pop %v1518
    %v1520 = vmul.f32 %v1518, %v1519
    %v1521 = vsub.f32 1.0, %v1520
    %v1522 = vmul.f32 %v1519, %v1521
    %v1523 = vadd.f32 %v1519, %v1522
    %vm1524 = vweird.f32 %v1518
    %vm1525 = vweird.f32 %v1519
    %vm1526 = vmor %vm1524, %vm1525
    %v1527 = vsel %vm1526, %v1519, %v1523
    %v1528 = vand.u32 2147483647, %v1518
    %vm1529 = vcmp.eq.f32.partialorder %v1528, 8.507059e+37
    %v1530 = vand.u32 %v1518, 2147483648
    %v1531 = vor.u32 1.1754944e-38, %v1530
    %v1532 = vsel %vm1529, %v1531, %v1527
    %v1533 = vmul.f32 1.0, %v1532
    %v1534 = vxor.u32 %v1512, 2147483648
    %v1535 = vmul.f32 %v1534, 1.442695
    %v1536 = vpow.pop %v1535
    %v1537 = vadd.f32 %v1536, 1.0
    %v1538 = vrcp.pop %v1537
    %v1539 = vmul.f32 %v1537, %v1538
    %v1540 = vsub.f32 1.0, %v1539
    %v1541 = vmul.f32 %v1538, %v1540
    %v1542 = vadd.f32 %v1538, %v1541
    %vm1543 = vweird.f32 %v1537
    %vm1544 = vweird.f32 %v1538
    %vm1545 = vmor %vm1543, %vm1544
    %v1546 = vsel %vm1545, %v1538, %v1542
    %v1547 = vand.u32 2147483647, %v1537
    %vm1548 = vcmp.eq.f32.partialorder %v1547, 8.507059e+37
    %v1549 = vand.u32 %v1537, 2147483648
    %v1550 = vor.u32 1.1754944e-38, %v1549
    %v1551 = vsel %vm1548, %v1550, %v1546
    %v1552 = vmul.f32 1.0, %v1551
    %v1553 = vtanh.pop %v1513
    %v1554 = vxor.u32 %v1514, 2147483648
    %v1555 = vmul.f32 %v1554, 1.442695
    %v1556 = vpow.pop %v1555
    %v1557 = vadd.f32 %v1556, 1.0
    %v1558 = vrcp.pop %v1557
    %v1559 = vmul.f32 %v1557, %v1558
    %v1560 = vsub.f32 1.0, %v1559
    %v1561 = vmul.f32 %v1558, %v1560
    %v1562 = vadd.f32 %v1558, %v1561
    %vm1563 = vweird.f32 %v1557
    %vm1564 = vweird.f32 %v1558
    %vm1565 = vmor %vm1563, %vm1564
    %v1566 = vsel %vm1565, %v1558, %v1562
    %v1567 = vand.u32 2147483647, %v1557
    %vm1568 = vcmp.eq.f32.partialorder %v1567, 8.507059e+37
    %v1569 = vand.u32 %v1557, 2147483648
    %v1570 = vor.u32 1.1754944e-38, %v1569
    %v1571 = vsel %vm1568, %v1570, %v1566
    %v1572 = vmul.f32 1.0, %v1571
    %v1573 = vmul.f32 %v1552, %v1256
    %v1574 = vmul.f32 %v1533, %v1553
    %v1575 = vadd.f32 %v1573, %v1574
    %v1576 = vtanh.pop %v1575
    %v1577 = vmul.f32 %v1572, %v1576
    %s1578 = scalar_lea.vmem [#allocation2], 24
    %1579 = vst [vmem:[%s1578] sm:$0xff] %v1577
    %v1580 = vpack.c.bf16 %v1577, %v1577
    %s1581 = scalar_lea.vmem [#allocation3], 128
    %v1582 = vld [vmem:[%s1581] sm:$0xff]
    %v1583 = vld [vmem:[%s1581 + $0x8] sm:$0xff]
    %v1584 = vld [vmem:[%s1581 + $0x10] sm:$0xff]
    %v1585 = vld [vmem:[%s1581 + $0x18] sm:$0xff]
    %v1586 = vld [vmem:[#allocation4] sm:$0xff]
    %v1587 = vld [vmem:[#allocation4 + $0x8] sm:$0xff]
    %v1588 = vld [vmem:[#allocation4 + $0x10] sm:$0xff]
    %v1589 = vld [vmem:[#allocation4 + $0x18] sm:$0xff]
    %v1590 = vld [vmem:[#allocation4 + $0x20] sm:$0xff]
    %v1591 = vld [vmem:[#allocation4 + $0x28] sm:$0xff]
    %v1592 = vld [vmem:[#allocation4 + $0x30] sm:$0xff]
    %v1593 = vld [vmem:[#allocation4 + $0x38] sm:$0xff]
    %v1594 = vld [vmem:[#allocation4 + $0x40] sm:$0xff]
    %v1595 = vld [vmem:[#allocation4 + $0x48] sm:$0xff]
    %v1596 = vld [vmem:[#allocation4 + $0x50] sm:$0xff]
    %v1597 = vld [vmem:[#allocation4 + $0x58] sm:$0xff]
    %v1598 = vld [vmem:[#allocation4 + $0x60] sm:$0xff]
    %v1599 = vld [vmem:[#allocation4 + $0x68] sm:$0xff]
    %v1600 = vld [vmem:[#allocation4 + $0x70] sm:$0xff]
    %v1601 = vld [vmem:[#allocation4 + $0x78] sm:$0xff]
    %v1602 = vld [vmem:[#allocation4 + $0x80] sm:$0xff]
    %v1603 = vld [vmem:[#allocation4 + $0x88] sm:$0xff]
    %v1604 = vld [vmem:[#allocation4 + $0x90] sm:$0xff]
    %v1605 = vld [vmem:[#allocation4 + $0x98] sm:$0xff]
    %v1606 = vld [vmem:[#allocation4 + $0xa0] sm:$0xff]
    %v1607 = vld [vmem:[#allocation4 + $0xa8] sm:$0xff]
    %v1608 = vld [vmem:[#allocation4 + $0xb0] sm:$0xff]
    %v1609 = vld [vmem:[#allocation4 + $0xb8] sm:$0xff]
    %v1610 = vld [vmem:[#allocation4 + $0xc0] sm:$0xff]
    %v1611 = vld [vmem:[#allocation4 + $0xc8] sm:$0xff]
    %v1612 = vld [vmem:[#allocation4 + $0xd0] sm:$0xff]
    %v1613 = vld [vmem:[#allocation4 + $0xd8] sm:$0xff]
    %v1614 = vld [vmem:[#allocation4 + $0xe0] sm:$0xff]
    %v1615 = vld [vmem:[#allocation4 + $0xe8] sm:$0xff]
    %v1616 = vld [vmem:[#allocation4 + $0xf0] sm:$0xff]
    %v1617 = vld [vmem:[#allocation4 + $0xf8] sm:$0xff]
    %v1650 = vunpack.c.l.b16 %v1586
    %v1651 = vunpack.c.h.b16 %v1586
    %v1652 = vunpack.c.l.b16 %v1587
    %v1653 = vunpack.c.h.b16 %v1587
    %v1654 = vunpack.c.l.b16 %v1588
    %v1655 = vunpack.c.h.b16 %v1588
    %v1656 = vunpack.c.l.b16 %v1589
    %v1657 = vunpack.c.h.b16 %v1589
    %v1658 = vunpack.c.l.b16 %v1590
    %v1659 = vunpack.c.h.b16 %v1590
    %v1660 = vunpack.c.l.b16 %v1591
    %v1661 = vunpack.c.h.b16 %v1591
    %v1662 = vunpack.c.l.b16 %v1592
    %v1663 = vunpack.c.h.b16 %v1592
    %v1664 = vunpack.c.l.b16 %v1593
    %v1665 = vunpack.c.h.b16 %v1593
    %v1666 = vunpack.c.l.b16 %v1594
    %v1667 = vunpack.c.h.b16 %v1594
    %v1668 = vunpack.c.l.b16 %v1595
    %v1669 = vunpack.c.h.b16 %v1595
    %v1670 = vunpack.c.l.b16 %v1596
    %v1671 = vunpack.c.h.b16 %v1596
    %v1672 = vunpack.c.l.b16 %v1597
    %v1673 = vunpack.c.h.b16 %v1597
    %v1674 = vunpack.c.l.b16 %v1598
    %v1675 = vunpack.c.h.b16 %v1598
    %v1676 = vunpack.c.l.b16 %v1599
    %v1677 = vunpack.c.h.b16 %v1599
    %v1678 = vunpack.c.l.b16 %v1600
    %v1679 = vunpack.c.h.b16 %v1600
    %v1680 = vunpack.c.l.b16 %v1601
    %v1681 = vunpack.c.h.b16 %v1601
    %v1682 = vunpack.c.l.b16 %v1602
    %v1683 = vunpack.c.h.b16 %v1602
    %v1684 = vunpack.c.l.b16 %v1603
    %v1685 = vunpack.c.h.b16 %v1603
    %v1686 = vunpack.c.l.b16 %v1604
    %v1687 = vunpack.c.h.b16 %v1604
    %v1688 = vunpack.c.l.b16 %v1605
    %v1689 = vunpack.c.h.b16 %v1605
    %v1690 = vunpack.c.l.b16 %v1606
    %v1691 = vunpack.c.h.b16 %v1606
    %v1692 = vunpack.c.l.b16 %v1607
    %v1693 = vunpack.c.h.b16 %v1607
    %v1694 = vunpack.c.l.b16 %v1608
    %v1695 = vunpack.c.h.b16 %v1608
    %v1696 = vunpack.c.l.b16 %v1609
    %v1697 = vunpack.c.h.b16 %v1609
    %v1698 = vunpack.c.l.b16 %v1610
    %v1699 = vunpack.c.h.b16 %v1610
    %v1700 = vunpack.c.l.b16 %v1611
    %v1701 = vunpack.c.h.b16 %v1611
    %v1702 = vunpack.c.l.b16 %v1612
    %v1703 = vunpack.c.h.b16 %v1612
    %v1704 = vunpack.c.l.b16 %v1613
    %v1705 = vunpack.c.h.b16 %v1613
    %v1706 = vunpack.c.l.b16 %v1614
    %v1707 = vunpack.c.h.b16 %v1614
    %v1708 = vunpack.c.l.b16 %v1615
    %v1709 = vunpack.c.h.b16 %v1615
    %v1710 = vunpack.c.l.b16 %v1616
    %v1711 = vunpack.c.h.b16 %v1616
    %v1712 = vunpack.c.l.b16 %v1617
    %v1713 = vunpack.c.h.b16 %v1617
    %v1714 = vpack.c.b16 %v1654, %v1650
    %v1715 = vpack.c.b16 %v1655, %v1651
    %v1716 = vpack.c.b16 %v1656, %v1652
    %v1717 = vpack.c.b16 %v1657, %v1653
    %v1718 = vpack.c.b16 %v1662, %v1658
    %v1719 = vpack.c.b16 %v1663, %v1659
    %v1720 = vpack.c.b16 %v1664, %v1660
    %v1721 = vpack.c.b16 %v1665, %v1661
    %v1722 = vpack.c.b16 %v1670, %v1666
    %v1723 = vpack.c.b16 %v1671, %v1667
    %v1724 = vpack.c.b16 %v1672, %v1668
    %v1725 = vpack.c.b16 %v1673, %v1669
    %v1726 = vpack.c.b16 %v1678, %v1674
    %v1727 = vpack.c.b16 %v1679, %v1675
    %v1728 = vpack.c.b16 %v1680, %v1676
    %v1729 = vpack.c.b16 %v1681, %v1677
    %v1730 = vpack.c.b16 %v1686, %v1682
    %v1731 = vpack.c.b16 %v1687, %v1683
    %v1732 = vpack.c.b16 %v1688, %v1684
    %v1733 = vpack.c.b16 %v1689, %v1685
    %v1734 = vpack.c.b16 %v1694, %v1690
    %v1735 = vpack.c.b16 %v1695, %v1691
    %v1736 = vpack.c.b16 %v1696, %v1692
    %v1737 = vpack.c.b16 %v1697, %v1693
    %v1738 = vpack.c.b16 %v1702, %v1698
    %v1739 = vpack.c.b16 %v1703, %v1699
    %v1740 = vpack.c.b16 %v1704, %v1700
    %v1741 = vpack.c.b16 %v1705, %v1701
    %v1742 = vpack.c.b16 %v1710, %v1706
    %v1743 = vpack.c.b16 %v1711, %v1707
    %v1744 = vpack.c.b16 %v1712, %v1708
    %v1745 = vpack.c.b16 %v1713, %v1709
    %1778 = vmatpush.bf16.msra.mxu0 %v1742
    %1779 = vmatpush.bf16.msra.mxu0 %v1738
    %1780 = vmatpush.bf16.msra.mxu0 %v1734
    %1781 = vmatpush.bf16.msra.mxu0 %v1730
    %1782 = vmatpush.bf16.msra.mxu0 %v1726
    %1783 = vmatpush.bf16.msra.mxu0 %v1722
    %1784 = vmatpush.bf16.msra.mxu0 %v1718
    %1785 = vmatpush.bf16.msra.mxu0 %v1714
    %1786 = vmatmul.bf16.gmra.mxu0 %v1580
    %v1787 = vpop.f32.mrf.mxu0
    %v1788 = vadd.f32 0.0, %v1787
    %v1789 = vpop.f32.mrf.mxu0
    %1790 = vdwg.mxu0
    %1791 = vmatpush.bf16.msra.mxu0 %v1743
    %1792 = vmatpush.bf16.msra.mxu0 %v1739
    %1793 = vmatpush.bf16.msra.mxu0 %v1735
    %1794 = vmatpush.bf16.msra.mxu0 %v1731
    %1795 = vmatpush.bf16.msra.mxu0 %v1727
    %1796 = vmatpush.bf16.msra.mxu0 %v1723
    %1797 = vmatpush.bf16.msra.mxu0 %v1719
    %1798 = vmatpush.bf16.msra.mxu0 %v1715
    %1799 = vmatmul.bf16.gmra.mxu0 %v1580
    %v1800 = vpop.f32.mrf.mxu0
    %v1801 = vadd.f32 0.0, %v1800
    %v1802 = vpop.f32.mrf.mxu0
    %1803 = vdwg.mxu0
    %1804 = vmatpush.bf16.msra.mxu0 %v1744
    %1805 = vmatpush.bf16.msra.mxu0 %v1740
    %1806 = vmatpush.bf16.msra.mxu0 %v1736
    %1807 = vmatpush.bf16.msra.mxu0 %v1732
    %1808 = vmatpush.bf16.msra.mxu0 %v1728
    %1809 = vmatpush.bf16.msra.mxu0 %v1724
    %1810 = vmatpush.bf16.msra.mxu0 %v1720
    %1811 = vmatpush.bf16.msra.mxu0 %v1716
    %1812 = vmatmul.bf16.gmra.mxu0 %v1580
    %v1813 = vpop.f32.mrf.mxu0
    %v1814 = vadd.f32 0.0, %v1813
    %v1815 = vpop.f32.mrf.mxu0
    %1816 = vdwg.mxu0
    %1817 = vmatpush.bf16.msra.mxu0 %v1745
    %1818 = vmatpush.bf16.msra.mxu0 %v1741
    %1819 = vmatpush.bf16.msra.mxu0 %v1737
    %1820 = vmatpush.bf16.msra.mxu0 %v1733
    %1821 = vmatpush.bf16.msra.mxu0 %v1729
    %1822 = vmatpush.bf16.msra.mxu0 %v1725
    %1823 = vmatpush.bf16.msra.mxu0 %v1721
    %1824 = vmatpush.bf16.msra.mxu0 %v1717
    %1825 = vmatmul.bf16.gmra.mxu0 %v1580
    %v1826 = vpop.f32.mrf.mxu0
    %v1827 = vadd.f32 0.0, %v1826
    %v1828 = vpop.f32.mrf.mxu0
    %1829 = vdwg.mxu0
    %v1830 = vadd.f32 %v1582, %v1788
    %v1831 = vadd.f32 %v1583, %v1801
    %v1832 = vadd.f32 %v1584, %v1814
    %v1833 = vadd.f32 %v1585, %v1827
    %v1834 = vxor.u32 %v1830, 2147483648
    %v1835 = vmul.f32 %v1834, 1.442695
    %v1836 = vpow.pop %v1835
    %v1837 = vadd.f32 %v1836, 1.0
    %v1838 = vrcp.pop %v1837
    %v1839 = vmul.f32 %v1837, %v1838
    %v1840 = vsub.f32 1.0, %v1839
    %v1841 = vmul.f32 %v1838, %v1840
    %v1842 = vadd.f32 %v1838, %v1841
    %vm1843 = vweird.f32 %v1837
    %vm1844 = vweird.f32 %v1838
    %vm1845 = vmor %vm1843, %vm1844
    %v1846 = vsel %vm1845, %v1838, %v1842
    %v1847 = vand.u32 2147483647, %v1837
    %vm1848 = vcmp.eq.f32.partialorder %v1847, 8.507059e+37
    %v1849 = vand.u32 %v1837, 2147483648
    %v1850 = vor.u32 1.1754944e-38, %v1849
    %v1851 = vsel %vm1848, %v1850, %v1846
    %v1852 = vmul.f32 1.0, %v1851
    %v1853 = vxor.u32 %v1831, 2147483648
    %v1854 = vmul.f32 %v1853, 1.442695
    %v1855 = vpow.pop %v1854
    %v1856 = vadd.f32 %v1855, 1.0
    %v1857 = vrcp.pop %v1856
    %v1858 = vmul.f32 %v1856, %v1857
    %v1859 = vsub.f32 1.0, %v1858
    %v1860 = vmul.f32 %v1857, %v1859
    %v1861 = vadd.f32 %v1857, %v1860
    %vm1862 = vweird.f32 %v1856
    %vm1863 = vweird.f32 %v1857
    %vm1864 = vmor %vm1862, %vm1863
    %v1865 = vsel %vm1864, %v1857, %v1861
    %v1866 = vand.u32 2147483647, %v1856
    %vm1867 = vcmp.eq.f32.partialorder %v1866, 8.507059e+37
    %v1868 = vand.u32 %v1856, 2147483648
    %v1869 = vor.u32 1.1754944e-38, %v1868
    %v1870 = vsel %vm1867, %v1869, %v1865
    %v1871 = vmul.f32 1.0, %v1870
    %v1872 = vtanh.pop %v1832
    %v1873 = vxor.u32 %v1833, 2147483648
    %v1874 = vmul.f32 %v1873, 1.442695
    %v1875 = vpow.pop %v1874
    %v1876 = vadd.f32 %v1875, 1.0
    %v1877 = vrcp.pop %v1876
    %v1878 = vmul.f32 %v1876, %v1877
    %v1879 = vsub.f32 1.0, %v1878
    %v1880 = vmul.f32 %v1877, %v1879
    %v1881 = vadd.f32 %v1877, %v1880
    %vm1882 = vweird.f32 %v1876
    %vm1883 = vweird.f32 %v1877
    %vm1884 = vmor %vm1882, %vm1883
    %v1885 = vsel %vm1884, %v1877, %v1881
    %v1886 = vand.u32 2147483647, %v1876
    %vm1887 = vcmp.eq.f32.partialorder %v1886, 8.507059e+37
    %v1888 = vand.u32 %v1876, 2147483648
    %v1889 = vor.u32 1.1754944e-38, %v1888
    %v1890 = vsel %vm1887, %v1889, %v1885
    %v1891 = vmul.f32 1.0, %v1890
    %v1892 = vmul.f32 %v1871, %v1575
    %v1893 = vmul.f32 %v1852, %v1872
    %v1894 = vadd.f32 %v1892, %v1893
    %v1895 = vtanh.pop %v1894
    %v1896 = vmul.f32 %v1891, %v1895
    %s1897 = scalar_lea.vmem [#allocation2], 32
    %1898 = vst [vmem:[%s1897] sm:$0xff] %v1896
    %v1899 = vpack.c.bf16 %v1896, %v1896
    %s1900 = scalar_lea.vmem [#allocation3], 160
    %v1901 = vld [vmem:[%s1900] sm:$0xff]
    %v1902 = vld [vmem:[%s1900 + $0x8] sm:$0xff]
    %v1903 = vld [vmem:[%s1900 + $0x10] sm:$0xff]
    %v1904 = vld [vmem:[%s1900 + $0x18] sm:$0xff]
    %v1905 = vld [vmem:[#allocation4] sm:$0xff]
    %v1906 = vld [vmem:[#allocation4 + $0x8] sm:$0xff]
    %v1907 = vld [vmem:[#allocation4 + $0x10] sm:$0xff]
    %v1908 = vld [vmem:[#allocation4 + $0x18] sm:$0xff]
    %v1909 = vld [vmem:[#allocation4 + $0x20] sm:$0xff]
    %v1910 = vld [vmem:[#allocation4 + $0x28] sm:$0xff]
    %v1911 = vld [vmem:[#allocation4 + $0x30] sm:$0xff]
    %v1912 = vld [vmem:[#allocation4 + $0x38] sm:$0xff]
    %v1913 = vld [vmem:[#allocation4 + $0x40] sm:$0xff]
    %v1914 = vld [vmem:[#allocation4 + $0x48] sm:$0xff]
    %v1915 = vld [vmem:[#allocation4 + $0x50] sm:$0xff]
    %v1916 = vld [vmem:[#allocation4 + $0x58] sm:$0xff]
    %v1917 = vld [vmem:[#allocation4 + $0x60] sm:$0xff]
    %v1918 = vld [vmem:[#allocation4 + $0x68] sm:$0xff]
    %v1919 = vld [vmem:[#allocation4 + $0x70] sm:$0xff]
    %v1920 = vld [vmem:[#allocation4 + $0x78] sm:$0xff]
    %v1921 = vld [vmem:[#allocation4 + $0x80] sm:$0xff]
    %v1922 = vld [vmem:[#allocation4 + $0x88] sm:$0xff]
    %v1923 = vld [vmem:[#allocation4 + $0x90] sm:$0xff]
    %v1924 = vld [vmem:[#allocation4 + $0x98] sm:$0xff]
    %v1925 = vld [vmem:[#allocation4 + $0xa0] sm:$0xff]
    %v1926 = vld [vmem:[#allocation4 + $0xa8] sm:$0xff]
    %v1927 = vld [vmem:[#allocation4 + $0xb0] sm:$0xff]
    %v1928 = vld [vmem:[#allocation4 + $0xb8] sm:$0xff]
    %v1929 = vld [vmem:[#allocation4 + $0xc0] sm:$0xff]
    %v1930 = vld [vmem:[#allocation4 + $0xc8] sm:$0xff]
    %v1931 = vld [vmem:[#allocation4 + $0xd0] sm:$0xff]
    %v1932 = vld [vmem:[#allocation4 + $0xd8] sm:$0xff]
    %v1933 = vld [vmem:[#allocation4 + $0xe0] sm:$0xff]
    %v1934 = vld [vmem:[#allocation4 + $0xe8] sm:$0xff]
    %v1935 = vld [vmem:[#allocation4 + $0xf0] sm:$0xff]
    %v1936 = vld [vmem:[#allocation4 + $0xf8] sm:$0xff]
    %v1969 = vunpack.c.l.b16 %v1905
    %v1970 = vunpack.c.h.b16 %v1905
    %v1971 = vunpack.c.l.b16 %v1906
    %v1972 = vunpack.c.h.b16 %v1906
    %v1973 = vunpack.c.l.b16 %v1907
    %v1974 = vunpack.c.h.b16 %v1907
    %v1975 = vunpack.c.l.b16 %v1908
    %v1976 = vunpack.c.h.b16 %v1908
    %v1977 = vunpack.c.l.b16 %v1909
    %v1978 = vunpack.c.h.b16 %v1909
    %v1979 = vunpack.c.l.b16 %v1910
    %v1980 = vunpack.c.h.b16 %v1910
    %v1981 = vunpack.c.l.b16 %v1911
    %v1982 = vunpack.c.h.b16 %v1911
    %v1983 = vunpack.c.l.b16 %v1912
    %v1984 = vunpack.c.h.b16 %v1912
    %v1985 = vunpack.c.l.b16 %v1913
    %v1986 = vunpack.c.h.b16 %v1913
    %v1987 = vunpack.c.l.b16 %v1914
    %v1988 = vunpack.c.h.b16 %v1914
    %v1989 = vunpack.c.l.b16 %v1915
    %v1990 = vunpack.c.h.b16 %v1915
    %v1991 = vunpack.c.l.b16 %v1916
    %v1992 = vunpack.c.h.b16 %v1916
    %v1993 = vunpack.c.l.b16 %v1917
    %v1994 = vunpack.c.h.b16 %v1917
    %v1995 = vunpack.c.l.b16 %v1918
    %v1996 = vunpack.c.h.b16 %v1918
    %v1997 = vunpack.c.l.b16 %v1919
    %v1998 = vunpack.c.h.b16 %v1919
    %v1999 = vunpack.c.l.b16 %v1920
    %v2000 = vunpack.c.h.b16 %v1920
    %v2001 = vunpack.c.l.b16 %v1921
    %v2002 = vunpack.c.h.b16 %v1921
    %v2003 = vunpack.c.l.b16 %v1922
    %v2004 = vunpack.c.h.b16 %v1922
    %v2005 = vunpack.c.l.b16 %v1923
    %v2006 = vunpack.c.h.b16 %v1923
    %v2007 = vunpack.c.l.b16 %v1924
    %v2008 = vunpack.c.h.b16 %v1924
    %v2009 = vunpack.c.l.b16 %v1925
    %v2010 = vunpack.c.h.b16 %v1925
    %v2011 = vunpack.c.l.b16 %v1926
    %v2012 = vunpack.c.h.b16 %v1926
    %v2013 = vunpack.c.l.b16 %v1927
    %v2014 = vunpack.c.h.b16 %v1927
    %v2015 = vunpack.c.l.b16 %v1928
    %v2016 = vunpack.c.h.b16 %v1928
    %v2017 = vunpack.c.l.b16 %v1929
    %v2018 = vunpack.c.h.b16 %v1929
    %v2019 = vunpack.c.l.b16 %v1930
    %v2020 = vunpack.c.h.b16 %v1930
    %v2021 = vunpack.c.l.b16 %v1931
    %v2022 = vunpack.c.h.b16 %v1931
    %v2023 = vunpack.c.l.b16 %v1932
    %v2024 = vunpack.c.h.b16 %v1932
    %v2025 = vunpack.c.l.b16 %v1933
    %v2026 = vunpack.c.h.b16 %v1933
    %v2027 = vunpack.c.l.b16 %v1934
    %v2028 = vunpack.c.h.b16 %v1934
    %v2029 = vunpack.c.l.b16 %v1935
    %v2030 = vunpack.c.h.b16 %v1935
    %v2031 = vunpack.c.l.b16 %v1936
    %v2032 = vunpack.c.h.b16 %v1936
    %v2033 = vpack.c.b16 %v1973, %v1969
    %v2034 = vpack.c.b16 %v1974, %v1970
    %v2035 = vpack.c.b16 %v1975, %v1971
    %v2036 = vpack.c.b16 %v1976, %v1972
    %v2037 = vpack.c.b16 %v1981, %v1977
    %v2038 = vpack.c.b16 %v1982, %v1978
    %v2039 = vpack.c.b16 %v1983, %v1979
    %v2040 = vpack.c.b16 %v1984, %v1980
    %v2041 = vpack.c.b16 %v1989, %v1985
    %v2042 = vpack.c.b16 %v1990, %v1986
    %v2043 = vpack.c.b16 %v1991, %v1987
    %v2044 = vpack.c.b16 %v1992, %v1988
    %v2045 = vpack.c.b16 %v1997, %v1993
    %v2046 = vpack.c.b16 %v1998, %v1994
    %v2047 = vpack.c.b16 %v1999, %v1995
    %v2048 = vpack.c.b16 %v2000, %v1996
    %v2049 = vpack.c.b16 %v2005, %v2001
    %v2050 = vpack.c.b16 %v2006, %v2002
    %v2051 = vpack.c.b16 %v2007, %v2003
    %v2052 = vpack.c.b16 %v2008, %v2004
    %v2053 = vpack.c.b16 %v2013, %v2009
    %v2054 = vpack.c.b16 %v2014, %v2010
    %v2055 = vpack.c.b16 %v2015, %v2011
    %v2056 = vpack.c.b16 %v2016, %v2012
    %v2057 = vpack.c.b16 %v2021, %v2017
    %v2058 = vpack.c.b16 %v2022, %v2018
    %v2059 = vpack.c.b16 %v2023, %v2019
    %v2060 = vpack.c.b16 %v2024, %v2020
    %v2061 = vpack.c.b16 %v2029, %v2025
    %v2062 = vpack.c.b16 %v2030, %v2026
    %v2063 = vpack.c.b16 %v2031, %v2027
    %v2064 = vpack.c.b16 %v2032, %v2028
    %2097 = vmatpush.bf16.msra.mxu0 %v2061
    %2098 = vmatpush.bf16.msra.mxu0 %v2057
    %2099 = vmatpush.bf16.msra.mxu0 %v2053
    %2100 = vmatpush.bf16.msra.mxu0 %v2049
    %2101 = vmatpush.bf16.msra.mxu0 %v2045
    %2102 = vmatpush.bf16.msra.mxu0 %v2041
    %2103 = vmatpush.bf16.msra.mxu0 %v2037
    %2104 = vmatpush.bf16.msra.mxu0 %v2033
    %2105 = vmatmul.bf16.gmra.mxu0 %v1899
    %v2106 = vpop.f32.mrf.mxu0
    %v2107 = vadd.f32 0.0, %v2106
    %v2108 = vpop.f32.mrf.mxu0
    %2109 = vdwg.mxu0
    %2110 = vmatpush.bf16.msra.mxu0 %v2062
    %2111 = vmatpush.bf16.msra.mxu0 %v2058
    %2112 = vmatpush.bf16.msra.mxu0 %v2054
    %2113 = vmatpush.bf16.msra.mxu0 %v2050
    %2114 = vmatpush.bf16.msra.mxu0 %v2046
    %2115 = vmatpush.bf16.msra.mxu0 %v2042
    %2116 = vmatpush.bf16.msra.mxu0 %v2038
    %2117 = vmatpush.bf16.msra.mxu0 %v2034
    %2118 = vmatmul.bf16.gmra.mxu0 %v1899
    %v2119 = vpop.f32.mrf.mxu0
    %v2120 = vadd.f32 0.0, %v2119
    %v2121 = vpop.f32.mrf.mxu0
    %2122 = vdwg.mxu0
    %2123 = vmatpush.bf16.msra.mxu0 %v2063
    %2124 = vmatpush.bf16.msra.mxu0 %v2059
    %2125 = vmatpush.bf16.msra.mxu0 %v2055
    %2126 = vmatpush.bf16.msra.mxu0 %v2051
    %2127 = vmatpush.bf16.msra.mxu0 %v2047
    %2128 = vmatpush.bf16.msra.mxu0 %v2043
    %2129 = vmatpush.bf16.msra.mxu0 %v2039
    %2130 = vmatpush.bf16.msra.mxu0 %v2035
    %2131 = vmatmul.bf16.gmra.mxu0 %v1899
    %v2132 = vpop.f32.mrf.mxu0
    %v2133 = vadd.f32 0.0, %v2132
    %v2134 = vpop.f32.mrf.mxu0
    %2135 = vdwg.mxu0
    %2136 = vmatpush.bf16.msra.mxu0 %v2064
    %2137 = vmatpush.bf16.msra.mxu0 %v2060
    %2138 = vmatpush.bf16.msra.mxu0 %v2056
    %2139 = vmatpush.bf16.msra.mxu0 %v2052
    %2140 = vmatpush.bf16.msra.mxu0 %v2048
    %2141 = vmatpush.bf16.msra.mxu0 %v2044
    %2142 = vmatpush.bf16.msra.mxu0 %v2040
    %2143 = vmatpush.bf16.msra.mxu0 %v2036
    %2144 = vmatmul.bf16.gmra.mxu0 %v1899
    %v2145 = vpop.f32.mrf.mxu0
    %v2146 = vadd.f32 0.0, %v2145
    %v2147 = vpop.f32.mrf.mxu0
    %2148 = vdwg.mxu0
    %v2149 = vadd.f32 %v1901, %v2107
    %v2150 = vadd.f32 %v1902, %v2120
    %v2151 = vadd.f32 %v1903, %v2133
    %v2152 = vadd.f32 %v1904, %v2146
    %v2153 = vxor.u32 %v2149, 2147483648
    %v2154 = vmul.f32 %v2153, 1.442695
    %v2155 = vpow.pop %v2154
    %v2156 = vadd.f32 %v2155, 1.0
    %v2157 = vrcp.pop %v2156
    %v2158 = vmul.f32 %v2156, %v2157
    %v2159 = vsub.f32 1.0, %v2158
    %v2160 = vmul.f32 %v2157, %v2159
    %v2161 = vadd.f32 %v2157, %v2160
    %vm2162 = vweird.f32 %v2156
    %vm2163 = vweird.f32 %v2157
    %vm2164 = vmor %vm2162, %vm2163
    %v2165 = vsel %vm2164, %v2157, %v2161
    %v2166 = vand.u32 2147483647, %v2156
    %vm2167 = vcmp.eq.f32.partialorder %v2166, 8.507059e+37
    %v2168 = vand.u32 %v2156, 2147483648
    %v2169 = vor.u32 1.1754944e-38, %v2168
    %v2170 = vsel %vm2167, %v2169, %v2165
    %v2171 = vmul.f32 1.0, %v2170
    %v2172 = vxor.u32 %v2150, 2147483648
    %v2173 = vmul.f32 %v2172, 1.442695
    %v2174 = vpow.pop %v2173
    %v2175 = vadd.f32 %v2174, 1.0
    %v2176 = vrcp.pop %v2175
    %v2177 = vmul.f32 %v2175, %v2176
    %v2178 = vsub.f32 1.0, %v2177
    %v2179 = vmul.f32 %v2176, %v2178
    %v2180 = vadd.f32 %v2176, %v2179
    %vm2181 = vweird.f32 %v2175
    %vm2182 = vweird.f32 %v2176
    %vm2183 = vmor %vm2181, %vm2182
    %v2184 = vsel %vm2183, %v2176, %v2180
    %v2185 = vand.u32 2147483647, %v2175
    %vm2186 = vcmp.eq.f32.partialorder %v2185, 8.507059e+37
    %v2187 = vand.u32 %v2175, 2147483648
    %v2188 = vor.u32 1.1754944e-38, %v2187
    %v2189 = vsel %vm2186, %v2188, %v2184
    %v2190 = vmul.f32 1.0, %v2189
    %v2191 = vtanh.pop %v2151
    %v2192 = vxor.u32 %v2152, 2147483648
    %v2193 = vmul.f32 %v2192, 1.442695
    %v2194 = vpow.pop %v2193
    %v2195 = vadd.f32 %v2194, 1.0
    %v2196 = vrcp.pop %v2195
    %v2197 = vmul.f32 %v2195, %v2196
    %v2198 = vsub.f32 1.0, %v2197
    %v2199 = vmul.f32 %v2196, %v2198
    %v2200 = vadd.f32 %v2196, %v2199
    %vm2201 = vweird.f32 %v2195
    %vm2202 = vweird.f32 %v2196
    %vm2203 = vmor %vm2201, %vm2202
    %v2204 = vsel %vm2203, %v2196, %v2200
    %v2205 = vand.u32 2147483647, %v2195
    %vm2206 = vcmp.eq.f32.partialorder %v2205, 8.507059e+37
    %v2207 = vand.u32 %v2195, 2147483648
    %v2208 = vor.u32 1.1754944e-38, %v2207
    %v2209 = vsel %vm2206, %v2208, %v2204
    %v2210 = vmul.f32 1.0, %v2209
    %v2211 = vmul.f32 %v2190, %v1894
    %v2212 = vmul.f32 %v2171, %v2191
    %v2213 = vadd.f32 %v2211, %v2212
    %v2214 = vtanh.pop %v2213
    %v2215 = vmul.f32 %v2210, %v2214
    %s2216 = scalar_lea.vmem [#allocation2], 40
    %2217 = vst [vmem:[%s2216] sm:$0xff] %v2215
    %v2218 = vpack.c.bf16 %v2215, %v2215
    %s2219 = scalar_lea.vmem [#allocation3], 192
    %v2220 = vld [vmem:[%s2219] sm:$0xff]
    %v2221 = vld [vmem:[%s2219 + $0x8] sm:$0xff]
    %v2222 = vld [vmem:[%s2219 + $0x10] sm:$0xff]
    %v2223 = vld [vmem:[%s2219 + $0x18] sm:$0xff]
    %v2224 = vld [vmem:[#allocation4] sm:$0xff]
    %v2225 = vld [vmem:[#allocation4 + $0x8] sm:$0xff]
    %v2226 = vld [vmem:[#allocation4 + $0x10] sm:$0xff]
    %v2227 = vld [vmem:[#allocation4 + $0x18] sm:$0xff]
    %v2228 = vld [vmem:[#allocation4 + $0x20] sm:$0xff]
    %v2229 = vld [vmem:[#allocation4 + $0x28] sm:$0xff]
    %v2230 = vld [vmem:[#allocation4 + $0x30] sm:$0xff]
    %v2231 = vld [vmem:[#allocation4 + $0x38] sm:$0xff]
    %v2232 = vld [vmem:[#allocation4 + $0x40] sm:$0xff]
    %v2233 = vld [vmem:[#allocation4 + $0x48] sm:$0xff]
    %v2234 = vld [vmem:[#allocation4 + $0x50] sm:$0xff]
    %v2235 = vld [vmem:[#allocation4 + $0x58] sm:$0xff]
    %v2236 = vld [vmem:[#allocation4 + $0x60] sm:$0xff]
    %v2237 = vld [vmem:[#allocation4 + $0x68] sm:$0xff]
    %v2238 = vld [vmem:[#allocation4 + $0x70] sm:$0xff]
    %v2239 = vld [vmem:[#allocation4 + $0x78] sm:$0xff]
    %v2240 = vld [vmem:[#allocation4 + $0x80] sm:$0xff]
    %v2241 = vld [vmem:[#allocation4 + $0x88] sm:$0xff]
    %v2242 = vld [vmem:[#allocation4 + $0x90] sm:$0xff]
    %v2243 = vld [vmem:[#allocation4 + $0x98] sm:$0xff]
    %v2244 = vld [vmem:[#allocation4 + $0xa0] sm:$0xff]
    %v2245 = vld [vmem:[#allocation4 + $0xa8] sm:$0xff]
    %v2246 = vld [vmem:[#allocation4 + $0xb0] sm:$0xff]
    %v2247 = vld [vmem:[#allocation4 + $0xb8] sm:$0xff]
    %v2248 = vld [vmem:[#allocation4 + $0xc0] sm:$0xff]
    %v2249 = vld [vmem:[#allocation4 + $0xc8] sm:$0xff]
    %v2250 = vld [vmem:[#allocation4 + $0xd0] sm:$0xff]
    %v2251 = vld [vmem:[#allocation4 + $0xd8] sm:$0xff]
    %v2252 = vld [vmem:[#allocation4 + $0xe0] sm:$0xff]
    %v2253 = vld [vmem:[#allocation4 + $0xe8] sm:$0xff]
    %v2254 = vld [vmem:[#allocation4 + $0xf0] sm:$0xff]
    %v2255 = vld [vmem:[#allocation4 + $0xf8] sm:$0xff]
    %v2288 = vunpack.c.l.b16 %v2224
    %v2289 = vunpack.c.h.b16 %v2224
    %v2290 = vunpack.c.l.b16 %v2225
    %v2291 = vunpack.c.h.b16 %v2225
    %v2292 = vunpack.c.l.b16 %v2226
    %v2293 = vunpack.c.h.b16 %v2226
    %v2294 = vunpack.c.l.b16 %v2227
    %v2295 = vunpack.c.h.b16 %v2227
    %v2296 = vunpack.c.l.b16 %v2228
    %v2297 = vunpack.c.h.b16 %v2228
    %v2298 = vunpack.c.l.b16 %v2229
    %v2299 = vunpack.c.h.b16 %v2229
    %v2300 = vunpack.c.l.b16 %v2230
    %v2301 = vunpack.c.h.b16 %v2230
    %v2302 = vunpack.c.l.b16 %v2231
    %v2303 = vunpack.c.h.b16 %v2231
    %v2304 = vunpack.c.l.b16 %v2232
    %v2305 = vunpack.c.h.b16 %v2232
    %v2306 = vunpack.c.l.b16 %v2233
    %v2307 = vunpack.c.h.b16 %v2233
    %v2308 = vunpack.c.l.b16 %v2234
    %v2309 = vunpack.c.h.b16 %v2234
    %v2310 = vunpack.c.l.b16 %v2235
    %v2311 = vunpack.c.h.b16 %v2235
    %v2312 = vunpack.c.l.b16 %v2236
    %v2313 = vunpack.c.h.b16 %v2236
    %v2314 = vunpack.c.l.b16 %v2237
    %v2315 = vunpack.c.h.b16 %v2237
    %v2316 = vunpack.c.l.b16 %v2238
    %v2317 = vunpack.c.h.b16 %v2238
    %v2318 = vunpack.c.l.b16 %v2239
    %v2319 = vunpack.c.h.b16 %v2239
    %v2320 = vunpack.c.l.b16 %v2240
    %v2321 = vunpack.c.h.b16 %v2240
    %v2322 = vunpack.c.l.b16 %v2241
    %v2323 = vunpack.c.h.b16 %v2241
    %v2324 = vunpack.c.l.b16 %v2242
    %v2325 = vunpack.c.h.b16 %v2242
    %v2326 = vunpack.c.l.b16 %v2243
    %v2327 = vunpack.c.h.b16 %v2243
    %v2328 = vunpack.c.l.b16 %v2244
    %v2329 = vunpack.c.h.b16 %v2244
    %v2330 = vunpack.c.l.b16 %v2245
    %v2331 = vunpack.c.h.b16 %v2245
    %v2332 = vunpack.c.l.b16 %v2246
    %v2333 = vunpack.c.h.b16 %v2246
    %v2334 = vunpack.c.l.b16 %v2247
    %v2335 = vunpack.c.h.b16 %v2247
    %v2336 = vunpack.c.l.b16 %v2248
    %v2337 = vunpack.c.h.b16 %v2248
    %v2338 = vunpack.c.l.b16 %v2249
    %v2339 = vunpack.c.h.b16 %v2249
    %v2340 = vunpack.c.l.b16 %v2250
    %v2341 = vunpack.c.h.b16 %v2250
    %v2342 = vunpack.c.l.b16 %v2251
    %v2343 = vunpack.c.h.b16 %v2251
    %v2344 = vunpack.c.l.b16 %v2252
    %v2345 = vunpack.c.h.b16 %v2252
    %v2346 = vunpack.c.l.b16 %v2253
    %v2347 = vunpack.c.h.b16 %v2253
    %v2348 = vunpack.c.l.b16 %v2254
    %v2349 = vunpack.c.h.b16 %v2254
    %v2350 = vunpack.c.l.b16 %v2255
    %v2351 = vunpack.c.h.b16 %v2255
    %v2352 = vpack.c.b16 %v2292, %v2288
    %v2353 = vpack.c.b16 %v2293, %v2289
    %v2354 = vpack.c.b16 %v2294, %v2290
    %v2355 = vpack.c.b16 %v2295, %v2291
    %v2356 = vpack.c.b16 %v2300, %v2296
    %v2357 = vpack.c.b16 %v2301, %v2297
    %v2358 = vpack.c.b16 %v2302, %v2298
    %v2359 = vpack.c.b16 %v2303, %v2299
    %v2360 = vpack.c.b16 %v2308, %v2304
    %v2361 = vpack.c.b16 %v2309, %v2305
    %v2362 = vpack.c.b16 %v2310, %v2306
    %v2363 = vpack.c.b16 %v2311, %v2307
    %v2364 = vpack.c.b16 %v2316, %v2312
    %v2365 = vpack.c.b16 %v2317, %v2313
    %v2366 = vpack.c.b16 %v2318, %v2314
    %v2367 = vpack.c.b16 %v2319, %v2315
    %v2368 = vpack.c.b16 %v2324, %v2320
    %v2369 = vpack.c.b16 %v2325, %v2321
    %v2370 = vpack.c.b16 %v2326, %v2322
    %v2371 = vpack.c.b16 %v2327, %v2323
    %v2372 = vpack.c.b16 %v2332, %v2328
    %v2373 = vpack.c.b16 %v2333, %v2329
    %v2374 = vpack.c.b16 %v2334, %v2330
    %v2375 = vpack.c.b16 %v2335, %v2331
    %v2376 = vpack.c.b16 %v2340, %v2336
    %v2377 = vpack.c.b16 %v2341, %v2337
    %v2378 = vpack.c.b16 %v2342, %v2338
    %v2379 = vpack.c.b16 %v2343, %v2339
    %v2380 = vpack.c.b16 %v2348, %v2344
    %v2381 = vpack.c.b16 %v2349, %v2345
    %v2382 = vpack.c.b16 %v2350, %v2346
    %v2383 = vpack.c.b16 %v2351, %v2347
    %2416 = vmatpush.bf16.msra.mxu0 %v2380
    %2417 = vmatpush.bf16.msra.mxu0 %v2376
    %2418 = vmatpush.bf16.msra.mxu0 %v2372
    %2419 = vmatpush.bf16.msra.mxu0 %v2368
    %2420 = vmatpush.bf16.msra.mxu0 %v2364
    %2421 = vmatpush.bf16.msra.mxu0 %v2360
    %2422 = vmatpush.bf16.msra.mxu0 %v2356
    %2423 = vmatpush.bf16.msra.mxu0 %v2352
    %2424 = vmatmul.bf16.gmra.mxu0 %v2218
    %v2425 = vpop.f32.mrf.mxu0
    %v2426 = vadd.f32 0.0, %v2425
    %v2427 = vpop.f32.mrf.mxu0
    %2428 = vdwg.mxu0
    %2429 = vmatpush.bf16.msra.mxu0 %v2381
    %2430 = vmatpush.bf16.msra.mxu0 %v2377
    %2431 = vmatpush.bf16.msra.mxu0 %v2373
    %2432 = vmatpush.bf16.msra.mxu0 %v2369
    %2433 = vmatpush.bf16.msra.mxu0 %v2365
    %2434 = vmatpush.bf16.msra.mxu0 %v2361
    %2435 = vmatpush.bf16.msra.mxu0 %v2357
    %2436 = vmatpush.bf16.msra.mxu0 %v2353
    %2437 = vmatmul.bf16.gmra.mxu0 %v2218
    %v2438 = vpop.f32.mrf.mxu0
    %v2439 = vadd.f32 0.0, %v2438
    %v2440 = vpop.f32.mrf.mxu0
    %2441 = vdwg.mxu0
    %2442 = vmatpush.bf16.msra.mxu0 %v2382
    %2443 = vmatpush.bf16.msra.mxu0 %v2378
    %2444 = vmatpush.bf16.msra.mxu0 %v2374
    %2445 = vmatpush.bf16.msra.mxu0 %v2370
    %2446 = vmatpush.bf16.msra.mxu0 %v2366
    %2447 = vmatpush.bf16.msra.mxu0 %v2362
    %2448 = vmatpush.bf16.msra.mxu0 %v2358
    %2449 = vmatpush.bf16.msra.mxu0 %v2354
    %2450 = vmatmul.bf16.gmra.mxu0 %v2218
    %v2451 = vpop.f32.mrf.mxu0
    %v2452 = vadd.f32 0.0, %v2451
    %v2453 = vpop.f32.mrf.mxu0
    %2454 = vdwg.mxu0
    %2455 = vmatpush.bf16.msra.mxu0 %v2383
    %2456 = vmatpush.bf16.msra.mxu0 %v2379
    %2457 = vmatpush.bf16.msra.mxu0 %v2375
    %2458 = vmatpush.bf16.msra.mxu0 %v2371
    %2459 = vmatpush.bf16.msra.mxu0 %v2367
    %2460 = vmatpush.bf16.msra.mxu0 %v2363
    %2461 = vmatpush.bf16.msra.mxu0 %v2359
    %2462 = vmatpush.bf16.msra.mxu0 %v2355
    %2463 = vmatmul.bf16.gmra.mxu0 %v2218
    %v2464 = vpop.f32.mrf.mxu0
    %v2465 = vadd.f32 0.0, %v2464
    %v2466 = vpop.f32.mrf.mxu0
    %2467 = vdwg.mxu0
    %v2468 = vadd.f32 %v2220, %v2426
    %v2469 = vadd.f32 %v2221, %v2439
    %v2470 = vadd.f32 %v2222, %v2452
    %v2471 = vadd.f32 %v2223, %v2465
    %v2472 = vxor.u32 %v2468, 2147483648
    %v2473 = vmul.f32 %v2472, 1.442695
    %v2474 = vpow.pop %v2473
    %v2475 = vadd.f32 %v2474, 1.0
    %v2476 = vrcp.pop %v2475
    %v2477 = vmul.f32 %v2475, %v2476
    %v2478 = vsub.f32 1.0, %v2477
    %v2479 = vmul.f32 %v2476, %v2478
    %v2480 = vadd.f32 %v2476, %v2479
    %vm2481 = vweird.f32 %v2475
    %vm2482 = vweird.f32 %v2476
    %vm2483 = vmor %vm2481, %vm2482
    %v2484 = vsel %vm2483, %v2476, %v2480
    %v2485 = vand.u32 2147483647, %v2475
    %vm2486 = vcmp.eq.f32.partialorder %v2485, 8.507059e+37
    %v2487 = vand.u32 %v2475, 2147483648
    %v2488 = vor.u32 1.1754944e-38, %v2487
    %v2489 = vsel %vm2486, %v2488, %v2484
    %v2490 = vmul.f32 1.0, %v2489
    %v2491 = vxor.u32 %v2469, 2147483648
    %v2492 = vmul.f32 %v2491, 1.442695
    %v2493 = vpow.pop %v2492
    %v2494 = vadd.f32 %v2493, 1.0
    %v2495 = vrcp.pop %v2494
    %v2496 = vmul.f32 %v2494, %v2495
    %v2497 = vsub.f32 1.0, %v2496
    %v2498 = vmul.f32 %v2495, %v2497
    %v2499 = vadd.f32 %v2495, %v2498
    %vm2500 = vweird.f32 %v2494
    %vm2501 = vweird.f32 %v2495
    %vm2502 = vmor %vm2500, %vm2501
    %v2503 = vsel %vm2502, %v2495, %v2499
    %v2504 = vand.u32 2147483647, %v2494
    %vm2505 = vcmp.eq.f32.partialorder %v2504, 8.507059e+37
    %v2506 = vand.u32 %v2494, 2147483648
    %v2507 = vor.u32 1.1754944e-38, %v2506
    %v2508 = vsel %vm2505, %v2507, %v2503
    %v2509 = vmul.f32 1.0, %v2508
    %v2510 = vtanh.pop %v2470
    %v2511 = vxor.u32 %v2471, 2147483648
    %v2512 = vmul.f32 %v2511, 1.442695
    %v2513 = vpow.pop %v2512
    %v2514 = vadd.f32 %v2513, 1.0
    %v2515 = vrcp.pop %v2514
    %v2516 = vmul.f32 %v2514, %v2515
    %v2517 = vsub.f32 1.0, %v2516
    %v2518 = vmul.f32 %v2515, %v2517
    %v2519 = vadd.f32 %v2515, %v2518
    %vm2520 = vweird.f32 %v2514
    %vm2521 = vweird.f32 %v2515
    %vm2522 = vmor %vm2520, %vm2521
    %v2523 = vsel %vm2522, %v2515, %v2519
    %v2524 = vand.u32 2147483647, %v2514
    %vm2525 = vcmp.eq.f32.partialorder %v2524, 8.507059e+37
    %v2526 = vand.u32 %v2514, 2147483648
    %v2527 = vor.u32 1.1754944e-38, %v2526
    %v2528 = vsel %vm2525, %v2527, %v2523
    %v2529 = vmul.f32 1.0, %v2528
    %v2530 = vmul.f32 %v2509, %v2213
    %v2531 = vmul.f32 %v2490, %v2510
    %v2532 = vadd.f32 %v2530, %v2531
    %v2533 = vtanh.pop %v2532
    %v2534 = vmul.f32 %v2529, %v2533
    %s2535 = scalar_lea.vmem [#allocation2], 48
    %2536 = vst [vmem:[%s2535] sm:$0xff] %v2534
    %v2537 = vpack.c.bf16 %v2534, %v2534
    %s2538 = scalar_lea.vmem [#allocation3], 224
    %v2539 = vld [vmem:[%s2538] sm:$0xff]
    %v2540 = vld [vmem:[%s2538 + $0x8] sm:$0xff]
    %v2541 = vld [vmem:[%s2538 + $0x10] sm:$0xff]
    %v2542 = vld [vmem:[%s2538 + $0x18] sm:$0xff]
    %v2543 = vld [vmem:[#allocation4] sm:$0xff]
    %v2544 = vld [vmem:[#allocation4 + $0x8] sm:$0xff]
    %v2545 = vld [vmem:[#allocation4 + $0x10] sm:$0xff]
    %v2546 = vld [vmem:[#allocation4 + $0x18] sm:$0xff]
    %v2547 = vld [vmem:[#allocation4 + $0x20] sm:$0xff]
    %v2548 = vld [vmem:[#allocation4 + $0x28] sm:$0xff]
    %v2549 = vld [vmem:[#allocation4 + $0x30] sm:$0xff]
    %v2550 = vld [vmem:[#allocation4 + $0x38] sm:$0xff]
    %v2551 = vld [vmem:[#allocation4 + $0x40] sm:$0xff]
    %v2552 = vld [vmem:[#allocation4 + $0x48] sm:$0xff]
    %v2553 = vld [vmem:[#allocation4 + $0x50] sm:$0xff]
    %v2554 = vld [vmem:[#allocation4 + $0x58] sm:$0xff]
    %v2555 = vld [vmem:[#allocation4 + $0x60] sm:$0xff]
    %v2556 = vld [vmem:[#allocation4 + $0x68] sm:$0xff]
    %v2557 = vld [vmem:[#allocation4 + $0x70] sm:$0xff]
    %v2558 = vld [vmem:[#allocation4 + $0x78] sm:$0xff]
    %v2559 = vld [vmem:[#allocation4 + $0x80] sm:$0xff]
    %v2560 = vld [vmem:[#allocation4 + $0x88] sm:$0xff]
    %v2561 = vld [vmem:[#allocation4 + $0x90] sm:$0xff]
    %v2562 = vld [vmem:[#allocation4 + $0x98] sm:$0xff]
    %v2563 = vld [vmem:[#allocation4 + $0xa0] sm:$0xff]
    %v2564 = vld [vmem:[#allocation4 + $0xa8] sm:$0xff]
    %v2565 = vld [vmem:[#allocation4 + $0xb0] sm:$0xff]
    %v2566 = vld [vmem:[#allocation4 + $0xb8] sm:$0xff]
    %v2567 = vld [vmem:[#allocation4 + $0xc0] sm:$0xff]
    %v2568 = vld [vmem:[#allocation4 + $0xc8] sm:$0xff]
    %v2569 = vld [vmem:[#allocation4 + $0xd0] sm:$0xff]
    %v2570 = vld [vmem:[#allocation4 + $0xd8] sm:$0xff]
    %v2571 = vld [vmem:[#allocation4 + $0xe0] sm:$0xff]
    %v2572 = vld [vmem:[#allocation4 + $0xe8] sm:$0xff]
    %v2573 = vld [vmem:[#allocation4 + $0xf0] sm:$0xff]
    %v2574 = vld [vmem:[#allocation4 + $0xf8] sm:$0xff]
    %v2607 = vunpack.c.l.b16 %v2543
    %v2608 = vunpack.c.h.b16 %v2543
    %v2609 = vunpack.c.l.b16 %v2544
    %v2610 = vunpack.c.h.b16 %v2544
    %v2611 = vunpack.c.l.b16 %v2545
    %v2612 = vunpack.c.h.b16 %v2545
    %v2613 = vunpack.c.l.b16 %v2546
    %v2614 = vunpack.c.h.b16 %v2546
    %v2615 = vunpack.c.l.b16 %v2547
    %v2616 = vunpack.c.h.b16 %v2547
    %v2617 = vunpack.c.l.b16 %v2548
    %v2618 = vunpack.c.h.b16 %v2548
    %v2619 = vunpack.c.l.b16 %v2549
    %v2620 = vunpack.c.h.b16 %v2549
    %v2621 = vunpack.c.l.b16 %v2550
    %v2622 = vunpack.c.h.b16 %v2550
    %v2623 = vunpack.c.l.b16 %v2551
    %v2624 = vunpack.c.h.b16 %v2551
    %v2625 = vunpack.c.l.b16 %v2552
    %v2626 = vunpack.c.h.b16 %v2552
    %v2627 = vunpack.c.l.b16 %v2553
    %v2628 = vunpack.c.h.b16 %v2553
    %v2629 = vunpack.c.l.b16 %v2554
    %v2630 = vunpack.c.h.b16 %v2554
    %v2631 = vunpack.c.l.b16 %v2555
    %v2632 = vunpack.c.h.b16 %v2555
    %v2633 = vunpack.c.l.b16 %v2556
    %v2634 = vunpack.c.h.b16 %v2556
    %v2635 = vunpack.c.l.b16 %v2557
    %v2636 = vunpack.c.h.b16 %v2557
    %v2637 = vunpack.c.l.b16 %v2558
    %v2638 = vunpack.c.h.b16 %v2558
    %v2639 = vunpack.c.l.b16 %v2559
    %v2640 = vunpack.c.h.b16 %v2559
    %v2641 = vunpack.c.l.b16 %v2560
    %v2642 = vunpack.c.h.b16 %v2560
    %v2643 = vunpack.c.l.b16 %v2561
    %v2644 = vunpack.c.h.b16 %v2561
    %v2645 = vunpack.c.l.b16 %v2562
    %v2646 = vunpack.c.h.b16 %v2562
    %v2647 = vunpack.c.l.b16 %v2563
    %v2648 = vunpack.c.h.b16 %v2563
    %v2649 = vunpack.c.l.b16 %v2564
    %v2650 = vunpack.c.h.b16 %v2564
    %v2651 = vunpack.c.l.b16 %v2565
    %v2652 = vunpack.c.h.b16 %v2565
    %v2653 = vunpack.c.l.b16 %v2566
    %v2654 = vunpack.c.h.b16 %v2566
    %v2655 = vunpack.c.l.b16 %v2567
    %v2656 = vunpack.c.h.b16 %v2567
    %v2657 = vunpack.c.l.b16 %v2568
    %v2658 = vunpack.c.h.b16 %v2568
    %v2659 = vunpack.c.l.b16 %v2569
    %v2660 = vunpack.c.h.b16 %v2569
    %v2661 = vunpack.c.l.b16 %v2570
    %v2662 = vunpack.c.h.b16 %v2570
    %v2663 = vunpack.c.l.b16 %v2571
    %v2664 = vunpack.c.h.b16 %v2571
    %v2665 = vunpack.c.l.b16 %v2572
    %v2666 = vunpack.c.h.b16 %v2572
    %v2667 = vunpack.c.l.b16 %v2573
    %v2668 = vunpack.c.h.b16 %v2573
    %v2669 = vunpack.c.l.b16 %v2574
    %v2670 = vunpack.c.h.b16 %v2574
    %v2671 = vpack.c.b16 %v2611, %v2607
    %v2672 = vpack.c.b16 %v2612, %v2608
    %v2673 = vpack.c.b16 %v2613, %v2609
    %v2674 = vpack.c.b16 %v2614, %v2610
    %v2675 = vpack.c.b16 %v2619, %v2615
    %v2676 = vpack.c.b16 %v2620, %v2616
    %v2677 = vpack.c.b16 %v2621, %v2617
    %v2678 = vpack.c.b16 %v2622, %v2618
    %v2679 = vpack.c.b16 %v2627, %v2623
    %v2680 = vpack.c.b16 %v2628, %v2624
    %v2681 = vpack.c.b16 %v2629, %v2625
    %v2682 = vpack.c.b16 %v2630, %v2626
    %v2683 = vpack.c.b16 %v2635, %v2631
    %v2684 = vpack.c.b16 %v2636, %v2632
    %v2685 = vpack.c.b16 %v2637, %v2633
    %v2686 = vpack.c.b16 %v2638, %v2634
    %v2687 = vpack.c.b16 %v2643, %v2639
    %v2688 = vpack.c.b16 %v2644, %v2640
    %v2689 = vpack.c.b16 %v2645, %v2641
    %v2690 = vpack.c.b16 %v2646, %v2642
    %v2691 = vpack.c.b16 %v2651, %v2647
    %v2692 = vpack.c.b16 %v2652, %v2648
    %v2693 = vpack.c.b16 %v2653, %v2649
    %v2694 = vpack.c.b16 %v2654, %v2650
    %v2695 = vpack.c.b16 %v2659, %v2655
    %v2696 = vpack.c.b16 %v2660, %v2656
    %v2697 = vpack.c.b16 %v2661, %v2657
    %v2698 = vpack.c.b16 %v2662, %v2658
    %v2699 = vpack.c.b16 %v2667, %v2663
    %v2700 = vpack.c.b16 %v2668, %v2664
    %v2701 = vpack.c.b16 %v2669, %v2665
    %v2702 = vpack.c.b16 %v2670, %v2666
    %2735 = vmatpush.bf16.msra.mxu0 %v2699
    %2736 = vmatpush.bf16.msra.mxu0 %v2695
    %2737 = vmatpush.bf16.msra.mxu0 %v2691
    %2738 = vmatpush.bf16.msra.mxu0 %v2687
    %2739 = vmatpush.bf16.msra.mxu0 %v2683
    %2740 = vmatpush.bf16.msra.mxu0 %v2679
    %2741 = vmatpush.bf16.msra.mxu0 %v2675
    %2742 = vmatpush.bf16.msra.mxu0 %v2671
    %2743 = vmatmul.bf16.gmra.mxu0 %v2537
    %v2744 = vpop.f32.mrf.mxu0
    %v2745 = vadd.f32 0.0, %v2744
    %v2746 = vpop.f32.mrf.mxu0
    %2747 = vdwg.mxu0
    %2748 = vmatpush.bf16.msra.mxu0 %v2700
    %2749 = vmatpush.bf16.msra.mxu0 %v2696
    %2750 = vmatpush.bf16.msra.mxu0 %v2692
    %2751 = vmatpush.bf16.msra.mxu0 %v2688
    %2752 = vmatpush.bf16.msra.mxu0 %v2684
    %2753 = vmatpush.bf16.msra.mxu0 %v2680
    %2754 = vmatpush.bf16.msra.mxu0 %v2676
    %2755 = vmatpush.bf16.msra.mxu0 %v2672
    %2756 = vmatmul.bf16.gmra.mxu0 %v2537
    %v2757 = vpop.f32.mrf.mxu0
    %v2758 = vadd.f32 0.0, %v2757
    %v2759 = vpop.f32.mrf.mxu0
    %2760 = vdwg.mxu0
    %2761 = vmatpush.bf16.msra.mxu0 %v2701
    %2762 = vmatpush.bf16.msra.mxu0 %v2697
    %2763 = vmatpush.bf16.msra.mxu0 %v2693
    %2764 = vmatpush.bf16.msra.mxu0 %v2689
    %2765 = vmatpush.bf16.msra.mxu0 %v2685
    %2766 = vmatpush.bf16.msra.mxu0 %v2681
    %2767 = vmatpush.bf16.msra.mxu0 %v2677
    %2768 = vmatpush.bf16.msra.mxu0 %v2673
    %2769 = vmatmul.bf16.gmra.mxu0 %v2537
    %v2770 = vpop.f32.mrf.mxu0
    %v2771 = vadd.f32 0.0, %v2770
    %v2772 = vpop.f32.mrf.mxu0
    %2773 = vdwg.mxu0
    %2774 = vmatpush.bf16.msra.mxu0 %v2702
    %2775 = vmatpush.bf16.msra.mxu0 %v2698
    %2776 = vmatpush.bf16.msra.mxu0 %v2694
    %2777 = vmatpush.bf16.msra.mxu0 %v2690
    %2778 = vmatpush.bf16.msra.mxu0 %v2686
    %2779 = vmatpush.bf16.msra.mxu0 %v2682
    %2780 = vmatpush.bf16.msra.mxu0 %v2678
    %2781 = vmatpush.bf16.msra.mxu0 %v2674
    %2782 = vmatmul.bf16.gmra.mxu0 %v2537
    %v2783 = vpop.f32.mrf.mxu0
    %v2784 = vadd.f32 0.0, %v2783
    %v2785 = vpop.f32.mrf.mxu0
    %2786 = vdwg.mxu0
    %v2787 = vadd.f32 %v2539, %v2745
    %v2788 = vadd.f32 %v2540, %v2758
    %v2789 = vadd.f32 %v2541, %v2771
    %v2790 = vadd.f32 %v2542, %v2784
    %v2791 = vxor.u32 %v2787, 2147483648
    %v2792 = vmul.f32 %v2791, 1.442695
    %v2793 = vpow.pop %v2792
    %v2794 = vadd.f32 %v2793, 1.0
    %v2795 = vrcp.pop %v2794
    %v2796 = vmul.f32 %v2794, %v2795
    %v2797 = vsub.f32 1.0, %v2796
    %v2798 = vmul.f32 %v2795, %v2797
    %v2799 = vadd.f32 %v2795, %v2798
    %vm2800 = vweird.f32 %v2794
    %vm2801 = vweird.f32 %v2795
    %vm2802 = vmor %vm2800, %vm2801
    %v2803 = vsel %vm2802, %v2795, %v2799
    %v2804 = vand.u32 2147483647, %v2794
    %vm2805 = vcmp.eq.f32.partialorder %v2804, 8.507059e+37
    %v2806 = vand.u32 %v2794, 2147483648
    %v2807 = vor.u32 1.1754944e-38, %v2806
    %v2808 = vsel %vm2805, %v2807, %v2803
    %v2809 = vmul.f32 1.0, %v2808
    %v2810 = vxor.u32 %v2788, 2147483648
    %v2811 = vmul.f32 %v2810, 1.442695
    %v2812 = vpow.pop %v2811
    %v2813 = vadd.f32 %v2812, 1.0
    %v2814 = vrcp.pop %v2813
    %v2815 = vmul.f32 %v2813, %v2814
    %v2816 = vsub.f32 1.0, %v2815
    %v2817 = vmul.f32 %v2814, %v2816
    %v2818 = vadd.f32 %v2814, %v2817
    %vm2819 = vweird.f32 %v2813
    %vm2820 = vweird.f32 %v2814
    %vm2821 = vmor %vm2819, %vm2820
    %v2822 = vsel %vm2821, %v2814, %v2818
    %v2823 = vand.u32 2147483647, %v2813
    %vm2824 = vcmp.eq.f32.partialorder %v2823, 8.507059e+37
    %v2825 = vand.u32 %v2813, 2147483648
    %v2826 = vor.u32 1.1754944e-38, %v2825
    %v2827 = vsel %vm2824, %v2826, %v2822
    %v2828 = vmul.f32 1.0, %v2827
    %v2829 = vtanh.pop %v2789
    %v2830 = vxor.u32 %v2790, 2147483648
    %v2831 = vmul.f32 %v2830, 1.442695
    %v2832 = vpow.pop %v2831
    %v2833 = vadd.f32 %v2832, 1.0
    %v2834 = vrcp.pop %v2833
    %v2835 = vmul.f32 %v2833, %v2834
    %v2836 = vsub.f32 1.0, %v2835
    %v2837 = vmul.f32 %v2834, %v2836
    %v2838 = vadd.f32 %v2834, %v2837
    %vm2839 = vweird.f32 %v2833
    %vm2840 = vweird.f32 %v2834
    %vm2841 = vmor %vm2839, %vm2840
    %v2842 = vsel %vm2841, %v2834, %v2838
    %v2843 = vand.u32 2147483647, %v2833
    %vm2844 = vcmp.eq.f32.partialorder %v2843, 8.507059e+37
    %v2845 = vand.u32 %v2833, 2147483648
    %v2846 = vor.u32 1.1754944e-38, %v2845
    %v2847 = vsel %vm2844, %v2846, %v2842
    %v2848 = vmul.f32 1.0, %v2847
    %v2849 = vmul.f32 %v2828, %v2532
    %v2850 = vmul.f32 %v2809, %v2829
    %v2851 = vadd.f32 %v2849, %v2850
    %v2852 = vtanh.pop %v2851
    %v2853 = vmul.f32 %v2848, %v2852
    %s2854 = scalar_lea.vmem [#allocation2], 56
    %2855 = vst [vmem:[%s2854] sm:$0xff] %v2853
    %v2856 = vld [vmem:[#allocation2] sm:$0xff]
    %v2857 = vld [vmem:[#allocation2 + $0x8] sm:$0xff]
    %v2858 = vld [vmem:[#allocation2 + $0x10] sm:$0xff]
    %v2859 = vld [vmem:[#allocation2 + $0x18] sm:$0xff]
    %v2860 = vld [vmem:[#allocation2 + $0x20] sm:$0xff]
    %v2861 = vld [vmem:[#allocation2 + $0x28] sm:$0xff]
    %v2862 = vld [vmem:[#allocation2 + $0x30] sm:$0xff]
    %v2863 = vld [vmem:[#allocation2 + $0x38] sm:$0xff]
    %v2864 = vpack.c.bf16 %v2857, %v2856
    %v2865 = vpack.c.bf16 %v2859, %v2858
    %v2866 = vpack.c.bf16 %v2861, %v2860
    %v2867 = vpack.c.bf16 %v2863, %v2862
    %v2868 = vld [vmem:[#allocation7] sm:$0xff]
    %v2869 = vld [vmem:[#allocation7 + $0x8] sm:$0xff]
    %v2870 = vld [vmem:[#allocation7 + $0x10] sm:$0xff]
    %v2871 = vld [vmem:[#allocation7 + $0x18] sm:$0xff]
    %v2872 = vld [vmem:[#allocation7 + $0x20] sm:$0xff]
    %v2873 = vld [vmem:[#allocation7 + $0x28] sm:$0xff]
    %v2874 = vld [vmem:[#allocation7 + $0x30] sm:$0xff]
    %v2875 = vld [vmem:[#allocation7 + $0x38] sm:$0xff]
    %v2876 = vld [vmem:[#allocation7 + $0x40] sm:$0xff]
    %v2877 = vld [vmem:[#allocation7 + $0x48] sm:$0xff]
    %v2878 = vld [vmem:[#allocation7 + $0x50] sm:$0xff]
    %v2879 = vld [vmem:[#allocation7 + $0x58] sm:$0xff]
    %v2880 = vld [vmem:[#allocation7 + $0x60] sm:$0xff]
    %v2881 = vld [vmem:[#allocation7 + $0x68] sm:$0xff]
    %v2882 = vld [vmem:[#allocation7 + $0x70] sm:$0xff]
    %v2883 = vld [vmem:[#allocation7 + $0x78] sm:$0xff]
    %v2884 = vld [vmem:[#allocation7 + $0x80] sm:$0xff]
    %v2885 = vld [vmem:[#allocation7 + $0x88] sm:$0xff]
    %v2886 = vld [vmem:[#allocation7 + $0x90] sm:$0xff]
    %v2887 = vld [vmem:[#allocation7 + $0x98] sm:$0xff]
    %v2888 = vld [vmem:[#allocation7 + $0xa0] sm:$0xff]
    %v2889 = vld [vmem:[#allocation7 + $0xa8] sm:$0xff]
    %v2890 = vld [vmem:[#allocation7 + $0xb0] sm:$0xff]
    %v2891 = vld [vmem:[#allocation7 + $0xb8] sm:$0xff]
    %v2892 = vld [vmem:[#allocation7 + $0xc0] sm:$0xff]
    %v2893 = vld [vmem:[#allocation7 + $0xc8] sm:$0xff]
    %v2894 = vld [vmem:[#allocation7 + $0xd0] sm:$0xff]
    %v2895 = vld [vmem:[#allocation7 + $0xd8] sm:$0xff]
    %v2896 = vld [vmem:[#allocation7 + $0xe0] sm:$0xff]
    %v2897 = vld [vmem:[#allocation7 + $0xe8] sm:$0xff]
    %v2898 = vld [vmem:[#allocation7 + $0xf0] sm:$0xff]
    %v2899 = vld [vmem:[#allocation7 + $0xf8] sm:$0xff]
    %v2932 = vunpack.c.l.b16 %v2868
    %v2933 = vunpack.c.h.b16 %v2868
    %v2934 = vunpack.c.l.b16 %v2869
    %v2935 = vunpack.c.h.b16 %v2869
    %v2936 = vunpack.c.l.b16 %v2870
    %v2937 = vunpack.c.h.b16 %v2870
    %v2938 = vunpack.c.l.b16 %v2871
    %v2939 = vunpack.c.h.b16 %v2871
    %v2940 = vunpack.c.l.b16 %v2872
    %v2941 = vunpack.c.h.b16 %v2872
    %v2942 = vunpack.c.l.b16 %v2873
    %v2943 = vunpack.c.h.b16 %v2873
    %v2944 = vunpack.c.l.b16 %v2874
    %v2945 = vunpack.c.h.b16 %v2874
    %v2946 = vunpack.c.l.b16 %v2875
    %v2947 = vunpack.c.h.b16 %v2875
    %v2948 = vunpack.c.l.b16 %v2876
    %v2949 = vunpack.c.h.b16 %v2876
    %v2950 = vunpack.c.l.b16 %v2877
    %v2951 = vunpack.c.h.b16 %v2877
    %v2952 = vunpack.c.l.b16 %v2878
    %v2953 = vunpack.c.h.b16 %v2878
    %v2954 = vunpack.c.l.b16 %v2879
    %v2955 = vunpack.c.h.b16 %v2879
    %v2956 = vunpack.c.l.b16 %v2880
    %v2957 = vunpack.c.h.b16 %v2880
    %v2958 = vunpack.c.l.b16 %v2881
    %v2959 = vunpack.c.h.b16 %v2881
    %v2960 = vunpack.c.l.b16 %v2882
    %v2961 = vunpack.c.h.b16 %v2882
    %v2962 = vunpack.c.l.b16 %v2883
    %v2963 = vunpack.c.h.b16 %v2883
    %v2964 = vunpack.c.l.b16 %v2884
    %v2965 = vunpack.c.h.b16 %v2884
    %v2966 = vunpack.c.l.b16 %v2885
    %v2967 = vunpack.c.h.b16 %v2885
    %v2968 = vunpack.c.l.b16 %v2886
    %v2969 = vunpack.c.h.b16 %v2886
    %v2970 = vunpack.c.l.b16 %v2887
    %v2971 = vunpack.c.h.b16 %v2887
    %v2972 = vunpack.c.l.b16 %v2888
    %v2973 = vunpack.c.h.b16 %v2888
    %v2974 = vunpack.c.l.b16 %v2889
    %v2975 = vunpack.c.h.b16 %v2889
    %v2976 = vunpack.c.l.b16 %v2890
    %v2977 = vunpack.c.h.b16 %v2890
    %v2978 = vunpack.c.l.b16 %v2891
    %v2979 = vunpack.c.h.b16 %v2891
    %v2980 = vunpack.c.l.b16 %v2892
    %v2981 = vunpack.c.h.b16 %v2892
    %v2982 = vunpack.c.l.b16 %v2893
    %v2983 = vunpack.c.h.b16 %v2893
    %v2984 = vunpack.c.l.b16 %v2894
    %v2985 = vunpack.c.h.b16 %v2894
    %v2986 = vunpack.c.l.b16 %v2895
    %v2987 = vunpack.c.h.b16 %v2895
    %v2988 = vunpack.c.l.b16 %v2896
    %v2989 = vunpack.c.h.b16 %v2896
    %v2990 = vunpack.c.l.b16 %v2897
    %v2991 = vunpack.c.h.b16 %v2897
    %v2992 = vunpack.c.l.b16 %v2898
    %v2993 = vunpack.c.h.b16 %v2898
    %v2994 = vunpack.c.l.b16 %v2899
    %v2995 = vunpack.c.h.b16 %v2899
    %v2996 = vpack.c.b16 %v2936, %v2932
    %v2997 = vpack.c.b16 %v2937, %v2933
    %v2998 = vpack.c.b16 %v2938, %v2934
    %v2999 = vpack.c.b16 %v2939, %v2935
    %v3000 = vpack.c.b16 %v2944, %v2940
    %v3001 = vpack.c.b16 %v2945, %v2941
    %v3002 = vpack.c.b16 %v2946, %v2942
    %v3003 = vpack.c.b16 %v2947, %v2943
    %v3004 = vpack.c.b16 %v2952, %v2948
    %v3005 = vpack.c.b16 %v2953, %v2949
    %v3006 = vpack.c.b16 %v2954, %v2950
    %v3007 = vpack.c.b16 %v2955, %v2951
    %v3008 = vpack.c.b16 %v2960, %v2956
    %v3009 = vpack.c.b16 %v2961, %v2957
    %v3010 = vpack.c.b16 %v2962, %v2958
    %v3011 = vpack.c.b16 %v2963, %v2959
    %v3012 = vpack.c.b16 %v2968, %v2964
    %v3013 = vpack.c.b16 %v2969, %v2965
    %v3014 = vpack.c.b16 %v2970, %v2966
    %v3015 = vpack.c.b16 %v2971, %v2967
    %v3016 = vpack.c.b16 %v2976, %v2972
    %v3017 = vpack.c.b16 %v2977, %v2973
    %v3018 = vpack.c.b16 %v2978, %v2974
    %v3019 = vpack.c.b16 %v2979, %v2975
    %v3020 = vpack.c.b16 %v2984, %v2980
    %v3021 = vpack.c.b16 %v2985, %v2981
    %v3022 = vpack.c.b16 %v2986, %v2982
    %v3023 = vpack.c.b16 %v2987, %v2983
    %v3024 = vpack.c.b16 %v2992, %v2988
    %v3025 = vpack.c.b16 %v2993, %v2989
    %v3026 = vpack.c.b16 %v2994, %v2990
    %v3027 = vpack.c.b16 %v2995, %v2991
    %3060 = vmatpush.bf16.msra.mxu0 %v3024
    %3061 = vmatpush.bf16.msra.mxu0 %v3020
    %3062 = vmatpush.bf16.msra.mxu0 %v3016
    %3063 = vmatpush.bf16.msra.mxu0 %v3012
    %3064 = vmatpush.bf16.msra.mxu0 %v3008
    %3065 = vmatpush.bf16.msra.mxu0 %v3004
    %3066 = vmatpush.bf16.msra.mxu0 %v3000
    %3067 = vmatpush.bf16.msra.mxu0 %v2996
    %3068 = vmatmul.bf16.gmra.mxu0 %v2864
    %v3069 = vpop.f32.mrf.mxu0
    %v3070 = vadd.f32 0.0, %v3069
    %v3071 = vpop.f32.mrf.mxu0
    %v3072 = vadd.f32 0.0, %v3071
    %3073 = vmatmul.bf16.gmra.mxu0 %v2865
    %v3074 = vpop.f32.mrf.mxu0
    %v3075 = vadd.f32 0.0, %v3074
    %v3076 = vpop.f32.mrf.mxu0
    %v3077 = vadd.f32 0.0, %v3076
    %3078 = vmatmul.bf16.gmra.mxu0 %v2866
    %v3079 = vpop.f32.mrf.mxu0
    %v3080 = vadd.f32 0.0, %v3079
    %v3081 = vpop.f32.mrf.mxu0
    %v3082 = vadd.f32 0.0, %v3081
    %3083 = vmatmul.bf16.gmra.mxu0 %v2867
    %v3084 = vpop.f32.mrf.mxu0
    %v3085 = vadd.f32 0.0, %v3084
    %v3086 = vpop.f32.mrf.mxu0
    %v3087 = vadd.f32 0.0, %v3086
    %3088 = vdwg.mxu0
    %3089 = vmatpush.bf16.msra.mxu0 %v3025
    %3090 = vmatpush.bf16.msra.mxu0 %v3021
    %3091 = vmatpush.bf16.msra.mxu0 %v3017
    %3092 = vmatpush.bf16.msra.mxu0 %v3013
    %3093 = vmatpush.bf16.msra.mxu0 %v3009
    %3094 = vmatpush.bf16.msra.mxu0 %v3005
    %3095 = vmatpush.bf16.msra.mxu0 %v3001
    %3096 = vmatpush.bf16.msra.mxu0 %v2997
    %3097 = vmatmul.bf16.gmra.mxu0 %v2864
    %v3098 = vpop.f32.mrf.mxu0
    %v3099 = vadd.f32 0.0, %v3098
    %v3100 = vpop.f32.mrf.mxu0
    %v3101 = vadd.f32 0.0, %v3100
    %3102 = vmatmul.bf16.gmra.mxu0 %v2865
    %v3103 = vpop.f32.mrf.mxu0
    %v3104 = vadd.f32 0.0, %v3103
    %v3105 = vpop.f32.mrf.mxu0
    %v3106 = vadd.f32 0.0, %v3105
    %3107 = vmatmul.bf16.gmra.mxu0 %v2866
    %v3108 = vpop.f32.mrf.mxu0
    %v3109 = vadd.f32 0.0, %v3108
    %v3110 = vpop.f32.mrf.mxu0
    %v3111 = vadd.f32 0.0, %v3110
    %3112 = vmatmul.bf16.gmra.mxu0 %v2867
    %v3113 = vpop.f32.mrf.mxu0
    %v3114 = vadd.f32 0.0, %v3113
    %v3115 = vpop.f32.mrf.mxu0
    %v3116 = vadd.f32 0.0, %v3115
    %3117 = vdwg.mxu0
    %3118 = vmatpush.bf16.msra.mxu0 %v3026
    %3119 = vmatpush.bf16.msra.mxu0 %v3022
    %3120 = vmatpush.bf16.msra.mxu0 %v3018
    %3121 = vmatpush.bf16.msra.mxu0 %v3014
    %3122 = vmatpush.bf16.msra.mxu0 %v3010
    %3123 = vmatpush.bf16.msra.mxu0 %v3006
    %3124 = vmatpush.bf16.msra.mxu0 %v3002
    %3125 = vmatpush.bf16.msra.mxu0 %v2998
    %3126 = vmatmul.bf16.gmra.mxu0 %v2864
    %v3127 = vpop.f32.mrf.mxu0
    %v3128 = vadd.f32 0.0, %v3127
    %v3129 = vpop.f32.mrf.mxu0
    %v3130 = vadd.f32 0.0, %v3129
    %3131 = vmatmul.bf16.gmra.mxu0 %v2865
    %v3132 = vpop.f32.mrf.mxu0
    %v3133 = vadd.f32 0.0, %v3132
    %v3134 = vpop.f32.mrf.mxu0
    %v3135 = vadd.f32 0.0, %v3134
    %3136 = vmatmul.bf16.gmra.mxu0 %v2866
    %v3137 = vpop.f32.mrf.mxu0
    %v3138 = vadd.f32 0.0, %v3137
    %v3139 = vpop.f32.mrf.mxu0
    %v3140 = vadd.f32 0.0, %v3139
    %3141 = vmatmul.bf16.gmra.mxu0 %v2867
    %v3142 = vpop.f32.mrf.mxu0
    %v3143 = vadd.f32 0.0, %v3142
    %v3144 = vpop.f32.mrf.mxu0
    %v3145 = vadd.f32 0.0, %v3144
    %3146 = vdwg.mxu0
    %3147 = vmatpush.bf16.msra.mxu0 %v3027
    %3148 = vmatpush.bf16.msra.mxu0 %v3023
    %3149 = vmatpush.bf16.msra.mxu0 %v3019
    %3150 = vmatpush.bf16.msra.mxu0 %v3015
    %3151 = vmatpush.bf16.msra.mxu0 %v3011
    %3152 = vmatpush.bf16.msra.mxu0 %v3007
    %3153 = vmatpush.bf16.msra.mxu0 %v3003
    %3154 = vmatpush.bf16.msra.mxu0 %v2999
    %3155 = vmatmul.bf16.gmra.mxu0 %v2864
    %v3156 = vpop.f32.mrf.mxu0
    %v3157 = vadd.f32 0.0, %v3156
    %v3158 = vpop.f32.mrf.mxu0
    %v3159 = vadd.f32 0.0, %v3158
    %3160 = vmatmul.bf16.gmra.mxu0 %v2865
    %v3161 = vpop.f32.mrf.mxu0
    %v3162 = vadd.f32 0.0, %v3161
    %v3163 = vpop.f32.mrf.mxu0
    %v3164 = vadd.f32 0.0, %v3163
    %3165 = vmatmul.bf16.gmra.mxu0 %v2866
    %v3166 = vpop.f32.mrf.mxu0
    %v3167 = vadd.f32 0.0, %v3166
    %v3168 = vpop.f32.mrf.mxu0
    %v3169 = vadd.f32 0.0, %v3168
    %3170 = vmatmul.bf16.gmra.mxu0 %v2867
    %v3171 = vpop.f32.mrf.mxu0
    %v3172 = vadd.f32 0.0, %v3171
    %v3173 = vpop.f32.mrf.mxu0
    %v3174 = vadd.f32 0.0, %v3173
    %3175 = vdwg.mxu0
    %v3176 = vld [vmem:[%s5] sm:$0xf]
    %v3178 = vperm.slane %v3176, 0
    %v3179 = vperm.slane %v3176, 1
    %v3180 = vperm.slane %v3176, 2
    %v3181 = vperm.slane %v3176, 3
    %v3186 = vadd.f32 %v3070, %v3178
    %v3187 = vadd.f32 %v3099, %v3179
    %v3188 = vadd.f32 %v3128, %v3180
    %v3189 = vadd.f32 %v3157, %v3181
    %v3190 = vadd.f32 %v3072, %v3178
    %v3191 = vadd.f32 %v3101, %v3179
    %v3192 = vadd.f32 %v3130, %v3180
    %v3193 = vadd.f32 %v3159, %v3181
    %v3194 = vadd.f32 %v3075, %v3178
    %v3195 = vadd.f32 %v3104, %v3179
    %v3196 = vadd.f32 %v3133, %v3180
    %v3197 = vadd.f32 %v3162, %v3181
    %v3198 = vadd.f32 %v3077, %v3178
    %v3199 = vadd.f32 %v3106, %v3179
    %v3200 = vadd.f32 %v3135, %v3180
    %v3201 = vadd.f32 %v3164, %v3181
    %v3202 = vadd.f32 %v3080, %v3178
    %v3203 = vadd.f32 %v3109, %v3179
    %v3204 = vadd.f32 %v3138, %v3180
    %v3205 = vadd.f32 %v3167, %v3181
    %v3206 = vadd.f32 %v3082, %v3178
    %v3207 = vadd.f32 %v3111, %v3179
    %v3208 = vadd.f32 %v3140, %v3180
    %v3209 = vadd.f32 %v3169, %v3181
    %v3210 = vadd.f32 %v3085, %v3178
    %v3211 = vadd.f32 %v3114, %v3179
    %v3212 = vadd.f32 %v3143, %v3180
    %v3213 = vadd.f32 %v3172, %v3181
    %v3214 = vadd.f32 %v3087, %v3178
    %v3215 = vadd.f32 %v3116, %v3179
    %v3216 = vadd.f32 %v3145, %v3180
    %v3217 = vadd.f32 %v3174, %v3181
    %3218 = vst [vmem:[#allocation3] sm:$0xff] %v3186
    %3219 = vst [vmem:[#allocation3 + $0x8] sm:$0xff] %v3187
    %3220 = vst [vmem:[#allocation3 + $0x10] sm:$0xff] %v3188
    %3221 = vst [vmem:[#allocation3 + $0x18] sm:$0xff] %v3189
    %3222 = vst [vmem:[#allocation3 + $0x20] sm:$0xff] %v3190
    %3223 = vst [vmem:[#allocation3 + $0x28] sm:$0xff] %v3191
    %3224 = vst [vmem:[#allocation3 + $0x30] sm:$0xff] %v3192
    %3225 = vst [vmem:[#allocation3 + $0x38] sm:$0xff] %v3193
    %3226 = vst [vmem:[#allocation3 + $0x40] sm:$0xff] %v3194
    %3227 = vst [vmem:[#allocation3 + $0x48] sm:$0xff] %v3195
    %3228 = vst [vmem:[#allocation3 + $0x50] sm:$0xff] %v3196
    %3229 = vst [vmem:[#allocation3 + $0x58] sm:$0xff] %v3197
    %3230 = vst [vmem:[#allocation3 + $0x60] sm:$0xff] %v3198
    %3231 = vst [vmem:[#allocation3 + $0x68] sm:$0xff] %v3199
    %3232 = vst [vmem:[#allocation3 + $0x70] sm:$0xff] %v3200
    %3233 = vst [vmem:[#allocation3 + $0x78] sm:$0xff] %v3201
    %3234 = vst [vmem:[#allocation3 + $0x80] sm:$0xff] %v3202
    %3235 = vst [vmem:[#allocation3 + $0x88] sm:$0xff] %v3203
    %3236 = vst [vmem:[#allocation3 + $0x90] sm:$0xff] %v3204
    %3237 = vst [vmem:[#allocation3 + $0x98] sm:$0xff] %v3205
    %3238 = vst [vmem:[#allocation3 + $0xa0] sm:$0xff] %v3206
    %3239 = vst [vmem:[#allocation3 + $0xa8] sm:$0xff] %v3207
    %3240 = vst [vmem:[#allocation3 + $0xb0] sm:$0xff] %v3208
    %3241 = vst [vmem:[#allocation3 + $0xb8] sm:$0xff] %v3209
    %3242 = vst [vmem:[#allocation3 + $0xc0] sm:$0xff] %v3210
    %3243 = vst [vmem:[#allocation3 + $0xc8] sm:$0xff] %v3211
    %3244 = vst [vmem:[#allocation3 + $0xd0] sm:$0xff] %v3212
    %3245 = vst [vmem:[#allocation3 + $0xd8] sm:$0xff] %v3213
    %3246 = vst [vmem:[#allocation3 + $0xe0] sm:$0xff] %v3214
    %3247 = vst [vmem:[#allocation3 + $0xe8] sm:$0xff] %v3215
    %3248 = vst [vmem:[#allocation3 + $0xf0] sm:$0xff] %v3216
    %3249 = vst [vmem:[#allocation3 + $0xf8] sm:$0xff] %v3217
    %v3250 = vld [vmem:[#allocation3] sm:$0xff]
    %v3251 = vld [vmem:[#allocation3 + $0x8] sm:$0xff]
    %v3252 = vld [vmem:[#allocation3 + $0x10] sm:$0xff]
    %v3253 = vld [vmem:[#allocation3 + $0x18] sm:$0xff]
    %v3254 = vld [vmem:[#allocation9] sm:$0xff]
    %v3255 = vld [vmem:[#allocation9 + $0x8] sm:$0xff]
    %v3256 = vld [vmem:[#allocation9 + $0x10] sm:$0xff]
    %v3257 = vld [vmem:[#allocation9 + $0x18] sm:$0xff]
    %v3258 = vld [vmem:[#allocation9 + $0x20] sm:$0xff]
    %v3259 = vld [vmem:[#allocation9 + $0x28] sm:$0xff]
    %v3260 = vld [vmem:[#allocation9 + $0x30] sm:$0xff]
    %v3261 = vld [vmem:[#allocation9 + $0x38] sm:$0xff]
    %v3262 = vld [vmem:[#allocation9 + $0x40] sm:$0xff]
    %v3263 = vld [vmem:[#allocation9 + $0x48] sm:$0xff]
    %v3264 = vld [vmem:[#allocation9 + $0x50] sm:$0xff]
    %v3265 = vld [vmem:[#allocation9 + $0x58] sm:$0xff]
    %v3266 = vld [vmem:[#allocation9 + $0x60] sm:$0xff]
    %v3267 = vld [vmem:[#allocation9 + $0x68] sm:$0xff]
    %v3268 = vld [vmem:[#allocation9 + $0x70] sm:$0xff]
    %v3269 = vld [vmem:[#allocation9 + $0x78] sm:$0xff]
    %v3270 = vld [vmem:[#allocation9 + $0x80] sm:$0xff]
    %v3271 = vld [vmem:[#allocation9 + $0x88] sm:$0xff]
    %v3272 = vld [vmem:[#allocation9 + $0x90] sm:$0xff]
    %v3273 = vld [vmem:[#allocation9 + $0x98] sm:$0xff]
    %v3274 = vld [vmem:[#allocation9 + $0xa0] sm:$0xff]
    %v3275 = vld [vmem:[#allocation9 + $0xa8] sm:$0xff]
    %v3276 = vld [vmem:[#allocation9 + $0xb0] sm:$0xff]
    %v3277 = vld [vmem:[#allocation9 + $0xb8] sm:$0xff]
    %v3278 = vld [vmem:[#allocation9 + $0xc0] sm:$0xff]
    %v3279 = vld [vmem:[#allocation9 + $0xc8] sm:$0xff]
    %v3280 = vld [vmem:[#allocation9 + $0xd0] sm:$0xff]
    %v3281 = vld [vmem:[#allocation9 + $0xd8] sm:$0xff]
    %v3282 = vld [vmem:[#allocation9 + $0xe0] sm:$0xff]
    %v3283 = vld [vmem:[#allocation9 + $0xe8] sm:$0xff]
    %v3284 = vld [vmem:[#allocation9 + $0xf0] sm:$0xff]
    %v3285 = vld [vmem:[#allocation9 + $0xf8] sm:$0xff]
    %v3318 = vunpack.c.l.b16 %v3254
    %v3319 = vunpack.c.h.b16 %v3254
    %v3320 = vunpack.c.l.b16 %v3255
    %v3321 = vunpack.c.h.b16 %v3255
    %v3322 = vunpack.c.l.b16 %v3256
    %v3323 = vunpack.c.h.b16 %v3256
    %v3324 = vunpack.c.l.b16 %v3257
    %v3325 = vunpack.c.h.b16 %v3257
    %v3326 = vunpack.c.l.b16 %v3258
    %v3327 = vunpack.c.h.b16 %v3258
    %v3328 = vunpack.c.l.b16 %v3259
    %v3329 = vunpack.c.h.b16 %v3259
    %v3330 = vunpack.c.l.b16 %v3260
    %v3331 = vunpack.c.h.b16 %v3260
    %v3332 = vunpack.c.l.b16 %v3261
    %v3333 = vunpack.c.h.b16 %v3261
    %v3334 = vunpack.c.l.b16 %v3262
    %v3335 = vunpack.c.h.b16 %v3262
    %v3336 = vunpack.c.l.b16 %v3263
    %v3337 = vunpack.c.h.b16 %v3263
    %v3338 = vunpack.c.l.b16 %v3264
    %v3339 = vunpack.c.h.b16 %v3264
    %v3340 = vunpack.c.l.b16 %v3265
    %v3341 = vunpack.c.h.b16 %v3265
    %v3342 = vunpack.c.l.b16 %v3266
    %v3343 = vunpack.c.h.b16 %v3266
    %v3344 = vunpack.c.l.b16 %v3267
    %v3345 = vunpack.c.h.b16 %v3267
    %v3346 = vunpack.c.l.b16 %v3268
    %v3347 = vunpack.c.h.b16 %v3268
    %v3348 = vunpack.c.l.b16 %v3269
    %v3349 = vunpack.c.h.b16 %v3269
    %v3350 = vunpack.c.l.b16 %v3270
    %v3351 = vunpack.c.h.b16 %v3270
    %v3352 = vunpack.c.l.b16 %v3271
    %v3353 = vunpack.c.h.b16 %v3271
    %v3354 = vunpack.c.l.b16 %v3272
    %v3355 = vunpack.c.h.b16 %v3272
    %v3356 = vunpack.c.l.b16 %v3273
    %v3357 = vunpack.c.h.b16 %v3273
    %v3358 = vunpack.c.l.b16 %v3274
    %v3359 = vunpack.c.h.b16 %v3274
    %v3360 = vunpack.c.l.b16 %v3275
    %v3361 = vunpack.c.h.b16 %v3275
    %v3362 = vunpack.c.l.b16 %v3276
    %v3363 = vunpack.c.h.b16 %v3276
    %v3364 = vunpack.c.l.b16 %v3277
    %v3365 = vunpack.c.h.b16 %v3277
    %v3366 = vunpack.c.l.b16 %v3278
    %v3367 = vunpack.c.h.b16 %v3278
    %v3368 = vunpack.c.l.b16 %v3279
    %v3369 = vunpack.c.h.b16 %v3279
    %v3370 = vunpack.c.l.b16 %v3280
    %v3371 = vunpack.c.h.b16 %v3280
    %v3372 = vunpack.c.l.b16 %v3281
    %v3373 = vunpack.c.h.b16 %v3281
    %v3374 = vunpack.c.l.b16 %v3282
    %v3375 = vunpack.c.h.b16 %v3282
    %v3376 = vunpack.c.l.b16 %v3283
    %v3377 = vunpack.c.h.b16 %v3283
    %v3378 = vunpack.c.l.b16 %v3284
    %v3379 = vunpack.c.h.b16 %v3284
    %v3380 = vunpack.c.l.b16 %v3285
    %v3381 = vunpack.c.h.b16 %v3285
    %v3382 = vpack.c.b16 %v3322, %v3318
    %v3383 = vpack.c.b16 %v3323, %v3319
    %v3384 = vpack.c.b16 %v3324, %v3320
    %v3385 = vpack.c.b16 %v3325, %v3321
    %v3386 = vpack.c.b16 %v3330, %v3326
    %v3387 = vpack.c.b16 %v3331, %v3327
    %v3388 = vpack.c.b16 %v3332, %v3328
    %v3389 = vpack.c.b16 %v3333, %v3329
    %v3390 = vpack.c.b16 %v3338, %v3334
    %v3391 = vpack.c.b16 %v3339, %v3335
    %v3392 = vpack.c.b16 %v3340, %v3336
    %v3393 = vpack.c.b16 %v3341, %v3337
    %v3394 = vpack.c.b16 %v3346, %v3342
    %v3395 = vpack.c.b16 %v3347, %v3343
    %v3396 = vpack.c.b16 %v3348, %v3344
    %v3397 = vpack.c.b16 %v3349, %v3345
    %v3398 = vpack.c.b16 %v3354, %v3350
    %v3399 = vpack.c.b16 %v3355, %v3351
    %v3400 = vpack.c.b16 %v3356, %v3352
    %v3401 = vpack.c.b16 %v3357, %v3353
    %v3402 = vpack.c.b16 %v3362, %v3358
    %v3403 = vpack.c.b16 %v3363, %v3359
    %v3404 = vpack.c.b16 %v3364, %v3360
    %v3405 = vpack.c.b16 %v3365, %v3361
    %v3406 = vpack.c.b16 %v3370, %v3366
    %v3407 = vpack.c.b16 %v3371, %v3367
    %v3408 = vpack.c.b16 %v3372, %v3368
    %v3409 = vpack.c.b16 %v3373, %v3369
    %v3410 = vpack.c.b16 %v3378, %v3374
    %v3411 = vpack.c.b16 %v3379, %v3375
    %v3412 = vpack.c.b16 %v3380, %v3376
    %v3413 = vpack.c.b16 %v3381, %v3377
    %3446 = vmatpush.bf16.msra.mxu0 %v3410
    %3447 = vmatpush.bf16.msra.mxu0 %v3406
    %3448 = vmatpush.bf16.msra.mxu0 %v3402
    %3449 = vmatpush.bf16.msra.mxu0 %v3398
    %3450 = vmatpush.bf16.msra.mxu0 %v3394
    %3451 = vmatpush.bf16.msra.mxu0 %v3390
    %3452 = vmatpush.bf16.msra.mxu0 %v3386
    %3453 = vmatpush.bf16.msra.mxu0 %v3382
    %3454 = vmatmul.bf16.gmra.mxu0 0
    %v3455 = vpop.f32.mrf.mxu0
    %v3456 = vadd.f32 0.0, %v3455
    %v3457 = vpop.f32.mrf.mxu0
    %3458 = vdwg.mxu0
    %3459 = vmatpush.bf16.msra.mxu0 %v3411
    %3460 = vmatpush.bf16.msra.mxu0 %v3407
    %3461 = vmatpush.bf16.msra.mxu0 %v3403
    %3462 = vmatpush.bf16.msra.mxu0 %v3399
    %3463 = vmatpush.bf16.msra.mxu0 %v3395
    %3464 = vmatpush.bf16.msra.mxu0 %v3391
    %3465 = vmatpush.bf16.msra.mxu0 %v3387
    %3466 = vmatpush.bf16.msra.mxu0 %v3383
    %3467 = vmatmul.bf16.gmra.mxu0 0
    %v3468 = vpop.f32.mrf.mxu0
    %v3469 = vadd.f32 0.0, %v3468
    %v3470 = vpop.f32.mrf.mxu0
    %3471 = vdwg.mxu0
    %3472 = vmatpush.bf16.msra.mxu0 %v3412
    %3473 = vmatpush.bf16.msra.mxu0 %v3408
    %3474 = vmatpush.bf16.msra.mxu0 %v3404
    %3475 = vmatpush.bf16.msra.mxu0 %v3400
    %3476 = vmatpush.bf16.msra.mxu0 %v3396
    %3477 = vmatpush.bf16.msra.mxu0 %v3392
    %3478 = vmatpush.bf16.msra.mxu0 %v3388
    %3479 = vmatpush.bf16.msra.mxu0 %v3384
    %3480 = vmatmul.bf16.gmra.mxu0 0
    %v3481 = vpop.f32.mrf.mxu0
    %v3482 = vadd.f32 0.0, %v3481
    %v3483 = vpop.f32.mrf.mxu0
    %3484 = vdwg.mxu0
    %3485 = vmatpush.bf16.msra.mxu0 %v3413
    %3486 = vmatpush.bf16.msra.mxu0 %v3409
    %3487 = vmatpush.bf16.msra.mxu0 %v3405
    %3488 = vmatpush.bf16.msra.mxu0 %v3401
    %3489 = vmatpush.bf16.msra.mxu0 %v3397
    %3490 = vmatpush.bf16.msra.mxu0 %v3393
    %3491 = vmatpush.bf16.msra.mxu0 %v3389
    %3492 = vmatpush.bf16.msra.mxu0 %v3385
    %3493 = vmatmul.bf16.gmra.mxu0 0
    %v3494 = vpop.f32.mrf.mxu0
    %v3495 = vadd.f32 0.0, %v3494
    %v3496 = vpop.f32.mrf.mxu0
    %3497 = vdwg.mxu0
    %v3498 = vadd.f32 %v3250, %v3456
    %v3499 = vadd.f32 %v3251, %v3469
    %v3500 = vadd.f32 %v3252, %v3482
    %v3501 = vadd.f32 %v3253, %v3495
    %v3502 = vxor.u32 %v3498, 2147483648
    %v3503 = vmul.f32 %v3502, 1.442695
    %v3504 = vpow.pop %v3503
    %v3505 = vadd.f32 %v3504, 1.0
    %v3506 = vrcp.pop %v3505
    %v3507 = vmul.f32 %v3505, %v3506
    %v3508 = vsub.f32 1.0, %v3507
    %v3509 = vmul.f32 %v3506, %v3508
    %v3510 = vadd.f32 %v3506, %v3509
    %vm3511 = vweird.f32 %v3505
    %vm3512 = vweird.f32 %v3506
    %vm3513 = vmor %vm3511, %vm3512
    %v3514 = vsel %vm3513, %v3506, %v3510
    %v3515 = vand.u32 2147483647, %v3505
    %vm3516 = vcmp.eq.f32.partialorder %v3515, 8.507059e+37
    %v3517 = vand.u32 %v3505, 2147483648
    %v3518 = vor.u32 1.1754944e-38, %v3517
    %v3519 = vsel %vm3516, %v3518, %v3514
    %v3520 = vmul.f32 1.0, %v3519
    %v3521 = vxor.u32 %v3499, 2147483648
    %v3522 = vmul.f32 %v3521, 1.442695
    %v3523 = vpow.pop %v3522
    %v3524 = vadd.f32 %v3523, 1.0
    %v3525 = vrcp.pop %v3524
    %v3526 = vmul.f32 %v3524, %v3525
    %v3527 = vsub.f32 1.0, %v3526
    %v3528 = vmul.f32 %v3525, %v3527
    %v3529 = vadd.f32 %v3525, %v3528
    %vm3530 = vweird.f32 %v3524
    %vm3531 = vweird.f32 %v3525
    %vm3532 = vmor %vm3530, %vm3531
    %v3533 = vsel %vm3532, %v3525, %v3529
    %v3534 = vand.u32 2147483647, %v3524
    %vm3535 = vcmp.eq.f32.partialorder %v3534, 8.507059e+37
    %v3536 = vand.u32 %v3524, 2147483648
    %v3537 = vor.u32 1.1754944e-38, %v3536
    %v3538 = vsel %vm3535, %v3537, %v3533
    %v3539 = vmul.f32 1.0, %v3538
    %v3540 = vtanh.pop %v3500
    %v3541 = vxor.u32 %v3501, 2147483648
    %v3542 = vmul.f32 %v3541, 1.442695
    %v3543 = vpow.pop %v3542
    %v3544 = vadd.f32 %v3543, 1.0
    %v3545 = vrcp.pop %v3544
    %v3546 = vmul.f32 %v3544, %v3545
    %v3547 = vsub.f32 1.0, %v3546
    %v3548 = vmul.f32 %v3545, %v3547
    %v3549 = vadd.f32 %v3545, %v3548
    %vm3550 = vweird.f32 %v3544
    %vm3551 = vweird.f32 %v3545
    %vm3552 = vmor %vm3550, %vm3551
    %v3553 = vsel %vm3552, %v3545, %v3549
    %v3554 = vand.u32 2147483647, %v3544
    %vm3555 = vcmp.eq.f32.partialorder %v3554, 8.507059e+37
    %v3556 = vand.u32 %v3544, 2147483648
    %v3557 = vor.u32 1.1754944e-38, %v3556
    %v3558 = vsel %vm3555, %v3557, %v3553
    %v3559 = vmul.f32 1.0, %v3558
    %v3560 = vmul.f32 %v3539, 0.0
    %v3561 = vmul.f32 %v3520, %v3540
    %v3562 = vadd.f32 %v3560, %v3561
    %v3563 = vtanh.pop %v3562
    %v3564 = vmul.f32 %v3559, %v3563
    %3565 = vst [vmem:[#allocation2] sm:$0xff] %v3564
    %v3566 = vpack.c.bf16 %v3564, %v3564
    %v3567 = vld [vmem:[%s624] sm:$0xff]
    %v3568 = vld [vmem:[%s624 + $0x8] sm:$0xff]
    %v3569 = vld [vmem:[%s624 + $0x10] sm:$0xff]
    %v3570 = vld [vmem:[%s624 + $0x18] sm:$0xff]
    %v3571 = vld [vmem:[#allocation9] sm:$0xff]
    %v3572 = vld [vmem:[#allocation9 + $0x8] sm:$0xff]
    %v3573 = vld [vmem:[#allocation9 + $0x10] sm:$0xff]
    %v3574 = vld [vmem:[#allocation9 + $0x18] sm:$0xff]
    %v3575 = vld [vmem:[#allocation9 + $0x20] sm:$0xff]
    %v3576 = vld [vmem:[#allocation9 + $0x28] sm:$0xff]
    %v3577 = vld [vmem:[#allocation9 + $0x30] sm:$0xff]
    %v3578 = vld [vmem:[#allocation9 + $0x38] sm:$0xff]
    %v3579 = vld [vmem:[#allocation9 + $0x40] sm:$0xff]
    %v3580 = vld [vmem:[#allocation9 + $0x48] sm:$0xff]
    %v3581 = vld [vmem:[#allocation9 + $0x50] sm:$0xff]
    %v3582 = vld [vmem:[#allocation9 + $0x58] sm:$0xff]
    %v3583 = vld [vmem:[#allocation9 + $0x60] sm:$0xff]
    %v3584 = vld [vmem:[#allocation9 + $0x68] sm:$0xff]
    %v3585 = vld [vmem:[#allocation9 + $0x70] sm:$0xff]
    %v3586 = vld [vmem:[#allocation9 + $0x78] sm:$0xff]
    %v3587 = vld [vmem:[#allocation9 + $0x80] sm:$0xff]
    %v3588 = vld [vmem:[#allocation9 + $0x88] sm:$0xff]
    %v3589 = vld [vmem:[#allocation9 + $0x90] sm:$0xff]
    %v3590 = vld [vmem:[#allocation9 + $0x98] sm:$0xff]
    %v3591 = vld [vmem:[#allocation9 + $0xa0] sm:$0xff]
    %v3592 = vld [vmem:[#allocation9 + $0xa8] sm:$0xff]
    %v3593 = vld [vmem:[#allocation9 + $0xb0] sm:$0xff]
    %v3594 = vld [vmem:[#allocation9 + $0xb8] sm:$0xff]
    %v3595 = vld [vmem:[#allocation9 + $0xc0] sm:$0xff]
    %v3596 = vld [vmem:[#allocation9 + $0xc8] sm:$0xff]
    %v3597 = vld [vmem:[#allocation9 + $0xd0] sm:$0xff]
    %v3598 = vld [vmem:[#allocation9 + $0xd8] sm:$0xff]
    %v3599 = vld [vmem:[#allocation9 + $0xe0] sm:$0xff]
    %v3600 = vld [vmem:[#allocation9 + $0xe8] sm:$0xff]
    %v3601 = vld [vmem:[#allocation9 + $0xf0] sm:$0xff]
    %v3602 = vld [vmem:[#allocation9 + $0xf8] sm:$0xff]
    %v3635 = vunpack.c.l.b16 %v3571
    %v3636 = vunpack.c.h.b16 %v3571
    %v3637 = vunpack.c.l.b16 %v3572
    %v3638 = vunpack.c.h.b16 %v3572
    %v3639 = vunpack.c.l.b16 %v3573
    %v3640 = vunpack.c.h.b16 %v3573
    %v3641 = vunpack.c.l.b16 %v3574
    %v3642 = vunpack.c.h.b16 %v3574
    %v3643 = vunpack.c.l.b16 %v3575
    %v3644 = vunpack.c.h.b16 %v3575
    %v3645 = vunpack.c.l.b16 %v3576
    %v3646 = vunpack.c.h.b16 %v3576
    %v3647 = vunpack.c.l.b16 %v3577
    %v3648 = vunpack.c.h.b16 %v3577
    %v3649 = vunpack.c.l.b16 %v3578
    %v3650 = vunpack.c.h.b16 %v3578
    %v3651 = vunpack.c.l.b16 %v3579
    %v3652 = vunpack.c.h.b16 %v3579
    %v3653 = vunpack.c.l.b16 %v3580
    %v3654 = vunpack.c.h.b16 %v3580
    %v3655 = vunpack.c.l.b16 %v3581
    %v3656 = vunpack.c.h.b16 %v3581
    %v3657 = vunpack.c.l.b16 %v3582
    %v3658 = vunpack.c.h.b16 %v3582
    %v3659 = vunpack.c.l.b16 %v3583
    %v3660 = vunpack.c.h.b16 %v3583
    %v3661 = vunpack.c.l.b16 %v3584
    %v3662 = vunpack.c.h.b16 %v3584
    %v3663 = vunpack.c.l.b16 %v3585
    %v3664 = vunpack.c.h.b16 %v3585
    %v3665 = vunpack.c.l.b16 %v3586
    %v3666 = vunpack.c.h.b16 %v3586
    %v3667 = vunpack.c.l.b16 %v3587
    %v3668 = vunpack.c.h.b16 %v3587
    %v3669 = vunpack.c.l.b16 %v3588
    %v3670 = vunpack.c.h.b16 %v3588
    %v3671 = vunpack.c.l.b16 %v3589
    %v3672 = vunpack.c.h.b16 %v3589
    %v3673 = vunpack.c.l.b16 %v3590
    %v3674 = vunpack.c.h.b16 %v3590
    %v3675 = vunpack.c.l.b16 %v3591
    %v3676 = vunpack.c.h.b16 %v3591
    %v3677 = vunpack.c.l.b16 %v3592
    %v3678 = vunpack.c.h.b16 %v3592
    %v3679 = vunpack.c.l.b16 %v3593
    %v3680 = vunpack.c.h.b16 %v3593
    %v3681 = vunpack.c.l.b16 %v3594
    %v3682 = vunpack.c.h.b16 %v3594
    %v3683 = vunpack.c.l.b16 %v3595
    %v3684 = vunpack.c.h.b16 %v3595
    %v3685 = vunpack.c.l.b16 %v3596
    %v3686 = vunpack.c.h.b16 %v3596
    %v3687 = vunpack.c.l.b16 %v3597
    %v3688 = vunpack.c.h.b16 %v3597
    %v3689 = vunpack.c.l.b16 %v3598
    %v3690 = vunpack.c.h.b16 %v3598
    %v3691 = vunpack.c.l.b16 %v3599
    %v3692 = vunpack.c.h.b16 %v3599
    %v3693 = vunpack.c.l.b16 %v3600
    %v3694 = vunpack.c.h.b16 %v3600
    %v3695 = vunpack.c.l.b16 %v3601
    %v3696 = vunpack.c.h.b16 %v3601
    %v3697 = vunpack.c.l.b16 %v3602
    %v3698 = vunpack.c.h.b16 %v3602
    %v3699 = vpack.c.b16 %v3639, %v3635
    %v3700 = vpack.c.b16 %v3640, %v3636
    %v3701 = vpack.c.b16 %v3641, %v3637
    %v3702 = vpack.c.b16 %v3642, %v3638
    %v3703 = vpack.c.b16 %v3647, %v3643
    %v3704 = vpack.c.b16 %v3648, %v3644
    %v3705 = vpack.c.b16 %v3649, %v3645
    %v3706 = vpack.c.b16 %v3650, %v3646
    %v3707 = vpack.c.b16 %v3655, %v3651
    %v3708 = vpack.c.b16 %v3656, %v3652
    %v3709 = vpack.c.b16 %v3657, %v3653
    %v3710 = vpack.c.b16 %v3658, %v3654
    %v3711 = vpack.c.b16 %v3663, %v3659
    %v3712 = vpack.c.b16 %v3664, %v3660
    %v3713 = vpack.c.b16 %v3665, %v3661
    %v3714 = vpack.c.b16 %v3666, %v3662
    %v3715 = vpack.c.b16 %v3671, %v3667
    %v3716 = vpack.c.b16 %v3672, %v3668
    %v3717 = vpack.c.b16 %v3673, %v3669
    %v3718 = vpack.c.b16 %v3674, %v3670
    %v3719 = vpack.c.b16 %v3679, %v3675
    %v3720 = vpack.c.b16 %v3680, %v3676
    %v3721 = vpack.c.b16 %v3681, %v3677
    %v3722 = vpack.c.b16 %v3682, %v3678
    %v3723 = vpack.c.b16 %v3687, %v3683
    %v3724 = vpack.c.b16 %v3688, %v3684
    %v3725 = vpack.c.b16 %v3689, %v3685
    %v3726 = vpack.c.b16 %v3690, %v3686
    %v3727 = vpack.c.b16 %v3695, %v3691
    %v3728 = vpack.c.b16 %v3696, %v3692
    %v3729 = vpack.c.b16 %v3697, %v3693
    %v3730 = vpack.c.b16 %v3698, %v3694
    %3763 = vmatpush.bf16.msra.mxu0 %v3727
    %3764 = vmatpush.bf16.msra.mxu0 %v3723
    %3765 = vmatpush.bf16.msra.mxu0 %v3719
    %3766 = vmatpush.bf16.msra.mxu0 %v3715
    %3767 = vmatpush.bf16.msra.mxu0 %v3711
    %3768 = vmatpush.bf16.msra.mxu0 %v3707
    %3769 = vmatpush.bf16.msra.mxu0 %v3703
    %3770 = vmatpush.bf16.msra.mxu0 %v3699
    %3771 = vmatmul.bf16.gmra.mxu0 %v3566
    %v3772 = vpop.f32.mrf.mxu0
    %v3773 = vadd.f32 0.0, %v3772
    %v3774 = vpop.f32.mrf.mxu0
    %3775 = vdwg.mxu0
    %3776 = vmatpush.bf16.msra.mxu0 %v3728
    %3777 = vmatpush.bf16.msra.mxu0 %v3724
    %3778 = vmatpush.bf16.msra.mxu0 %v3720
    %3779 = vmatpush.bf16.msra.mxu0 %v3716
    %3780 = vmatpush.bf16.msra.mxu0 %v3712
    %3781 = vmatpush.bf16.msra.mxu0 %v3708
    %3782 = vmatpush.bf16.msra.mxu0 %v3704
    %3783 = vmatpush.bf16.msra.mxu0 %v3700
    %3784 = vmatmul.bf16.gmra.mxu0 %v3566
    %v3785 = vpop.f32.mrf.mxu0
    %v3786 = vadd.f32 0.0, %v3785
    %v3787 = vpop.f32.mrf.mxu0
    %3788 = vdwg.mxu0
    %3789 = vmatpush.bf16.msra.mxu0 %v3729
    %3790 = vmatpush.bf16.msra.mxu0 %v3725
    %3791 = vmatpush.bf16.msra.mxu0 %v3721
    %3792 = vmatpush.bf16.msra.mxu0 %v3717
    %3793 = vmatpush.bf16.msra.mxu0 %v3713
    %3794 = vmatpush.bf16.msra.mxu0 %v3709
    %3795 = vmatpush.bf16.msra.mxu0 %v3705
    %3796 = vmatpush.bf16.msra.mxu0 %v3701
    %3797 = vmatmul.bf16.gmra.mxu0 %v3566
    %v3798 = vpop.f32.mrf.mxu0
    %v3799 = vadd.f32 0.0, %v3798
    %v3800 = vpop.f32.mrf.mxu0
    %3801 = vdwg.mxu0
    %3802 = vmatpush.bf16.msra.mxu0 %v3730
    %3803 = vmatpush.bf16.msra.mxu0 %v3726
    %3804 = vmatpush.bf16.msra.mxu0 %v3722
    %3805 = vmatpush.bf16.msra.mxu0 %v3718
    %3806 = vmatpush.bf16.msra.mxu0 %v3714
    %3807 = vmatpush.bf16.msra.mxu0 %v3710
    %3808 = vmatpush.bf16.msra.mxu0 %v3706
    %3809 = vmatpush.bf16.msra.mxu0 %v3702
    %3810 = vmatmul.bf16.gmra.mxu0 %v3566
    %v3811 = vpop.f32.mrf.mxu0
    %v3812 = vadd.f32 0.0, %v3811
    %v3813 = vpop.f32.mrf.mxu0
    %3814 = vdwg.mxu0
    %v3815 = vadd.f32 %v3567, %v3773
    %v3816 = vadd.f32 %v3568, %v3786
    %v3817 = vadd.f32 %v3569, %v3799
    %v3818 = vadd.f32 %v3570, %v3812
    %v3819 = vxor.u32 %v3815, 2147483648
    %v3820 = vmul.f32 %v3819, 1.442695
    %v3821 = vpow.pop %v3820
    %v3822 = vadd.f32 %v3821, 1.0
    %v3823 = vrcp.pop %v3822
    %v3824 = vmul.f32 %v3822, %v3823
    %v3825 = vsub.f32 1.0, %v3824
    %v3826 = vmul.f32 %v3823, %v3825
    %v3827 = vadd.f32 %v3823, %v3826
    %vm3828 = vweird.f32 %v3822
    %vm3829 = vweird.f32 %v3823
    %vm3830 = vmor %vm3828, %vm3829
    %v3831 = vsel %vm3830, %v3823, %v3827
    %v3832 = vand.u32 2147483647, %v3822
    %vm3833 = vcmp.eq.f32.partialorder %v3832, 8.507059e+37
    %v3834 = vand.u32 %v3822, 2147483648
    %v3835 = vor.u32 1.1754944e-38, %v3834
    %v3836 = vsel %vm3833, %v3835, %v3831
    %v3837 = vmul.f32 1.0, %v3836
    %v3838 = vxor.u32 %v3816, 2147483648
    %v3839 = vmul.f32 %v3838, 1.442695
    %v3840 = vpow.pop %v3839
    %v3841 = vadd.f32 %v3840, 1.0
    %v3842 = vrcp.pop %v3841
    %v3843 = vmul.f32 %v3841, %v3842
    %v3844 = vsub.f32 1.0, %v3843
    %v3845 = vmul.f32 %v3842, %v3844
    %v3846 = vadd.f32 %v3842, %v3845
    %vm3847 = vweird.f32 %v3841
    %vm3848 = vweird.f32 %v3842
    %vm3849 = vmor %vm3847, %vm3848
    %v3850 = vsel %vm3849, %v3842, %v3846
    %v3851 = vand.u32 2147483647, %v3841
    %vm3852 = vcmp.eq.f32.partialorder %v3851, 8.507059e+37
    %v3853 = vand.u32 %v3841, 2147483648
    %v3854 = vor.u32 1.1754944e-38, %v3853
    %v3855 = vsel %vm3852, %v3854, %v3850
    %v3856 = vmul.f32 1.0, %v3855
    %v3857 = vtanh.pop %v3817
    %v3858 = vxor.u32 %v3818, 2147483648
    %v3859 = vmul.f32 %v3858, 1.442695
    %v3860 = vpow.pop %v3859
    %v3861 = vadd.f32 %v3860, 1.0
    %v3862 = vrcp.pop %v3861
    %v3863 = vmul.f32 %v3861, %v3862
    %v3864 = vsub.f32 1.0, %v3863
    %v3865 = vmul.f32 %v3862, %v3864
    %v3866 = vadd.f32 %v3862, %v3865
    %vm3867 = vweird.f32 %v3861
    %vm3868 = vweird.f32 %v3862
    %vm3869 = vmor %vm3867, %vm3868
    %v3870 = vsel %vm3869, %v3862, %v3866
    %v3871 = vand.u32 2147483647, %v3861
    %vm3872 = vcmp.eq.f32.partialorder %v3871, 8.507059e+37
    %v3873 = vand.u32 %v3861, 2147483648
    %v3874 = vor.u32 1.1754944e-38, %v3873
    %v3875 = vsel %vm3872, %v3874, %v3870
    %v3876 = vmul.f32 1.0, %v3875
    %v3877 = vmul.f32 %v3856, %v3562
    %v3878 = vmul.f32 %v3837, %v3857
    %v3879 = vadd.f32 %v3877, %v3878
    %v3880 = vtanh.pop %v3879
    %v3881 = vmul.f32 %v3876, %v3880
    %3882 = vst [vmem:[%s940] sm:$0xff] %v3881
    %v3883 = vpack.c.bf16 %v3881, %v3881
    %v3884 = vld [vmem:[%s943] sm:$0xff]
    %v3885 = vld [vmem:[%s943 + $0x8] sm:$0xff]
    %v3886 = vld [vmem:[%s943 + $0x10] sm:$0xff]
    %v3887 = vld [vmem:[%s943 + $0x18] sm:$0xff]
    %v3888 = vld [vmem:[#allocation9] sm:$0xff]
    %v3889 = vld [vmem:[#allocation9 + $0x8] sm:$0xff]
    %v3890 = vld [vmem:[#allocation9 + $0x10] sm:$0xff]
    %v3891 = vld [vmem:[#allocation9 + $0x18] sm:$0xff]
    %v3892 = vld [vmem:[#allocation9 + $0x20] sm:$0xff]
    %v3893 = vld [vmem:[#allocation9 + $0x28] sm:$0xff]
    %v3894 = vld [vmem:[#allocation9 + $0x30] sm:$0xff]
    %v3895 = vld [vmem:[#allocation9 + $0x38] sm:$0xff]
    %v3896 = vld [vmem:[#allocation9 + $0x40] sm:$0xff]
    %v3897 = vld [vmem:[#allocation9 + $0x48] sm:$0xff]
    %v3898 = vld [vmem:[#allocation9 + $0x50] sm:$0xff]
    %v3899 = vld [vmem:[#allocation9 + $0x58] sm:$0xff]
    %v3900 = vld [vmem:[#allocation9 + $0x60] sm:$0xff]
    %v3901 = vld [vmem:[#allocation9 + $0x68] sm:$0xff]
    %v3902 = vld [vmem:[#allocation9 + $0x70] sm:$0xff]
    %v3903 = vld [vmem:[#allocation9 + $0x78] sm:$0xff]
    %v3904 = vld [vmem:[#allocation9 + $0x80] sm:$0xff]
    %v3905 = vld [vmem:[#allocation9 + $0x88] sm:$0xff]
    %v3906 = vld [vmem:[#allocation9 + $0x90] sm:$0xff]
    %v3907 = vld [vmem:[#allocation9 + $0x98] sm:$0xff]
    %v3908 = vld [vmem:[#allocation9 + $0xa0] sm:$0xff]
    %v3909 = vld [vmem:[#allocation9 + $0xa8] sm:$0xff]
    %v3910 = vld [vmem:[#allocation9 + $0xb0] sm:$0xff]
    %v3911 = vld [vmem:[#allocation9 + $0xb8] sm:$0xff]
    %v3912 = vld [vmem:[#allocation9 + $0xc0] sm:$0xff]
    %v3913 = vld [vmem:[#allocation9 + $0xc8] sm:$0xff]
    %v3914 = vld [vmem:[#allocation9 + $0xd0] sm:$0xff]
    %v3915 = vld [vmem:[#allocation9 + $0xd8] sm:$0xff]
    %v3916 = vld [vmem:[#allocation9 + $0xe0] sm:$0xff]
    %v3917 = vld [vmem:[#allocation9 + $0xe8] sm:$0xff]
    %v3918 = vld [vmem:[#allocation9 + $0xf0] sm:$0xff]
    %v3919 = vld [vmem:[#allocation9 + $0xf8] sm:$0xff]
    %v3952 = vunpack.c.l.b16 %v3888
    %v3953 = vunpack.c.h.b16 %v3888
    %v3954 = vunpack.c.l.b16 %v3889
    %v3955 = vunpack.c.h.b16 %v3889
    %v3956 = vunpack.c.l.b16 %v3890
    %v3957 = vunpack.c.h.b16 %v3890
    %v3958 = vunpack.c.l.b16 %v3891
    %v3959 = vunpack.c.h.b16 %v3891
    %v3960 = vunpack.c.l.b16 %v3892
    %v3961 = vunpack.c.h.b16 %v3892
    %v3962 = vunpack.c.l.b16 %v3893
    %v3963 = vunpack.c.h.b16 %v3893
    %v3964 = vunpack.c.l.b16 %v3894
    %v3965 = vunpack.c.h.b16 %v3894
    %v3966 = vunpack.c.l.b16 %v3895
    %v3967 = vunpack.c.h.b16 %v3895
    %v3968 = vunpack.c.l.b16 %v3896
    %v3969 = vunpack.c.h.b16 %v3896
    %v3970 = vunpack.c.l.b16 %v3897
    %v3971 = vunpack.c.h.b16 %v3897
    %v3972 = vunpack.c.l.b16 %v3898
    %v3973 = vunpack.c.h.b16 %v3898
    %v3974 = vunpack.c.l.b16 %v3899
    %v3975 = vunpack.c.h.b16 %v3899
    %v3976 = vunpack.c.l.b16 %v3900
    %v3977 = vunpack.c.h.b16 %v3900
    %v3978 = vunpack.c.l.b16 %v3901
    %v3979 = vunpack.c.h.b16 %v3901
    %v3980 = vunpack.c.l.b16 %v3902
    %v3981 = vunpack.c.h.b16 %v3902
    %v3982 = vunpack.c.l.b16 %v3903
    %v3983 = vunpack.c.h.b16 %v3903
    %v3984 = vunpack.c.l.b16 %v3904
    %v3985 = vunpack.c.h.b16 %v3904
    %v3986 = vunpack.c.l.b16 %v3905
    %v3987 = vunpack.c.h.b16 %v3905
    %v3988 = vunpack.c.l.b16 %v3906
    %v3989 = vunpack.c.h.b16 %v3906
    %v3990 = vunpack.c.l.b16 %v3907
    %v3991 = vunpack.c.h.b16 %v3907
    %v3992 = vunpack.c.l.b16 %v3908
    %v3993 = vunpack.c.h.b16 %v3908
    %v3994 = vunpack.c.l.b16 %v3909
    %v3995 = vunpack.c.h.b16 %v3909
    %v3996 = vunpack.c.l.b16 %v3910
    %v3997 = vunpack.c.h.b16 %v3910
    %v3998 = vunpack.c.l.b16 %v3911
    %v3999 = vunpack.c.h.b16 %v3911
    %v4000 = vunpack.c.l.b16 %v3912
    %v4001 = vunpack.c.h.b16 %v3912
    %v4002 = vunpack.c.l.b16 %v3913
    %v4003 = vunpack.c.h.b16 %v3913
    %v4004 = vunpack.c.l.b16 %v3914
    %v4005 = vunpack.c.h.b16 %v3914
    %v4006 = vunpack.c.l.b16 %v3915
    %v4007 = vunpack.c.h.b16 %v3915
    %v4008 = vunpack.c.l.b16 %v3916
    %v4009 = vunpack.c.h.b16 %v3916
    %v4010 = vunpack.c.l.b16 %v3917
    %v4011 = vunpack.c.h.b16 %v3917
    %v4012 = vunpack.c.l.b16 %v3918
    %v4013 = vunpack.c.h.b16 %v3918
    %v4014 = vunpack.c.l.b16 %v3919
    %v4015 = vunpack.c.h.b16 %v3919
    %v4016 = vpack.c.b16 %v3956, %v3952
    %v4017 = vpack.c.b16 %v3957, %v3953
    %v4018 = vpack.c.b16 %v3958, %v3954
    %v4019 = vpack.c.b16 %v3959, %v3955
    %v4020 = vpack.c.b16 %v3964, %v3960
    %v4021 = vpack.c.b16 %v3965, %v3961
    %v4022 = vpack.c.b16 %v3966, %v3962
    %v4023 = vpack.c.b16 %v3967, %v3963
    %v4024 = vpack.c.b16 %v3972, %v3968
    %v4025 = vpack.c.b16 %v3973, %v3969
    %v4026 = vpack.c.b16 %v3974, %v3970
    %v4027 = vpack.c.b16 %v3975, %v3971
    %v4028 = vpack.c.b16 %v3980, %v3976
    %v4029 = vpack.c.b16 %v3981, %v3977
    %v4030 = vpack.c.b16 %v3982, %v3978
    %v4031 = vpack.c.b16 %v3983, %v3979
    %v4032 = vpack.c.b16 %v3988, %v3984
    %v4033 = vpack.c.b16 %v3989, %v3985
    %v4034 = vpack.c.b16 %v3990, %v3986
    %v4035 = vpack.c.b16 %v3991, %v3987
    %v4036 = vpack.c.b16 %v3996, %v3992
    %v4037 = vpack.c.b16 %v3997, %v3993
    %v4038 = vpack.c.b16 %v3998, %v3994
    %v4039 = vpack.c.b16 %v3999, %v3995
    %v4040 = vpack.c.b16 %v4004, %v4000
    %v4041 = vpack.c.b16 %v4005, %v4001
    %v4042 = vpack.c.b16 %v4006, %v4002
    %v4043 = vpack.c.b16 %v4007, %v4003
    %v4044 = vpack.c.b16 %v4012, %v4008
    %v4045 = vpack.c.b16 %v4013, %v4009
    %v4046 = vpack.c.b16 %v4014, %v4010
    %v4047 = vpack.c.b16 %v4015, %v4011
    %4080 = vmatpush.bf16.msra.mxu0 %v4044
    %4081 = vmatpush.bf16.msra.mxu0 %v4040
    %4082 = vmatpush.bf16.msra.mxu0 %v4036
    %4083 = vmatpush.bf16.msra.mxu0 %v4032
    %4084 = vmatpush.bf16.msra.mxu0 %v4028
    %4085 = vmatpush.bf16.msra.mxu0 %v4024
    %4086 = vmatpush.bf16.msra.mxu0 %v4020
    %4087 = vmatpush.bf16.msra.mxu0 %v4016
    %4088 = vmatmul.bf16.gmra.mxu0 %v3883
    %v4089 = vpop.f32.mrf.mxu0
    %v4090 = vadd.f32 0.0, %v4089
    %v4091 = vpop.f32.mrf.mxu0
    %4092 = vdwg.mxu0
    %4093 = vmatpush.bf16.msra.mxu0 %v4045
    %4094 = vmatpush.bf16.msra.mxu0 %v4041
    %4095 = vmatpush.bf16.msra.mxu0 %v4037
    %4096 = vmatpush.bf16.msra.mxu0 %v4033
    %4097 = vmatpush.bf16.msra.mxu0 %v4029
    %4098 = vmatpush.bf16.msra.mxu0 %v4025
    %4099 = vmatpush.bf16.msra.mxu0 %v4021
    %4100 = vmatpush.bf16.msra.mxu0 %v4017
    %4101 = vmatmul.bf16.gmra.mxu0 %v3883
    %v4102 = vpop.f32.mrf.mxu0
    %v4103 = vadd.f32 0.0, %v4102
    %v4104 = vpop.f32.mrf.mxu0
    %4105 = vdwg.mxu0
    %4106 = vmatpush.bf16.msra.mxu0 %v4046
    %4107 = vmatpush.bf16.msra.mxu0 %v4042
    %4108 = vmatpush.bf16.msra.mxu0 %v4038
    %4109 = vmatpush.bf16.msra.mxu0 %v4034
    %4110 = vmatpush.bf16.msra.mxu0 %v4030
    %4111 = vmatpush.bf16.msra.mxu0 %v4026
    %4112 = vmatpush.bf16.msra.mxu0 %v4022
    %4113 = vmatpush.bf16.msra.mxu0 %v4018
    %4114 = vmatmul.bf16.gmra.mxu0 %v3883
    %v4115 = vpop.f32.mrf.mxu0
    %v4116 = vadd.f32 0.0, %v4115
    %v4117 = vpop.f32.mrf.mxu0
    %4118 = vdwg.mxu0
    %4119 = vmatpush.bf16.msra.mxu0 %v4047
    %4120 = vmatpush.bf16.msra.mxu0 %v4043
    %4121 = vmatpush.bf16.msra.mxu0 %v4039
    %4122 = vmatpush.bf16.msra.mxu0 %v4035
    %4123 = vmatpush.bf16.msra.mxu0 %v4031
    %4124 = vmatpush.bf16.msra.mxu0 %v4027
    %4125 = vmatpush.bf16.msra.mxu0 %v4023
    %4126 = vmatpush.bf16.msra.mxu0 %v4019
    %4127 = vmatmul.bf16.gmra.mxu0 %v3883
    %v4128 = vpop.f32.mrf.mxu0
    %v4129 = vadd.f32 0.0, %v4128
    %v4130 = vpop.f32.mrf.mxu0
    %4131 = vdwg.mxu0
    %v4132 = vadd.f32 %v3884, %v4090
    %v4133 = vadd.f32 %v3885, %v4103
    %v4134 = vadd.f32 %v3886, %v4116
    %v4135 = vadd.f32 %v3887, %v4129
    %v4136 = vxor.u32 %v4132, 2147483648
    %v4137 = vmul.f32 %v4136, 1.442695
    %v4138 = vpow.pop %v4137
    %v4139 = vadd.f32 %v4138, 1.0
    %v4140 = vrcp.pop %v4139
    %v4141 = vmul.f32 %v4139, %v4140
    %v4142 = vsub.f32 1.0, %v4141
    %v4143 = vmul.f32 %v4140, %v4142
    %v4144 = vadd.f32 %v4140, %v4143
    %vm4145 = vweird.f32 %v4139
    %vm4146 = vweird.f32 %v4140
    %vm4147 = vmor %vm4145, %vm4146
    %v4148 = vsel %vm4147, %v4140, %v4144
    %v4149 = vand.u32 2147483647, %v4139
    %vm4150 = vcmp.eq.f32.partialorder %v4149, 8.507059e+37
    %v4151 = vand.u32 %v4139, 2147483648
    %v4152 = vor.u32 1.1754944e-38, %v4151
    %v4153 = vsel %vm4150, %v4152, %v4148
    %v4154 = vmul.f32 1.0, %v4153
    %v4155 = vxor.u32 %v4133, 2147483648
    %v4156 = vmul.f32 %v4155, 1.442695
    %v4157 = vpow.pop %v4156
    %v4158 = vadd.f32 %v4157, 1.0
    %v4159 = vrcp.pop %v4158
    %v4160 = vmul.f32 %v4158, %v4159
    %v4161 = vsub.f32 1.0, %v4160
    %v4162 = vmul.f32 %v4159, %v4161
    %v4163 = vadd.f32 %v4159, %v4162
    %vm4164 = vweird.f32 %v4158
    %vm4165 = vweird.f32 %v4159
    %vm4166 = vmor %vm4164, %vm4165
    %v4167 = vsel %vm4166, %v4159, %v4163
    %v4168 = vand.u32 2147483647, %v4158
    %vm4169 = vcmp.eq.f32.partialorder %v4168, 8.507059e+37
    %v4170 = vand.u32 %v4158, 2147483648
    %v4171 = vor.u32 1.1754944e-38, %v4170
    %v4172 = vsel %vm4169, %v4171, %v4167
    %v4173 = vmul.f32 1.0, %v4172
    %v4174 = vtanh.pop %v4134
    %v4175 = vxor.u32 %v4135, 2147483648
    %v4176 = vmul.f32 %v4175, 1.442695
    %v4177 = vpow.pop %v4176
    %v4178 = vadd.f32 %v4177, 1.0
    %v4179 = vrcp.pop %v4178
    %v4180 = vmul.f32 %v4178, %v4179
    %v4181 = vsub.f32 1.0, %v4180
    %v4182 = vmul.f32 %v4179, %v4181
    %v4183 = vadd.f32 %v4179, %v4182
    %vm4184 = vweird.f32 %v4178
    %vm4185 = vweird.f32 %v4179
    %vm4186 = vmor %vm4184, %vm4185
    %v4187 = vsel %vm4186, %v4179, %v4183
    %v4188 = vand.u32 2147483647, %v4178
    %vm4189 = vcmp.eq.f32.partialorder %v4188, 8.507059e+37
    %v4190 = vand.u32 %v4178, 2147483648
    %v4191 = vor.u32 1.1754944e-38, %v4190
    %v4192 = vsel %vm4189, %v4191, %v4187
    %v4193 = vmul.f32 1.0, %v4192
    %v4194 = vmul.f32 %v4173, %v3879
    %v4195 = vmul.f32 %v4154, %v4174
    %v4196 = vadd.f32 %v4194, %v4195
    %v4197 = vtanh.pop %v4196
    %v4198 = vmul.f32 %v4193, %v4197
    %4199 = vst [vmem:[%s1259] sm:$0xff] %v4198
    %v4200 = vpack.c.bf16 %v4198, %v4198
    %v4201 = vld [vmem:[%s1262] sm:$0xff]
    %v4202 = vld [vmem:[%s1262 + $0x8] sm:$0xff]
    %v4203 = vld [vmem:[%s1262 + $0x10] sm:$0xff]
    %v4204 = vld [vmem:[%s1262 + $0x18] sm:$0xff]
    %v4205 = vld [vmem:[#allocation9] sm:$0xff]
    %v4206 = vld [vmem:[#allocation9 + $0x8] sm:$0xff]
    %v4207 = vld [vmem:[#allocation9 + $0x10] sm:$0xff]
    %v4208 = vld [vmem:[#allocation9 + $0x18] sm:$0xff]
    %v4209 = vld [vmem:[#allocation9 + $0x20] sm:$0xff]
    %v4210 = vld [vmem:[#allocation9 + $0x28] sm:$0xff]
    %v4211 = vld [vmem:[#allocation9 + $0x30] sm:$0xff]
    %v4212 = vld [vmem:[#allocation9 + $0x38] sm:$0xff]
    %v4213 = vld [vmem:[#allocation9 + $0x40] sm:$0xff]
    %v4214 = vld [vmem:[#allocation9 + $0x48] sm:$0xff]
    %v4215 = vld [vmem:[#allocation9 + $0x50] sm:$0xff]
    %v4216 = vld [vmem:[#allocation9 + $0x58] sm:$0xff]
    %v4217 = vld [vmem:[#allocation9 + $0x60] sm:$0xff]
    %v4218 = vld [vmem:[#allocation9 + $0x68] sm:$0xff]
    %v4219 = vld [vmem:[#allocation9 + $0x70] sm:$0xff]
    %v4220 = vld [vmem:[#allocation9 + $0x78] sm:$0xff]
    %v4221 = vld [vmem:[#allocation9 + $0x80] sm:$0xff]
    %v4222 = vld [vmem:[#allocation9 + $0x88] sm:$0xff]
    %v4223 = vld [vmem:[#allocation9 + $0x90] sm:$0xff]
    %v4224 = vld [vmem:[#allocation9 + $0x98] sm:$0xff]
    %v4225 = vld [vmem:[#allocation9 + $0xa0] sm:$0xff]
    %v4226 = vld [vmem:[#allocation9 + $0xa8] sm:$0xff]
    %v4227 = vld [vmem:[#allocation9 + $0xb0] sm:$0xff]
    %v4228 = vld [vmem:[#allocation9 + $0xb8] sm:$0xff]
    %v4229 = vld [vmem:[#allocation9 + $0xc0] sm:$0xff]
    %v4230 = vld [vmem:[#allocation9 + $0xc8] sm:$0xff]
    %v4231 = vld [vmem:[#allocation9 + $0xd0] sm:$0xff]
    %v4232 = vld [vmem:[#allocation9 + $0xd8] sm:$0xff]
    %v4233 = vld [vmem:[#allocation9 + $0xe0] sm:$0xff]
    %v4234 = vld [vmem:[#allocation9 + $0xe8] sm:$0xff]
    %v4235 = vld [vmem:[#allocation9 + $0xf0] sm:$0xff]
    %v4236 = vld [vmem:[#allocation9 + $0xf8] sm:$0xff]
    %v4269 = vunpack.c.l.b16 %v4205
    %v4270 = vunpack.c.h.b16 %v4205
    %v4271 = vunpack.c.l.b16 %v4206
    %v4272 = vunpack.c.h.b16 %v4206
    %v4273 = vunpack.c.l.b16 %v4207
    %v4274 = vunpack.c.h.b16 %v4207
    %v4275 = vunpack.c.l.b16 %v4208
    %v4276 = vunpack.c.h.b16 %v4208
    %v4277 = vunpack.c.l.b16 %v4209
    %v4278 = vunpack.c.h.b16 %v4209
    %v4279 = vunpack.c.l.b16 %v4210
    %v4280 = vunpack.c.h.b16 %v4210
    %v4281 = vunpack.c.l.b16 %v4211
    %v4282 = vunpack.c.h.b16 %v4211
    %v4283 = vunpack.c.l.b16 %v4212
    %v4284 = vunpack.c.h.b16 %v4212
    %v4285 = vunpack.c.l.b16 %v4213
    %v4286 = vunpack.c.h.b16 %v4213
    %v4287 = vunpack.c.l.b16 %v4214
    %v4288 = vunpack.c.h.b16 %v4214
    %v4289 = vunpack.c.l.b16 %v4215
    %v4290 = vunpack.c.h.b16 %v4215
    %v4291 = vunpack.c.l.b16 %v4216
    %v4292 = vunpack.c.h.b16 %v4216
    %v4293 = vunpack.c.l.b16 %v4217
    %v4294 = vunpack.c.h.b16 %v4217
    %v4295 = vunpack.c.l.b16 %v4218
    %v4296 = vunpack.c.h.b16 %v4218
    %v4297 = vunpack.c.l.b16 %v4219
    %v4298 = vunpack.c.h.b16 %v4219
    %v4299 = vunpack.c.l.b16 %v4220
    %v4300 = vunpack.c.h.b16 %v4220
    %v4301 = vunpack.c.l.b16 %v4221
    %v4302 = vunpack.c.h.b16 %v4221
    %v4303 = vunpack.c.l.b16 %v4222
    %v4304 = vunpack.c.h.b16 %v4222
    %v4305 = vunpack.c.l.b16 %v4223
    %v4306 = vunpack.c.h.b16 %v4223
    %v4307 = vunpack.c.l.b16 %v4224
    %v4308 = vunpack.c.h.b16 %v4224
    %v4309 = vunpack.c.l.b16 %v4225
    %v4310 = vunpack.c.h.b16 %v4225
    %v4311 = vunpack.c.l.b16 %v4226
    %v4312 = vunpack.c.h.b16 %v4226
    %v4313 = vunpack.c.l.b16 %v4227
    %v4314 = vunpack.c.h.b16 %v4227
    %v4315 = vunpack.c.l.b16 %v4228
    %v4316 = vunpack.c.h.b16 %v4228
    %v4317 = vunpack.c.l.b16 %v4229
    %v4318 = vunpack.c.h.b16 %v4229
    %v4319 = vunpack.c.l.b16 %v4230
    %v4320 = vunpack.c.h.b16 %v4230
    %v4321 = vunpack.c.l.b16 %v4231
    %v4322 = vunpack.c.h.b16 %v4231
    %v4323 = vunpack.c.l.b16 %v4232
    %v4324 = vunpack.c.h.b16 %v4232
    %v4325 = vunpack.c.l.b16 %v4233
    %v4326 = vunpack.c.h.b16 %v4233
    %v4327 = vunpack.c.l.b16 %v4234
    %v4328 = vunpack.c.h.b16 %v4234
    %v4329 = vunpack.c.l.b16 %v4235
    %v4330 = vunpack.c.h.b16 %v4235
    %v4331 = vunpack.c.l.b16 %v4236
    %v4332 = vunpack.c.h.b16 %v4236
    %v4333 = vpack.c.b16 %v4273, %v4269
    %v4334 = vpack.c.b16 %v4274, %v4270
    %v4335 = vpack.c.b16 %v4275, %v4271
    %v4336 = vpack.c.b16 %v4276, %v4272
    %v4337 = vpack.c.b16 %v4281, %v4277
    %v4338 = vpack.c.b16 %v4282, %v4278
    %v4339 = vpack.c.b16 %v4283, %v4279
    %v4340 = vpack.c.b16 %v4284, %v4280
    %v4341 = vpack.c.b16 %v4289, %v4285
    %v4342 = vpack.c.b16 %v4290, %v4286
    %v4343 = vpack.c.b16 %v4291, %v4287
    %v4344 = vpack.c.b16 %v4292, %v4288
    %v4345 = vpack.c.b16 %v4297, %v4293
    %v4346 = vpack.c.b16 %v4298, %v4294
    %v4347 = vpack.c.b16 %v4299, %v4295
    %v4348 = vpack.c.b16 %v4300, %v4296
    %v4349 = vpack.c.b16 %v4305, %v4301
    %v4350 = vpack.c.b16 %v4306, %v4302
    %v4351 = vpack.c.b16 %v4307, %v4303
    %v4352 = vpack.c.b16 %v4308, %v4304
    %v4353 = vpack.c.b16 %v4313, %v4309
    %v4354 = vpack.c.b16 %v4314, %v4310
    %v4355 = vpack.c.b16 %v4315, %v4311
    %v4356 = vpack.c.b16 %v4316, %v4312
    %v4357 = vpack.c.b16 %v4321, %v4317
    %v4358 = vpack.c.b16 %v4322, %v4318
    %v4359 = vpack.c.b16 %v4323, %v4319
    %v4360 = vpack.c.b16 %v4324, %v4320
    %v4361 = vpack.c.b16 %v4329, %v4325
    %v4362 = vpack.c.b16 %v4330, %v4326
    %v4363 = vpack.c.b16 %v4331, %v4327
    %v4364 = vpack.c.b16 %v4332, %v4328
    %4397 = vmatpush.bf16.msra.mxu0 %v4361
    %4398 = vmatpush.bf16.msra.mxu0 %v4357
    %4399 = vmatpush.bf16.msra.mxu0 %v4353
    %4400 = vmatpush.bf16.msra.mxu0 %v4349
    %4401 = vmatpush.bf16.msra.mxu0 %v4345
    %4402 = vmatpush.bf16.msra.mxu0 %v4341
    %4403 = vmatpush.bf16.msra.mxu0 %v4337
    %4404 = vmatpush.bf16.msra.mxu0 %v4333
    %4405 = vmatmul.bf16.gmra.mxu0 %v4200
    %v4406 = vpop.f32.mrf.mxu0
    %v4407 = vadd.f32 0.0, %v4406
    %v4408 = vpop.f32.mrf.mxu0
    %4409 = vdwg.mxu0
    %4410 = vmatpush.bf16.msra.mxu0 %v4362
    %4411 = vmatpush.bf16.msra.mxu0 %v4358
    %4412 = vmatpush.bf16.msra.mxu0 %v4354
    %4413 = vmatpush.bf16.msra.mxu0 %v4350
    %4414 = vmatpush.bf16.msra.mxu0 %v4346
    %4415 = vmatpush.bf16.msra.mxu0 %v4342
    %4416 = vmatpush.bf16.msra.mxu0 %v4338
    %4417 = vmatpush.bf16.msra.mxu0 %v4334
    %4418 = vmatmul.bf16.gmra.mxu0 %v4200
    %v4419 = vpop.f32.mrf.mxu0
    %v4420 = vadd.f32 0.0, %v4419
    %v4421 = vpop.f32.mrf.mxu0
    %4422 = vdwg.mxu0
    %4423 = vmatpush.bf16.msra.mxu0 %v4363
    %4424 = vmatpush.bf16.msra.mxu0 %v4359
    %4425 = vmatpush.bf16.msra.mxu0 %v4355
    %4426 = vmatpush.bf16.msra.mxu0 %v4351
    %4427 = vmatpush.bf16.msra.mxu0 %v4347
    %4428 = vmatpush.bf16.msra.mxu0 %v4343
    %4429 = vmatpush.bf16.msra.mxu0 %v4339
    %4430 = vmatpush.bf16.msra.mxu0 %v4335
    %4431 = vmatmul.bf16.gmra.mxu0 %v4200
    %v4432 = vpop.f32.mrf.mxu0
    %v4433 = vadd.f32 0.0, %v4432
    %v4434 = vpop.f32.mrf.mxu0
    %4435 = vdwg.mxu0
    %4436 = vmatpush.bf16.msra.mxu0 %v4364
    %4437 = vmatpush.bf16.msra.mxu0 %v4360
    %4438 = vmatpush.bf16.msra.mxu0 %v4356
    %4439 = vmatpush.bf16.msra.mxu0 %v4352
    %4440 = vmatpush.bf16.msra.mxu0 %v4348
    %4441 = vmatpush.bf16.msra.mxu0 %v4344
    %4442 = vmatpush.bf16.msra.mxu0 %v4340
    %4443 = vmatpush.bf16.msra.mxu0 %v4336
    %4444 = vmatmul.bf16.gmra.mxu0 %v4200
    %v4445 = vpop.f32.mrf.mxu0
    %v4446 = vadd.f32 0.0, %v4445
    %v4447 = vpop.f32.mrf.mxu0
    %4448 = vdwg.mxu0
    %v4449 = vadd.f32 %v4201, %v4407
    %v4450 = vadd.f32 %v4202, %v4420
    %v4451 = vadd.f32 %v4203, %v4433
    %v4452 = vadd.f32 %v4204, %v4446
    %v4453 = vxor.u32 %v4449, 2147483648
    %v4454 = vmul.f32 %v4453, 1.442695
    %v4455 = vpow.pop %v4454
    %v4456 = vadd.f32 %v4455, 1.0
    %v4457 = vrcp.pop %v4456
    %v4458 = vmul.f32 %v4456, %v4457
    %v4459 = vsub.f32 1.0, %v4458
    %v4460 = vmul.f32 %v4457, %v4459
    %v4461 = vadd.f32 %v4457, %v4460
    %vm4462 = vweird.f32 %v4456
    %vm4463 = vweird.f32 %v4457
    %vm4464 = vmor %vm4462, %vm4463
    %v4465 = vsel %vm4464, %v4457, %v4461
    %v4466 = vand.u32 2147483647, %v4456
    %vm4467 = vcmp.eq.f32.partialorder %v4466, 8.507059e+37
    %v4468 = vand.u32 %v4456, 2147483648
    %v4469 = vor.u32 1.1754944e-38, %v4468
    %v4470 = vsel %vm4467, %v4469, %v4465
    %v4471 = vmul.f32 1.0, %v4470
    %v4472 = vxor.u32 %v4450, 2147483648
    %v4473 = vmul.f32 %v4472, 1.442695
    %v4474 = vpow.pop %v4473
    %v4475 = vadd.f32 %v4474, 1.0
    %v4476 = vrcp.pop %v4475
    %v4477 = vmul.f32 %v4475, %v4476
    %v4478 = vsub.f32 1.0, %v4477
    %v4479 = vmul.f32 %v4476, %v4478
    %v4480 = vadd.f32 %v4476, %v4479
    %vm4481 = vweird.f32 %v4475
    %vm4482 = vweird.f32 %v4476
    %vm4483 = vmor %vm4481, %vm4482
    %v4484 = vsel %vm4483, %v4476, %v4480
    %v4485 = vand.u32 2147483647, %v4475
    %vm4486 = vcmp.eq.f32.partialorder %v4485, 8.507059e+37
    %v4487 = vand.u32 %v4475, 2147483648
    %v4488 = vor.u32 1.1754944e-38, %v4487
    %v4489 = vsel %vm4486, %v4488, %v4484
    %v4490 = vmul.f32 1.0, %v4489
    %v4491 = vtanh.pop %v4451
    %v4492 = vxor.u32 %v4452, 2147483648
    %v4493 = vmul.f32 %v4492, 1.442695
    %v4494 = vpow.pop %v4493
    %v4495 = vadd.f32 %v4494, 1.0
    %v4496 = vrcp.pop %v4495
    %v4497 = vmul.f32 %v4495, %v4496
    %v4498 = vsub.f32 1.0, %v4497
    %v4499 = vmul.f32 %v4496, %v4498
    %v4500 = vadd.f32 %v4496, %v4499
    %vm4501 = vweird.f32 %v4495
    %vm4502 = vweird.f32 %v4496
    %vm4503 = vmor %vm4501, %vm4502
    %v4504 = vsel %vm4503, %v4496, %v4500
    %v4505 = vand.u32 2147483647, %v4495
    %vm4506 = vcmp.eq.f32.partialorder %v4505, 8.507059e+37
    %v4507 = vand.u32 %v4495, 2147483648
    %v4508 = vor.u32 1.1754944e-38, %v4507
    %v4509 = vsel %vm4506, %v4508, %v4504
    %v4510 = vmul.f32 1.0, %v4509
    %v4511 = vmul.f32 %v4490, %v4196
    %v4512 = vmul.f32 %v4471, %v4491
    %v4513 = vadd.f32 %v4511, %v4512
    %v4514 = vtanh.pop %v4513
    %v4515 = vmul.f32 %v4510, %v4514
    %4516 = vst [vmem:[%s1578] sm:$0xff] %v4515
    %v4517 = vpack.c.bf16 %v4515, %v4515
    %v4518 = vld [vmem:[%s1581] sm:$0xff]
    %v4519 = vld [vmem:[%s1581 + $0x8] sm:$0xff]
    %v4520 = vld [vmem:[%s1581 + $0x10] sm:$0xff]
    %v4521 = vld [vmem:[%s1581 + $0x18] sm:$0xff]
    %v4522 = vld [vmem:[#allocation9] sm:$0xff]
    %v4523 = vld [vmem:[#allocation9 + $0x8] sm:$0xff]
    %v4524 = vld [vmem:[#allocation9 + $0x10] sm:$0xff]
    %v4525 = vld [vmem:[#allocation9 + $0x18] sm:$0xff]
    %v4526 = vld [vmem:[#allocation9 + $0x20] sm:$0xff]
    %v4527 = vld [vmem:[#allocation9 + $0x28] sm:$0xff]
    %v4528 = vld [vmem:[#allocation9 + $0x30] sm:$0xff]
    %v4529 = vld [vmem:[#allocation9 + $0x38] sm:$0xff]
    %v4530 = vld [vmem:[#allocation9 + $0x40] sm:$0xff]
    %v4531 = vld [vmem:[#allocation9 + $0x48] sm:$0xff]
    %v4532 = vld [vmem:[#allocation9 + $0x50] sm:$0xff]
    %v4533 = vld [vmem:[#allocation9 + $0x58] sm:$0xff]
    %v4534 = vld [vmem:[#allocation9 + $0x60] sm:$0xff]
    %v4535 = vld [vmem:[#allocation9 + $0x68] sm:$0xff]
    %v4536 = vld [vmem:[#allocation9 + $0x70] sm:$0xff]
    %v4537 = vld [vmem:[#allocation9 + $0x78] sm:$0xff]
    %v4538 = vld [vmem:[#allocation9 + $0x80] sm:$0xff]
    %v4539 = vld [vmem:[#allocation9 + $0x88] sm:$0xff]
    %v4540 = vld [vmem:[#allocation9 + $0x90] sm:$0xff]
    %v4541 = vld [vmem:[#allocation9 + $0x98] sm:$0xff]
    %v4542 = vld [vmem:[#allocation9 + $0xa0] sm:$0xff]
    %v4543 = vld [vmem:[#allocation9 + $0xa8] sm:$0xff]
    %v4544 = vld [vmem:[#allocation9 + $0xb0] sm:$0xff]
    %v4545 = vld [vmem:[#allocation9 + $0xb8] sm:$0xff]
    %v4546 = vld [vmem:[#allocation9 + $0xc0] sm:$0xff]
    %v4547 = vld [vmem:[#allocation9 + $0xc8] sm:$0xff]
    %v4548 = vld [vmem:[#allocation9 + $0xd0] sm:$0xff]
    %v4549 = vld [vmem:[#allocation9 + $0xd8] sm:$0xff]
    %v4550 = vld [vmem:[#allocation9 + $0xe0] sm:$0xff]
    %v4551 = vld [vmem:[#allocation9 + $0xe8] sm:$0xff]
    %v4552 = vld [vmem:[#allocation9 + $0xf0] sm:$0xff]
    %v4553 = vld [vmem:[#allocation9 + $0xf8] sm:$0xff]
    %v4586 = vunpack.c.l.b16 %v4522
    %v4587 = vunpack.c.h.b16 %v4522
    %v4588 = vunpack.c.l.b16 %v4523
    %v4589 = vunpack.c.h.b16 %v4523
    %v4590 = vunpack.c.l.b16 %v4524
    %v4591 = vunpack.c.h.b16 %v4524
    %v4592 = vunpack.c.l.b16 %v4525
    %v4593 = vunpack.c.h.b16 %v4525
    %v4594 = vunpack.c.l.b16 %v4526
    %v4595 = vunpack.c.h.b16 %v4526
    %v4596 = vunpack.c.l.b16 %v4527
    %v4597 = vunpack.c.h.b16 %v4527
    %v4598 = vunpack.c.l.b16 %v4528
    %v4599 = vunpack.c.h.b16 %v4528
    %v4600 = vunpack.c.l.b16 %v4529
    %v4601 = vunpack.c.h.b16 %v4529
    %v4602 = vunpack.c.l.b16 %v4530
    %v4603 = vunpack.c.h.b16 %v4530
    %v4604 = vunpack.c.l.b16 %v4531
    %v4605 = vunpack.c.h.b16 %v4531
    %v4606 = vunpack.c.l.b16 %v4532
    %v4607 = vunpack.c.h.b16 %v4532
    %v4608 = vunpack.c.l.b16 %v4533
    %v4609 = vunpack.c.h.b16 %v4533
    %v4610 = vunpack.c.l.b16 %v4534
    %v4611 = vunpack.c.h.b16 %v4534
    %v4612 = vunpack.c.l.b16 %v4535
    %v4613 = vunpack.c.h.b16 %v4535
    %v4614 = vunpack.c.l.b16 %v4536
    %v4615 = vunpack.c.h.b16 %v4536
    %v4616 = vunpack.c.l.b16 %v4537
    %v4617 = vunpack.c.h.b16 %v4537
    %v4618 = vunpack.c.l.b16 %v4538
    %v4619 = vunpack.c.h.b16 %v4538
    %v4620 = vunpack.c.l.b16 %v4539
    %v4621 = vunpack.c.h.b16 %v4539
    %v4622 = vunpack.c.l.b16 %v4540
    %v4623 = vunpack.c.h.b16 %v4540
    %v4624 = vunpack.c.l.b16 %v4541
    %v4625 = vunpack.c.h.b16 %v4541
    %v4626 = vunpack.c.l.b16 %v4542
    %v4627 = vunpack.c.h.b16 %v4542
    %v4628 = vunpack.c.l.b16 %v4543
    %v4629 = vunpack.c.h.b16 %v4543
    %v4630 = vunpack.c.l.b16 %v4544
    %v4631 = vunpack.c.h.b16 %v4544
    %v4632 = vunpack.c.l.b16 %v4545
    %v4633 = vunpack.c.h.b16 %v4545
    %v4634 = vunpack.c.l.b16 %v4546
    %v4635 = vunpack.c.h.b16 %v4546
    %v4636 = vunpack.c.l.b16 %v4547
    %v4637 = vunpack.c.h.b16 %v4547
    %v4638 = vunpack.c.l.b16 %v4548
    %v4639 = vunpack.c.h.b16 %v4548
    %v4640 = vunpack.c.l.b16 %v4549
    %v4641 = vunpack.c.h.b16 %v4549
    %v4642 = vunpack.c.l.b16 %v4550
    %v4643 = vunpack.c.h.b16 %v4550
    %v4644 = vunpack.c.l.b16 %v4551
    %v4645 = vunpack.c.h.b16 %v4551
    %v4646 = vunpack.c.l.b16 %v4552
    %v4647 = vunpack.c.h.b16 %v4552
    %v4648 = vunpack.c.l.b16 %v4553
    %v4649 = vunpack.c.h.b16 %v4553
    %v4650 = vpack.c.b16 %v4590, %v4586
    %v4651 = vpack.c.b16 %v4591, %v4587
    %v4652 = vpack.c.b16 %v4592, %v4588
    %v4653 = vpack.c.b16 %v4593, %v4589
    %v4654 = vpack.c.b16 %v4598, %v4594
    %v4655 = vpack.c.b16 %v4599, %v4595
    %v4656 = vpack.c.b16 %v4600, %v4596
    %v4657 = vpack.c.b16 %v4601, %v4597
    %v4658 = vpack.c.b16 %v4606, %v4602
    %v4659 = vpack.c.b16 %v4607, %v4603
    %v4660 = vpack.c.b16 %v4608, %v4604
    %v4661 = vpack.c.b16 %v4609, %v4605
    %v4662 = vpack.c.b16 %v4614, %v4610
    %v4663 = vpack.c.b16 %v4615, %v4611
    %v4664 = vpack.c.b16 %v4616, %v4612
    %v4665 = vpack.c.b16 %v4617, %v4613
    %v4666 = vpack.c.b16 %v4622, %v4618
    %v4667 = vpack.c.b16 %v4623, %v4619
    %v4668 = vpack.c.b16 %v4624, %v4620
    %v4669 = vpack.c.b16 %v4625, %v4621
    %v4670 = vpack.c.b16 %v4630, %v4626
    %v4671 = vpack.c.b16 %v4631, %v4627
    %v4672 = vpack.c.b16 %v4632, %v4628
    %v4673 = vpack.c.b16 %v4633, %v4629
    %v4674 = vpack.c.b16 %v4638, %v4634
    %v4675 = vpack.c.b16 %v4639, %v4635
    %v4676 = vpack.c.b16 %v4640, %v4636
    %v4677 = vpack.c.b16 %v4641, %v4637
    %v4678 = vpack.c.b16 %v4646, %v4642
    %v4679 = vpack.c.b16 %v4647, %v4643
    %v4680 = vpack.c.b16 %v4648, %v4644
    %v4681 = vpack.c.b16 %v4649, %v4645
    %4714 = vmatpush.bf16.msra.mxu0 %v4678
    %4715 = vmatpush.bf16.msra.mxu0 %v4674
    %4716 = vmatpush.bf16.msra.mxu0 %v4670
    %4717 = vmatpush.bf16.msra.mxu0 %v4666
    %4718 = vmatpush.bf16.msra.mxu0 %v4662
    %4719 = vmatpush.bf16.msra.mxu0 %v4658
    %4720 = vmatpush.bf16.msra.mxu0 %v4654
    %4721 = vmatpush.bf16.msra.mxu0 %v4650
    %4722 = vmatmul.bf16.gmra.mxu0 %v4517
    %v4723 = vpop.f32.mrf.mxu0
    %v4724 = vadd.f32 0.0, %v4723
    %v4725 = vpop.f32.mrf.mxu0
    %4726 = vdwg.mxu0
    %4727 = vmatpush.bf16.msra.mxu0 %v4679
    %4728 = vmatpush.bf16.msra.mxu0 %v4675
    %4729 = vmatpush.bf16.msra.mxu0 %v4671
    %4730 = vmatpush.bf16.msra.mxu0 %v4667
    %4731 = vmatpush.bf16.msra.mxu0 %v4663
    %4732 = vmatpush.bf16.msra.mxu0 %v4659
    %4733 = vmatpush.bf16.msra.mxu0 %v4655
    %4734 = vmatpush.bf16.msra.mxu0 %v4651
    %4735 = vmatmul.bf16.gmra.mxu0 %v4517
    %v4736 = vpop.f32.mrf.mxu0
    %v4737 = vadd.f32 0.0, %v4736
    %v4738 = vpop.f32.mrf.mxu0
    %4739 = vdwg.mxu0
    %4740 = vmatpush.bf16.msra.mxu0 %v4680
    %4741 = vmatpush.bf16.msra.mxu0 %v4676
    %4742 = vmatpush.bf16.msra.mxu0 %v4672
    %4743 = vmatpush.bf16.msra.mxu0 %v4668
    %4744 = vmatpush.bf16.msra.mxu0 %v4664
    %4745 = vmatpush.bf16.msra.mxu0 %v4660
    %4746 = vmatpush.bf16.msra.mxu0 %v4656
    %4747 = vmatpush.bf16.msra.mxu0 %v4652
    %4748 = vmatmul.bf16.gmra.mxu0 %v4517
    %v4749 = vpop.f32.mrf.mxu0
    %v4750 = vadd.f32 0.0, %v4749
    %v4751 = vpop.f32.mrf.mxu0
    %4752 = vdwg.mxu0
    %4753 = vmatpush.bf16.msra.mxu0 %v4681
    %4754 = vmatpush.bf16.msra.mxu0 %v4677
    %4755 = vmatpush.bf16.msra.mxu0 %v4673
    %4756 = vmatpush.bf16.msra.mxu0 %v4669
    %4757 = vmatpush.bf16.msra.mxu0 %v4665
    %4758 = vmatpush.bf16.msra.mxu0 %v4661
    %4759 = vmatpush.bf16.msra.mxu0 %v4657
    %4760 = vmatpush.bf16.msra.mxu0 %v4653
    %4761 = vmatmul.bf16.gmra.mxu0 %v4517
    %v4762 = vpop.f32.mrf.mxu0
    %v4763 = vadd.f32 0.0, %v4762
    %v4764 = vpop.f32.mrf.mxu0
    %4765 = vdwg.mxu0
    %v4766 = vadd.f32 %v4518, %v4724
    %v4767 = vadd.f32 %v4519, %v4737
    %v4768 = vadd.f32 %v4520, %v4750
    %v4769 = vadd.f32 %v4521, %v4763
    %v4770 = vxor.u32 %v4766, 2147483648
    %v4771 = vmul.f32 %v4770, 1.442695
    %v4772 = vpow.pop %v4771
    %v4773 = vadd.f32 %v4772, 1.0
    %v4774 = vrcp.pop %v4773
    %v4775 = vmul.f32 %v4773, %v4774
    %v4776 = vsub.f32 1.0, %v4775
    %v4777 = vmul.f32 %v4774, %v4776
    %v4778 = vadd.f32 %v4774, %v4777
    %vm4779 = vweird.f32 %v4773
    %vm4780 = vweird.f32 %v4774
    %vm4781 = vmor %vm4779, %vm4780
    %v4782 = vsel %vm4781, %v4774, %v4778
    %v4783 = vand.u32 2147483647, %v4773
    %vm4784 = vcmp.eq.f32.partialorder %v4783, 8.507059e+37
    %v4785 = vand.u32 %v4773, 2147483648
    %v4786 = vor.u32 1.1754944e-38, %v4785
    %v4787 = vsel %vm4784, %v4786, %v4782
    %v4788 = vmul.f32 1.0, %v4787
    %v4789 = vxor.u32 %v4767, 2147483648
    %v4790 = vmul.f32 %v4789, 1.442695
    %v4791 = vpow.pop %v4790
    %v4792 = vadd.f32 %v4791, 1.0
    %v4793 = vrcp.pop %v4792
    %v4794 = vmul.f32 %v4792, %v4793
    %v4795 = vsub.f32 1.0, %v4794
    %v4796 = vmul.f32 %v4793, %v4795
    %v4797 = vadd.f32 %v4793, %v4796
    %vm4798 = vweird.f32 %v4792
    %vm4799 = vweird.f32 %v4793
    %vm4800 = vmor %vm4798, %vm4799
    %v4801 = vsel %vm4800, %v4793, %v4797
    %v4802 = vand.u32 2147483647, %v4792
    %vm4803 = vcmp.eq.f32.partialorder %v4802, 8.507059e+37
    %v4804 = vand.u32 %v4792, 2147483648
    %v4805 = vor.u32 1.1754944e-38, %v4804
    %v4806 = vsel %vm4803, %v4805, %v4801
    %v4807 = vmul.f32 1.0, %v4806
    %v4808 = vtanh.pop %v4768
    %v4809 = vxor.u32 %v4769, 2147483648
    %v4810 = vmul.f32 %v4809, 1.442695
    %v4811 = vpow.pop %v4810
    %v4812 = vadd.f32 %v4811, 1.0
    %v4813 = vrcp.pop %v4812
    %v4814 = vmul.f32 %v4812, %v4813
    %v4815 = vsub.f32 1.0, %v4814
    %v4816 = vmul.f32 %v4813, %v4815
    %v4817 = vadd.f32 %v4813, %v4816
    %vm4818 = vweird.f32 %v4812
    %vm4819 = vweird.f32 %v4813
    %vm4820 = vmor %vm4818, %vm4819
    %v4821 = vsel %vm4820, %v4813, %v4817
    %v4822 = vand.u32 2147483647, %v4812
    %vm4823 = vcmp.eq.f32.partialorder %v4822, 8.507059e+37
    %v4824 = vand.u32 %v4812, 2147483648
    %v4825 = vor.u32 1.1754944e-38, %v4824
    %v4826 = vsel %vm4823, %v4825, %v4821
    %v4827 = vmul.f32 1.0, %v4826
    %v4828 = vmul.f32 %v4807, %v4513
    %v4829 = vmul.f32 %v4788, %v4808
    %v4830 = vadd.f32 %v4828, %v4829
    %v4831 = vtanh.pop %v4830
    %v4832 = vmul.f32 %v4827, %v4831
    %4833 = vst [vmem:[%s1897] sm:$0xff] %v4832
    %v4834 = vpack.c.bf16 %v4832, %v4832
    %v4835 = vld [vmem:[%s1900] sm:$0xff]
    %v4836 = vld [vmem:[%s1900 + $0x8] sm:$0xff]
    %v4837 = vld [vmem:[%s1900 + $0x10] sm:$0xff]
    %v4838 = vld [vmem:[%s1900 + $0x18] sm:$0xff]
    %v4839 = vld [vmem:[#allocation9] sm:$0xff]
    %v4840 = vld [vmem:[#allocation9 + $0x8] sm:$0xff]
    %v4841 = vld [vmem:[#allocation9 + $0x10] sm:$0xff]
    %v4842 = vld [vmem:[#allocation9 + $0x18] sm:$0xff]
    %v4843 = vld [vmem:[#allocation9 + $0x20] sm:$0xff]
    %v4844 = vld [vmem:[#allocation9 + $0x28] sm:$0xff]
    %v4845 = vld [vmem:[#allocation9 + $0x30] sm:$0xff]
    %v4846 = vld [vmem:[#allocation9 + $0x38] sm:$0xff]
    %v4847 = vld [vmem:[#allocation9 + $0x40] sm:$0xff]
    %v4848 = vld [vmem:[#allocation9 + $0x48] sm:$0xff]
    %v4849 = vld [vmem:[#allocation9 + $0x50] sm:$0xff]
    %v4850 = vld [vmem:[#allocation9 + $0x58] sm:$0xff]
    %v4851 = vld [vmem:[#allocation9 + $0x60] sm:$0xff]
    %v4852 = vld [vmem:[#allocation9 + $0x68] sm:$0xff]
    %v4853 = vld [vmem:[#allocation9 + $0x70] sm:$0xff]
    %v4854 = vld [vmem:[#allocation9 + $0x78] sm:$0xff]
    %v4855 = vld [vmem:[#allocation9 + $0x80] sm:$0xff]
    %v4856 = vld [vmem:[#allocation9 + $0x88] sm:$0xff]
    %v4857 = vld [vmem:[#allocation9 + $0x90] sm:$0xff]
    %v4858 = vld [vmem:[#allocation9 + $0x98] sm:$0xff]
    %v4859 = vld [vmem:[#allocation9 + $0xa0] sm:$0xff]
    %v4860 = vld [vmem:[#allocation9 + $0xa8] sm:$0xff]
    %v4861 = vld [vmem:[#allocation9 + $0xb0] sm:$0xff]
    %v4862 = vld [vmem:[#allocation9 + $0xb8] sm:$0xff]
    %v4863 = vld [vmem:[#allocation9 + $0xc0] sm:$0xff]
    %v4864 = vld [vmem:[#allocation9 + $0xc8] sm:$0xff]
    %v4865 = vld [vmem:[#allocation9 + $0xd0] sm:$0xff]
    %v4866 = vld [vmem:[#allocation9 + $0xd8] sm:$0xff]
    %v4867 = vld [vmem:[#allocation9 + $0xe0] sm:$0xff]
    %v4868 = vld [vmem:[#allocation9 + $0xe8] sm:$0xff]
    %v4869 = vld [vmem:[#allocation9 + $0xf0] sm:$0xff]
    %v4870 = vld [vmem:[#allocation9 + $0xf8] sm:$0xff]
    %v4903 = vunpack.c.l.b16 %v4839
    %v4904 = vunpack.c.h.b16 %v4839
    %v4905 = vunpack.c.l.b16 %v4840
    %v4906 = vunpack.c.h.b16 %v4840
    %v4907 = vunpack.c.l.b16 %v4841
    %v4908 = vunpack.c.h.b16 %v4841
    %v4909 = vunpack.c.l.b16 %v4842
    %v4910 = vunpack.c.h.b16 %v4842
    %v4911 = vunpack.c.l.b16 %v4843
    %v4912 = vunpack.c.h.b16 %v4843
    %v4913 = vunpack.c.l.b16 %v4844
    %v4914 = vunpack.c.h.b16 %v4844
    %v4915 = vunpack.c.l.b16 %v4845
    %v4916 = vunpack.c.h.b16 %v4845
    %v4917 = vunpack.c.l.b16 %v4846
    %v4918 = vunpack.c.h.b16 %v4846
    %v4919 = vunpack.c.l.b16 %v4847
    %v4920 = vunpack.c.h.b16 %v4847
    %v4921 = vunpack.c.l.b16 %v4848
    %v4922 = vunpack.c.h.b16 %v4848
    %v4923 = vunpack.c.l.b16 %v4849
    %v4924 = vunpack.c.h.b16 %v4849
    %v4925 = vunpack.c.l.b16 %v4850
    %v4926 = vunpack.c.h.b16 %v4850
    %v4927 = vunpack.c.l.b16 %v4851
    %v4928 = vunpack.c.h.b16 %v4851
    %v4929 = vunpack.c.l.b16 %v4852
    %v4930 = vunpack.c.h.b16 %v4852
    %v4931 = vunpack.c.l.b16 %v4853
    %v4932 = vunpack.c.h.b16 %v4853
    %v4933 = vunpack.c.l.b16 %v4854
    %v4934 = vunpack.c.h.b16 %v4854
    %v4935 = vunpack.c.l.b16 %v4855
    %v4936 = vunpack.c.h.b16 %v4855
    %v4937 = vunpack.c.l.b16 %v4856
    %v4938 = vunpack.c.h.b16 %v4856
    %v4939 = vunpack.c.l.b16 %v4857
    %v4940 = vunpack.c.h.b16 %v4857
    %v4941 = vunpack.c.l.b16 %v4858
    %v4942 = vunpack.c.h.b16 %v4858
    %v4943 = vunpack.c.l.b16 %v4859
    %v4944 = vunpack.c.h.b16 %v4859
    %v4945 = vunpack.c.l.b16 %v4860
    %v4946 = vunpack.c.h.b16 %v4860
    %v4947 = vunpack.c.l.b16 %v4861
    %v4948 = vunpack.c.h.b16 %v4861
    %v4949 = vunpack.c.l.b16 %v4862
    %v4950 = vunpack.c.h.b16 %v4862
    %v4951 = vunpack.c.l.b16 %v4863
    %v4952 = vunpack.c.h.b16 %v4863
    %v4953 = vunpack.c.l.b16 %v4864
    %v4954 = vunpack.c.h.b16 %v4864
    %v4955 = vunpack.c.l.b16 %v4865
    %v4956 = vunpack.c.h.b16 %v4865
    %v4957 = vunpack.c.l.b16 %v4866
    %v4958 = vunpack.c.h.b16 %v4866
    %v4959 = vunpack.c.l.b16 %v4867
    %v4960 = vunpack.c.h.b16 %v4867
    %v4961 = vunpack.c.l.b16 %v4868
    %v4962 = vunpack.c.h.b16 %v4868
    %v4963 = vunpack.c.l.b16 %v4869
    %v4964 = vunpack.c.h.b16 %v4869
    %v4965 = vunpack.c.l.b16 %v4870
    %v4966 = vunpack.c.h.b16 %v4870
    %v4967 = vpack.c.b16 %v4907, %v4903
    %v4968 = vpack.c.b16 %v4908, %v4904
    %v4969 = vpack.c.b16 %v4909, %v4905
    %v4970 = vpack.c.b16 %v4910, %v4906
    %v4971 = vpack.c.b16 %v4915, %v4911
    %v4972 = vpack.c.b16 %v4916, %v4912
    %v4973 = vpack.c.b16 %v4917, %v4913
    %v4974 = vpack.c.b16 %v4918, %v4914
    %v4975 = vpack.c.b16 %v4923, %v4919
    %v4976 = vpack.c.b16 %v4924, %v4920
    %v4977 = vpack.c.b16 %v4925, %v4921
    %v4978 = vpack.c.b16 %v4926, %v4922
    %v4979 = vpack.c.b16 %v4931, %v4927
    %v4980 = vpack.c.b16 %v4932, %v4928
    %v4981 = vpack.c.b16 %v4933, %v4929
    %v4982 = vpack.c.b16 %v4934, %v4930
    %v4983 = vpack.c.b16 %v4939, %v4935
    %v4984 = vpack.c.b16 %v4940, %v4936
    %v4985 = vpack.c.b16 %v4941, %v4937
    %v4986 = vpack.c.b16 %v4942, %v4938
    %v4987 = vpack.c.b16 %v4947, %v4943
    %v4988 = vpack.c.b16 %v4948, %v4944
    %v4989 = vpack.c.b16 %v4949, %v4945
    %v4990 = vpack.c.b16 %v4950, %v4946
    %v4991 = vpack.c.b16 %v4955, %v4951
    %v4992 = vpack.c.b16 %v4956, %v4952
    %v4993 = vpack.c.b16 %v4957, %v4953
    %v4994 = vpack.c.b16 %v4958, %v4954
    %v4995 = vpack.c.b16 %v4963, %v4959
    %v4996 = vpack.c.b16 %v4964, %v4960
    %v4997 = vpack.c.b16 %v4965, %v4961
    %v4998 = vpack.c.b16 %v4966, %v4962
    %5031 = vmatpush.bf16.msra.mxu0 %v4995
    %5032 = vmatpush.bf16.msra.mxu0 %v4991
    %5033 = vmatpush.bf16.msra.mxu0 %v4987
    %5034 = vmatpush.bf16.msra.mxu0 %v4983
    %5035 = vmatpush.bf16.msra.mxu0 %v4979
    %5036 = vmatpush.bf16.msra.mxu0 %v4975
    %5037 = vmatpush.bf16.msra.mxu0 %v4971
    %5038 = vmatpush.bf16.msra.mxu0 %v4967
    %5039 = vmatmul.bf16.gmra.mxu0 %v4834
    %v5040 = vpop.f32.mrf.mxu0
    %v5041 = vadd.f32 0.0, %v5040
    %v5042 = vpop.f32.mrf.mxu0
    %5043 = vdwg.mxu0
    %5044 = vmatpush.bf16.msra.mxu0 %v4996
    %5045 = vmatpush.bf16.msra.mxu0 %v4992
    %5046 = vmatpush.bf16.msra.mxu0 %v4988
    %5047 = vmatpush.bf16.msra.mxu0 %v4984
    %5048 = vmatpush.bf16.msra.mxu0 %v4980
    %5049 = vmatpush.bf16.msra.mxu0 %v4976
    %5050 = vmatpush.bf16.msra.mxu0 %v4972
    %5051 = vmatpush.bf16.msra.mxu0 %v4968
    %5052 = vmatmul.bf16.gmra.mxu0 %v4834
    %v5053 = vpop.f32.mrf.mxu0
    %v5054 = vadd.f32 0.0, %v5053
    %v5055 = vpop.f32.mrf.mxu0
    %5056 = vdwg.mxu0
    %5057 = vmatpush.bf16.msra.mxu0 %v4997
    %5058 = vmatpush.bf16.msra.mxu0 %v4993
    %5059 = vmatpush.bf16.msra.mxu0 %v4989
    %5060 = vmatpush.bf16.msra.mxu0 %v4985
    %5061 = vmatpush.bf16.msra.mxu0 %v4981
    %5062 = vmatpush.bf16.msra.mxu0 %v4977
    %5063 = vmatpush.bf16.msra.mxu0 %v4973
    %5064 = vmatpush.bf16.msra.mxu0 %v4969
    %5065 = vmatmul.bf16.gmra.mxu0 %v4834
    %v5066 = vpop.f32.mrf.mxu0
    %v5067 = vadd.f32 0.0, %v5066
    %v5068 = vpop.f32.mrf.mxu0
    %5069 = vdwg.mxu0
    %5070 = vmatpush.bf16.msra.mxu0 %v4998
    %5071 = vmatpush.bf16.msra.mxu0 %v4994
    %5072 = vmatpush.bf16.msra.mxu0 %v4990
    %5073 = vmatpush.bf16.msra.mxu0 %v4986
    %5074 = vmatpush.bf16.msra.mxu0 %v4982
    %5075 = vmatpush.bf16.msra.mxu0 %v4978
    %5076 = vmatpush.bf16.msra.mxu0 %v4974
    %5077 = vmatpush.bf16.msra.mxu0 %v4970
    %5078 = vmatmul.bf16.gmra.mxu0 %v4834
    %v5079 = vpop.f32.mrf.mxu0
    %v5080 = vadd.f32 0.0, %v5079
    %v5081 = vpop.f32.mrf.mxu0
    %5082 = vdwg.mxu0
    %v5083 = vadd.f32 %v4835, %v5041
    %v5084 = vadd.f32 %v4836, %v5054
    %v5085 = vadd.f32 %v4837, %v5067
    %v5086 = vadd.f32 %v4838, %v5080
    %v5087 = vxor.u32 %v5083, 2147483648
    %v5088 = vmul.f32 %v5087, 1.442695
    %v5089 = vpow.pop %v5088
    %v5090 = vadd.f32 %v5089, 1.0
    %v5091 = vrcp.pop %v5090
    %v5092 = vmul.f32 %v5090, %v5091
    %v5093 = vsub.f32 1.0, %v5092
    %v5094 = vmul.f32 %v5091, %v5093
    %v5095 = vadd.f32 %v5091, %v5094
    %vm5096 = vweird.f32 %v5090
    %vm5097 = vweird.f32 %v5091
    %vm5098 = vmor %vm5096, %vm5097
    %v5099 = vsel %vm5098, %v5091, %v5095
    %v5100 = vand.u32 2147483647, %v5090
    %vm5101 = vcmp.eq.f32.partialorder %v5100, 8.507059e+37
    %v5102 = vand.u32 %v5090, 2147483648
    %v5103 = vor.u32 1.1754944e-38, %v5102
    %v5104 = vsel %vm5101, %v5103, %v5099
    %v5105 = vmul.f32 1.0, %v5104
    %v5106 = vxor.u32 %v5084, 2147483648
    %v5107 = vmul.f32 %v5106, 1.442695
    %v5108 = vpow.pop %v5107
    %v5109 = vadd.f32 %v5108, 1.0
    %v5110 = vrcp.pop %v5109
    %v5111 = vmul.f32 %v5109, %v5110
    %v5112 = vsub.f32 1.0, %v5111
    %v5113 = vmul.f32 %v5110, %v5112
    %v5114 = vadd.f32 %v5110, %v5113
    %vm5115 = vweird.f32 %v5109
    %vm5116 = vweird.f32 %v5110
    %vm5117 = vmor %vm5115, %vm5116
    %v5118 = vsel %vm5117, %v5110, %v5114
    %v5119 = vand.u32 2147483647, %v5109
    %vm5120 = vcmp.eq.f32.partialorder %v5119, 8.507059e+37
    %v5121 = vand.u32 %v5109, 2147483648
    %v5122 = vor.u32 1.1754944e-38, %v5121
    %v5123 = vsel %vm5120, %v5122, %v5118
    %v5124 = vmul.f32 1.0, %v5123
    %v5125 = vtanh.pop %v5085
    %v5126 = vxor.u32 %v5086, 2147483648
    %v5127 = vmul.f32 %v5126, 1.442695
    %v5128 = vpow.pop %v5127
    %v5129 = vadd.f32 %v5128, 1.0
    %v5130 = vrcp.pop %v5129
    %v5131 = vmul.f32 %v5129, %v5130
    %v5132 = vsub.f32 1.0, %v5131
    %v5133 = vmul.f32 %v5130, %v5132
    %v5134 = vadd.f32 %v5130, %v5133
    %vm5135 = vweird.f32 %v5129
    %vm5136 = vweird.f32 %v5130
    %vm5137 = vmor %vm5135, %vm5136
    %v5138 = vsel %vm5137, %v5130, %v5134
    %v5139 = vand.u32 2147483647, %v5129
    %vm5140 = vcmp.eq.f32.partialorder %v5139, 8.507059e+37
    %v5141 = vand.u32 %v5129, 2147483648
    %v5142 = vor.u32 1.1754944e-38, %v5141
    %v5143 = vsel %vm5140, %v5142, %v5138
    %v5144 = vmul.f32 1.0, %v5143
    %v5145 = vmul.f32 %v5124, %v4830
    %v5146 = vmul.f32 %v5105, %v5125
    %v5147 = vadd.f32 %v5145, %v5146
    %v5148 = vtanh.pop %v5147
    %v5149 = vmul.f32 %v5144, %v5148
    %5150 = vst [vmem:[%s2216] sm:$0xff] %v5149
    %v5151 = vpack.c.bf16 %v5149, %v5149
    %v5152 = vld [vmem:[%s2219] sm:$0xff]
    %v5153 = vld [vmem:[%s2219 + $0x8] sm:$0xff]
    %v5154 = vld [vmem:[%s2219 + $0x10] sm:$0xff]
    %v5155 = vld [vmem:[%s2219 + $0x18] sm:$0xff]
    %v5156 = vld [vmem:[#allocation9] sm:$0xff]
    %v5157 = vld [vmem:[#allocation9 + $0x8] sm:$0xff]
    %v5158 = vld [vmem:[#allocation9 + $0x10] sm:$0xff]
    %v5159 = vld [vmem:[#allocation9 + $0x18] sm:$0xff]
    %v5160 = vld [vmem:[#allocation9 + $0x20] sm:$0xff]
    %v5161 = vld [vmem:[#allocation9 + $0x28] sm:$0xff]
    %v5162 = vld [vmem:[#allocation9 + $0x30] sm:$0xff]
    %v5163 = vld [vmem:[#allocation9 + $0x38] sm:$0xff]
    %v5164 = vld [vmem:[#allocation9 + $0x40] sm:$0xff]
    %v5165 = vld [vmem:[#allocation9 + $0x48] sm:$0xff]
    %v5166 = vld [vmem:[#allocation9 + $0x50] sm:$0xff]
    %v5167 = vld [vmem:[#allocation9 + $0x58] sm:$0xff]
    %v5168 = vld [vmem:[#allocation9 + $0x60] sm:$0xff]
    %v5169 = vld [vmem:[#allocation9 + $0x68] sm:$0xff]
    %v5170 = vld [vmem:[#allocation9 + $0x70] sm:$0xff]
    %v5171 = vld [vmem:[#allocation9 + $0x78] sm:$0xff]
    %v5172 = vld [vmem:[#allocation9 + $0x80] sm:$0xff]
    %v5173 = vld [vmem:[#allocation9 + $0x88] sm:$0xff]
    %v5174 = vld [vmem:[#allocation9 + $0x90] sm:$0xff]
    %v5175 = vld [vmem:[#allocation9 + $0x98] sm:$0xff]
    %v5176 = vld [vmem:[#allocation9 + $0xa0] sm:$0xff]
    %v5177 = vld [vmem:[#allocation9 + $0xa8] sm:$0xff]
    %v5178 = vld [vmem:[#allocation9 + $0xb0] sm:$0xff]
    %v5179 = vld [vmem:[#allocation9 + $0xb8] sm:$0xff]
    %v5180 = vld [vmem:[#allocation9 + $0xc0] sm:$0xff]
    %v5181 = vld [vmem:[#allocation9 + $0xc8] sm:$0xff]
    %v5182 = vld [vmem:[#allocation9 + $0xd0] sm:$0xff]
    %v5183 = vld [vmem:[#allocation9 + $0xd8] sm:$0xff]
    %v5184 = vld [vmem:[#allocation9 + $0xe0] sm:$0xff]
    %v5185 = vld [vmem:[#allocation9 + $0xe8] sm:$0xff]
    %v5186 = vld [vmem:[#allocation9 + $0xf0] sm:$0xff]
    %v5187 = vld [vmem:[#allocation9 + $0xf8] sm:$0xff]
    %v5220 = vunpack.c.l.b16 %v5156
    %v5221 = vunpack.c.h.b16 %v5156
    %v5222 = vunpack.c.l.b16 %v5157
    %v5223 = vunpack.c.h.b16 %v5157
    %v5224 = vunpack.c.l.b16 %v5158
    %v5225 = vunpack.c.h.b16 %v5158
    %v5226 = vunpack.c.l.b16 %v5159
    %v5227 = vunpack.c.h.b16 %v5159
    %v5228 = vunpack.c.l.b16 %v5160
    %v5229 = vunpack.c.h.b16 %v5160
    %v5230 = vunpack.c.l.b16 %v5161
    %v5231 = vunpack.c.h.b16 %v5161
    %v5232 = vunpack.c.l.b16 %v5162
    %v5233 = vunpack.c.h.b16 %v5162
    %v5234 = vunpack.c.l.b16 %v5163
    %v5235 = vunpack.c.h.b16 %v5163
    %v5236 = vunpack.c.l.b16 %v5164
    %v5237 = vunpack.c.h.b16 %v5164
    %v5238 = vunpack.c.l.b16 %v5165
    %v5239 = vunpack.c.h.b16 %v5165
    %v5240 = vunpack.c.l.b16 %v5166
    %v5241 = vunpack.c.h.b16 %v5166
    %v5242 = vunpack.c.l.b16 %v5167
    %v5243 = vunpack.c.h.b16 %v5167
    %v5244 = vunpack.c.l.b16 %v5168
    %v5245 = vunpack.c.h.b16 %v5168
    %v5246 = vunpack.c.l.b16 %v5169
    %v5247 = vunpack.c.h.b16 %v5169
    %v5248 = vunpack.c.l.b16 %v5170
    %v5249 = vunpack.c.h.b16 %v5170
    %v5250 = vunpack.c.l.b16 %v5171
    %v5251 = vunpack.c.h.b16 %v5171
    %v5252 = vunpack.c.l.b16 %v5172
    %v5253 = vunpack.c.h.b16 %v5172
    %v5254 = vunpack.c.l.b16 %v5173
    %v5255 = vunpack.c.h.b16 %v5173
    %v5256 = vunpack.c.l.b16 %v5174
    %v5257 = vunpack.c.h.b16 %v5174
    %v5258 = vunpack.c.l.b16 %v5175
    %v5259 = vunpack.c.h.b16 %v5175
    %v5260 = vunpack.c.l.b16 %v5176
    %v5261 = vunpack.c.h.b16 %v5176
    %v5262 = vunpack.c.l.b16 %v5177
    %v5263 = vunpack.c.h.b16 %v5177
    %v5264 = vunpack.c.l.b16 %v5178
    %v5265 = vunpack.c.h.b16 %v5178
    %v5266 = vunpack.c.l.b16 %v5179
    %v5267 = vunpack.c.h.b16 %v5179
    %v5268 = vunpack.c.l.b16 %v5180
    %v5269 = vunpack.c.h.b16 %v5180
    %v5270 = vunpack.c.l.b16 %v5181
    %v5271 = vunpack.c.h.b16 %v5181
    %v5272 = vunpack.c.l.b16 %v5182
    %v5273 = vunpack.c.h.b16 %v5182
    %v5274 = vunpack.c.l.b16 %v5183
    %v5275 = vunpack.c.h.b16 %v5183
    %v5276 = vunpack.c.l.b16 %v5184
    %v5277 = vunpack.c.h.b16 %v5184
    %v5278 = vunpack.c.l.b16 %v5185
    %v5279 = vunpack.c.h.b16 %v5185
    %v5280 = vunpack.c.l.b16 %v5186
    %v5281 = vunpack.c.h.b16 %v5186
    %v5282 = vunpack.c.l.b16 %v5187
    %v5283 = vunpack.c.h.b16 %v5187
    %v5284 = vpack.c.b16 %v5224, %v5220
    %v5285 = vpack.c.b16 %v5225, %v5221
    %v5286 = vpack.c.b16 %v5226, %v5222
    %v5287 = vpack.c.b16 %v5227, %v5223
    %v5288 = vpack.c.b16 %v5232, %v5228
    %v5289 = vpack.c.b16 %v5233, %v5229
    %v5290 = vpack.c.b16 %v5234, %v5230
    %v5291 = vpack.c.b16 %v5235, %v5231
    %v5292 = vpack.c.b16 %v5240, %v5236
    %v5293 = vpack.c.b16 %v5241, %v5237
    %v5294 = vpack.c.b16 %v5242, %v5238
    %v5295 = vpack.c.b16 %v5243, %v5239
    %v5296 = vpack.c.b16 %v5248, %v5244
    %v5297 = vpack.c.b16 %v5249, %v5245
    %v5298 = vpack.c.b16 %v5250, %v5246
    %v5299 = vpack.c.b16 %v5251, %v5247
    %v5300 = vpack.c.b16 %v5256, %v5252
    %v5301 = vpack.c.b16 %v5257, %v5253
    %v5302 = vpack.c.b16 %v5258, %v5254
    %v5303 = vpack.c.b16 %v5259, %v5255
    %v5304 = vpack.c.b16 %v5264, %v5260
    %v5305 = vpack.c.b16 %v5265, %v5261
    %v5306 = vpack.c.b16 %v5266, %v5262
    %v5307 = vpack.c.b16 %v5267, %v5263
    %v5308 = vpack.c.b16 %v5272, %v5268
    %v5309 = vpack.c.b16 %v5273, %v5269
    %v5310 = vpack.c.b16 %v5274, %v5270
    %v5311 = vpack.c.b16 %v5275, %v5271
    %v5312 = vpack.c.b16 %v5280, %v5276
    %v5313 = vpack.c.b16 %v5281, %v5277
    %v5314 = vpack.c.b16 %v5282, %v5278
    %v5315 = vpack.c.b16 %v5283, %v5279
    %5348 = vmatpush.bf16.msra.mxu0 %v5312
    %5349 = vmatpush.bf16.msra.mxu0 %v5308
    %5350 = vmatpush.bf16.msra.mxu0 %v5304
    %5351 = vmatpush.bf16.msra.mxu0 %v5300
    %5352 = vmatpush.bf16.msra.mxu0 %v5296
    %5353 = vmatpush.bf16.msra.mxu0 %v5292
    %5354 = vmatpush.bf16.msra.mxu0 %v5288
    %5355 = vmatpush.bf16.msra.mxu0 %v5284
    %5356 = vmatmul.bf16.gmra.mxu0 %v5151
    %v5357 = vpop.f32.mrf.mxu0
    %v5358 = vadd.f32 0.0, %v5357
    %v5359 = vpop.f32.mrf.mxu0
    %5360 = vdwg.mxu0
    %5361 = vmatpush.bf16.msra.mxu0 %v5313
    %5362 = vmatpush.bf16.msra.mxu0 %v5309
    %5363 = vmatpush.bf16.msra.mxu0 %v5305
    %5364 = vmatpush.bf16.msra.mxu0 %v5301
    %5365 = vmatpush.bf16.msra.mxu0 %v5297
    %5366 = vmatpush.bf16.msra.mxu0 %v5293
    %5367 = vmatpush.bf16.msra.mxu0 %v5289
    %5368 = vmatpush.bf16.msra.mxu0 %v5285
    %5369 = vmatmul.bf16.gmra.mxu0 %v5151
    %v5370 = vpop.f32.mrf.mxu0
    %v5371 = vadd.f32 0.0, %v5370
    %v5372 = vpop.f32.mrf.mxu0
    %5373 = vdwg.mxu0
    %5374 = vmatpush.bf16.msra.mxu0 %v5314
    %5375 = vmatpush.bf16.msra.mxu0 %v5310
    %5376 = vmatpush.bf16.msra.mxu0 %v5306
    %5377 = vmatpush.bf16.msra.mxu0 %v5302
    %5378 = vmatpush.bf16.msra.mxu0 %v5298
    %5379 = vmatpush.bf16.msra.mxu0 %v5294
    %5380 = vmatpush.bf16.msra.mxu0 %v5290
    %5381 = vmatpush.bf16.msra.mxu0 %v5286
    %5382 = vmatmul.bf16.gmra.mxu0 %v5151
    %v5383 = vpop.f32.mrf.mxu0
    %v5384 = vadd.f32 0.0, %v5383
    %v5385 = vpop.f32.mrf.mxu0
    %5386 = vdwg.mxu0
    %5387 = vmatpush.bf16.msra.mxu0 %v5315
    %5388 = vmatpush.bf16.msra.mxu0 %v5311
    %5389 = vmatpush.bf16.msra.mxu0 %v5307
    %5390 = vmatpush.bf16.msra.mxu0 %v5303
    %5391 = vmatpush.bf16.msra.mxu0 %v5299
    %5392 = vmatpush.bf16.msra.mxu0 %v5295
    %5393 = vmatpush.bf16.msra.mxu0 %v5291
    %5394 = vmatpush.bf16.msra.mxu0 %v5287
    %5395 = vmatmul.bf16.gmra.mxu0 %v5151
    %v5396 = vpop.f32.mrf.mxu0
    %v5397 = vadd.f32 0.0, %v5396
    %v5398 = vpop.f32.mrf.mxu0
    %5399 = vdwg.mxu0
    %v5400 = vadd.f32 %v5152, %v5358
    %v5401 = vadd.f32 %v5153, %v5371
    %v5402 = vadd.f32 %v5154, %v5384
    %v5403 = vadd.f32 %v5155, %v5397
    %v5404 = vxor.u32 %v5400, 2147483648
    %v5405 = vmul.f32 %v5404, 1.442695
    %v5406 = vpow.pop %v5405
    %v5407 = vadd.f32 %v5406, 1.0
    %v5408 = vrcp.pop %v5407
    %v5409 = vmul.f32 %v5407, %v5408
    %v5410 = vsub.f32 1.0, %v5409
    %v5411 = vmul.f32 %v5408, %v5410
    %v5412 = vadd.f32 %v5408, %v5411
    %vm5413 = vweird.f32 %v5407
    %vm5414 = vweird.f32 %v5408
    %vm5415 = vmor %vm5413, %vm5414
    %v5416 = vsel %vm5415, %v5408, %v5412
    %v5417 = vand.u32 2147483647, %v5407
    %vm5418 = vcmp.eq.f32.partialorder %v5417, 8.507059e+37
    %v5419 = vand.u32 %v5407, 2147483648
    %v5420 = vor.u32 1.1754944e-38, %v5419
    %v5421 = vsel %vm5418, %v5420, %v5416
    %v5422 = vmul.f32 1.0, %v5421
    %v5423 = vxor.u32 %v5401, 2147483648
    %v5424 = vmul.f32 %v5423, 1.442695
    %v5425 = vpow.pop %v5424
    %v5426 = vadd.f32 %v5425, 1.0
    %v5427 = vrcp.pop %v5426
    %v5428 = vmul.f32 %v5426, %v5427
    %v5429 = vsub.f32 1.0, %v5428
    %v5430 = vmul.f32 %v5427, %v5429
    %v5431 = vadd.f32 %v5427, %v5430
    %vm5432 = vweird.f32 %v5426
    %vm5433 = vweird.f32 %v5427
    %vm5434 = vmor %vm5432, %vm5433
    %v5435 = vsel %vm5434, %v5427, %v5431
    %v5436 = vand.u32 2147483647, %v5426
    %vm5437 = vcmp.eq.f32.partialorder %v5436, 8.507059e+37
    %v5438 = vand.u32 %v5426, 2147483648
    %v5439 = vor.u32 1.1754944e-38, %v5438
    %v5440 = vsel %vm5437, %v5439, %v5435
    %v5441 = vmul.f32 1.0, %v5440
    %v5442 = vtanh.pop %v5402
    %v5443 = vxor.u32 %v5403, 2147483648
    %v5444 = vmul.f32 %v5443, 1.442695
    %v5445 = vpow.pop %v5444
    %v5446 = vadd.f32 %v5445, 1.0
    %v5447 = vrcp.pop %v5446
    %v5448 = vmul.f32 %v5446, %v5447
    %v5449 = vsub.f32 1.0, %v5448
    %v5450 = vmul.f32 %v5447, %v5449
    %v5451 = vadd.f32 %v5447, %v5450
    %vm5452 = vweird.f32 %v5446
    %vm5453 = vweird.f32 %v5447
    %vm5454 = vmor %vm5452, %vm5453
    %v5455 = vsel %vm5454, %v5447, %v5451
    %v5456 = vand.u32 2147483647, %v5446
    %vm5457 = vcmp.eq.f32.partialorder %v5456, 8.507059e+37
    %v5458 = vand.u32 %v5446, 2147483648
    %v5459 = vor.u32 1.1754944e-38, %v5458
    %v5460 = vsel %vm5457, %v5459, %v5455
    %v5461 = vmul.f32 1.0, %v5460
    %v5462 = vmul.f32 %v5441, %v5147
    %v5463 = vmul.f32 %v5422, %v5442
    %v5464 = vadd.f32 %v5462, %v5463
    %v5465 = vtanh.pop %v5464
    %v5466 = vmul.f32 %v5461, %v5465
    %5467 = vst [vmem:[%s2535] sm:$0xff] %v5466
    %v5468 = vpack.c.bf16 %v5466, %v5466
    %v5469 = vld [vmem:[%s2538] sm:$0xff]
    %v5470 = vld [vmem:[%s2538 + $0x8] sm:$0xff]
    %v5471 = vld [vmem:[%s2538 + $0x10] sm:$0xff]
    %v5472 = vld [vmem:[%s2538 + $0x18] sm:$0xff]
    %v5473 = vld [vmem:[#allocation9] sm:$0xff]
    %v5474 = vld [vmem:[#allocation9 + $0x8] sm:$0xff]
    %v5475 = vld [vmem:[#allocation9 + $0x10] sm:$0xff]
    %v5476 = vld [vmem:[#allocation9 + $0x18] sm:$0xff]
    %v5477 = vld [vmem:[#allocation9 + $0x20] sm:$0xff]
    %v5478 = vld [vmem:[#allocation9 + $0x28] sm:$0xff]
    %v5479 = vld [vmem:[#allocation9 + $0x30] sm:$0xff]
    %v5480 = vld [vmem:[#allocation9 + $0x38] sm:$0xff]
    %v5481 = vld [vmem:[#allocation9 + $0x40] sm:$0xff]
    %v5482 = vld [vmem:[#allocation9 + $0x48] sm:$0xff]
    %v5483 = vld [vmem:[#allocation9 + $0x50] sm:$0xff]
    %v5484 = vld [vmem:[#allocation9 + $0x58] sm:$0xff]
    %v5485 = vld [vmem:[#allocation9 + $0x60] sm:$0xff]
    %v5486 = vld [vmem:[#allocation9 + $0x68] sm:$0xff]
    %v5487 = vld [vmem:[#allocation9 + $0x70] sm:$0xff]
    %v5488 = vld [vmem:[#allocation9 + $0x78] sm:$0xff]
    %v5489 = vld [vmem:[#allocation9 + $0x80] sm:$0xff]
    %v5490 = vld [vmem:[#allocation9 + $0x88] sm:$0xff]
    %v5491 = vld [vmem:[#allocation9 + $0x90] sm:$0xff]
    %v5492 = vld [vmem:[#allocation9 + $0x98] sm:$0xff]
    %v5493 = vld [vmem:[#allocation9 + $0xa0] sm:$0xff]
    %v5494 = vld [vmem:[#allocation9 + $0xa8] sm:$0xff]
    %v5495 = vld [vmem:[#allocation9 + $0xb0] sm:$0xff]
    %v5496 = vld [vmem:[#allocation9 + $0xb8] sm:$0xff]
    %v5497 = vld [vmem:[#allocation9 + $0xc0] sm:$0xff]
    %v5498 = vld [vmem:[#allocation9 + $0xc8] sm:$0xff]
    %v5499 = vld [vmem:[#allocation9 + $0xd0] sm:$0xff]
    %v5500 = vld [vmem:[#allocation9 + $0xd8] sm:$0xff]
    %v5501 = vld [vmem:[#allocation9 + $0xe0] sm:$0xff]
    %v5502 = vld [vmem:[#allocation9 + $0xe8] sm:$0xff]
    %v5503 = vld [vmem:[#allocation9 + $0xf0] sm:$0xff]
    %v5504 = vld [vmem:[#allocation9 + $0xf8] sm:$0xff]
    %v5537 = vunpack.c.l.b16 %v5473
    %v5538 = vunpack.c.h.b16 %v5473
    %v5539 = vunpack.c.l.b16 %v5474
    %v5540 = vunpack.c.h.b16 %v5474
    %v5541 = vunpack.c.l.b16 %v5475
    %v5542 = vunpack.c.h.b16 %v5475
    %v5543 = vunpack.c.l.b16 %v5476
    %v5544 = vunpack.c.h.b16 %v5476
    %v5545 = vunpack.c.l.b16 %v5477
    %v5546 = vunpack.c.h.b16 %v5477
    %v5547 = vunpack.c.l.b16 %v5478
    %v5548 = vunpack.c.h.b16 %v5478
    %v5549 = vunpack.c.l.b16 %v5479
    %v5550 = vunpack.c.h.b16 %v5479
    %v5551 = vunpack.c.l.b16 %v5480
    %v5552 = vunpack.c.h.b16 %v5480
    %v5553 = vunpack.c.l.b16 %v5481
    %v5554 = vunpack.c.h.b16 %v5481
    %v5555 = vunpack.c.l.b16 %v5482
    %v5556 = vunpack.c.h.b16 %v5482
    %v5557 = vunpack.c.l.b16 %v5483
    %v5558 = vunpack.c.h.b16 %v5483
    %v5559 = vunpack.c.l.b16 %v5484
    %v5560 = vunpack.c.h.b16 %v5484
    %v5561 = vunpack.c.l.b16 %v5485
    %v5562 = vunpack.c.h.b16 %v5485
    %v5563 = vunpack.c.l.b16 %v5486
    %v5564 = vunpack.c.h.b16 %v5486
    %v5565 = vunpack.c.l.b16 %v5487
    %v5566 = vunpack.c.h.b16 %v5487
    %v5567 = vunpack.c.l.b16 %v5488
    %v5568 = vunpack.c.h.b16 %v5488
    %v5569 = vunpack.c.l.b16 %v5489
    %v5570 = vunpack.c.h.b16 %v5489
    %v5571 = vunpack.c.l.b16 %v5490
    %v5572 = vunpack.c.h.b16 %v5490
    %v5573 = vunpack.c.l.b16 %v5491
    %v5574 = vunpack.c.h.b16 %v5491
    %v5575 = vunpack.c.l.b16 %v5492
    %v5576 = vunpack.c.h.b16 %v5492
    %v5577 = vunpack.c.l.b16 %v5493
    %v5578 = vunpack.c.h.b16 %v5493
    %v5579 = vunpack.c.l.b16 %v5494
    %v5580 = vunpack.c.h.b16 %v5494
    %v5581 = vunpack.c.l.b16 %v5495
    %v5582 = vunpack.c.h.b16 %v5495
    %v5583 = vunpack.c.l.b16 %v5496
    %v5584 = vunpack.c.h.b16 %v5496
    %v5585 = vunpack.c.l.b16 %v5497
    %v5586 = vunpack.c.h.b16 %v5497
    %v5587 = vunpack.c.l.b16 %v5498
    %v5588 = vunpack.c.h.b16 %v5498
    %v5589 = vunpack.c.l.b16 %v5499
    %v5590 = vunpack.c.h.b16 %v5499
    %v5591 = vunpack.c.l.b16 %v5500
    %v5592 = vunpack.c.h.b16 %v5500
    %v5593 = vunpack.c.l.b16 %v5501
    %v5594 = vunpack.c.h.b16 %v5501
    %v5595 = vunpack.c.l.b16 %v5502
    %v5596 = vunpack.c.h.b16 %v5502
    %v5597 = vunpack.c.l.b16 %v5503
    %v5598 = vunpack.c.h.b16 %v5503
    %v5599 = vunpack.c.l.b16 %v5504
    %v5600 = vunpack.c.h.b16 %v5504
    %v5601 = vpack.c.b16 %v5541, %v5537
    %v5602 = vpack.c.b16 %v5542, %v5538
    %v5603 = vpack.c.b16 %v5543, %v5539
    %v5604 = vpack.c.b16 %v5544, %v5540
    %v5605 = vpack.c.b16 %v5549, %v5545
    %v5606 = vpack.c.b16 %v5550, %v5546
    %v5607 = vpack.c.b16 %v5551, %v5547
    %v5608 = vpack.c.b16 %v5552, %v5548
    %v5609 = vpack.c.b16 %v5557, %v5553
    %v5610 = vpack.c.b16 %v5558, %v5554
    %v5611 = vpack.c.b16 %v5559, %v5555
    %v5612 = vpack.c.b16 %v5560, %v5556
    %v5613 = vpack.c.b16 %v5565, %v5561
    %v5614 = vpack.c.b16 %v5566, %v5562
    %v5615 = vpack.c.b16 %v5567, %v5563
    %v5616 = vpack.c.b16 %v5568, %v5564
    %v5617 = vpack.c.b16 %v5573, %v5569
    %v5618 = vpack.c.b16 %v5574, %v5570
    %v5619 = vpack.c.b16 %v5575, %v5571
    %v5620 = vpack.c.b16 %v5576, %v5572
    %v5621 = vpack.c.b16 %v5581, %v5577
    %v5622 = vpack.c.b16 %v5582, %v5578
    %v5623 = vpack.c.b16 %v5583, %v5579
    %v5624 = vpack.c.b16 %v5584, %v5580
    %v5625 = vpack.c.b16 %v5589, %v5585
    %v5626 = vpack.c.b16 %v5590, %v5586
    %v5627 = vpack.c.b16 %v5591, %v5587
    %v5628 = vpack.c.b16 %v5592, %v5588
    %v5629 = vpack.c.b16 %v5597, %v5593
    %v5630 = vpack.c.b16 %v5598, %v5594
    %v5631 = vpack.c.b16 %v5599, %v5595
    %v5632 = vpack.c.b16 %v5600, %v5596
    %5665 = vmatpush.bf16.msra.mxu0 %v5629
    %5666 = vmatpush.bf16.msra.mxu0 %v5625
    %5667 = vmatpush.bf16.msra.mxu0 %v5621
    %5668 = vmatpush.bf16.msra.mxu0 %v5617
    %5669 = vmatpush.bf16.msra.mxu0 %v5613
    %5670 = vmatpush.bf16.msra.mxu0 %v5609
    %5671 = vmatpush.bf16.msra.mxu0 %v5605
    %5672 = vmatpush.bf16.msra.mxu0 %v5601
    %5673 = vmatmul.bf16.gmra.mxu0 %v5468
    %v5674 = vpop.f32.mrf.mxu0
    %v5675 = vadd.f32 0.0, %v5674
    %v5676 = vpop.f32.mrf.mxu0
    %5677 = vdwg.mxu0
    %5678 = vmatpush.bf16.msra.mxu0 %v5630
    %5679 = vmatpush.bf16.msra.mxu0 %v5626
    %5680 = vmatpush.bf16.msra.mxu0 %v5622
    %5681 = vmatpush.bf16.msra.mxu0 %v5618
    %5682 = vmatpush.bf16.msra.mxu0 %v5614
    %5683 = vmatpush.bf16.msra.mxu0 %v5610
    %5684 = vmatpush.bf16.msra.mxu0 %v5606
    %5685 = vmatpush.bf16.msra.mxu0 %v5602
    %5686 = vmatmul.bf16.gmra.mxu0 %v5468
    %v5687 = vpop.f32.mrf.mxu0
    %v5688 = vadd.f32 0.0, %v5687
    %v5689 = vpop.f32.mrf.mxu0
    %5690 = vdwg.mxu0
    %5691 = vmatpush.bf16.msra.mxu0 %v5631
    %5692 = vmatpush.bf16.msra.mxu0 %v5627
    %5693 = vmatpush.bf16.msra.mxu0 %v5623
    %5694 = vmatpush.bf16.msra.mxu0 %v5619
    %5695 = vmatpush.bf16.msra.mxu0 %v5615
    %5696 = vmatpush.bf16.msra.mxu0 %v5611
    %5697 = vmatpush.bf16.msra.mxu0 %v5607
    %5698 = vmatpush.bf16.msra.mxu0 %v5603
    %5699 = vmatmul.bf16.gmra.mxu0 %v5468
    %v5700 = vpop.f32.mrf.mxu0
    %v5701 = vadd.f32 0.0, %v5700
    %v5702 = vpop.f32.mrf.mxu0
    %5703 = vdwg.mxu0
    %5704 = vmatpush.bf16.msra.mxu0 %v5632
    %5705 = vmatpush.bf16.msra.mxu0 %v5628
    %5706 = vmatpush.bf16.msra.mxu0 %v5624
    %5707 = vmatpush.bf16.msra.mxu0 %v5620
    %5708 = vmatpush.bf16.msra.mxu0 %v5616
    %5709 = vmatpush.bf16.msra.mxu0 %v5612
    %5710 = vmatpush.bf16.msra.mxu0 %v5608
    %5711 = vmatpush.bf16.msra.mxu0 %v5604
    %5712 = vmatmul.bf16.gmra.mxu0 %v5468
    %v5713 = vpop.f32.mrf.mxu0
    %v5714 = vadd.f32 0.0, %v5713
    %v5715 = vpop.f32.mrf.mxu0
    %5716 = vdwg.mxu0
    %v5717 = vadd.f32 %v5469, %v5675
    %v5718 = vadd.f32 %v5470, %v5688
    %v5719 = vadd.f32 %v5471, %v5701
    %v5720 = vadd.f32 %v5472, %v5714
    %v5721 = vxor.u32 %v5717, 2147483648
    %v5722 = vmul.f32 %v5721, 1.442695
    %v5723 = vpow.pop %v5722
    %v5724 = vadd.f32 %v5723, 1.0
    %v5725 = vrcp.pop %v5724
    %v5726 = vmul.f32 %v5724, %v5725
    %v5727 = vsub.f32 1.0, %v5726
    %v5728 = vmul.f32 %v5725, %v5727
    %v5729 = vadd.f32 %v5725, %v5728
    %vm5730 = vweird.f32 %v5724
    %vm5731 = vweird.f32 %v5725
    %vm5732 = vmor %vm5730, %vm5731
    %v5733 = vsel %vm5732, %v5725, %v5729
    %v5734 = vand.u32 2147483647, %v5724
    %vm5735 = vcmp.eq.f32.partialorder %v5734, 8.507059e+37
    %v5736 = vand.u32 %v5724, 2147483648
    %v5737 = vor.u32 1.1754944e-38, %v5736
    %v5738 = vsel %vm5735, %v5737, %v5733
    %v5739 = vmul.f32 1.0, %v5738
    %v5740 = vxor.u32 %v5718, 2147483648
    %v5741 = vmul.f32 %v5740, 1.442695
    %v5742 = vpow.pop %v5741
    %v5743 = vadd.f32 %v5742, 1.0
    %v5744 = vrcp.pop %v5743
    %v5745 = vmul.f32 %v5743, %v5744
    %v5746 = vsub.f32 1.0, %v5745
    %v5747 = vmul.f32 %v5744, %v5746
    %v5748 = vadd.f32 %v5744, %v5747
    %vm5749 = vweird.f32 %v5743
    %vm5750 = vweird.f32 %v5744
    %vm5751 = vmor %vm5749, %vm5750
    %v5752 = vsel %vm5751, %v5744, %v5748
    %v5753 = vand.u32 2147483647, %v5743
    %vm5754 = vcmp.eq.f32.partialorder %v5753, 8.507059e+37
    %v5755 = vand.u32 %v5743, 2147483648
    %v5756 = vor.u32 1.1754944e-38, %v5755
    %v5757 = vsel %vm5754, %v5756, %v5752
    %v5758 = vmul.f32 1.0, %v5757
    %v5759 = vtanh.pop %v5719
    %v5760 = vxor.u32 %v5720, 2147483648
    %v5761 = vmul.f32 %v5760, 1.442695
    %v5762 = vpow.pop %v5761
    %v5763 = vadd.f32 %v5762, 1.0
    %v5764 = vrcp.pop %v5763
    %v5765 = vmul.f32 %v5763, %v5764
    %v5766 = vsub.f32 1.0, %v5765
    %v5767 = vmul.f32 %v5764, %v5766
    %v5768 = vadd.f32 %v5764, %v5767
    %vm5769 = vweird.f32 %v5763
    %vm5770 = vweird.f32 %v5764
    %vm5771 = vmor %vm5769, %vm5770
    %v5772 = vsel %vm5771, %v5764, %v5768
    %v5773 = vand.u32 2147483647, %v5763
    %vm5774 = vcmp.eq.f32.partialorder %v5773, 8.507059e+37
    %v5775 = vand.u32 %v5763, 2147483648
    %v5776 = vor.u32 1.1754944e-38, %v5775
    %v5777 = vsel %vm5774, %v5776, %v5772
    %v5778 = vmul.f32 1.0, %v5777
    %v5779 = vmul.f32 %v5758, %v5464
    %v5780 = vmul.f32 %v5739, %v5759
    %v5781 = vadd.f32 %v5779, %v5780
    %v5782 = vtanh.pop %v5781
    %v5783 = vmul.f32 %v5778, %v5782
    %5784 = vst [vmem:[%s2854] sm:$0xff] %v5783
    %v5785 = vld [vmem:[#allocation2] sm:$0xff]
    %v5786 = vld [vmem:[#allocation2 + $0x8] sm:$0xff]
    %v5787 = vld [vmem:[#allocation2 + $0x10] sm:$0xff]
    %v5788 = vld [vmem:[#allocation2 + $0x18] sm:$0xff]
    %v5789 = vld [vmem:[#allocation2 + $0x20] sm:$0xff]
    %v5790 = vld [vmem:[#allocation2 + $0x28] sm:$0xff]
    %v5791 = vld [vmem:[#allocation2 + $0x30] sm:$0xff]
    %v5792 = vld [vmem:[#allocation2 + $0x38] sm:$0xff]
    %v5793 = vpack.c.bf16 %v5786, %v5785
    %v5794 = vpack.c.bf16 %v5788, %v5787
    %v5795 = vpack.c.bf16 %v5790, %v5789
    %v5796 = vpack.c.bf16 %v5792, %v5791
    %v5797 = vld [vmem:[#allocation10] sm:$0xff]
    %v5798 = vld [vmem:[#allocation10 + $0x8] sm:$0xff]
    %v5799 = vld [vmem:[#allocation10 + $0x10] sm:$0xff]
    %v5800 = vld [vmem:[#allocation10 + $0x18] sm:$0xff]
    %v5801 = vld [vmem:[#allocation10 + $0x20] sm:$0xff]
    %v5802 = vld [vmem:[#allocation10 + $0x28] sm:$0xff]
    %v5803 = vld [vmem:[#allocation10 + $0x30] sm:$0xff]
    %v5804 = vld [vmem:[#allocation10 + $0x38] sm:$0xff]
    %v5805 = vld [vmem:[#allocation10 + $0x40] sm:$0xff]
    %v5806 = vld [vmem:[#allocation10 + $0x48] sm:$0xff]
    %v5807 = vld [vmem:[#allocation10 + $0x50] sm:$0xff]
    %v5808 = vld [vmem:[#allocation10 + $0x58] sm:$0xff]
    %v5809 = vld [vmem:[#allocation10 + $0x60] sm:$0xff]
    %v5810 = vld [vmem:[#allocation10 + $0x68] sm:$0xff]
    %v5811 = vld [vmem:[#allocation10 + $0x70] sm:$0xff]
    %v5812 = vld [vmem:[#allocation10 + $0x78] sm:$0xff]
    %v5813 = vld [vmem:[#allocation10 + $0x80] sm:$0xff]
    %v5814 = vld [vmem:[#allocation10 + $0x88] sm:$0xff]
    %v5815 = vld [vmem:[#allocation10 + $0x90] sm:$0xff]
    %v5816 = vld [vmem:[#allocation10 + $0x98] sm:$0xff]
    %v5817 = vld [vmem:[#allocation10 + $0xa0] sm:$0xff]
    %v5818 = vld [vmem:[#allocation10 + $0xa8] sm:$0xff]
    %v5819 = vld [vmem:[#allocation10 + $0xb0] sm:$0xff]
    %v5820 = vld [vmem:[#allocation10 + $0xb8] sm:$0xff]
    %v5821 = vld [vmem:[#allocation10 + $0xc0] sm:$0xff]
    %v5822 = vld [vmem:[#allocation10 + $0xc8] sm:$0xff]
    %v5823 = vld [vmem:[#allocation10 + $0xd0] sm:$0xff]
    %v5824 = vld [vmem:[#allocation10 + $0xd8] sm:$0xff]
    %v5825 = vld [vmem:[#allocation10 + $0xe0] sm:$0xff]
    %v5826 = vld [vmem:[#allocation10 + $0xe8] sm:$0xff]
    %v5827 = vld [vmem:[#allocation10 + $0xf0] sm:$0xff]
    %v5828 = vld [vmem:[#allocation10 + $0xf8] sm:$0xff]
    %v5861 = vunpack.c.l.b16 %v5797
    %v5862 = vunpack.c.h.b16 %v5797
    %v5863 = vunpack.c.l.b16 %v5798
    %v5864 = vunpack.c.h.b16 %v5798
    %v5865 = vunpack.c.l.b16 %v5799
    %v5866 = vunpack.c.h.b16 %v5799
    %v5867 = vunpack.c.l.b16 %v5800
    %v5868 = vunpack.c.h.b16 %v5800
    %v5869 = vunpack.c.l.b16 %v5801
    %v5870 = vunpack.c.h.b16 %v5801
    %v5871 = vunpack.c.l.b16 %v5802
    %v5872 = vunpack.c.h.b16 %v5802
    %v5873 = vunpack.c.l.b16 %v5803
    %v5874 = vunpack.c.h.b16 %v5803
    %v5875 = vunpack.c.l.b16 %v5804
    %v5876 = vunpack.c.h.b16 %v5804
    %v5877 = vunpack.c.l.b16 %v5805
    %v5878 = vunpack.c.h.b16 %v5805
    %v5879 = vunpack.c.l.b16 %v5806
    %v5880 = vunpack.c.h.b16 %v5806
    %v5881 = vunpack.c.l.b16 %v5807
    %v5882 = vunpack.c.h.b16 %v5807
    %v5883 = vunpack.c.l.b16 %v5808
    %v5884 = vunpack.c.h.b16 %v5808
    %v5885 = vunpack.c.l.b16 %v5809
    %v5886 = vunpack.c.h.b16 %v5809
    %v5887 = vunpack.c.l.b16 %v5810
    %v5888 = vunpack.c.h.b16 %v5810
    %v5889 = vunpack.c.l.b16 %v5811
    %v5890 = vunpack.c.h.b16 %v5811
    %v5891 = vunpack.c.l.b16 %v5812
    %v5892 = vunpack.c.h.b16 %v5812
    %v5893 = vunpack.c.l.b16 %v5813
    %v5894 = vunpack.c.h.b16 %v5813
    %v5895 = vunpack.c.l.b16 %v5814
    %v5896 = vunpack.c.h.b16 %v5814
    %v5897 = vunpack.c.l.b16 %v5815
    %v5898 = vunpack.c.h.b16 %v5815
    %v5899 = vunpack.c.l.b16 %v5816
    %v5900 = vunpack.c.h.b16 %v5816
    %v5901 = vunpack.c.l.b16 %v5817
    %v5902 = vunpack.c.h.b16 %v5817
    %v5903 = vunpack.c.l.b16 %v5818
    %v5904 = vunpack.c.h.b16 %v5818
    %v5905 = vunpack.c.l.b16 %v5819
    %v5906 = vunpack.c.h.b16 %v5819
    %v5907 = vunpack.c.l.b16 %v5820
    %v5908 = vunpack.c.h.b16 %v5820
    %v5909 = vunpack.c.l.b16 %v5821
    %v5910 = vunpack.c.h.b16 %v5821
    %v5911 = vunpack.c.l.b16 %v5822
    %v5912 = vunpack.c.h.b16 %v5822
    %v5913 = vunpack.c.l.b16 %v5823
    %v5914 = vunpack.c.h.b16 %v5823
    %v5915 = vunpack.c.l.b16 %v5824
    %v5916 = vunpack.c.h.b16 %v5824
    %v5917 = vunpack.c.l.b16 %v5825
    %v5918 = vunpack.c.h.b16 %v5825
    %v5919 = vunpack.c.l.b16 %v5826
    %v5920 = vunpack.c.h.b16 %v5826
    %v5921 = vunpack.c.l.b16 %v5827
    %v5922 = vunpack.c.h.b16 %v5827
    %v5923 = vunpack.c.l.b16 %v5828
    %v5924 = vunpack.c.h.b16 %v5828
    %v5925 = vpack.c.b16 %v5865, %v5861
    %v5926 = vpack.c.b16 %v5866, %v5862
    %v5927 = vpack.c.b16 %v5867, %v5863
    %v5928 = vpack.c.b16 %v5868, %v5864
    %v5929 = vpack.c.b16 %v5873, %v5869
    %v5930 = vpack.c.b16 %v5874, %v5870
    %v5931 = vpack.c.b16 %v5875, %v5871
    %v5932 = vpack.c.b16 %v5876, %v5872
    %v5933 = vpack.c.b16 %v5881, %v5877
    %v5934 = vpack.c.b16 %v5882, %v5878
    %v5935 = vpack.c.b16 %v5883, %v5879
    %v5936 = vpack.c.b16 %v5884, %v5880
    %v5937 = vpack.c.b16 %v5889, %v5885
    %v5938 = vpack.c.b16 %v5890, %v5886
    %v5939 = vpack.c.b16 %v5891, %v5887
    %v5940 = vpack.c.b16 %v5892, %v5888
    %v5941 = vpack.c.b16 %v5897, %v5893
    %v5942 = vpack.c.b16 %v5898, %v5894
    %v5943 = vpack.c.b16 %v5899, %v5895
    %v5944 = vpack.c.b16 %v5900, %v5896
    %v5945 = vpack.c.b16 %v5905, %v5901
    %v5946 = vpack.c.b16 %v5906, %v5902
    %v5947 = vpack.c.b16 %v5907, %v5903
    %v5948 = vpack.c.b16 %v5908, %v5904
    %v5949 = vpack.c.b16 %v5913, %v5909
    %v5950 = vpack.c.b16 %v5914, %v5910
    %v5951 = vpack.c.b16 %v5915, %v5911
    %v5952 = vpack.c.b16 %v5916, %v5912
    %v5953 = vpack.c.b16 %v5921, %v5917
    %v5954 = vpack.c.b16 %v5922, %v5918
    %v5955 = vpack.c.b16 %v5923, %v5919
    %v5956 = vpack.c.b16 %v5924, %v5920
    %5989 = vmatpush.bf16.msra.mxu0 %v5953
    %5990 = vmatpush.bf16.msra.mxu0 %v5949
    %5991 = vmatpush.bf16.msra.mxu0 %v5945
    %5992 = vmatpush.bf16.msra.mxu0 %v5941
    %5993 = vmatpush.bf16.msra.mxu0 %v5937
    %5994 = vmatpush.bf16.msra.mxu0 %v5933
    %5995 = vmatpush.bf16.msra.mxu0 %v5929
    %5996 = vmatpush.bf16.msra.mxu0 %v5925
    %5997 = vmatmul.bf16.gmra.mxu0 %v5793
    %v5998 = vpop.f32.mrf.mxu0
    %v5999 = vadd.f32 0.0, %v5998
    %v6000 = vpop.f32.mrf.mxu0
    %v6001 = vadd.f32 0.0, %v6000
    %6002 = vmatmul.bf16.gmra.mxu0 %v5794
    %v6003 = vpop.f32.mrf.mxu0
    %v6004 = vadd.f32 0.0, %v6003
    %v6005 = vpop.f32.mrf.mxu0
    %v6006 = vadd.f32 0.0, %v6005
    %6007 = vmatmul.bf16.gmra.mxu0 %v5795
    %v6008 = vpop.f32.mrf.mxu0
    %v6009 = vadd.f32 0.0, %v6008
    %v6010 = vpop.f32.mrf.mxu0
    %v6011 = vadd.f32 0.0, %v6010
    %6012 = vmatmul.bf16.gmra.mxu0 %v5796
    %v6013 = vpop.f32.mrf.mxu0
    %v6014 = vadd.f32 0.0, %v6013
    %v6015 = vpop.f32.mrf.mxu0
    %v6016 = vadd.f32 0.0, %v6015
    %6017 = vdwg.mxu0
    %6018 = vmatpush.bf16.msra.mxu0 %v5954
    %6019 = vmatpush.bf16.msra.mxu0 %v5950
    %6020 = vmatpush.bf16.msra.mxu0 %v5946
    %6021 = vmatpush.bf16.msra.mxu0 %v5942
    %6022 = vmatpush.bf16.msra.mxu0 %v5938
    %6023 = vmatpush.bf16.msra.mxu0 %v5934
    %6024 = vmatpush.bf16.msra.mxu0 %v5930
    %6025 = vmatpush.bf16.msra.mxu0 %v5926
    %6026 = vmatmul.bf16.gmra.mxu0 %v5793
    %v6027 = vpop.f32.mrf.mxu0
    %v6028 = vadd.f32 0.0, %v6027
    %v6029 = vpop.f32.mrf.mxu0
    %v6030 = vadd.f32 0.0, %v6029
    %6031 = vmatmul.bf16.gmra.mxu0 %v5794
    %v6032 = vpop.f32.mrf.mxu0
    %v6033 = vadd.f32 0.0, %v6032
    %v6034 = vpop.f32.mrf.mxu0
    %v6035 = vadd.f32 0.0, %v6034
    %6036 = vmatmul.bf16.gmra.mxu0 %v5795
    %v6037 = vpop.f32.mrf.mxu0
    %v6038 = vadd.f32 0.0, %v6037
    %v6039 = vpop.f32.mrf.mxu0
    %v6040 = vadd.f32 0.0, %v6039
    %6041 = vmatmul.bf16.gmra.mxu0 %v5796
    %v6042 = vpop.f32.mrf.mxu0
    %v6043 = vadd.f32 0.0, %v6042
    %v6044 = vpop.f32.mrf.mxu0
    %v6045 = vadd.f32 0.0, %v6044
    %6046 = vdwg.mxu0
    %6047 = vmatpush.bf16.msra.mxu0 %v5955
    %6048 = vmatpush.bf16.msra.mxu0 %v5951
    %6049 = vmatpush.bf16.msra.mxu0 %v5947
    %6050 = vmatpush.bf16.msra.mxu0 %v5943
    %6051 = vmatpush.bf16.msra.mxu0 %v5939
    %6052 = vmatpush.bf16.msra.mxu0 %v5935
    %6053 = vmatpush.bf16.msra.mxu0 %v5931
    %6054 = vmatpush.bf16.msra.mxu0 %v5927
    %6055 = vmatmul.bf16.gmra.mxu0 %v5793
    %v6056 = vpop.f32.mrf.mxu0
    %v6057 = vadd.f32 0.0, %v6056
    %v6058 = vpop.f32.mrf.mxu0
    %v6059 = vadd.f32 0.0, %v6058
    %6060 = vmatmul.bf16.gmra.mxu0 %v5794
    %v6061 = vpop.f32.mrf.mxu0
    %v6062 = vadd.f32 0.0, %v6061
    %v6063 = vpop.f32.mrf.mxu0
    %v6064 = vadd.f32 0.0, %v6063
    %6065 = vmatmul.bf16.gmra.mxu0 %v5795
    %v6066 = vpop.f32.mrf.mxu0
    %v6067 = vadd.f32 0.0, %v6066
    %v6068 = vpop.f32.mrf.mxu0
    %v6069 = vadd.f32 0.0, %v6068
    %6070 = vmatmul.bf16.gmra.mxu0 %v5796
    %v6071 = vpop.f32.mrf.mxu0
    %v6072 = vadd.f32 0.0, %v6071
    %v6073 = vpop.f32.mrf.mxu0
    %v6074 = vadd.f32 0.0, %v6073
    %6075 = vdwg.mxu0
    %6076 = vmatpush.bf16.msra.mxu0 %v5956
    %6077 = vmatpush.bf16.msra.mxu0 %v5952
    %6078 = vmatpush.bf16.msra.mxu0 %v5948
    %6079 = vmatpush.bf16.msra.mxu0 %v5944
    %6080 = vmatpush.bf16.msra.mxu0 %v5940
    %6081 = vmatpush.bf16.msra.mxu0 %v5936
    %6082 = vmatpush.bf16.msra.mxu0 %v5932
    %6083 = vmatpush.bf16.msra.mxu0 %v5928
    %6084 = vmatmul.bf16.gmra.mxu0 %v5793
    %v6085 = vpop.f32.mrf.mxu0
    %v6086 = vadd.f32 0.0, %v6085
    %v6087 = vpop.f32.mrf.mxu0
    %v6088 = vadd.f32 0.0, %v6087
    %6089 = vmatmul.bf16.gmra.mxu0 %v5794
    %v6090 = vpop.f32.mrf.mxu0
    %v6091 = vadd.f32 0.0, %v6090
    %v6092 = vpop.f32.mrf.mxu0
    %v6093 = vadd.f32 0.0, %v6092
    %6094 = vmatmul.bf16.gmra.mxu0 %v5795
    %v6095 = vpop.f32.mrf.mxu0
    %v6096 = vadd.f32 0.0, %v6095
    %v6097 = vpop.f32.mrf.mxu0
    %v6098 = vadd.f32 0.0, %v6097
    %6099 = vmatmul.bf16.gmra.mxu0 %v5796
    %v6100 = vpop.f32.mrf.mxu0
    %v6101 = vadd.f32 0.0, %v6100
    %v6102 = vpop.f32.mrf.mxu0
    %v6103 = vadd.f32 0.0, %v6102
    %6104 = vdwg.mxu0
    %v6105 = vld [vmem:[%s8] sm:$0xf]
    %v6107 = vperm.slane %v6105, 0
    %v6108 = vperm.slane %v6105, 1
    %v6109 = vperm.slane %v6105, 2
    %v6110 = vperm.slane %v6105, 3
    %v6115 = vadd.f32 %v5999, %v6107
    %v6116 = vadd.f32 %v6028, %v6108
    %v6117 = vadd.f32 %v6057, %v6109
    %v6118 = vadd.f32 %v6086, %v6110
    %v6119 = vadd.f32 %v6001, %v6107
    %v6120 = vadd.f32 %v6030, %v6108
    %v6121 = vadd.f32 %v6059, %v6109
    %v6122 = vadd.f32 %v6088, %v6110
    %v6123 = vadd.f32 %v6004, %v6107
    %v6124 = vadd.f32 %v6033, %v6108
    %v6125 = vadd.f32 %v6062, %v6109
    %v6126 = vadd.f32 %v6091, %v6110
    %v6127 = vadd.f32 %v6006, %v6107
    %v6128 = vadd.f32 %v6035, %v6108
    %v6129 = vadd.f32 %v6064, %v6109
    %v6130 = vadd.f32 %v6093, %v6110
    %v6131 = vadd.f32 %v6009, %v6107
    %v6132 = vadd.f32 %v6038, %v6108
    %v6133 = vadd.f32 %v6067, %v6109
    %v6134 = vadd.f32 %v6096, %v6110
    %v6135 = vadd.f32 %v6011, %v6107
    %v6136 = vadd.f32 %v6040, %v6108
    %v6137 = vadd.f32 %v6069, %v6109
    %v6138 = vadd.f32 %v6098, %v6110
    %v6139 = vadd.f32 %v6014, %v6107
    %v6140 = vadd.f32 %v6043, %v6108
    %v6141 = vadd.f32 %v6072, %v6109
    %v6142 = vadd.f32 %v6101, %v6110
    %v6143 = vadd.f32 %v6016, %v6107
    %v6144 = vadd.f32 %v6045, %v6108
    %v6145 = vadd.f32 %v6074, %v6109
    %v6146 = vadd.f32 %v6103, %v6110
    %6147 = vst [vmem:[#allocation3] sm:$0xff] %v6115
    %6148 = vst [vmem:[#allocation3 + $0x8] sm:$0xff] %v6116
    %6149 = vst [vmem:[#allocation3 + $0x10] sm:$0xff] %v6117
    %6150 = vst [vmem:[#allocation3 + $0x18] sm:$0xff] %v6118
    %6151 = vst [vmem:[#allocation3 + $0x20] sm:$0xff] %v6119
    %6152 = vst [vmem:[#allocation3 + $0x28] sm:$0xff] %v6120
    %6153 = vst [vmem:[#allocation3 + $0x30] sm:$0xff] %v6121
    %6154 = vst [vmem:[#allocation3 + $0x38] sm:$0xff] %v6122
    %6155 = vst [vmem:[#allocation3 + $0x40] sm:$0xff] %v6123
    %6156 = vst [vmem:[#allocation3 + $0x48] sm:$0xff] %v6124
    %6157 = vst [vmem:[#allocation3 + $0x50] sm:$0xff] %v6125
    %6158 = vst [vmem:[#allocation3 + $0x58] sm:$0xff] %v6126
    %6159 = vst [vmem:[#allocation3 + $0x60] sm:$0xff] %v6127
    %6160 = vst [vmem:[#allocation3 + $0x68] sm:$0xff] %v6128
    %6161 = vst [vmem:[#allocation3 + $0x70] sm:$0xff] %v6129
    %6162 = vst [vmem:[#allocation3 + $0x78] sm:$0xff] %v6130
    %6163 = vst [vmem:[#allocation3 + $0x80] sm:$0xff] %v6131
    %6164 = vst [vmem:[#allocation3 + $0x88] sm:$0xff] %v6132
    %6165 = vst [vmem:[#allocation3 + $0x90] sm:$0xff] %v6133
    %6166 = vst [vmem:[#allocation3 + $0x98] sm:$0xff] %v6134
    %6167 = vst [vmem:[#allocation3 + $0xa0] sm:$0xff] %v6135
    %6168 = vst [vmem:[#allocation3 + $0xa8] sm:$0xff] %v6136
    %6169 = vst [vmem:[#allocation3 + $0xb0] sm:$0xff] %v6137
    %6170 = vst [vmem:[#allocation3 + $0xb8] sm:$0xff] %v6138
    %6171 = vst [vmem:[#allocation3 + $0xc0] sm:$0xff] %v6139
    %6172 = vst [vmem:[#allocation3 + $0xc8] sm:$0xff] %v6140
    %6173 = vst [vmem:[#allocation3 + $0xd0] sm:$0xff] %v6141
    %6174 = vst [vmem:[#allocation3 + $0xd8] sm:$0xff] %v6142
    %6175 = vst [vmem:[#allocation3 + $0xe0] sm:$0xff] %v6143
    %6176 = vst [vmem:[#allocation3 + $0xe8] sm:$0xff] %v6144
    %6177 = vst [vmem:[#allocation3 + $0xf0] sm:$0xff] %v6145
    %6178 = vst [vmem:[#allocation3 + $0xf8] sm:$0xff] %v6146
    %v6179 = vld [vmem:[#allocation3] sm:$0xff]
    %v6180 = vld [vmem:[#allocation3 + $0x8] sm:$0xff]
    %v6181 = vld [vmem:[#allocation3 + $0x10] sm:$0xff]
    %v6182 = vld [vmem:[#allocation3 + $0x18] sm:$0xff]
    %v6183 = vld [vmem:[#allocation12] sm:$0xff]
    %v6184 = vld [vmem:[#allocation12 + $0x8] sm:$0xff]
    %v6185 = vld [vmem:[#allocation12 + $0x10] sm:$0xff]
    %v6186 = vld [vmem:[#allocation12 + $0x18] sm:$0xff]
    %v6187 = vld [vmem:[#allocation12 + $0x20] sm:$0xff]
    %v6188 = vld [vmem:[#allocation12 + $0x28] sm:$0xff]
    %v6189 = vld [vmem:[#allocation12 + $0x30] sm:$0xff]
    %v6190 = vld [vmem:[#allocation12 + $0x38] sm:$0xff]
    %v6191 = vld [vmem:[#allocation12 + $0x40] sm:$0xff]
    %v6192 = vld [vmem:[#allocation12 + $0x48] sm:$0xff]
    %v6193 = vld [vmem:[#allocation12 + $0x50] sm:$0xff]
    %v6194 = vld [vmem:[#allocation12 + $0x58] sm:$0xff]
    %v6195 = vld [vmem:[#allocation12 + $0x60] sm:$0xff]
    %v6196 = vld [vmem:[#allocation12 + $0x68] sm:$0xff]
    %v6197 = vld [vmem:[#allocation12 + $0x70] sm:$0xff]
    %v6198 = vld [vmem:[#allocation12 + $0x78] sm:$0xff]
    %v6199 = vld [vmem:[#allocation12 + $0x80] sm:$0xff]
    %v6200 = vld [vmem:[#allocation12 + $0x88] sm:$0xff]
    %v6201 = vld [vmem:[#allocation12 + $0x90] sm:$0xff]
    %v6202 = vld [vmem:[#allocation12 + $0x98] sm:$0xff]
    %v6203 = vld [vmem:[#allocation12 + $0xa0] sm:$0xff]
    %v6204 = vld [vmem:[#allocation12 + $0xa8] sm:$0xff]
    %v6205 = vld [vmem:[#allocation12 + $0xb0] sm:$0xff]
    %v6206 = vld [vmem:[#allocation12 + $0xb8] sm:$0xff]
    %v6207 = vld [vmem:[#allocation12 + $0xc0] sm:$0xff]
    %v6208 = vld [vmem:[#allocation12 + $0xc8] sm:$0xff]
    %v6209 = vld [vmem:[#allocation12 + $0xd0] sm:$0xff]
    %v6210 = vld [vmem:[#allocation12 + $0xd8] sm:$0xff]
    %v6211 = vld [vmem:[#allocation12 + $0xe0] sm:$0xff]
    %v6212 = vld [vmem:[#allocation12 + $0xe8] sm:$0xff]
    %v6213 = vld [vmem:[#allocation12 + $0xf0] sm:$0xff]
    %v6214 = vld [vmem:[#allocation12 + $0xf8] sm:$0xff]
    %v6247 = vunpack.c.l.b16 %v6183
    %v6248 = vunpack.c.h.b16 %v6183
    %v6249 = vunpack.c.l.b16 %v6184
    %v6250 = vunpack.c.h.b16 %v6184
    %v6251 = vunpack.c.l.b16 %v6185
    %v6252 = vunpack.c.h.b16 %v6185
    %v6253 = vunpack.c.l.b16 %v6186
    %v6254 = vunpack.c.h.b16 %v6186
    %v6255 = vunpack.c.l.b16 %v6187
    %v6256 = vunpack.c.h.b16 %v6187
    %v6257 = vunpack.c.l.b16 %v6188
    %v6258 = vunpack.c.h.b16 %v6188
    %v6259 = vunpack.c.l.b16 %v6189
    %v6260 = vunpack.c.h.b16 %v6189
    %v6261 = vunpack.c.l.b16 %v6190
    %v6262 = vunpack.c.h.b16 %v6190
    %v6263 = vunpack.c.l.b16 %v6191
    %v6264 = vunpack.c.h.b16 %v6191
    %v6265 = vunpack.c.l.b16 %v6192
    %v6266 = vunpack.c.h.b16 %v6192
    %v6267 = vunpack.c.l.b16 %v6193
    %v6268 = vunpack.c.h.b16 %v6193
    %v6269 = vunpack.c.l.b16 %v6194
    %v6270 = vunpack.c.h.b16 %v6194
    %v6271 = vunpack.c.l.b16 %v6195
    %v6272 = vunpack.c.h.b16 %v6195
    %v6273 = vunpack.c.l.b16 %v6196
    %v6274 = vunpack.c.h.b16 %v6196
    %v6275 = vunpack.c.l.b16 %v6197
    %v6276 = vunpack.c.h.b16 %v6197
    %v6277 = vunpack.c.l.b16 %v6198
    %v6278 = vunpack.c.h.b16 %v6198
    %v6279 = vunpack.c.l.b16 %v6199
    %v6280 = vunpack.c.h.b16 %v6199
    %v6281 = vunpack.c.l.b16 %v6200
    %v6282 = vunpack.c.h.b16 %v6200
    %v6283 = vunpack.c.l.b16 %v6201
    %v6284 = vunpack.c.h.b16 %v6201
    %v6285 = vunpack.c.l.b16 %v6202
    %v6286 = vunpack.c.h.b16 %v6202
    %v6287 = vunpack.c.l.b16 %v6203
    %v6288 = vunpack.c.h.b16 %v6203
    %v6289 = vunpack.c.l.b16 %v6204
    %v6290 = vunpack.c.h.b16 %v6204
    %v6291 = vunpack.c.l.b16 %v6205
    %v6292 = vunpack.c.h.b16 %v6205
    %v6293 = vunpack.c.l.b16 %v6206
    %v6294 = vunpack.c.h.b16 %v6206
    %v6295 = vunpack.c.l.b16 %v6207
    %v6296 = vunpack.c.h.b16 %v6207
    %v6297 = vunpack.c.l.b16 %v6208
    %v6298 = vunpack.c.h.b16 %v6208
    %v6299 = vunpack.c.l.b16 %v6209
    %v6300 = vunpack.c.h.b16 %v6209
    %v6301 = vunpack.c.l.b16 %v6210
    %v6302 = vunpack.c.h.b16 %v6210
    %v6303 = vunpack.c.l.b16 %v6211
    %v6304 = vunpack.c.h.b16 %v6211
    %v6305 = vunpack.c.l.b16 %v6212
    %v6306 = vunpack.c.h.b16 %v6212
    %v6307 = vunpack.c.l.b16 %v6213
    %v6308 = vunpack.c.h.b16 %v6213
    %v6309 = vunpack.c.l.b16 %v6214
    %v6310 = vunpack.c.h.b16 %v6214
    %v6311 = vpack.c.b16 %v6251, %v6247
    %v6312 = vpack.c.b16 %v6252, %v6248
    %v6313 = vpack.c.b16 %v6253, %v6249
    %v6314 = vpack.c.b16 %v6254, %v6250
    %v6315 = vpack.c.b16 %v6259, %v6255
    %v6316 = vpack.c.b16 %v6260, %v6256
    %v6317 = vpack.c.b16 %v6261, %v6257
    %v6318 = vpack.c.b16 %v6262, %v6258
    %v6319 = vpack.c.b16 %v6267, %v6263
    %v6320 = vpack.c.b16 %v6268, %v6264
    %v6321 = vpack.c.b16 %v6269, %v6265
    %v6322 = vpack.c.b16 %v6270, %v6266
    %v6323 = vpack.c.b16 %v6275, %v6271
    %v6324 = vpack.c.b16 %v6276, %v6272
    %v6325 = vpack.c.b16 %v6277, %v6273
    %v6326 = vpack.c.b16 %v6278, %v6274
    %v6327 = vpack.c.b16 %v6283, %v6279
    %v6328 = vpack.c.b16 %v6284, %v6280
    %v6329 = vpack.c.b16 %v6285, %v6281
    %v6330 = vpack.c.b16 %v6286, %v6282
    %v6331 = vpack.c.b16 %v6291, %v6287
    %v6332 = vpack.c.b16 %v6292, %v6288
    %v6333 = vpack.c.b16 %v6293, %v6289
    %v6334 = vpack.c.b16 %v6294, %v6290
    %v6335 = vpack.c.b16 %v6299, %v6295
    %v6336 = vpack.c.b16 %v6300, %v6296
    %v6337 = vpack.c.b16 %v6301, %v6297
    %v6338 = vpack.c.b16 %v6302, %v6298
    %v6339 = vpack.c.b16 %v6307, %v6303
    %v6340 = vpack.c.b16 %v6308, %v6304
    %v6341 = vpack.c.b16 %v6309, %v6305
    %v6342 = vpack.c.b16 %v6310, %v6306
    %6375 = vmatpush.bf16.msra.mxu0 %v6339
    %6376 = vmatpush.bf16.msra.mxu0 %v6335
    %6377 = vmatpush.bf16.msra.mxu0 %v6331
    %6378 = vmatpush.bf16.msra.mxu0 %v6327
    %6379 = vmatpush.bf16.msra.mxu0 %v6323
    %6380 = vmatpush.bf16.msra.mxu0 %v6319
    %6381 = vmatpush.bf16.msra.mxu0 %v6315
    %6382 = vmatpush.bf16.msra.mxu0 %v6311
    %6383 = vmatmul.bf16.gmra.mxu0 0
    %v6384 = vpop.f32.mrf.mxu0
    %v6385 = vadd.f32 0.0, %v6384
    %v6386 = vpop.f32.mrf.mxu0
    %6387 = vdwg.mxu0
    %6388 = vmatpush.bf16.msra.mxu0 %v6340
    %6389 = vmatpush.bf16.msra.mxu0 %v6336
    %6390 = vmatpush.bf16.msra.mxu0 %v6332
    %6391 = vmatpush.bf16.msra.mxu0 %v6328
    %6392 = vmatpush.bf16.msra.mxu0 %v6324
    %6393 = vmatpush.bf16.msra.mxu0 %v6320
    %6394 = vmatpush.bf16.msra.mxu0 %v6316
    %6395 = vmatpush.bf16.msra.mxu0 %v6312
    %6396 = vmatmul.bf16.gmra.mxu0 0
    %v6397 = vpop.f32.mrf.mxu0
    %v6398 = vadd.f32 0.0, %v6397
    %v6399 = vpop.f32.mrf.mxu0
    %6400 = vdwg.mxu0
    %6401 = vmatpush.bf16.msra.mxu0 %v6341
    %6402 = vmatpush.bf16.msra.mxu0 %v6337
    %6403 = vmatpush.bf16.msra.mxu0 %v6333
    %6404 = vmatpush.bf16.msra.mxu0 %v6329
    %6405 = vmatpush.bf16.msra.mxu0 %v6325
    %6406 = vmatpush.bf16.msra.mxu0 %v6321
    %6407 = vmatpush.bf16.msra.mxu0 %v6317
    %6408 = vmatpush.bf16.msra.mxu0 %v6313
    %6409 = vmatmul.bf16.gmra.mxu0 0
    %v6410 = vpop.f32.mrf.mxu0
    %v6411 = vadd.f32 0.0, %v6410
    %v6412 = vpop.f32.mrf.mxu0
    %6413 = vdwg.mxu0
    %6414 = vmatpush.bf16.msra.mxu0 %v6342
    %6415 = vmatpush.bf16.msra.mxu0 %v6338
    %6416 = vmatpush.bf16.msra.mxu0 %v6334
    %6417 = vmatpush.bf16.msra.mxu0 %v6330
    %6418 = vmatpush.bf16.msra.mxu0 %v6326
    %6419 = vmatpush.bf16.msra.mxu0 %v6322
    %6420 = vmatpush.bf16.msra.mxu0 %v6318
    %6421 = vmatpush.bf16.msra.mxu0 %v6314
    %6422 = vmatmul.bf16.gmra.mxu0 0
    %v6423 = vpop.f32.mrf.mxu0
    %v6424 = vadd.f32 0.0, %v6423
    %v6425 = vpop.f32.mrf.mxu0
    %6426 = vdwg.mxu0
    %v6427 = vadd.f32 %v6179, %v6385
    %v6428 = vadd.f32 %v6180, %v6398
    %v6429 = vadd.f32 %v6181, %v6411
    %v6430 = vadd.f32 %v6182, %v6424
    %v6431 = vxor.u32 %v6427, 2147483648
    %v6432 = vmul.f32 %v6431, 1.442695
    %v6433 = vpow.pop %v6432
    %v6434 = vadd.f32 %v6433, 1.0
    %v6435 = vrcp.pop %v6434
    %v6436 = vmul.f32 %v6434, %v6435
    %v6437 = vsub.f32 1.0, %v6436
    %v6438 = vmul.f32 %v6435, %v6437
    %v6439 = vadd.f32 %v6435, %v6438
    %vm6440 = vweird.f32 %v6434
    %vm6441 = vweird.f32 %v6435
    %vm6442 = vmor %vm6440, %vm6441
    %v6443 = vsel %vm6442, %v6435, %v6439
    %v6444 = vand.u32 2147483647, %v6434
    %vm6445 = vcmp.eq.f32.partialorder %v6444, 8.507059e+37
    %v6446 = vand.u32 %v6434, 2147483648
    %v6447 = vor.u32 1.1754944e-38, %v6446
    %v6448 = vsel %vm6445, %v6447, %v6443
    %v6449 = vmul.f32 1.0, %v6448
    %v6450 = vxor.u32 %v6428, 2147483648
    %v6451 = vmul.f32 %v6450, 1.442695
    %v6452 = vpow.pop %v6451
    %v6453 = vadd.f32 %v6452, 1.0
    %v6454 = vrcp.pop %v6453
    %v6455 = vmul.f32 %v6453, %v6454
    %v6456 = vsub.f32 1.0, %v6455
    %v6457 = vmul.f32 %v6454, %v6456
    %v6458 = vadd.f32 %v6454, %v6457
    %vm6459 = vweird.f32 %v6453
    %vm6460 = vweird.f32 %v6454
    %vm6461 = vmor %vm6459, %vm6460
    %v6462 = vsel %vm6461, %v6454, %v6458
    %v6463 = vand.u32 2147483647, %v6453
    %vm6464 = vcmp.eq.f32.partialorder %v6463, 8.507059e+37
    %v6465 = vand.u32 %v6453, 2147483648
    %v6466 = vor.u32 1.1754944e-38, %v6465
    %v6467 = vsel %vm6464, %v6466, %v6462
    %v6468 = vmul.f32 1.0, %v6467
    %v6469 = vtanh.pop %v6429
    %v6470 = vxor.u32 %v6430, 2147483648
    %v6471 = vmul.f32 %v6470, 1.442695
    %v6472 = vpow.pop %v6471
    %v6473 = vadd.f32 %v6472, 1.0
    %v6474 = vrcp.pop %v6473
    %v6475 = vmul.f32 %v6473, %v6474
    %v6476 = vsub.f32 1.0, %v6475
    %v6477 = vmul.f32 %v6474, %v6476
    %v6478 = vadd.f32 %v6474, %v6477
    %vm6479 = vweird.f32 %v6473
    %vm6480 = vweird.f32 %v6474
    %vm6481 = vmor %vm6479, %vm6480
    %v6482 = vsel %vm6481, %v6474, %v6478
    %v6483 = vand.u32 2147483647, %v6473
    %vm6484 = vcmp.eq.f32.partialorder %v6483, 8.507059e+37
    %v6485 = vand.u32 %v6473, 2147483648
    %v6486 = vor.u32 1.1754944e-38, %v6485
    %v6487 = vsel %vm6484, %v6486, %v6482
    %v6488 = vmul.f32 1.0, %v6487
    %v6489 = vmul.f32 %v6468, 0.0
    %v6490 = vmul.f32 %v6449, %v6469
    %v6491 = vadd.f32 %v6489, %v6490
    %v6492 = vtanh.pop %v6491
    %v6493 = vmul.f32 %v6488, %v6492
    %v6494 = vpack.c.bf16 %v6493, %v6493
    %v6495 = vld [vmem:[%s624] sm:$0xff]
    %v6496 = vld [vmem:[%s624 + $0x8] sm:$0xff]
    %v6497 = vld [vmem:[%s624 + $0x10] sm:$0xff]
    %v6498 = vld [vmem:[%s624 + $0x18] sm:$0xff]
    %6499 = vmatpush.bf16.msra.mxu0 %v6339
    %6500 = vmatpush.bf16.msra.mxu0 %v6335
    %6501 = vmatpush.bf16.msra.mxu0 %v6331
    %6502 = vmatpush.bf16.msra.mxu0 %v6327
    %6503 = vmatpush.bf16.msra.mxu0 %v6323
    %6504 = vmatpush.bf16.msra.mxu0 %v6319
    %6505 = vmatpush.bf16.msra.mxu0 %v6315
    %6506 = vmatpush.bf16.msra.mxu0 %v6311
    %6507 = vmatmul.bf16.gmra.mxu0 %v6494
    %v6508 = vpop.f32.mrf.mxu0
    %v6509 = vadd.f32 0.0, %v6508
    %v6510 = vpop.f32.mrf.mxu0
    %6511 = vdwg.mxu0
    %6512 = vmatpush.bf16.msra.mxu0 %v6340
    %6513 = vmatpush.bf16.msra.mxu0 %v6336
    %6514 = vmatpush.bf16.msra.mxu0 %v6332
    %6515 = vmatpush.bf16.msra.mxu0 %v6328
    %6516 = vmatpush.bf16.msra.mxu0 %v6324
    %6517 = vmatpush.bf16.msra.mxu0 %v6320
    %6518 = vmatpush.bf16.msra.mxu0 %v6316
    %6519 = vmatpush.bf16.msra.mxu0 %v6312
    %6520 = vmatmul.bf16.gmra.mxu0 %v6494
    %v6521 = vpop.f32.mrf.mxu0
    %v6522 = vadd.f32 0.0, %v6521
    %v6523 = vpop.f32.mrf.mxu0
    %6524 = vdwg.mxu0
    %6525 = vmatpush.bf16.msra.mxu0 %v6341
    %6526 = vmatpush.bf16.msra.mxu0 %v6337
    %6527 = vmatpush.bf16.msra.mxu0 %v6333
    %6528 = vmatpush.bf16.msra.mxu0 %v6329
    %6529 = vmatpush.bf16.msra.mxu0 %v6325
    %6530 = vmatpush.bf16.msra.mxu0 %v6321
    %6531 = vmatpush.bf16.msra.mxu0 %v6317
    %6532 = vmatpush.bf16.msra.mxu0 %v6313
    %6533 = vmatmul.bf16.gmra.mxu0 %v6494
    %v6534 = vpop.f32.mrf.mxu0
    %v6535 = vadd.f32 0.0, %v6534
    %v6536 = vpop.f32.mrf.mxu0
    %6537 = vdwg.mxu0
    %6538 = vmatpush.bf16.msra.mxu0 %v6342
    %6539 = vmatpush.bf16.msra.mxu0 %v6338
    %6540 = vmatpush.bf16.msra.mxu0 %v6334
    %6541 = vmatpush.bf16.msra.mxu0 %v6330
    %6542 = vmatpush.bf16.msra.mxu0 %v6326
    %6543 = vmatpush.bf16.msra.mxu0 %v6322
    %6544 = vmatpush.bf16.msra.mxu0 %v6318
    %6545 = vmatpush.bf16.msra.mxu0 %v6314
    %6546 = vmatmul.bf16.gmra.mxu0 %v6494
    %v6547 = vpop.f32.mrf.mxu0
    %v6548 = vadd.f32 0.0, %v6547
    %v6549 = vpop.f32.mrf.mxu0
    %6550 = vdwg.mxu0
    %v6551 = vadd.f32 %v6495, %v6509
    %v6552 = vadd.f32 %v6496, %v6522
    %v6553 = vadd.f32 %v6497, %v6535
    %v6554 = vadd.f32 %v6498, %v6548
    %v6555 = vxor.u32 %v6551, 2147483648
    %v6556 = vmul.f32 %v6555, 1.442695
    %v6557 = vpow.pop %v6556
    %v6558 = vadd.f32 %v6557, 1.0
    %v6559 = vrcp.pop %v6558
    %v6560 = vmul.f32 %v6558, %v6559
    %v6561 = vsub.f32 1.0, %v6560
    %v6562 = vmul.f32 %v6559, %v6561
    %v6563 = vadd.f32 %v6559, %v6562
    %vm6564 = vweird.f32 %v6558
    %vm6565 = vweird.f32 %v6559
    %vm6566 = vmor %vm6564, %vm6565
    %v6567 = vsel %vm6566, %v6559, %v6563
    %v6568 = vand.u32 2147483647, %v6558
    %vm6569 = vcmp.eq.f32.partialorder %v6568, 8.507059e+37
    %v6570 = vand.u32 %v6558, 2147483648
    %v6571 = vor.u32 1.1754944e-38, %v6570
    %v6572 = vsel %vm6569, %v6571, %v6567
    %v6573 = vmul.f32 1.0, %v6572
    %v6574 = vxor.u32 %v6552, 2147483648
    %v6575 = vmul.f32 %v6574, 1.442695
    %v6576 = vpow.pop %v6575
    %v6577 = vadd.f32 %v6576, 1.0
    %v6578 = vrcp.pop %v6577
    %v6579 = vmul.f32 %v6577, %v6578
    %v6580 = vsub.f32 1.0, %v6579
    %v6581 = vmul.f32 %v6578, %v6580
    %v6582 = vadd.f32 %v6578, %v6581
    %vm6583 = vweird.f32 %v6577
    %vm6584 = vweird.f32 %v6578
    %vm6585 = vmor %vm6583, %vm6584
    %v6586 = vsel %vm6585, %v6578, %v6582
    %v6587 = vand.u32 2147483647, %v6577
    %vm6588 = vcmp.eq.f32.partialorder %v6587, 8.507059e+37
    %v6589 = vand.u32 %v6577, 2147483648
    %v6590 = vor.u32 1.1754944e-38, %v6589
    %v6591 = vsel %vm6588, %v6590, %v6586
    %v6592 = vmul.f32 1.0, %v6591
    %v6593 = vtanh.pop %v6553
    %v6594 = vxor.u32 %v6554, 2147483648
    %v6595 = vmul.f32 %v6594, 1.442695
    %v6596 = vpow.pop %v6595
    %v6597 = vadd.f32 %v6596, 1.0
    %v6598 = vrcp.pop %v6597
    %v6599 = vmul.f32 %v6597, %v6598
    %v6600 = vsub.f32 1.0, %v6599
    %v6601 = vmul.f32 %v6598, %v6600
    %v6602 = vadd.f32 %v6598, %v6601
    %vm6603 = vweird.f32 %v6597
    %vm6604 = vweird.f32 %v6598
    %vm6605 = vmor %vm6603, %vm6604
    %v6606 = vsel %vm6605, %v6598, %v6602
    %v6607 = vand.u32 2147483647, %v6597
    %vm6608 = vcmp.eq.f32.partialorder %v6607, 8.507059e+37
    %v6609 = vand.u32 %v6597, 2147483648
    %v6610 = vor.u32 1.1754944e-38, %v6609
    %v6611 = vsel %vm6608, %v6610, %v6606
    %v6612 = vmul.f32 1.0, %v6611
    %v6613 = vmul.f32 %v6592, %v6491
    %v6614 = vmul.f32 %v6573, %v6593
    %v6615 = vadd.f32 %v6613, %v6614
    %v6616 = vtanh.pop %v6615
    %v6617 = vmul.f32 %v6612, %v6616
    %v6618 = vpack.c.bf16 %v6617, %v6617
    %v6619 = vld [vmem:[%s943] sm:$0xff]
    %v6620 = vld [vmem:[%s943 + $0x8] sm:$0xff]
    %v6621 = vld [vmem:[%s943 + $0x10] sm:$0xff]
    %v6622 = vld [vmem:[%s943 + $0x18] sm:$0xff]
    %6623 = vmatpush.bf16.msra.mxu0 %v6339
    %6624 = vmatpush.bf16.msra.mxu0 %v6335
    %6625 = vmatpush.bf16.msra.mxu0 %v6331
    %6626 = vmatpush.bf16.msra.mxu0 %v6327
    %6627 = vmatpush.bf16.msra.mxu0 %v6323
    %6628 = vmatpush.bf16.msra.mxu0 %v6319
    %6629 = vmatpush.bf16.msra.mxu0 %v6315
    %6630 = vmatpush.bf16.msra.mxu0 %v6311
    %6631 = vmatmul.bf16.gmra.mxu0 %v6618
    %v6632 = vpop.f32.mrf.mxu0
    %v6633 = vadd.f32 0.0, %v6632
    %v6634 = vpop.f32.mrf.mxu0
    %6635 = vdwg.mxu0
    %6636 = vmatpush.bf16.msra.mxu0 %v6340
    %6637 = vmatpush.bf16.msra.mxu0 %v6336
    %6638 = vmatpush.bf16.msra.mxu0 %v6332
    %6639 = vmatpush.bf16.msra.mxu0 %v6328
    %6640 = vmatpush.bf16.msra.mxu0 %v6324
    %6641 = vmatpush.bf16.msra.mxu0 %v6320
    %6642 = vmatpush.bf16.msra.mxu0 %v6316
    %6643 = vmatpush.bf16.msra.mxu0 %v6312
    %6644 = vmatmul.bf16.gmra.mxu0 %v6618
    %v6645 = vpop.f32.mrf.mxu0
    %v6646 = vadd.f32 0.0, %v6645
    %v6647 = vpop.f32.mrf.mxu0
    %6648 = vdwg.mxu0
    %6649 = vmatpush.bf16.msra.mxu0 %v6341
    %6650 = vmatpush.bf16.msra.mxu0 %v6337
    %6651 = vmatpush.bf16.msra.mxu0 %v6333
    %6652 = vmatpush.bf16.msra.mxu0 %v6329
    %6653 = vmatpush.bf16.msra.mxu0 %v6325
    %6654 = vmatpush.bf16.msra.mxu0 %v6321
    %6655 = vmatpush.bf16.msra.mxu0 %v6317
    %6656 = vmatpush.bf16.msra.mxu0 %v6313
    %6657 = vmatmul.bf16.gmra.mxu0 %v6618
    %v6658 = vpop.f32.mrf.mxu0
    %v6659 = vadd.f32 0.0, %v6658
    %v6660 = vpop.f32.mrf.mxu0
    %6661 = vdwg.mxu0
    %6662 = vmatpush.bf16.msra.mxu0 %v6342
    %6663 = vmatpush.bf16.msra.mxu0 %v6338
    %6664 = vmatpush.bf16.msra.mxu0 %v6334
    %6665 = vmatpush.bf16.msra.mxu0 %v6330
    %6666 = vmatpush.bf16.msra.mxu0 %v6326
    %6667 = vmatpush.bf16.msra.mxu0 %v6322
    %6668 = vmatpush.bf16.msra.mxu0 %v6318
    %6669 = vmatpush.bf16.msra.mxu0 %v6314
    %6670 = vmatmul.bf16.gmra.mxu0 %v6618
    %v6671 = vpop.f32.mrf.mxu0
    %v6672 = vadd.f32 0.0, %v6671
    %v6673 = vpop.f32.mrf.mxu0
    %6674 = vdwg.mxu0
    %v6675 = vadd.f32 %v6619, %v6633
    %v6676 = vadd.f32 %v6620, %v6646
    %v6677 = vadd.f32 %v6621, %v6659
    %v6678 = vadd.f32 %v6622, %v6672
    %v6679 = vxor.u32 %v6675, 2147483648
    %v6680 = vmul.f32 %v6679, 1.442695
    %v6681 = vpow.pop %v6680
    %v6682 = vadd.f32 %v6681, 1.0
    %v6683 = vrcp.pop %v6682
    %v6684 = vmul.f32 %v6682, %v6683
    %v6685 = vsub.f32 1.0, %v6684
    %v6686 = vmul.f32 %v6683, %v6685
    %v6687 = vadd.f32 %v6683, %v6686
    %vm6688 = vweird.f32 %v6682
    %vm6689 = vweird.f32 %v6683
    %vm6690 = vmor %vm6688, %vm6689
    %v6691 = vsel %vm6690, %v6683, %v6687
    %v6692 = vand.u32 2147483647, %v6682
    %vm6693 = vcmp.eq.f32.partialorder %v6692, 8.507059e+37
    %v6694 = vand.u32 %v6682, 2147483648
    %v6695 = vor.u32 1.1754944e-38, %v6694
    %v6696 = vsel %vm6693, %v6695, %v6691
    %v6697 = vmul.f32 1.0, %v6696
    %v6698 = vxor.u32 %v6676, 2147483648
    %v6699 = vmul.f32 %v6698, 1.442695
    %v6700 = vpow.pop %v6699
    %v6701 = vadd.f32 %v6700, 1.0
    %v6702 = vrcp.pop %v6701
    %v6703 = vmul.f32 %v6701, %v6702
    %v6704 = vsub.f32 1.0, %v6703
    %v6705 = vmul.f32 %v6702, %v6704
    %v6706 = vadd.f32 %v6702, %v6705
    %vm6707 = vweird.f32 %v6701
    %vm6708 = vweird.f32 %v6702
    %vm6709 = vmor %vm6707, %vm6708
    %v6710 = vsel %vm6709, %v6702, %v6706
    %v6711 = vand.u32 2147483647, %v6701
    %vm6712 = vcmp.eq.f32.partialorder %v6711, 8.507059e+37
    %v6713 = vand.u32 %v6701, 2147483648
    %v6714 = vor.u32 1.1754944e-38, %v6713
    %v6715 = vsel %vm6712, %v6714, %v6710
    %v6716 = vmul.f32 1.0, %v6715
    %v6717 = vtanh.pop %v6677
    %v6718 = vxor.u32 %v6678, 2147483648
    %v6719 = vmul.f32 %v6718, 1.442695
    %v6720 = vpow.pop %v6719
    %v6721 = vadd.f32 %v6720, 1.0
    %v6722 = vrcp.pop %v6721
    %v6723 = vmul.f32 %v6721, %v6722
    %v6724 = vsub.f32 1.0, %v6723
    %v6725 = vmul.f32 %v6722, %v6724
    %v6726 = vadd.f32 %v6722, %v6725
    %vm6727 = vweird.f32 %v6721
    %vm6728 = vweird.f32 %v6722
    %vm6729 = vmor %vm6727, %vm6728
    %v6730 = vsel %vm6729, %v6722, %v6726
    %v6731 = vand.u32 2147483647, %v6721
    %vm6732 = vcmp.eq.f32.partialorder %v6731, 8.507059e+37
    %v6733 = vand.u32 %v6721, 2147483648
    %v6734 = vor.u32 1.1754944e-38, %v6733
    %v6735 = vsel %vm6732, %v6734, %v6730
    %v6736 = vmul.f32 1.0, %v6735
    %v6737 = vmul.f32 %v6716, %v6615
    %v6738 = vmul.f32 %v6697, %v6717
    %v6739 = vadd.f32 %v6737, %v6738
    %v6740 = vtanh.pop %v6739
    %v6741 = vmul.f32 %v6736, %v6740
    %v6742 = vpack.c.bf16 %v6741, %v6741
    %v6743 = vld [vmem:[%s1262] sm:$0xff]
    %v6744 = vld [vmem:[%s1262 + $0x8] sm:$0xff]
    %v6745 = vld [vmem:[%s1262 + $0x10] sm:$0xff]
    %v6746 = vld [vmem:[%s1262 + $0x18] sm:$0xff]
    %6747 = vmatpush.bf16.msra.mxu0 %v6339
    %6748 = vmatpush.bf16.msra.mxu0 %v6335
    %6749 = vmatpush.bf16.msra.mxu0 %v6331
    %6750 = vmatpush.bf16.msra.mxu0 %v6327
    %6751 = vmatpush.bf16.msra.mxu0 %v6323
    %6752 = vmatpush.bf16.msra.mxu0 %v6319
    %6753 = vmatpush.bf16.msra.mxu0 %v6315
    %6754 = vmatpush.bf16.msra.mxu0 %v6311
    %6755 = vmatmul.bf16.gmra.mxu0 %v6742
    %v6756 = vpop.f32.mrf.mxu0
    %v6757 = vadd.f32 0.0, %v6756
    %v6758 = vpop.f32.mrf.mxu0
    %6759 = vdwg.mxu0
    %6760 = vmatpush.bf16.msra.mxu0 %v6340
    %6761 = vmatpush.bf16.msra.mxu0 %v6336
    %6762 = vmatpush.bf16.msra.mxu0 %v6332
    %6763 = vmatpush.bf16.msra.mxu0 %v6328
    %6764 = vmatpush.bf16.msra.mxu0 %v6324
    %6765 = vmatpush.bf16.msra.mxu0 %v6320
    %6766 = vmatpush.bf16.msra.mxu0 %v6316
    %6767 = vmatpush.bf16.msra.mxu0 %v6312
    %6768 = vmatmul.bf16.gmra.mxu0 %v6742
    %v6769 = vpop.f32.mrf.mxu0
    %v6770 = vadd.f32 0.0, %v6769
    %v6771 = vpop.f32.mrf.mxu0
    %6772 = vdwg.mxu0
    %6773 = vmatpush.bf16.msra.mxu0 %v6341
    %6774 = vmatpush.bf16.msra.mxu0 %v6337
    %6775 = vmatpush.bf16.msra.mxu0 %v6333
    %6776 = vmatpush.bf16.msra.mxu0 %v6329
    %6777 = vmatpush.bf16.msra.mxu0 %v6325
    %6778 = vmatpush.bf16.msra.mxu0 %v6321
    %6779 = vmatpush.bf16.msra.mxu0 %v6317
    %6780 = vmatpush.bf16.msra.mxu0 %v6313
    %6781 = vmatmul.bf16.gmra.mxu0 %v6742
    %v6782 = vpop.f32.mrf.mxu0
    %v6783 = vadd.f32 0.0, %v6782
    %v6784 = vpop.f32.mrf.mxu0
    %6785 = vdwg.mxu0
    %6786 = vmatpush.bf16.msra.mxu0 %v6342
    %6787 = vmatpush.bf16.msra.mxu0 %v6338
    %6788 = vmatpush.bf16.msra.mxu0 %v6334
    %6789 = vmatpush.bf16.msra.mxu0 %v6330
    %6790 = vmatpush.bf16.msra.mxu0 %v6326
    %6791 = vmatpush.bf16.msra.mxu0 %v6322
    %6792 = vmatpush.bf16.msra.mxu0 %v6318
    %6793 = vmatpush.bf16.msra.mxu0 %v6314
    %6794 = vmatmul.bf16.gmra.mxu0 %v6742
    %v6795 = vpop.f32.mrf.mxu0
    %v6796 = vadd.f32 0.0, %v6795
    %v6797 = vpop.f32.mrf.mxu0
    %6798 = vdwg.mxu0
    %v6799 = vadd.f32 %v6743, %v6757
    %v6800 = vadd.f32 %v6744, %v6770
    %v6801 = vadd.f32 %v6745, %v6783
    %v6802 = vadd.f32 %v6746, %v6796
    %v6803 = vxor.u32 %v6799, 2147483648
    %v6804 = vmul.f32 %v6803, 1.442695
    %v6805 = vpow.pop %v6804
    %v6806 = vadd.f32 %v6805, 1.0
    %v6807 = vrcp.pop %v6806
    %v6808 = vmul.f32 %v6806, %v6807
    %v6809 = vsub.f32 1.0, %v6808
    %v6810 = vmul.f32 %v6807, %v6809
    %v6811 = vadd.f32 %v6807, %v6810
    %vm6812 = vweird.f32 %v6806
    %vm6813 = vweird.f32 %v6807
    %vm6814 = vmor %vm6812, %vm6813
    %v6815 = vsel %vm6814, %v6807, %v6811
    %v6816 = vand.u32 2147483647, %v6806
    %vm6817 = vcmp.eq.f32.partialorder %v6816, 8.507059e+37
    %v6818 = vand.u32 %v6806, 2147483648
    %v6819 = vor.u32 1.1754944e-38, %v6818
    %v6820 = vsel %vm6817, %v6819, %v6815
    %v6821 = vmul.f32 1.0, %v6820
    %v6822 = vxor.u32 %v6800, 2147483648
    %v6823 = vmul.f32 %v6822, 1.442695
    %v6824 = vpow.pop %v6823
    %v6825 = vadd.f32 %v6824, 1.0
    %v6826 = vrcp.pop %v6825
    %v6827 = vmul.f32 %v6825, %v6826
    %v6828 = vsub.f32 1.0, %v6827
    %v6829 = vmul.f32 %v6826, %v6828
    %v6830 = vadd.f32 %v6826, %v6829
    %vm6831 = vweird.f32 %v6825
    %vm6832 = vweird.f32 %v6826
    %vm6833 = vmor %vm6831, %vm6832
    %v6834 = vsel %vm6833, %v6826, %v6830
    %v6835 = vand.u32 2147483647, %v6825
    %vm6836 = vcmp.eq.f32.partialorder %v6835, 8.507059e+37
    %v6837 = vand.u32 %v6825, 2147483648
    %v6838 = vor.u32 1.1754944e-38, %v6837
    %v6839 = vsel %vm6836, %v6838, %v6834
    %v6840 = vmul.f32 1.0, %v6839
    %v6841 = vtanh.pop %v6801
    %v6842 = vxor.u32 %v6802, 2147483648
    %v6843 = vmul.f32 %v6842, 1.442695
    %v6844 = vpow.pop %v6843
    %v6845 = vadd.f32 %v6844, 1.0
    %v6846 = vrcp.pop %v6845
    %v6847 = vmul.f32 %v6845, %v6846
    %v6848 = vsub.f32 1.0, %v6847
    %v6849 = vmul.f32 %v6846, %v6848
    %v6850 = vadd.f32 %v6846, %v6849
    %vm6851 = vweird.f32 %v6845
    %vm6852 = vweird.f32 %v6846
    %vm6853 = vmor %vm6851, %vm6852
    %v6854 = vsel %vm6853, %v6846, %v6850
    %v6855 = vand.u32 2147483647, %v6845
    %vm6856 = vcmp.eq.f32.partialorder %v6855, 8.507059e+37
    %v6857 = vand.u32 %v6845, 2147483648
    %v6858 = vor.u32 1.1754944e-38, %v6857
    %v6859 = vsel %vm6856, %v6858, %v6854
    %v6860 = vmul.f32 1.0, %v6859
    %v6861 = vmul.f32 %v6840, %v6739
    %v6862 = vmul.f32 %v6821, %v6841
    %v6863 = vadd.f32 %v6861, %v6862
    %v6864 = vtanh.pop %v6863
    %v6865 = vmul.f32 %v6860, %v6864
    %v6866 = vpack.c.bf16 %v6865, %v6865
    %v6867 = vld [vmem:[%s1581] sm:$0xff]
    %v6868 = vld [vmem:[%s1581 + $0x8] sm:$0xff]
    %v6869 = vld [vmem:[%s1581 + $0x10] sm:$0xff]
    %v6870 = vld [vmem:[%s1581 + $0x18] sm:$0xff]
    %6871 = vmatpush.bf16.msra.mxu0 %v6339
    %6872 = vmatpush.bf16.msra.mxu0 %v6335
    %6873 = vmatpush.bf16.msra.mxu0 %v6331
    %6874 = vmatpush.bf16.msra.mxu0 %v6327
    %6875 = vmatpush.bf16.msra.mxu0 %v6323
    %6876 = vmatpush.bf16.msra.mxu0 %v6319
    %6877 = vmatpush.bf16.msra.mxu0 %v6315
    %6878 = vmatpush.bf16.msra.mxu0 %v6311
    %6879 = vmatmul.bf16.gmra.mxu0 %v6866
    %v6880 = vpop.f32.mrf.mxu0
    %v6881 = vadd.f32 0.0, %v6880
    %v6882 = vpop.f32.mrf.mxu0
    %6883 = vdwg.mxu0
    %6884 = vmatpush.bf16.msra.mxu0 %v6340
    %6885 = vmatpush.bf16.msra.mxu0 %v6336
    %6886 = vmatpush.bf16.msra.mxu0 %v6332
    %6887 = vmatpush.bf16.msra.mxu0 %v6328
    %6888 = vmatpush.bf16.msra.mxu0 %v6324
    %6889 = vmatpush.bf16.msra.mxu0 %v6320
    %6890 = vmatpush.bf16.msra.mxu0 %v6316
    %6891 = vmatpush.bf16.msra.mxu0 %v6312
    %6892 = vmatmul.bf16.gmra.mxu0 %v6866
    %v6893 = vpop.f32.mrf.mxu0
    %v6894 = vadd.f32 0.0, %v6893
    %v6895 = vpop.f32.mrf.mxu0
    %6896 = vdwg.mxu0
    %6897 = vmatpush.bf16.msra.mxu0 %v6341
    %6898 = vmatpush.bf16.msra.mxu0 %v6337
    %6899 = vmatpush.bf16.msra.mxu0 %v6333
    %6900 = vmatpush.bf16.msra.mxu0 %v6329
    %6901 = vmatpush.bf16.msra.mxu0 %v6325
    %6902 = vmatpush.bf16.msra.mxu0 %v6321
    %6903 = vmatpush.bf16.msra.mxu0 %v6317
    %6904 = vmatpush.bf16.msra.mxu0 %v6313
    %6905 = vmatmul.bf16.gmra.mxu0 %v6866
    %v6906 = vpop.f32.mrf.mxu0
    %v6907 = vadd.f32 0.0, %v6906
    %v6908 = vpop.f32.mrf.mxu0
    %6909 = vdwg.mxu0
    %6910 = vmatpush.bf16.msra.mxu0 %v6342
    %6911 = vmatpush.bf16.msra.mxu0 %v6338
    %6912 = vmatpush.bf16.msra.mxu0 %v6334
    %6913 = vmatpush.bf16.msra.mxu0 %v6330
    %6914 = vmatpush.bf16.msra.mxu0 %v6326
    %6915 = vmatpush.bf16.msra.mxu0 %v6322
    %6916 = vmatpush.bf16.msra.mxu0 %v6318
    %6917 = vmatpush.bf16.msra.mxu0 %v6314
    %6918 = vmatmul.bf16.gmra.mxu0 %v6866
    %v6919 = vpop.f32.mrf.mxu0
    %v6920 = vadd.f32 0.0, %v6919
    %v6921 = vpop.f32.mrf.mxu0
    %6922 = vdwg.mxu0
    %v6923 = vadd.f32 %v6867, %v6881
    %v6924 = vadd.f32 %v6868, %v6894
    %v6925 = vadd.f32 %v6869, %v6907
    %v6926 = vadd.f32 %v6870, %v6920
    %v6927 = vxor.u32 %v6923, 2147483648
    %v6928 = vmul.f32 %v6927, 1.442695
    %v6929 = vpow.pop %v6928
    %v6930 = vadd.f32 %v6929, 1.0
    %v6931 = vrcp.pop %v6930
    %v6932 = vmul.f32 %v6930, %v6931
    %v6933 = vsub.f32 1.0, %v6932
    %v6934 = vmul.f32 %v6931, %v6933
    %v6935 = vadd.f32 %v6931, %v6934
    %vm6936 = vweird.f32 %v6930
    %vm6937 = vweird.f32 %v6931
    %vm6938 = vmor %vm6936, %vm6937
    %v6939 = vsel %vm6938, %v6931, %v6935
    %v6940 = vand.u32 2147483647, %v6930
    %vm6941 = vcmp.eq.f32.partialorder %v6940, 8.507059e+37
    %v6942 = vand.u32 %v6930, 2147483648
    %v6943 = vor.u32 1.1754944e-38, %v6942
    %v6944 = vsel %vm6941, %v6943, %v6939
    %v6945 = vmul.f32 1.0, %v6944
    %v6946 = vxor.u32 %v6924, 2147483648
    %v6947 = vmul.f32 %v6946, 1.442695
    %v6948 = vpow.pop %v6947
    %v6949 = vadd.f32 %v6948, 1.0
    %v6950 = vrcp.pop %v6949
    %v6951 = vmul.f32 %v6949, %v6950
    %v6952 = vsub.f32 1.0, %v6951
    %v6953 = vmul.f32 %v6950, %v6952
    %v6954 = vadd.f32 %v6950, %v6953
    %vm6955 = vweird.f32 %v6949
    %vm6956 = vweird.f32 %v6950
    %vm6957 = vmor %vm6955, %vm6956
    %v6958 = vsel %vm6957, %v6950, %v6954
    %v6959 = vand.u32 2147483647, %v6949
    %vm6960 = vcmp.eq.f32.partialorder %v6959, 8.507059e+37
    %v6961 = vand.u32 %v6949, 2147483648
    %v6962 = vor.u32 1.1754944e-38, %v6961
    %v6963 = vsel %vm6960, %v6962, %v6958
    %v6964 = vmul.f32 1.0, %v6963
    %v6965 = vtanh.pop %v6925
    %v6966 = vxor.u32 %v6926, 2147483648
    %v6967 = vmul.f32 %v6966, 1.442695
    %v6968 = vpow.pop %v6967
    %v6969 = vadd.f32 %v6968, 1.0
    %v6970 = vrcp.pop %v6969
    %v6971 = vmul.f32 %v6969, %v6970
    %v6972 = vsub.f32 1.0, %v6971
    %v6973 = vmul.f32 %v6970, %v6972
    %v6974 = vadd.f32 %v6970, %v6973
    %vm6975 = vweird.f32 %v6969
    %vm6976 = vweird.f32 %v6970
    %vm6977 = vmor %vm6975, %vm6976
    %v6978 = vsel %vm6977, %v6970, %v6974
    %v6979 = vand.u32 2147483647, %v6969
    %vm6980 = vcmp.eq.f32.partialorder %v6979, 8.507059e+37
    %v6981 = vand.u32 %v6969, 2147483648
    %v6982 = vor.u32 1.1754944e-38, %v6981
    %v6983 = vsel %vm6980, %v6982, %v6978
    %v6984 = vmul.f32 1.0, %v6983
    %v6985 = vmul.f32 %v6964, %v6863
    %v6986 = vmul.f32 %v6945, %v6965
    %v6987 = vadd.f32 %v6985, %v6986
    %v6988 = vtanh.pop %v6987
    %v6989 = vmul.f32 %v6984, %v6988
    %v6990 = vpack.c.bf16 %v6989, %v6989
    %v6991 = vld [vmem:[%s1900] sm:$0xff]
    %v6992 = vld [vmem:[%s1900 + $0x8] sm:$0xff]
    %v6993 = vld [vmem:[%s1900 + $0x10] sm:$0xff]
    %v6994 = vld [vmem:[%s1900 + $0x18] sm:$0xff]
    %6995 = vmatpush.bf16.msra.mxu0 %v6339
    %6996 = vmatpush.bf16.msra.mxu0 %v6335
    %6997 = vmatpush.bf16.msra.mxu0 %v6331
    %6998 = vmatpush.bf16.msra.mxu0 %v6327
    %6999 = vmatpush.bf16.msra.mxu0 %v6323
    %7000 = vmatpush.bf16.msra.mxu0 %v6319
    %7001 = vmatpush.bf16.msra.mxu0 %v6315
    %7002 = vmatpush.bf16.msra.mxu0 %v6311
    %7003 = vmatmul.bf16.gmra.mxu0 %v6990
    %v7004 = vpop.f32.mrf.mxu0
    %v7005 = vadd.f32 0.0, %v7004
    %v7006 = vpop.f32.mrf.mxu0
    %7007 = vdwg.mxu0
    %7008 = vmatpush.bf16.msra.mxu0 %v6340
    %7009 = vmatpush.bf16.msra.mxu0 %v6336
    %7010 = vmatpush.bf16.msra.mxu0 %v6332
    %7011 = vmatpush.bf16.msra.mxu0 %v6328
    %7012 = vmatpush.bf16.msra.mxu0 %v6324
    %7013 = vmatpush.bf16.msra.mxu0 %v6320
    %7014 = vmatpush.bf16.msra.mxu0 %v6316
    %7015 = vmatpush.bf16.msra.mxu0 %v6312
    %7016 = vmatmul.bf16.gmra.mxu0 %v6990
    %v7017 = vpop.f32.mrf.mxu0
    %v7018 = vadd.f32 0.0, %v7017
    %v7019 = vpop.f32.mrf.mxu0
    %7020 = vdwg.mxu0
    %7021 = vmatpush.bf16.msra.mxu0 %v6341
    %7022 = vmatpush.bf16.msra.mxu0 %v6337
    %7023 = vmatpush.bf16.msra.mxu0 %v6333
    %7024 = vmatpush.bf16.msra.mxu0 %v6329
    %7025 = vmatpush.bf16.msra.mxu0 %v6325
    %7026 = vmatpush.bf16.msra.mxu0 %v6321
    %7027 = vmatpush.bf16.msra.mxu0 %v6317
    %7028 = vmatpush.bf16.msra.mxu0 %v6313
    %7029 = vmatmul.bf16.gmra.mxu0 %v6990
    %v7030 = vpop.f32.mrf.mxu0
    %v7031 = vadd.f32 0.0, %v7030
    %v7032 = vpop.f32.mrf.mxu0
    %7033 = vdwg.mxu0
    %7034 = vmatpush.bf16.msra.mxu0 %v6342
    %7035 = vmatpush.bf16.msra.mxu0 %v6338
    %7036 = vmatpush.bf16.msra.mxu0 %v6334
    %7037 = vmatpush.bf16.msra.mxu0 %v6330
    %7038 = vmatpush.bf16.msra.mxu0 %v6326
    %7039 = vmatpush.bf16.msra.mxu0 %v6322
    %7040 = vmatpush.bf16.msra.mxu0 %v6318
    %7041 = vmatpush.bf16.msra.mxu0 %v6314
    %7042 = vmatmul.bf16.gmra.mxu0 %v6990
    %v7043 = vpop.f32.mrf.mxu0
    %v7044 = vadd.f32 0.0, %v7043
    %v7045 = vpop.f32.mrf.mxu0
    %7046 = vdwg.mxu0
    %v7047 = vadd.f32 %v6991, %v7005
    %v7048 = vadd.f32 %v6992, %v7018
    %v7049 = vadd.f32 %v6993, %v7031
    %v7050 = vadd.f32 %v6994, %v7044
    %v7051 = vxor.u32 %v7047, 2147483648
    %v7052 = vmul.f32 %v7051, 1.442695
    %v7053 = vpow.pop %v7052
    %v7054 = vadd.f32 %v7053, 1.0
    %v7055 = vrcp.pop %v7054
    %v7056 = vmul.f32 %v7054, %v7055
    %v7057 = vsub.f32 1.0, %v7056
    %v7058 = vmul.f32 %v7055, %v7057
    %v7059 = vadd.f32 %v7055, %v7058
    %vm7060 = vweird.f32 %v7054
    %vm7061 = vweird.f32 %v7055
    %vm7062 = vmor %vm7060, %vm7061
    %v7063 = vsel %vm7062, %v7055, %v7059
    %v7064 = vand.u32 2147483647, %v7054
    %vm7065 = vcmp.eq.f32.partialorder %v7064, 8.507059e+37
    %v7066 = vand.u32 %v7054, 2147483648
    %v7067 = vor.u32 1.1754944e-38, %v7066
    %v7068 = vsel %vm7065, %v7067, %v7063
    %v7069 = vmul.f32 1.0, %v7068
    %v7070 = vxor.u32 %v7048, 2147483648
    %v7071 = vmul.f32 %v7070, 1.442695
    %v7072 = vpow.pop %v7071
    %v7073 = vadd.f32 %v7072, 1.0
    %v7074 = vrcp.pop %v7073
    %v7075 = vmul.f32 %v7073, %v7074
    %v7076 = vsub.f32 1.0, %v7075
    %v7077 = vmul.f32 %v7074, %v7076
    %v7078 = vadd.f32 %v7074, %v7077
    %vm7079 = vweird.f32 %v7073
    %vm7080 = vweird.f32 %v7074
    %vm7081 = vmor %vm7079, %vm7080
    %v7082 = vsel %vm7081, %v7074, %v7078
    %v7083 = vand.u32 2147483647, %v7073
    %vm7084 = vcmp.eq.f32.partialorder %v7083, 8.507059e+37
    %v7085 = vand.u32 %v7073, 2147483648
    %v7086 = vor.u32 1.1754944e-38, %v7085
    %v7087 = vsel %vm7084, %v7086, %v7082
    %v7088 = vmul.f32 1.0, %v7087
    %v7089 = vtanh.pop %v7049
    %v7090 = vxor.u32 %v7050, 2147483648
    %v7091 = vmul.f32 %v7090, 1.442695
    %v7092 = vpow.pop %v7091
    %v7093 = vadd.f32 %v7092, 1.0
    %v7094 = vrcp.pop %v7093
    %v7095 = vmul.f32 %v7093, %v7094
    %v7096 = vsub.f32 1.0, %v7095
    %v7097 = vmul.f32 %v7094, %v7096
    %v7098 = vadd.f32 %v7094, %v7097
    %vm7099 = vweird.f32 %v7093
    %vm7100 = vweird.f32 %v7094
    %vm7101 = vmor %vm7099, %vm7100
    %v7102 = vsel %vm7101, %v7094, %v7098
    %v7103 = vand.u32 2147483647, %v7093
    %vm7104 = vcmp.eq.f32.partialorder %v7103, 8.507059e+37
    %v7105 = vand.u32 %v7093, 2147483648
    %v7106 = vor.u32 1.1754944e-38, %v7105
    %v7107 = vsel %vm7104, %v7106, %v7102
    %v7108 = vmul.f32 1.0, %v7107
    %v7109 = vmul.f32 %v7088, %v6987
    %v7110 = vmul.f32 %v7069, %v7089
    %v7111 = vadd.f32 %v7109, %v7110
    %v7112 = vtanh.pop %v7111
    %v7113 = vmul.f32 %v7108, %v7112
    %v7114 = vpack.c.bf16 %v7113, %v7113
    %v7115 = vld [vmem:[%s2219] sm:$0xff]
    %v7116 = vld [vmem:[%s2219 + $0x8] sm:$0xff]
    %v7117 = vld [vmem:[%s2219 + $0x10] sm:$0xff]
    %v7118 = vld [vmem:[%s2219 + $0x18] sm:$0xff]
    %7119 = vmatpush.bf16.msra.mxu0 %v6339
    %7120 = vmatpush.bf16.msra.mxu0 %v6335
    %7121 = vmatpush.bf16.msra.mxu0 %v6331
    %7122 = vmatpush.bf16.msra.mxu0 %v6327
    %7123 = vmatpush.bf16.msra.mxu0 %v6323
    %7124 = vmatpush.bf16.msra.mxu0 %v6319
    %7125 = vmatpush.bf16.msra.mxu0 %v6315
    %7126 = vmatpush.bf16.msra.mxu0 %v6311
    %7127 = vmatmul.bf16.gmra.mxu0 %v7114
    %v7128 = vpop.f32.mrf.mxu0
    %v7129 = vadd.f32 0.0, %v7128
    %v7130 = vpop.f32.mrf.mxu0
    %7131 = vdwg.mxu0
    %7132 = vmatpush.bf16.msra.mxu0 %v6340
    %7133 = vmatpush.bf16.msra.mxu0 %v6336
    %7134 = vmatpush.bf16.msra.mxu0 %v6332
    %7135 = vmatpush.bf16.msra.mxu0 %v6328
    %7136 = vmatpush.bf16.msra.mxu0 %v6324
    %7137 = vmatpush.bf16.msra.mxu0 %v6320
    %7138 = vmatpush.bf16.msra.mxu0 %v6316
    %7139 = vmatpush.bf16.msra.mxu0 %v6312
    %7140 = vmatmul.bf16.gmra.mxu0 %v7114
    %v7141 = vpop.f32.mrf.mxu0
    %v7142 = vadd.f32 0.0, %v7141
    %v7143 = vpop.f32.mrf.mxu0
    %7144 = vdwg.mxu0
    %7145 = vmatpush.bf16.msra.mxu0 %v6341
    %7146 = vmatpush.bf16.msra.mxu0 %v6337
    %7147 = vmatpush.bf16.msra.mxu0 %v6333
    %7148 = vmatpush.bf16.msra.mxu0 %v6329
    %7149 = vmatpush.bf16.msra.mxu0 %v6325
    %7150 = vmatpush.bf16.msra.mxu0 %v6321
    %7151 = vmatpush.bf16.msra.mxu0 %v6317
    %7152 = vmatpush.bf16.msra.mxu0 %v6313
    %7153 = vmatmul.bf16.gmra.mxu0 %v7114
    %v7154 = vpop.f32.mrf.mxu0
    %v7155 = vadd.f32 0.0, %v7154
    %v7156 = vpop.f32.mrf.mxu0
    %7157 = vdwg.mxu0
    %7158 = vmatpush.bf16.msra.mxu0 %v6342
    %7159 = vmatpush.bf16.msra.mxu0 %v6338
    %7160 = vmatpush.bf16.msra.mxu0 %v6334
    %7161 = vmatpush.bf16.msra.mxu0 %v6330
    %7162 = vmatpush.bf16.msra.mxu0 %v6326
    %7163 = vmatpush.bf16.msra.mxu0 %v6322
    %7164 = vmatpush.bf16.msra.mxu0 %v6318
    %7165 = vmatpush.bf16.msra.mxu0 %v6314
    %7166 = vmatmul.bf16.gmra.mxu0 %v7114
    %v7167 = vpop.f32.mrf.mxu0
    %v7168 = vadd.f32 0.0, %v7167
    %v7169 = vpop.f32.mrf.mxu0
    %7170 = vdwg.mxu0
    %v7171 = vadd.f32 %v7115, %v7129
    %v7172 = vadd.f32 %v7116, %v7142
    %v7173 = vadd.f32 %v7117, %v7155
    %v7174 = vadd.f32 %v7118, %v7168
    %v7175 = vxor.u32 %v7171, 2147483648
    %v7176 = vmul.f32 %v7175, 1.442695
    %v7177 = vpow.pop %v7176
    %v7178 = vadd.f32 %v7177, 1.0
    %v7179 = vrcp.pop %v7178
    %v7180 = vmul.f32 %v7178, %v7179
    %v7181 = vsub.f32 1.0, %v7180
    %v7182 = vmul.f32 %v7179, %v7181
    %v7183 = vadd.f32 %v7179, %v7182
    %vm7184 = vweird.f32 %v7178
    %vm7185 = vweird.f32 %v7179
    %vm7186 = vmor %vm7184, %vm7185
    %v7187 = vsel %vm7186, %v7179, %v7183
    %v7188 = vand.u32 2147483647, %v7178
    %vm7189 = vcmp.eq.f32.partialorder %v7188, 8.507059e+37
    %v7190 = vand.u32 %v7178, 2147483648
    %v7191 = vor.u32 1.1754944e-38, %v7190
    %v7192 = vsel %vm7189, %v7191, %v7187
    %v7193 = vmul.f32 1.0, %v7192
    %v7194 = vxor.u32 %v7172, 2147483648
    %v7195 = vmul.f32 %v7194, 1.442695
    %v7196 = vpow.pop %v7195
    %v7197 = vadd.f32 %v7196, 1.0
    %v7198 = vrcp.pop %v7197
    %v7199 = vmul.f32 %v7197, %v7198
    %v7200 = vsub.f32 1.0, %v7199
    %v7201 = vmul.f32 %v7198, %v7200
    %v7202 = vadd.f32 %v7198, %v7201
    %vm7203 = vweird.f32 %v7197
    %vm7204 = vweird.f32 %v7198
    %vm7205 = vmor %vm7203, %vm7204
    %v7206 = vsel %vm7205, %v7198, %v7202
    %v7207 = vand.u32 2147483647, %v7197
    %vm7208 = vcmp.eq.f32.partialorder %v7207, 8.507059e+37
    %v7209 = vand.u32 %v7197, 2147483648
    %v7210 = vor.u32 1.1754944e-38, %v7209
    %v7211 = vsel %vm7208, %v7210, %v7206
    %v7212 = vmul.f32 1.0, %v7211
    %v7213 = vtanh.pop %v7173
    %v7214 = vxor.u32 %v7174, 2147483648
    %v7215 = vmul.f32 %v7214, 1.442695
    %v7216 = vpow.pop %v7215
    %v7217 = vadd.f32 %v7216, 1.0
    %v7218 = vrcp.pop %v7217
    %v7219 = vmul.f32 %v7217, %v7218
    %v7220 = vsub.f32 1.0, %v7219
    %v7221 = vmul.f32 %v7218, %v7220
    %v7222 = vadd.f32 %v7218, %v7221
    %vm7223 = vweird.f32 %v7217
    %vm7224 = vweird.f32 %v7218
    %vm7225 = vmor %vm7223, %vm7224
    %v7226 = vsel %vm7225, %v7218, %v7222
    %v7227 = vand.u32 2147483647, %v7217
    %vm7228 = vcmp.eq.f32.partialorder %v7227, 8.507059e+37
    %v7229 = vand.u32 %v7217, 2147483648
    %v7230 = vor.u32 1.1754944e-38, %v7229
    %v7231 = vsel %vm7228, %v7230, %v7226
    %v7232 = vmul.f32 1.0, %v7231
    %v7233 = vmul.f32 %v7212, %v7111
    %v7234 = vmul.f32 %v7193, %v7213
    %v7235 = vadd.f32 %v7233, %v7234
    %v7236 = vtanh.pop %v7235
    %v7237 = vmul.f32 %v7232, %v7236
    %v7238 = vpack.c.bf16 %v7237, %v7237
    %v7239 = vld [vmem:[%s2538] sm:$0xff]
    %v7240 = vld [vmem:[%s2538 + $0x8] sm:$0xff]
    %v7241 = vld [vmem:[%s2538 + $0x10] sm:$0xff]
    %v7242 = vld [vmem:[%s2538 + $0x18] sm:$0xff]
    %7243 = vmatpush.bf16.msra.mxu0 %v6339
    %7244 = vmatpush.bf16.msra.mxu0 %v6335
    %7245 = vmatpush.bf16.msra.mxu0 %v6331
    %7246 = vmatpush.bf16.msra.mxu0 %v6327
    %7247 = vmatpush.bf16.msra.mxu0 %v6323
    %7248 = vmatpush.bf16.msra.mxu0 %v6319
    %7249 = vmatpush.bf16.msra.mxu0 %v6315
    %7250 = vmatpush.bf16.msra.mxu0 %v6311
    %7251 = vmatmul.bf16.gmra.mxu0 %v7238
    %v7252 = vpop.f32.mrf.mxu0
    %v7253 = vadd.f32 0.0, %v7252
    %v7254 = vpop.f32.mrf.mxu0
    %7255 = vdwg.mxu0
    %7256 = vmatpush.bf16.msra.mxu0 %v6340
    %7257 = vmatpush.bf16.msra.mxu0 %v6336
    %7258 = vmatpush.bf16.msra.mxu0 %v6332
    %7259 = vmatpush.bf16.msra.mxu0 %v6328
    %7260 = vmatpush.bf16.msra.mxu0 %v6324
    %7261 = vmatpush.bf16.msra.mxu0 %v6320
    %7262 = vmatpush.bf16.msra.mxu0 %v6316
    %7263 = vmatpush.bf16.msra.mxu0 %v6312
    %7264 = vmatmul.bf16.gmra.mxu0 %v7238
    %v7265 = vpop.f32.mrf.mxu0
    %v7266 = vadd.f32 0.0, %v7265
    %v7267 = vpop.f32.mrf.mxu0
    %7268 = vdwg.mxu0
    %7269 = vmatpush.bf16.msra.mxu0 %v6341
    %7270 = vmatpush.bf16.msra.mxu0 %v6337
    %7271 = vmatpush.bf16.msra.mxu0 %v6333
    %7272 = vmatpush.bf16.msra.mxu0 %v6329
    %7273 = vmatpush.bf16.msra.mxu0 %v6325
    %7274 = vmatpush.bf16.msra.mxu0 %v6321
    %7275 = vmatpush.bf16.msra.mxu0 %v6317
    %7276 = vmatpush.bf16.msra.mxu0 %v6313
    %7277 = vmatmul.bf16.gmra.mxu0 %v7238
    %v7278 = vpop.f32.mrf.mxu0
    %v7279 = vadd.f32 0.0, %v7278
    %v7280 = vpop.f32.mrf.mxu0
    %7281 = vdwg.mxu0
    %7282 = vmatpush.bf16.msra.mxu0 %v6342
    %7283 = vmatpush.bf16.msra.mxu0 %v6338
    %7284 = vmatpush.bf16.msra.mxu0 %v6334
    %7285 = vmatpush.bf16.msra.mxu0 %v6330
    %7286 = vmatpush.bf16.msra.mxu0 %v6326
    %7287 = vmatpush.bf16.msra.mxu0 %v6322
    %7288 = vmatpush.bf16.msra.mxu0 %v6318
    %7289 = vmatpush.bf16.msra.mxu0 %v6314
    %7290 = vmatmul.bf16.gmra.mxu0 %v7238
    %v7291 = vpop.f32.mrf.mxu0
    %v7292 = vadd.f32 0.0, %v7291
    %v7293 = vpop.f32.mrf.mxu0
    %7294 = vdwg.mxu0
    %v7295 = vadd.f32 %v7239, %v7253
    %v7296 = vadd.f32 %v7240, %v7266
    %v7297 = vadd.f32 %v7241, %v7279
    %v7298 = vadd.f32 %v7242, %v7292
    %v7299 = vxor.u32 %v7295, 2147483648
    %v7300 = vmul.f32 %v7299, 1.442695
    %v7301 = vpow.pop %v7300
    %v7302 = vadd.f32 %v7301, 1.0
    %v7303 = vrcp.pop %v7302
    %v7304 = vmul.f32 %v7302, %v7303
    %v7305 = vsub.f32 1.0, %v7304
    %v7306 = vmul.f32 %v7303, %v7305
    %v7307 = vadd.f32 %v7303, %v7306
    %vm7308 = vweird.f32 %v7302
    %vm7309 = vweird.f32 %v7303
    %vm7310 = vmor %vm7308, %vm7309
    %v7311 = vsel %vm7310, %v7303, %v7307
    %v7312 = vand.u32 2147483647, %v7302
    %vm7313 = vcmp.eq.f32.partialorder %v7312, 8.507059e+37
    %v7314 = vand.u32 %v7302, 2147483648
    %v7315 = vor.u32 1.1754944e-38, %v7314
    %v7316 = vsel %vm7313, %v7315, %v7311
    %v7317 = vmul.f32 1.0, %v7316
    %v7318 = vxor.u32 %v7296, 2147483648
    %v7319 = vmul.f32 %v7318, 1.442695
    %v7320 = vpow.pop %v7319
    %v7321 = vadd.f32 %v7320, 1.0
    %v7322 = vrcp.pop %v7321
    %v7323 = vmul.f32 %v7321, %v7322
    %v7324 = vsub.f32 1.0, %v7323
    %v7325 = vmul.f32 %v7322, %v7324
    %v7326 = vadd.f32 %v7322, %v7325
    %vm7327 = vweird.f32 %v7321
    %vm7328 = vweird.f32 %v7322
    %vm7329 = vmor %vm7327, %vm7328
    %v7330 = vsel %vm7329, %v7322, %v7326
    %v7331 = vand.u32 2147483647, %v7321
    %vm7332 = vcmp.eq.f32.partialorder %v7331, 8.507059e+37
    %v7333 = vand.u32 %v7321, 2147483648
    %v7334 = vor.u32 1.1754944e-38, %v7333
    %v7335 = vsel %vm7332, %v7334, %v7330
    %v7336 = vmul.f32 1.0, %v7335
    %v7337 = vtanh.pop %v7297
    %v7338 = vxor.u32 %v7298, 2147483648
    %v7339 = vmul.f32 %v7338, 1.442695
    %v7340 = vpow.pop %v7339
    %v7341 = vadd.f32 %v7340, 1.0
    %v7342 = vrcp.pop %v7341
    %v7343 = vmul.f32 %v7341, %v7342
    %v7344 = vsub.f32 1.0, %v7343
    %v7345 = vmul.f32 %v7342, %v7344
    %v7346 = vadd.f32 %v7342, %v7345
    %vm7347 = vweird.f32 %v7341
    %vm7348 = vweird.f32 %v7342
    %vm7349 = vmor %vm7347, %vm7348
    %v7350 = vsel %vm7349, %v7342, %v7346
    %v7351 = vand.u32 2147483647, %v7341
    %vm7352 = vcmp.eq.f32.partialorder %v7351, 8.507059e+37
    %v7353 = vand.u32 %v7341, 2147483648
    %v7354 = vor.u32 1.1754944e-38, %v7353
    %v7355 = vsel %vm7352, %v7354, %v7350
    %v7356 = vmul.f32 1.0, %v7355
    %v7357 = vmul.f32 %v7336, %v7235
    %v7358 = vmul.f32 %v7317, %v7337
    %v7359 = vadd.f32 %v7357, %v7358
    %v7360 = vtanh.pop %v7359
    %v7361 = vmul.f32 %v7356, %v7360
    %v7362 = vpack.c.bf16 %v7361, %v7361
    %v7363 = vld [vmem:[%s10] sm:$0xf]
    %v7364 = vld [vmem:[%s10 + $0x4] sm:$0xf]
    %v7365 = vld [vmem:[%s10 + $0x8] sm:$0xf]
    %v7366 = vld [vmem:[%s10 + $0xc] sm:$0xf]
    %v7367 = vld [vmem:[%s10 + $0x10] sm:$0xf]
    %v7368 = vld [vmem:[%s10 + $0x14] sm:$0xf]
    %v7369 = vld [vmem:[%s10 + $0x18] sm:$0xf]
    %v7370 = vld [vmem:[%s10 + $0x1c] sm:$0xf]
    %v7371 = vld [vmem:[%s10 + $0x20] sm:$0xf]
    %v7372 = vld [vmem:[%s10 + $0x24] sm:$0xf]
    %v7373 = vld [vmem:[%s10 + $0x28] sm:$0xf]
    %v7374 = vld [vmem:[%s10 + $0x2c] sm:$0xf]
    %v7375 = vld [vmem:[%s10 + $0x30] sm:$0xf]
    %v7376 = vld [vmem:[%s10 + $0x34] sm:$0xf]
    %v7377 = vld [vmem:[%s10 + $0x38] sm:$0xf]
    %v7378 = vld [vmem:[%s10 + $0x3c] sm:$0xf]
    %v7379 = vld [vmem:[%s11] sm:$0x1]
    %v7381 = vperm.slane %v7379, 0
    %v7399 = vunpack.c.l.b16 %v7363
    %v7400 = vunpack.c.l.b16 %v7364
    %v7401 = vunpack.c.l.b16 %v7365
    %v7402 = vunpack.c.l.b16 %v7366
    %v7403 = vunpack.c.l.b16 %v7367
    %v7404 = vunpack.c.l.b16 %v7368
    %v7405 = vunpack.c.l.b16 %v7369
    %v7406 = vunpack.c.l.b16 %v7370
    %v7407 = vunpack.c.l.b16 %v7371
    %v7408 = vunpack.c.l.b16 %v7372
    %v7409 = vunpack.c.l.b16 %v7373
    %v7410 = vunpack.c.l.b16 %v7374
    %v7411 = vunpack.c.l.b16 %v7375
    %v7412 = vunpack.c.l.b16 %v7376
    %v7413 = vunpack.c.l.b16 %v7377
    %v7414 = vunpack.c.l.b16 %v7378
    %v7415 = vpack.c.b16 %v7400, %v7399
    %v7416 = vpack.c.b16 %v7402, %v7401
    %v7417 = vpack.c.b16 %v7404, %v7403
    %v7418 = vpack.c.b16 %v7406, %v7405
    %v7419 = vpack.c.b16 %v7408, %v7407
    %v7420 = vpack.c.b16 %v7410, %v7409
    %v7421 = vpack.c.b16 %v7412, %v7411
    %v7422 = vpack.c.b16 %v7414, %v7413
    %7431 = vmatpush.bf16.msra.mxu0 %v7422
    %7432 = vmatpush.bf16.msra.mxu0 %v7421
    %7433 = vmatpush.bf16.msra.mxu0 %v7420
    %7434 = vmatpush.bf16.msra.mxu0 %v7419
    %7435 = vmatpush.bf16.msra.mxu0 %v7418
    %7436 = vmatpush.bf16.msra.mxu0 %v7417
    %7437 = vmatpush.bf16.msra.mxu0 %v7416
    %7438 = vmatpush.bf16.msra.mxu0 %v7415
    %7439 = vmatmul.bf16.gmra.mxu0 %v7362
    %v7440 = vpop.f32.mrf.mxu0
    %v7441 = vadd.f32 %v7381, %v7440
    %v7442 = vpop.f32.mrf.mxu0
    %7443 = vdwg.mxu0
    %v7444 = vpack.c.bf16 %v7441, %v7441
    %v7445 = vld [vmem:[#allocation13] sm:$0xf]
    %v7446 = vld [vmem:[#allocation13 + $0x4] sm:$0xf]
    %v7447 = vld [vmem:[#allocation13 + $0x8] sm:$0xf]
    %v7448 = vld [vmem:[#allocation13 + $0xc] sm:$0xf]
    %v7449 = vld [vmem:[#allocation13 + $0x10] sm:$0xf]
    %v7450 = vld [vmem:[#allocation13 + $0x14] sm:$0xf]
    %v7451 = vld [vmem:[#allocation13 + $0x18] sm:$0xf]
    %v7452 = vld [vmem:[#allocation13 + $0x1c] sm:$0xf]
    %v7453 = vld [vmem:[#allocation13 + $0x20] sm:$0xf]
    %v7454 = vld [vmem:[#allocation13 + $0x24] sm:$0xf]
    %v7455 = vld [vmem:[#allocation13 + $0x28] sm:$0xf]
    %v7456 = vld [vmem:[#allocation13 + $0x2c] sm:$0xf]
    %v7457 = vld [vmem:[#allocation13 + $0x30] sm:$0xf]
    %v7458 = vld [vmem:[#allocation13 + $0x34] sm:$0xf]
    %v7459 = vld [vmem:[#allocation13 + $0x38] sm:$0xf]
    %v7460 = vld [vmem:[#allocation13 + $0x3c] sm:$0xf]
    %v7461 = vld [vmem:[%s13] sm:$0x1]
    %v7463 = vperm.slane %v7461, 0
    %v7481 = vunpack.c.l.b16 %v7445
    %v7482 = vunpack.c.l.b16 %v7446
    %v7483 = vunpack.c.l.b16 %v7447
    %v7484 = vunpack.c.l.b16 %v7448
    %v7485 = vunpack.c.l.b16 %v7449
    %v7486 = vunpack.c.l.b16 %v7450
    %v7487 = vunpack.c.l.b16 %v7451
    %v7488 = vunpack.c.l.b16 %v7452
    %v7489 = vunpack.c.l.b16 %v7453
    %v7490 = vunpack.c.l.b16 %v7454
    %v7491 = vunpack.c.l.b16 %v7455
    %v7492 = vunpack.c.l.b16 %v7456
    %v7493 = vunpack.c.l.b16 %v7457
    %v7494 = vunpack.c.l.b16 %v7458
    %v7495 = vunpack.c.l.b16 %v7459
    %v7496 = vunpack.c.l.b16 %v7460
    %v7497 = vpack.c.b16 %v7482, %v7481
    %v7498 = vpack.c.b16 %v7484, %v7483
    %v7499 = vpack.c.b16 %v7486, %v7485
    %v7500 = vpack.c.b16 %v7488, %v7487
    %v7501 = vpack.c.b16 %v7490, %v7489
    %v7502 = vpack.c.b16 %v7492, %v7491
    %v7503 = vpack.c.b16 %v7494, %v7493
    %v7504 = vpack.c.b16 %v7496, %v7495
    %7513 = vmatpush.bf16.msra.mxu0 %v7504
    %7514 = vmatpush.bf16.msra.mxu0 %v7503
    %7515 = vmatpush.bf16.msra.mxu0 %v7502
    %7516 = vmatpush.bf16.msra.mxu0 %v7501
    %7517 = vmatpush.bf16.msra.mxu0 %v7500
    %7518 = vmatpush.bf16.msra.mxu0 %v7499
    %7519 = vmatpush.bf16.msra.mxu0 %v7498
    %7520 = vmatpush.bf16.msra.mxu0 %v7497
    %7521 = vmatmul.bf16.gmra.mxu0 %v7444
    %v7522 = vpop.f32.mrf.mxu0
    %v7523 = vadd.f32 %v7463, %v7522
    %v7524 = vpop.f32.mrf.mxu0
    %7525 = vdwg.mxu0
    %7526 = vst [vmem:[#allocation15] sm:$0xff] %v7523
    // Predicated region
    $region82: #{tpu_custom_call.1} parent=1 // pred_check
      _
    $region83: #{tpu_custom_call.1} parent=1 // pred_check_branch
      %7528 = sbr.rel (0) target = $region85
    $region84: #{tpu_custom_call.1} parent=1 // pred_region
      %7530 = vsyncadd [#allocation6], 0
      %s7532 = sshll.u32 [#allocation15], 4
      %s7533 = int_to_ptr.vmem [resolvable:$true] %s7532
      %s7534 = sshll.u32 %s14, 4
      %s7535 = int_to_ptr.hbm [resolvable:$true] %s7534
      %7537 = dma.vmem_to_hbm [thread:$0]  %s7533, 128, %s7535, [#allocation6]
    $region85: #{tpu_custom_call.1} parent=1 // pred_fallthru
      _
    // Predicated region
    $region86: #{tpu_custom_call.1} parent=1 // pred_check
      _
    $region87: #{tpu_custom_call.1} parent=1 // pred_check_branch
      %7539 = sbr.rel (0) target = $region89
    $region88: #{tpu_custom_call.1} parent=1 // pred_region
      %7541 = dma.done [#allocation6], 128
    $region89: #{tpu_custom_call.1} parent=1 // pred_fallthru
      _
    %7542 = vsyncpa [#allocation5], 1
    %7543 = vsyncpa [#allocation8], 1
    %7544 = vsyncpa [#allocation11], 1
    %7545 = vsyncpa [#allocation14], 1
    %7546 = vsyncpa [#allocation6], 1

</llo_original>
